<compile_context>
chip_gen: v6e
topology: v6e:2x2x1
jax: 0.10.0
libtpu: 0.0.40
codegen_flags: <defaults>
</compile_context>

<pallas_src>
import functools
import math

import jax
import jax.numpy as jnp
from jax.experimental import pallas as pl
from jax.experimental.pallas import tpu as pltpu

NUM_HEADS = 8
FF_DIM = 2048          # TransformerEncoderLayer default dim_feedforward
PRED_DIM = 2048        # Linear(embed_size, 2048)
LN_EPS = 1e-5
VMEM_LIMIT = 32 * 1024 * 1024   # safe scoped budget on v5e/v6e/v7x


def _layer_norm(x, g, b):
    mu = jnp.mean(x, axis=-1, keepdims=True)
    xc = x - mu
    var = jnp.mean(xc * xc, axis=-1, keepdims=True)
    return xc * jax.lax.rsqrt(var + LN_EPS) * g + b


# -----------------------------------------------------------------------------
# Single fused kernel: grid = (num_layers,).  Activations stay in VMEM scratch.
# -----------------------------------------------------------------------------
def fused_encoder_kernel(ids_ref, table_ref,
                         wq_ref, bq_ref, wk_ref, bk_ref, wv_ref, bv_ref,
                         wo_ref, bo_ref, ln1g_ref, ln1b_ref,
                         w1_ref, b1_ref, w2_ref, b2_ref, ln2g_ref, ln2b_ref,
                         predw_ref, predb_ref,
                         o_ref, xcur_ref, *, batch, seq, heads):
    l = pl.program_id(0)
    nt = batch * seq
    E = xcur_ref.shape[-1]
    D = E // heads

    # ---- layer 0 prologue: embedding gather from the VMEM-resident table ----
    # ids are SMEM scalars (scalar prefetch); each row is a dynamic sublane slice.
    @pl.when(l == 0)
    def _():
        for i in range(nt):
            xcur_ref[pl.ds(i, 1), :] = table_ref[pl.ds(ids_ref[i], 1), :]

    x = xcur_ref[...]                       # (nt, E) f32, resident across layers
    xb = x.astype(jnp.bfloat16)

    # ---- full-width Q/K/V projections: (nt,E) @ (E,E) bf16 GEMMs, f32 acc ----
    # (1/sqrt(D) attention scale is folded into wq/bq at init.)
    q = jnp.dot(xb, wq_ref[...], preferred_element_type=jnp.float32) + bq_ref[...]
    k = jnp.dot(xb, wk_ref[...], preferred_element_type=jnp.float32) + bk_ref[...]
    v = jnp.dot(xb, wv_ref[...], preferred_element_type=jnp.float32) + bv_ref[...]

    # ---- per-head attention (static loop; tiny shapes, MXU work is above) ----
    ctx_cols = []
    for h in range(heads):
        lo, hi = h * D, (h + 1) * D
        qh = q[:, lo:hi].reshape(batch, seq, D).astype(jnp.bfloat16)
        kh = k[:, lo:hi].reshape(batch, seq, D).astype(jnp.bfloat16)
        vh = v[:, lo:hi].reshape(batch, seq, D).astype(jnp.bfloat16)
        s = jnp.einsum('bqd,bkd->bqk', qh, kh, preferred_element_type=jnp.float32)
        s = s - jnp.max(s, axis=-1, keepdims=True)
        p = jnp.exp(s)
        p = p * pl.reciprocal(jnp.sum(p, axis=-1, keepdims=True), approx=True)
        ch = jnp.einsum('bqk,bkd->bqd', p.astype(jnp.bfloat16), vh,
                        preferred_element_type=jnp.float32)       # (batch, seq, D)
        ctx_cols.append(ch.reshape(nt, D))
    ctx = jnp.concatenate(ctx_cols, axis=-1)                      # (nt, E) f32

    # ---- full-width output projection + residual + LN1 (post-norm) ----
    attn = jnp.dot(ctx.astype(jnp.bfloat16), wo_ref[...],
                   preferred_element_type=jnp.float32) + bo_ref[...]
    y1 = _layer_norm(x + attn, ln1g_ref[...], ln1b_ref[...])

    # ---- ReLU FFN + residual + LN2 ----
    h1 = jnp.dot(y1.astype(jnp.bfloat16), w1_ref[...],
                 preferred_element_type=jnp.float32) + b1_ref[...]
    h1 = jnp.maximum(h1, 0.0)
    ff = jnp.dot(h1.astype(jnp.bfloat16), w2_ref[...],
                 preferred_element_type=jnp.float32) + b2_ref[...]
    y2 = _layer_norm(y1 + ff, ln2g_ref[...], ln2b_ref[...])
    xcur_ref[...] = y2                                            # carry to next layer

    # ---- last layer epilogue: mean over seq + prediction Linear(E, 2048) ----
    @pl.when(l == pl.num_programs(0) - 1)
    def _():
        m = jnp.sum(y2.reshape(batch, seq, E), axis=1) * (1.0 / seq)   # (batch, E) f32
        o_ref[...] = jnp.dot(m.astype(jnp.bfloat16), predw_ref[...],
                             preferred_element_type=jnp.float32) + predb_ref[...]


def encoder_forward(params, ids):
    B, S = ids.shape
    V, E = params['emb'].shape
    L = params['wq'].shape[0]
    nt = B * S

    kernel = functools.partial(fused_encoder_kernel, batch=B, seq=S, heads=NUM_HEADS)

    # Per-layer (stacked) weight blocks: leading layer dim squeezed out in the kernel.
    def lyr(d0, d1):
        return pl.BlockSpec((None, d0, d1), lambda l, ids_r: (l, 0, 0))

    # Constant (fetched once) blocks.
    def const(d0, d1):
        return pl.BlockSpec((d0, d1), lambda l, ids_r: (0, 0))

    return pl.pallas_call(
        kernel,
        out_shape=jax.ShapeDtypeStruct((B, PRED_DIM), jnp.float32),
        grid_spec=pltpu.PrefetchScalarGridSpec(
            num_scalar_prefetch=1,          # token ids -> SMEM
            grid=(L,),
            in_specs=[
                const(V, E),                # embedding table (VMEM resident, small vocab)
                lyr(E, E),                  # wq  (scale folded)
                lyr(1, E),                  # bq
                lyr(E, E),                  # wk
                lyr(1, E),                  # bk
                lyr(E, E),                  # wv
                lyr(1, E),                  # bv
                lyr(E, E),                  # wo
                lyr(1, E),                  # bo
                lyr(1, E),                  # ln1 gamma
                lyr(1, E),                  # ln1 beta
                lyr(E, FF_DIM),             # w1
                lyr(1, FF_DIM),             # b1
                lyr(FF_DIM, E),             # w2
                lyr(1, E),                  # b2
                lyr(1, E),                  # ln2 gamma
                lyr(1, E),                  # ln2 beta
                const(E, PRED_DIM),         # pred weight
                const(1, PRED_DIM),         # pred bias
            ],
            out_specs=pl.BlockSpec((B, PRED_DIM), lambda l, ids_r: (0, 0)),
            scratch_shapes=[pltpu.VMEM((nt, E), jnp.float32)]),   # resident activations
        compiler_params=pltpu.CompilerParams(
            dimension_semantics=("arbitrary",),
            vmem_limit_bytes=VMEM_LIMIT),
    )(ids.reshape(nt).astype(jnp.int32), params['emb'],
      params['wq'], params['bq'], params['wk'], params['bk'],
      params['wv'], params['bv'], params['wo'], params['bo'],
      params['ln1g'], params['ln1b'], params['w1'], params['b1'],
      params['w2'], params['b2'], params['ln2g'], params['ln2b'],
      params['pred_w'], params['pred_b'])


# -----------------------------------------------------------------------------
# Parameter init (deterministic, synthetic).  Weights bf16 (MXU inputs),
# biases / LN params / embedding table f32.  Per-layer weights are stacked
# with a leading layer axis so the kernel can stream them over the layer grid.
# -----------------------------------------------------------------------------
def init_params(key, voc_size, embed_size, num_layers):
    E, F, H, L = embed_size, FF_DIM, NUM_HEADS, num_layers
    D = E // H
    scale = 1.0 / math.sqrt(D)       # attention scale, folded into wq/bq
    k_emb, k_layers, k_pred = jax.random.split(key, 3)

    def w(k, shape, s=0.02):
        return (jax.random.normal(k, shape, jnp.float32) * s).astype(jnp.bfloat16)

    lk = [jax.random.split(jax.random.fold_in(k_layers, i), 6) for i in range(L)]
    params = {
        'emb': jax.random.normal(k_emb, (voc_size, E), jnp.float32) * 0.02,
        'wq': jnp.stack([w(lk[i][0], (E, E), 0.02 * scale) for i in range(L)]),
        'bq': jnp.zeros((L, 1, E), jnp.float32),        # zero bias; scale fold is a no-op
        'wk': jnp.stack([w(lk[i][1], (E, E)) for i in range(L)]),
        'bk': jnp.zeros((L, 1, E), jnp.float32),
        'wv': jnp.stack([w(lk[i][2], (E, E)) for i in range(L)]),
        'bv': jnp.zeros((L, 1, E), jnp.float32),
        'wo': jnp.stack([w(lk[i][3], (E, E)) for i in range(L)]),
        'bo': jnp.zeros((L, 1, E), jnp.float32),
        'ln1g': jnp.ones((L, 1, E), jnp.float32),
        'ln1b': jnp.zeros((L, 1, E), jnp.float32),
        'w1': jnp.stack([w(lk[i][4], (E, F)) for i in range(L)]),
        'b1': jnp.zeros((L, 1, F), jnp.float32),
        'w2': jnp.stack([w(lk[i][5], (F, E)) for i in range(L)]),
        'b2': jnp.zeros((L, 1, E), jnp.float32),
        'ln2g': jnp.ones((L, 1, E), jnp.float32),
        'ln2b': jnp.zeros((L, 1, E), jnp.float32),
        'pred_w': w(k_pred, (E, PRED_DIM)),
        'pred_b': jnp.zeros((1, PRED_DIM), jnp.float32),
    }
    return params


if __name__ == "__main__":
    VOC_SIZE = 64
    EMBED = 128          # divisible by NUM_HEADS=8 -> head_dim = 16
    NUM_LAYERS = 2       # small for the demo (module default is 6; the layer grid handles any count)
    B, S = 2, 8

    key = jax.random.PRNGKey(0)
    params = init_params(key, VOC_SIZE, EMBED, NUM_LAYERS)
    ids = jax.random.randint(jax.random.fold_in(key, 123), (B, S), 0, VOC_SIZE,
                             dtype=jnp.int32)

    fwd = jax.jit(encoder_forward)
    out = fwd(params, ids)
    out = jax.block_until_ready(out)
    assert out.shape == (B, PRED_DIM) and out.dtype == jnp.float32
    assert bool(jnp.all(jnp.isfinite(out)))
    print("KERNEL_OK")
</pallas_src>

<mosaic_0001>
module attributes {stable_mosaic.version = 11 : i64} {
  func.func @fused_encoder_kernel(%arg0: i32, %arg1: memref<16xi32, #tpu.memory_space<smem>>, %arg2: memref<64x128xf32, #tpu.memory_space<vmem>>, %arg3: memref<1x128x128xbf16, #tpu.memory_space<vmem>>, %arg4: memref<1x1x128xf32, #tpu.memory_space<vmem>>, %arg5: memref<1x128x128xbf16, #tpu.memory_space<vmem>>, %arg6: memref<1x1x128xf32, #tpu.memory_space<vmem>>, %arg7: memref<1x128x128xbf16, #tpu.memory_space<vmem>>, %arg8: memref<1x1x128xf32, #tpu.memory_space<vmem>>, %arg9: memref<1x128x128xbf16, #tpu.memory_space<vmem>>, %arg10: memref<1x1x128xf32, #tpu.memory_space<vmem>>, %arg11: memref<1x1x128xf32, #tpu.memory_space<vmem>>, %arg12: memref<1x1x128xf32, #tpu.memory_space<vmem>>, %arg13: memref<1x128x2048xbf16, #tpu.memory_space<vmem>>, %arg14: memref<1x1x2048xf32, #tpu.memory_space<vmem>>, %arg15: memref<1x2048x128xbf16, #tpu.memory_space<vmem>>, %arg16: memref<1x1x128xf32, #tpu.memory_space<vmem>>, %arg17: memref<1x1x128xf32, #tpu.memory_space<vmem>>, %arg18: memref<1x1x128xf32, #tpu.memory_space<vmem>>, %arg19: memref<128x2048xbf16, #tpu.memory_space<vmem>>, %arg20: memref<1x2048xf32, #tpu.memory_space<vmem>>, %arg21: memref<2x2048xf32, #tpu.memory_space<vmem>>, %arg22: memref<16x128xf32, #tpu.memory_space<vmem>>) attributes {dimension_semantics = [#tpu.dimension_semantics<arbitrary>], iteration_bounds = array<i64: 2>, scalar_prefetch = 1 : i64, scratch_operands = 1 : i64, tpu.core_type = #tpu.core_type<tc>, window_params = [{pipeline_mode = #tpu.pipeline_mode<synchronous>, transform_indices = @transform_0, window_bounds = array<i64: 64, 128>}, {transform_indices = @transform_1, window_bounds = array<i64: 1, 128, 128>}, {transform_indices = @transform_2, window_bounds = array<i64: 1, 1, 128>}, {transform_indices = @transform_3, window_bounds = array<i64: 1, 128, 128>}, {transform_indices = @transform_4, window_bounds = array<i64: 1, 1, 128>}, {transform_indices = @transform_5, window_bounds = array<i64: 1, 128, 128>}, {transform_indices = @transform_6, window_bounds = array<i64: 1, 1, 128>}, {transform_indices = @transform_7, window_bounds = array<i64: 1, 128, 128>}, {transform_indices = @transform_8, window_bounds = array<i64: 1, 1, 128>}, {transform_indices = @transform_9, window_bounds = array<i64: 1, 1, 128>}, {transform_indices = @transform_10, window_bounds = array<i64: 1, 1, 128>}, {transform_indices = @transform_11, window_bounds = array<i64: 1, 128, 2048>}, {transform_indices = @transform_12, window_bounds = array<i64: 1, 1, 2048>}, {transform_indices = @transform_13, window_bounds = array<i64: 1, 2048, 128>}, {transform_indices = @transform_14, window_bounds = array<i64: 1, 1, 128>}, {transform_indices = @transform_15, window_bounds = array<i64: 1, 1, 128>}, {transform_indices = @transform_16, window_bounds = array<i64: 1, 1, 128>}, {pipeline_mode = #tpu.pipeline_mode<synchronous>, transform_indices = @transform_17, window_bounds = array<i64: 128, 2048>}, {pipeline_mode = #tpu.pipeline_mode<synchronous>, transform_indices = @transform_18, window_bounds = array<i64: 1, 2048>}, {pipeline_mode = #tpu.pipeline_mode<synchronous>, transform_indices = @transform_19, window_bounds = array<i64: 2, 2048>}]} {
    %c0_i32 = arith.constant 0 : i32
    %0 = arith.cmpi eq, %arg0, %c0_i32 : i32
    %1 = arith.extui %0 : i1 to i32
    %c0_i32_0 = arith.constant 0 : i32
    %2 = arith.cmpi ne, %1, %c0_i32_0 : i32
    scf.if %2 {
      %c0_101 = arith.constant 0 : index
      %291 = memref.load %arg1[%c0_101] : memref<16xi32, #tpu.memory_space<smem>>
      %292 = arith.index_cast %291 : i32 to index
      %c0_102 = arith.constant 0 : index
      %293 = vector.load %arg2[%292, %c0_102] : memref<64x128xf32, #tpu.memory_space<vmem>>, vector<1x128xf32>
      %c0_103 = arith.constant 0 : index
      %c0_104 = arith.constant 0 : index
      %294 = vector.load %arg22[%c0_103, %c0_104] : memref<16x128xf32, #tpu.memory_space<vmem>>, vector<1x128xf32>
      tpu.vector_store %arg22[%c0_103, %c0_104], %293 {strides = array<i32>} : memref<16x128xf32, #tpu.memory_space<vmem>>, vector<1x128xf32>,
      %c1 = arith.constant 1 : index
      %295 = memref.load %arg1[%c1] : memref<16xi32, #tpu.memory_space<smem>>
      %296 = arith.index_cast %295 : i32 to index
      %c0_105 = arith.constant 0 : index
      %297 = vector.load %arg2[%296, %c0_105] : memref<64x128xf32, #tpu.memory_space<vmem>>, vector<1x128xf32>
      %c1_106 = arith.constant 1 : index
      %c0_107 = arith.constant 0 : index
      %298 = vector.load %arg22[%c1_106, %c0_107] : memref<16x128xf32, #tpu.memory_space<vmem>>, vector<1x128xf32>
      tpu.vector_store %arg22[%c1_106, %c0_107], %297 {strides = array<i32>} : memref<16x128xf32, #tpu.memory_space<vmem>>, vector<1x128xf32>,
      %c2 = arith.constant 2 : index
      %299 = memref.load %arg1[%c2] : memref<16xi32, #tpu.memory_space<smem>>
      %300 = arith.index_cast %299 : i32 to index
      %c0_108 = arith.constant 0 : index
      %301 = vector.load %arg2[%300, %c0_108] : memref<64x128xf32, #tpu.memory_space<vmem>>, vector<1x128xf32>
      %c2_109 = arith.constant 2 : index
      %c0_110 = arith.constant 0 : index
      %302 = vector.load %arg22[%c2_109, %c0_110] : memref<16x128xf32, #tpu.memory_space<vmem>>, vector<1x128xf32>
      tpu.vector_store %arg22[%c2_109, %c0_110], %301 {strides = array<i32>} : memref<16x128xf32, #tpu.memory_space<vmem>>, vector<1x128xf32>,
      %c3 = arith.constant 3 : index
      %303 = memref.load %arg1[%c3] : memref<16xi32, #tpu.memory_space<smem>>
      %304 = arith.index_cast %303 : i32 to index
      %c0_111 = arith.constant 0 : index
      %305 = vector.load %arg2[%304, %c0_111] : memref<64x128xf32, #tpu.memory_space<vmem>>, vector<1x128xf32>
      %c3_112 = arith.constant 3 : index
      %c0_113 = arith.constant 0 : index
      %306 = vector.load %arg22[%c3_112, %c0_113] : memref<16x128xf32, #tpu.memory_space<vmem>>, vector<1x128xf32>
      tpu.vector_store %arg22[%c3_112, %c0_113], %305 {strides = array<i32>} : memref<16x128xf32, #tpu.memory_space<vmem>>, vector<1x128xf32>,
      %c4 = arith.constant 4 : index
      %307 = memref.load %arg1[%c4] : memref<16xi32, #tpu.memory_space<smem>>
      %308 = arith.index_cast %307 : i32 to index
      %c0_114 = arith.constant 0 : index
      %309 = vector.load %arg2[%308, %c0_114] : memref<64x128xf32, #tpu.memory_space<vmem>>, vector<1x128xf32>
      %c4_115 = arith.constant 4 : index
      %c0_116 = arith.constant 0 : index
      %310 = vector.load %arg22[%c4_115, %c0_116] : memref<16x128xf32, #tpu.memory_space<vmem>>, vector<1x128xf32>
      tpu.vector_store %arg22[%c4_115, %c0_116], %309 {strides = array<i32>} : memref<16x128xf32, #tpu.memory_space<vmem>>, vector<1x128xf32>,
      %c5 = arith.constant 5 : index
      %311 = memref.load %arg1[%c5] : memref<16xi32, #tpu.memory_space<smem>>
      %312 = arith.index_cast %311 : i32 to index
      %c0_117 = arith.constant 0 : index
      %313 = vector.load %arg2[%312, %c0_117] : memref<64x128xf32, #tpu.memory_space<vmem>>, vector<1x128xf32>
      %c5_118 = arith.constant 5 : index
      %c0_119 = arith.constant 0 : index
      %314 = vector.load %arg22[%c5_118, %c0_119] : memref<16x128xf32, #tpu.memory_space<vmem>>, vector<1x128xf32>
      tpu.vector_store %arg22[%c5_118, %c0_119], %313 {strides = array<i32>} : memref<16x128xf32, #tpu.memory_space<vmem>>, vector<1x128xf32>,
      %c6 = arith.constant 6 : index
      %315 = memref.load %arg1[%c6] : memref<16xi32, #tpu.memory_space<smem>>
      %316 = arith.index_cast %315 : i32 to index
      %c0_120 = arith.constant 0 : index
      %317 = vector.load %arg2[%316, %c0_120] : memref<64x128xf32, #tpu.memory_space<vmem>>, vector<1x128xf32>
      %c6_121 = arith.constant 6 : index
      %c0_122 = arith.constant 0 : index
      %318 = vector.load %arg22[%c6_121, %c0_122] : memref<16x128xf32, #tpu.memory_space<vmem>>, vector<1x128xf32>
      tpu.vector_store %arg22[%c6_121, %c0_122], %317 {strides = array<i32>} : memref<16x128xf32, #tpu.memory_space<vmem>>, vector<1x128xf32>,
      %c7 = arith.constant 7 : index
      %319 = memref.load %arg1[%c7] : memref<16xi32, #tpu.memory_space<smem>>
      %320 = arith.index_cast %319 : i32 to index
      %c0_123 = arith.constant 0 : index
      %321 = vector.load %arg2[%320, %c0_123] : memref<64x128xf32, #tpu.memory_space<vmem>>, vector<1x128xf32>
      %c7_124 = arith.constant 7 : index
      %c0_125 = arith.constant 0 : index
      %322 = vector.load %arg22[%c7_124, %c0_125] : memref<16x128xf32, #tpu.memory_space<vmem>>, vector<1x128xf32>
      tpu.vector_store %arg22[%c7_124, %c0_125], %321 {strides = array<i32>} : memref<16x128xf32, #tpu.memory_space<vmem>>, vector<1x128xf32>,
      %c8 = arith.constant 8 : index
      %323 = memref.load %arg1[%c8] : memref<16xi32, #tpu.memory_space<smem>>
      %324 = arith.index_cast %323 : i32 to index
      %c0_126 = arith.constant 0 : index
      %325 = vector.load %arg2[%324, %c0_126] : memref<64x128xf32, #tpu.memory_space<vmem>>, vector<1x128xf32>
      %c8_127 = arith.constant 8 : index
      %c0_128 = arith.constant 0 : index
      %326 = vector.load %arg22[%c8_127, %c0_128] : memref<16x128xf32, #tpu.memory_space<vmem>>, vector<1x128xf32>
      tpu.vector_store %arg22[%c8_127, %c0_128], %325 {strides = array<i32>} : memref<16x128xf32, #tpu.memory_space<vmem>>, vector<1x128xf32>,
      %c9 = arith.constant 9 : index
      %327 = memref.load %arg1[%c9] : memref<16xi32, #tpu.memory_space<smem>>
      %328 = arith.index_cast %327 : i32 to index
      %c0_129 = arith.constant 0 : index
      %329 = vector.load %arg2[%328, %c0_129] : memref<64x128xf32, #tpu.memory_space<vmem>>, vector<1x128xf32>
      %c9_130 = arith.constant 9 : index
      %c0_131 = arith.constant 0 : index
      %330 = vector.load %arg22[%c9_130, %c0_131] : memref<16x128xf32, #tpu.memory_space<vmem>>, vector<1x128xf32>
      tpu.vector_store %arg22[%c9_130, %c0_131], %329 {strides = array<i32>} : memref<16x128xf32, #tpu.memory_space<vmem>>, vector<1x128xf32>,
      %c10 = arith.constant 10 : index
      %331 = memref.load %arg1[%c10] : memref<16xi32, #tpu.memory_space<smem>>
      %332 = arith.index_cast %331 : i32 to index
      %c0_132 = arith.constant 0 : index
      %333 = vector.load %arg2[%332, %c0_132] : memref<64x128xf32, #tpu.memory_space<vmem>>, vector<1x128xf32>
      %c10_133 = arith.constant 10 : index
      %c0_134 = arith.constant 0 : index
      %334 = vector.load %arg22[%c10_133, %c0_134] : memref<16x128xf32, #tpu.memory_space<vmem>>, vector<1x128xf32>
      tpu.vector_store %arg22[%c10_133, %c0_134], %333 {strides = array<i32>} : memref<16x128xf32, #tpu.memory_space<vmem>>, vector<1x128xf32>,
      %c11 = arith.constant 11 : index
      %335 = memref.load %arg1[%c11] : memref<16xi32, #tpu.memory_space<smem>>
      %336 = arith.index_cast %335 : i32 to index
      %c0_135 = arith.constant 0 : index
      %337 = vector.load %arg2[%336, %c0_135] : memref<64x128xf32, #tpu.memory_space<vmem>>, vector<1x128xf32>
      %c11_136 = arith.constant 11 : index
      %c0_137 = arith.constant 0 : index
      %338 = vector.load %arg22[%c11_136, %c0_137] : memref<16x128xf32, #tpu.memory_space<vmem>>, vector<1x128xf32>
      tpu.vector_store %arg22[%c11_136, %c0_137], %337 {strides = array<i32>} : memref<16x128xf32, #tpu.memory_space<vmem>>, vector<1x128xf32>,
      %c12 = arith.constant 12 : index
      %339 = memref.load %arg1[%c12] : memref<16xi32, #tpu.memory_space<smem>>
      %340 = arith.index_cast %339 : i32 to index
      %c0_138 = arith.constant 0 : index
      %341 = vector.load %arg2[%340, %c0_138] : memref<64x128xf32, #tpu.memory_space<vmem>>, vector<1x128xf32>
      %c12_139 = arith.constant 12 : index
      %c0_140 = arith.constant 0 : index
      %342 = vector.load %arg22[%c12_139, %c0_140] : memref<16x128xf32, #tpu.memory_space<vmem>>, vector<1x128xf32>
      tpu.vector_store %arg22[%c12_139, %c0_140], %341 {strides = array<i32>} : memref<16x128xf32, #tpu.memory_space<vmem>>, vector<1x128xf32>,
      %c13 = arith.constant 13 : index
      %343 = memref.load %arg1[%c13] : memref<16xi32, #tpu.memory_space<smem>>
      %344 = arith.index_cast %343 : i32 to index
      %c0_141 = arith.constant 0 : index
      %345 = vector.load %arg2[%344, %c0_141] : memref<64x128xf32, #tpu.memory_space<vmem>>, vector<1x128xf32>
      %c13_142 = arith.constant 13 : index
      %c0_143 = arith.constant 0 : index
      %346 = vector.load %arg22[%c13_142, %c0_143] : memref<16x128xf32, #tpu.memory_space<vmem>>, vector<1x128xf32>
      tpu.vector_store %arg22[%c13_142, %c0_143], %345 {strides = array<i32>} : memref<16x128xf32, #tpu.memory_space<vmem>>, vector<1x128xf32>,
      %c14 = arith.constant 14 : index
      %347 = memref.load %arg1[%c14] : memref<16xi32, #tpu.memory_space<smem>>
      %348 = arith.index_cast %347 : i32 to index
      %c0_144 = arith.constant 0 : index
      %349 = vector.load %arg2[%348, %c0_144] : memref<64x128xf32, #tpu.memory_space<vmem>>, vector<1x128xf32>
      %c14_145 = arith.constant 14 : index
      %c0_146 = arith.constant 0 : index
      %350 = vector.load %arg22[%c14_145, %c0_146] : memref<16x128xf32, #tpu.memory_space<vmem>>, vector<1x128xf32>
      tpu.vector_store %arg22[%c14_145, %c0_146], %349 {strides = array<i32>} : memref<16x128xf32, #tpu.memory_space<vmem>>, vector<1x128xf32>,
      %c15 = arith.constant 15 : index
      %351 = memref.load %arg1[%c15] : memref<16xi32, #tpu.memory_space<smem>>
      %352 = arith.index_cast %351 : i32 to index
      %c0_147 = arith.constant 0 : index
      %353 = vector.load %arg2[%352, %c0_147] : memref<64x128xf32, #tpu.memory_space<vmem>>, vector<1x128xf32>
      %c15_148 = arith.constant 15 : index
      %c0_149 = arith.constant 0 : index
      %354 = vector.load %arg22[%c15_148, %c0_149] : memref<16x128xf32, #tpu.memory_space<vmem>>, vector<1x128xf32>
      tpu.vector_store %arg22[%c15_148, %c0_149], %353 {strides = array<i32>} : memref<16x128xf32, #tpu.memory_space<vmem>>, vector<1x128xf32>,
    } else {
    }
    %c0 = arith.constant 0 : index
    %c0_1 = arith.constant 0 : index
    %3 = vector.load %arg22[%c0, %c0_1] : memref<16x128xf32, #tpu.memory_space<vmem>>, vector<16x128xf32>
    %4 = arith.truncf %3 : vector<16x128xf32> to vector<16x128xbf16>
    %c0_2 = arith.constant 0 : index
    %c0_3 = arith.constant 0 : index
    %c0_4 = arith.constant 0 : index
    %5 = vector.load %arg3[%c0_2, %c0_3, %c0_4] : memref<1x128x128xbf16, #tpu.memory_space<vmem>>, vector<1x128x128xbf16>
    %6 = vector.shape_cast %5 : vector<1x128x128xbf16> to vector<128x128xbf16>
    %cst = arith.constant dense<0.000000e+00> : vector<16x128xf32>
    %7 = tpu.matmul %4, %6, %cst {dimension_numbers = #tpu.dot_dimension_numbers<[1], [0], [0], [1], [0, 0, 1, 1], [], []>} : vector<16x128xbf16>, vector<128x128xbf16>, vector<16x128xf32> -> vector<16x128xf32>
    %c0_5 = arith.constant 0 : index
    %c0_6 = arith.constant 0 : index
    %c0_7 = arith.constant 0 : index
    %8 = vector.load %arg4[%c0_5, %c0_6, %c0_7] : memref<1x1x128xf32, #tpu.memory_space<vmem>>, vector<1x1x128xf32>
    %9 = vector.shape_cast %8 : vector<1x1x128xf32> to vector<1x128xf32>
    %10 = vector.broadcast %9 : vector<1x128xf32> to vector<16x128xf32>
    %11 = arith.addf %7, %10 : vector<16x128xf32>
    %c0_8 = arith.constant 0 : index
    %c0_9 = arith.constant 0 : index
    %c0_10 = arith.constant 0 : index
    %12 = vector.load %arg5[%c0_8, %c0_9, %c0_10] : memref<1x128x128xbf16, #tpu.memory_space<vmem>>, vector<1x128x128xbf16>
    %13 = vector.shape_cast %12 : vector<1x128x128xbf16> to vector<128x128xbf16>
    %cst_11 = arith.constant dense<0.000000e+00> : vector<16x128xf32>
    %14 = tpu.matmul %4, %13, %cst_11 {dimension_numbers = #tpu.dot_dimension_numbers<[1], [0], [0], [1], [0, 0, 1, 1], [], []>} : vector<16x128xbf16>, vector<128x128xbf16>, vector<16x128xf32> -> vector<16x128xf32>
    %c0_12 = arith.constant 0 : index
    %c0_13 = arith.constant 0 : index
    %c0_14 = arith.constant 0 : index
    %15 = vector.load %arg6[%c0_12, %c0_13, %c0_14] : memref<1x1x128xf32, #tpu.memory_space<vmem>>, vector<1x1x128xf32>
    %16 = vector.shape_cast %15 : vector<1x1x128xf32> to vector<1x128xf32>
    %17 = vector.broadcast %16 : vector<1x128xf32> to vector<16x128xf32>
    %18 = arith.addf %14, %17 : vector<16x128xf32>
    %c0_15 = arith.constant 0 : index
    %c0_16 = arith.constant 0 : index
    %c0_17 = arith.constant 0 : index
    %19 = vector.load %arg7[%c0_15, %c0_16, %c0_17] : memref<1x128x128xbf16, #tpu.memory_space<vmem>>, vector<1x128x128xbf16>
    %20 = vector.shape_cast %19 : vector<1x128x128xbf16> to vector<128x128xbf16>
    %cst_18 = arith.constant dense<0.000000e+00> : vector<16x128xf32>
    %21 = tpu.matmul %4, %20, %cst_18 {dimension_numbers = #tpu.dot_dimension_numbers<[1], [0], [0], [1], [0, 0, 1, 1], [], []>} : vector<16x128xbf16>, vector<128x128xbf16>, vector<16x128xf32> -> vector<16x128xf32>
    %c0_19 = arith.constant 0 : index
    %c0_20 = arith.constant 0 : index
    %c0_21 = arith.constant 0 : index
    %22 = vector.load %arg8[%c0_19, %c0_20, %c0_21] : memref<1x1x128xf32, #tpu.memory_space<vmem>>, vector<1x1x128xf32>
    %23 = vector.shape_cast %22 : vector<1x1x128xf32> to vector<1x128xf32>
    %24 = vector.broadcast %23 : vector<1x128xf32> to vector<16x128xf32>
    %25 = arith.addf %21, %24 : vector<16x128xf32>
    %26 = vector.extract_strided_slice %11 {offsets = [0, 0], sizes = [16, 16], strides = [1, 1]} : vector<16x128xf32> to vector<16x16xf32>
    %27 = vector.shape_cast %26 : vector<16x16xf32> to vector<2x8x16xf32>
    %28 = arith.truncf %27 : vector<2x8x16xf32> to vector<2x8x16xbf16>
    %29 = vector.extract_strided_slice %18 {offsets = [0, 0], sizes = [16, 16], strides = [1, 1]} : vector<16x128xf32> to vector<16x16xf32>
    %30 = vector.shape_cast %29 : vector<16x16xf32> to vector<2x8x16xf32>
    %31 = arith.truncf %30 : vector<2x8x16xf32> to vector<2x8x16xbf16>
    %32 = vector.extract_strided_slice %25 {offsets = [0, 0], sizes = [16, 16], strides = [1, 1]} : vector<16x128xf32> to vector<16x16xf32>
    %33 = vector.shape_cast %32 : vector<16x16xf32> to vector<2x8x16xf32>
    %34 = arith.truncf %33 : vector<2x8x16xf32> to vector<2x8x16xbf16>
    "tpu.trace_start"() <{level = 10 : i32, message = "bqd,bkd->bqk"}> : () -> ()
    %cst_22 = arith.constant dense<0.000000e+00> : vector<2x8x8xf32>
    %35 = tpu.matmul %28, %31, %cst_22 {dimension_numbers = #tpu.dot_dimension_numbers<[2], [2], [1], [1], [0, 0, 0, 1, 1, 1], [0], [0]>} : vector<2x8x16xbf16>, vector<2x8x16xbf16>, vector<2x8x8xf32> -> vector<2x8x8xf32>
    "tpu.trace_stop"() : () -> ()
    %cst_23 = arith.constant dense<0xFF800000> : vector<2x8xf32>
    %36 = vector.multi_reduction <maximumf>, %35, %cst_23 [2] : vector<2x8x8xf32> to vector<2x8xf32>
    %37 = vector.shape_cast %36 : vector<2x8xf32> to vector<2x8x1xf32>
    %38 = vector.broadcast %37 : vector<2x8x1xf32> to vector<2x8x8xf32>
    %39 = arith.subf %35, %38 : vector<2x8x8xf32>
    %40 = math.exp %39 : vector<2x8x8xf32>
    %cst_24 = arith.constant dense<0.000000e+00> : vector<2x8xf32>
    %41 = vector.multi_reduction <add>, %40, %cst_24 [2] : vector<2x8x8xf32> to vector<2x8xf32>
    %42 = vector.shape_cast %41 : vector<2x8xf32> to vector<2x8x1xf32>
    %43 = tpu.reciprocal %42 {approx = true} : vector<2x8x1xf32> -> vector<2x8x1xf32>
    %44 = vector.broadcast %43 : vector<2x8x1xf32> to vector<2x8x8xf32>
    %45 = arith.mulf %40, %44 : vector<2x8x8xf32>
    %46 = arith.truncf %45 : vector<2x8x8xf32> to vector<2x8x8xbf16>
    "tpu.trace_start"() <{level = 10 : i32, message = "bqk,bkd->bqd"}> : () -> ()
    %cst_25 = arith.constant dense<0.000000e+00> : vector<2x8x16xf32>
    %47 = tpu.matmul %46, %34, %cst_25 {dimension_numbers = #tpu.dot_dimension_numbers<[2], [1], [1], [2], [0, 0, 0, 1, 1, 2], [0], [0]>} : vector<2x8x8xbf16>, vector<2x8x16xbf16>, vector<2x8x16xf32> -> vector<2x8x16xf32>
    "tpu.trace_stop"() : () -> ()
    %48 = vector.shape_cast %47 : vector<2x8x16xf32> to vector<16x16xf32>
    %49 = vector.extract_strided_slice %11 {offsets = [0, 16], sizes = [16, 16], strides = [1, 1]} : vector<16x128xf32> to vector<16x16xf32>
    %50 = vector.shape_cast %49 : vector<16x16xf32> to vector<2x8x16xf32>
    %51 = arith.truncf %50 : vector<2x8x16xf32> to vector<2x8x16xbf16>
    %52 = vector.extract_strided_slice %18 {offsets = [0, 16], sizes = [16, 16], strides = [1, 1]} : vector<16x128xf32> to vector<16x16xf32>
    %53 = vector.shape_cast %52 : vector<16x16xf32> to vector<2x8x16xf32>
    %54 = arith.truncf %53 : vector<2x8x16xf32> to vector<2x8x16xbf16>
    %55 = vector.extract_strided_slice %25 {offsets = [0, 16], sizes = [16, 16], strides = [1, 1]} : vector<16x128xf32> to vector<16x16xf32>
    %56 = vector.shape_cast %55 : vector<16x16xf32> to vector<2x8x16xf32>
    %57 = arith.truncf %56 : vector<2x8x16xf32> to vector<2x8x16xbf16>
    "tpu.trace_start"() <{level = 10 : i32, message = "bqd,bkd->bqk"}> : () -> ()
    %cst_26 = arith.constant dense<0.000000e+00> : vector<2x8x8xf32>
    %58 = tpu.matmul %51, %54, %cst_26 {dimension_numbers = #tpu.dot_dimension_numbers<[2], [2], [1], [1], [0, 0, 0, 1, 1, 1], [0], [0]>} : vector<2x8x16xbf16>, vector<2x8x16xbf16>, vector<2x8x8xf32> -> vector<2x8x8xf32>
    "tpu.trace_stop"() : () -> ()
    %cst_27 = arith.constant dense<0xFF800000> : vector<2x8xf32>
    %59 = vector.multi_reduction <maximumf>, %58, %cst_27 [2] : vector<2x8x8xf32> to vector<2x8xf32>
    %60 = vector.shape_cast %59 : vector<2x8xf32> to vector<2x8x1xf32>
    %61 = vector.broadcast %60 : vector<2x8x1xf32> to vector<2x8x8xf32>
    %62 = arith.subf %58, %61 : vector<2x8x8xf32>
    %63 = math.exp %62 : vector<2x8x8xf32>
    %cst_28 = arith.constant dense<0.000000e+00> : vector<2x8xf32>
    %64 = vector.multi_reduction <add>, %63, %cst_28 [2] : vector<2x8x8xf32> to vector<2x8xf32>
    %65 = vector.shape_cast %64 : vector<2x8xf32> to vector<2x8x1xf32>
    %66 = tpu.reciprocal %65 {approx = true} : vector<2x8x1xf32> -> vector<2x8x1xf32>
    %67 = vector.broadcast %66 : vector<2x8x1xf32> to vector<2x8x8xf32>
    %68 = arith.mulf %63, %67 : vector<2x8x8xf32>
    %69 = arith.truncf %68 : vector<2x8x8xf32> to vector<2x8x8xbf16>
    "tpu.trace_start"() <{level = 10 : i32, message = "bqk,bkd->bqd"}> : () -> ()
    %cst_29 = arith.constant dense<0.000000e+00> : vector<2x8x16xf32>
    %70 = tpu.matmul %69, %57, %cst_29 {dimension_numbers = #tpu.dot_dimension_numbers<[2], [1], [1], [2], [0, 0, 0, 1, 1, 2], [0], [0]>} : vector<2x8x8xbf16>, vector<2x8x16xbf16>, vector<2x8x16xf32> -> vector<2x8x16xf32>
    "tpu.trace_stop"() : () -> ()
    %71 = vector.shape_cast %70 : vector<2x8x16xf32> to vector<16x16xf32>
    %72 = vector.extract_strided_slice %11 {offsets = [0, 32], sizes = [16, 16], strides = [1, 1]} : vector<16x128xf32> to vector<16x16xf32>
    %73 = vector.shape_cast %72 : vector<16x16xf32> to vector<2x8x16xf32>
    %74 = arith.truncf %73 : vector<2x8x16xf32> to vector<2x8x16xbf16>
    %75 = vector.extract_strided_slice %18 {offsets = [0, 32], sizes = [16, 16], strides = [1, 1]} : vector<16x128xf32> to vector<16x16xf32>
    %76 = vector.shape_cast %75 : vector<16x16xf32> to vector<2x8x16xf32>
    %77 = arith.truncf %76 : vector<2x8x16xf32> to vector<2x8x16xbf16>
    %78 = vector.extract_strided_slice %25 {offsets = [0, 32], sizes = [16, 16], strides = [1, 1]} : vector<16x128xf32> to vector<16x16xf32>
    %79 = vector.shape_cast %78 : vector<16x16xf32> to vector<2x8x16xf32>
    %80 = arith.truncf %79 : vector<2x8x16xf32> to vector<2x8x16xbf16>
    "tpu.trace_start"() <{level = 10 : i32, message = "bqd,bkd->bqk"}> : () -> ()
    %cst_30 = arith.constant dense<0.000000e+00> : vector<2x8x8xf32>
    %81 = tpu.matmul %74, %77, %cst_30 {dimension_numbers = #tpu.dot_dimension_numbers<[2], [2], [1], [1], [0, 0, 0, 1, 1, 1], [0], [0]>} : vector<2x8x16xbf16>, vector<2x8x16xbf16>, vector<2x8x8xf32> -> vector<2x8x8xf32>
    "tpu.trace_stop"() : () -> ()
    %cst_31 = arith.constant dense<0xFF800000> : vector<2x8xf32>
    %82 = vector.multi_reduction <maximumf>, %81, %cst_31 [2] : vector<2x8x8xf32> to vector<2x8xf32>
    %83 = vector.shape_cast %82 : vector<2x8xf32> to vector<2x8x1xf32>
    %84 = vector.broadcast %83 : vector<2x8x1xf32> to vector<2x8x8xf32>
    %85 = arith.subf %81, %84 : vector<2x8x8xf32>
    %86 = math.exp %85 : vector<2x8x8xf32>
    %cst_32 = arith.constant dense<0.000000e+00> : vector<2x8xf32>
    %87 = vector.multi_reduction <add>, %86, %cst_32 [2] : vector<2x8x8xf32> to vector<2x8xf32>
    %88 = vector.shape_cast %87 : vector<2x8xf32> to vector<2x8x1xf32>
    %89 = tpu.reciprocal %88 {approx = true} : vector<2x8x1xf32> -> vector<2x8x1xf32>
    %90 = vector.broadcast %89 : vector<2x8x1xf32> to vector<2x8x8xf32>
    %91 = arith.mulf %86, %90 : vector<2x8x8xf32>
    %92 = arith.truncf %91 : vector<2x8x8xf32> to vector<2x8x8xbf16>
    "tpu.trace_start"() <{level = 10 : i32, message = "bqk,bkd->bqd"}> : () -> ()
    %cst_33 = arith.constant dense<0.000000e+00> : vector<2x8x16xf32>
    %93 = tpu.matmul %92, %80, %cst_33 {dimension_numbers = #tpu.dot_dimension_numbers<[2], [1], [1], [2], [0, 0, 0, 1, 1, 2], [0], [0]>} : vector<2x8x8xbf16>, vector<2x8x16xbf16>, vector<2x8x16xf32> -> vector<2x8x16xf32>
    "tpu.trace_stop"() : () -> ()
    %94 = vector.shape_cast %93 : vector<2x8x16xf32> to vector<16x16xf32>
    %95 = vector.extract_strided_slice %11 {offsets = [0, 48], sizes = [16, 16], strides = [1, 1]} : vector<16x128xf32> to vector<16x16xf32>
    %96 = vector.shape_cast %95 : vector<16x16xf32> to vector<2x8x16xf32>
    %97 = arith.truncf %96 : vector<2x8x16xf32> to vector<2x8x16xbf16>
    %98 = vector.extract_strided_slice %18 {offsets = [0, 48], sizes = [16, 16], strides = [1, 1]} : vector<16x128xf32> to vector<16x16xf32>
    %99 = vector.shape_cast %98 : vector<16x16xf32> to vector<2x8x16xf32>
    %100 = arith.truncf %99 : vector<2x8x16xf32> to vector<2x8x16xbf16>
    %101 = vector.extract_strided_slice %25 {offsets = [0, 48], sizes = [16, 16], strides = [1, 1]} : vector<16x128xf32> to vector<16x16xf32>
    %102 = vector.shape_cast %101 : vector<16x16xf32> to vector<2x8x16xf32>
    %103 = arith.truncf %102 : vector<2x8x16xf32> to vector<2x8x16xbf16>
    "tpu.trace_start"() <{level = 10 : i32, message = "bqd,bkd->bqk"}> : () -> ()
    %cst_34 = arith.constant dense<0.000000e+00> : vector<2x8x8xf32>
    %104 = tpu.matmul %97, %100, %cst_34 {dimension_numbers = #tpu.dot_dimension_numbers<[2], [2], [1], [1], [0, 0, 0, 1, 1, 1], [0], [0]>} : vector<2x8x16xbf16>, vector<2x8x16xbf16>, vector<2x8x8xf32> -> vector<2x8x8xf32>
    "tpu.trace_stop"() : () -> ()
    %cst_35 = arith.constant dense<0xFF800000> : vector<2x8xf32>
    %105 = vector.multi_reduction <maximumf>, %104, %cst_35 [2] : vector<2x8x8xf32> to vector<2x8xf32>
    %106 = vector.shape_cast %105 : vector<2x8xf32> to vector<2x8x1xf32>
    %107 = vector.broadcast %106 : vector<2x8x1xf32> to vector<2x8x8xf32>
    %108 = arith.subf %104, %107 : vector<2x8x8xf32>
    %109 = math.exp %108 : vector<2x8x8xf32>
    %cst_36 = arith.constant dense<0.000000e+00> : vector<2x8xf32>
    %110 = vector.multi_reduction <add>, %109, %cst_36 [2] : vector<2x8x8xf32> to vector<2x8xf32>
    %111 = vector.shape_cast %110 : vector<2x8xf32> to vector<2x8x1xf32>
    %112 = tpu.reciprocal %111 {approx = true} : vector<2x8x1xf32> -> vector<2x8x1xf32>
    %113 = vector.broadcast %112 : vector<2x8x1xf32> to vector<2x8x8xf32>
    %114 = arith.mulf %109, %113 : vector<2x8x8xf32>
    %115 = arith.truncf %114 : vector<2x8x8xf32> to vector<2x8x8xbf16>
    "tpu.trace_start"() <{level = 10 : i32, message = "bqk,bkd->bqd"}> : () -> ()
    %cst_37 = arith.constant dense<0.000000e+00> : vector<2x8x16xf32>
    %116 = tpu.matmul %115, %103, %cst_37 {dimension_numbers = #tpu.dot_dimension_numbers<[2], [1], [1], [2], [0, 0, 0, 1, 1, 2], [0], [0]>} : vector<2x8x8xbf16>, vector<2x8x16xbf16>, vector<2x8x16xf32> -> vector<2x8x16xf32>
    "tpu.trace_stop"() : () -> ()
    %117 = vector.shape_cast %116 : vector<2x8x16xf32> to vector<16x16xf32>
    %118 = vector.extract_strided_slice %11 {offsets = [0, 64], sizes = [16, 16], strides = [1, 1]} : vector<16x128xf32> to vector<16x16xf32>
    %119 = vector.shape_cast %118 : vector<16x16xf32> to vector<2x8x16xf32>
    %120 = arith.truncf %119 : vector<2x8x16xf32> to vector<2x8x16xbf16>
    %121 = vector.extract_strided_slice %18 {offsets = [0, 64], sizes = [16, 16], strides = [1, 1]} : vector<16x128xf32> to vector<16x16xf32>
    %122 = vector.shape_cast %121 : vector<16x16xf32> to vector<2x8x16xf32>
    %123 = arith.truncf %122 : vector<2x8x16xf32> to vector<2x8x16xbf16>
    %124 = vector.extract_strided_slice %25 {offsets = [0, 64], sizes = [16, 16], strides = [1, 1]} : vector<16x128xf32> to vector<16x16xf32>
    %125 = vector.shape_cast %124 : vector<16x16xf32> to vector<2x8x16xf32>
    %126 = arith.truncf %125 : vector<2x8x16xf32> to vector<2x8x16xbf16>
    "tpu.trace_start"() <{level = 10 : i32, message = "bqd,bkd->bqk"}> : () -> ()
    %cst_38 = arith.constant dense<0.000000e+00> : vector<2x8x8xf32>
    %127 = tpu.matmul %120, %123, %cst_38 {dimension_numbers = #tpu.dot_dimension_numbers<[2], [2], [1], [1], [0, 0, 0, 1, 1, 1], [0], [0]>} : vector<2x8x16xbf16>, vector<2x8x16xbf16>, vector<2x8x8xf32> -> vector<2x8x8xf32>
    "tpu.trace_stop"() : () -> ()
    %cst_39 = arith.constant dense<0xFF800000> : vector<2x8xf32>
    %128 = vector.multi_reduction <maximumf>, %127, %cst_39 [2] : vector<2x8x8xf32> to vector<2x8xf32>
    %129 = vector.shape_cast %128 : vector<2x8xf32> to vector<2x8x1xf32>
    %130 = vector.broadcast %129 : vector<2x8x1xf32> to vector<2x8x8xf32>
    %131 = arith.subf %127, %130 : vector<2x8x8xf32>
    %132 = math.exp %131 : vector<2x8x8xf32>
    %cst_40 = arith.constant dense<0.000000e+00> : vector<2x8xf32>
    %133 = vector.multi_reduction <add>, %132, %cst_40 [2] : vector<2x8x8xf32> to vector<2x8xf32>
    %134 = vector.shape_cast %133 : vector<2x8xf32> to vector<2x8x1xf32>
    %135 = tpu.reciprocal %134 {approx = true} : vector<2x8x1xf32> -> vector<2x8x1xf32>
    %136 = vector.broadcast %135 : vector<2x8x1xf32> to vector<2x8x8xf32>
    %137 = arith.mulf %132, %136 : vector<2x8x8xf32>
    %138 = arith.truncf %137 : vector<2x8x8xf32> to vector<2x8x8xbf16>
    "tpu.trace_start"() <{level = 10 : i32, message = "bqk,bkd->bqd"}> : () -> ()
    %cst_41 = arith.constant dense<0.000000e+00> : vector<2x8x16xf32>
    %139 = tpu.matmul %138, %126, %cst_41 {dimension_numbers = #tpu.dot_dimension_numbers<[2], [1], [1], [2], [0, 0, 0, 1, 1, 2], [0], [0]>} : vector<2x8x8xbf16>, vector<2x8x16xbf16>, vector<2x8x16xf32> -> vector<2x8x16xf32>
    "tpu.trace_stop"() : () -> ()
    %140 = vector.shape_cast %139 : vector<2x8x16xf32> to vector<16x16xf32>
    %141 = vector.extract_strided_slice %11 {offsets = [0, 80], sizes = [16, 16], strides = [1, 1]} : vector<16x128xf32> to vector<16x16xf32>
    %142 = vector.shape_cast %141 : vector<16x16xf32> to vector<2x8x16xf32>
    %143 = arith.truncf %142 : vector<2x8x16xf32> to vector<2x8x16xbf16>
    %144 = vector.extract_strided_slice %18 {offsets = [0, 80], sizes = [16, 16], strides = [1, 1]} : vector<16x128xf32> to vector<16x16xf32>
    %145 = vector.shape_cast %144 : vector<16x16xf32> to vector<2x8x16xf32>
    %146 = arith.truncf %145 : vector<2x8x16xf32> to vector<2x8x16xbf16>
    %147 = vector.extract_strided_slice %25 {offsets = [0, 80], sizes = [16, 16], strides = [1, 1]} : vector<16x128xf32> to vector<16x16xf32>
    %148 = vector.shape_cast %147 : vector<16x16xf32> to vector<2x8x16xf32>
    %149 = arith.truncf %148 : vector<2x8x16xf32> to vector<2x8x16xbf16>
    "tpu.trace_start"() <{level = 10 : i32, message = "bqd,bkd->bqk"}> : () -> ()
    %cst_42 = arith.constant dense<0.000000e+00> : vector<2x8x8xf32>
    %150 = tpu.matmul %143, %146, %cst_42 {dimension_numbers = #tpu.dot_dimension_numbers<[2], [2], [1], [1], [0, 0, 0, 1, 1, 1], [0], [0]>} : vector<2x8x16xbf16>, vector<2x8x16xbf16>, vector<2x8x8xf32> -> vector<2x8x8xf32>
    "tpu.trace_stop"() : () -> ()
    %cst_43 = arith.constant dense<0xFF800000> : vector<2x8xf32>
    %151 = vector.multi_reduction <maximumf>, %150, %cst_43 [2] : vector<2x8x8xf32> to vector<2x8xf32>
    %152 = vector.shape_cast %151 : vector<2x8xf32> to vector<2x8x1xf32>
    %153 = vector.broadcast %152 : vector<2x8x1xf32> to vector<2x8x8xf32>
    %154 = arith.subf %150, %153 : vector<2x8x8xf32>
    %155 = math.exp %154 : vector<2x8x8xf32>
    %cst_44 = arith.constant dense<0.000000e+00> : vector<2x8xf32>
    %156 = vector.multi_reduction <add>, %155, %cst_44 [2] : vector<2x8x8xf32> to vector<2x8xf32>
    %157 = vector.shape_cast %156 : vector<2x8xf32> to vector<2x8x1xf32>
    %158 = tpu.reciprocal %157 {approx = true} : vector<2x8x1xf32> -> vector<2x8x1xf32>
    %159 = vector.broadcast %158 : vector<2x8x1xf32> to vector<2x8x8xf32>
    %160 = arith.mulf %155, %159 : vector<2x8x8xf32>
    %161 = arith.truncf %160 : vector<2x8x8xf32> to vector<2x8x8xbf16>
    "tpu.trace_start"() <{level = 10 : i32, message = "bqk,bkd->bqd"}> : () -> ()
    %cst_45 = arith.constant dense<0.000000e+00> : vector<2x8x16xf32>
    %162 = tpu.matmul %161, %149, %cst_45 {dimension_numbers = #tpu.dot_dimension_numbers<[2], [1], [1], [2], [0, 0, 0, 1, 1, 2], [0], [0]>} : vector<2x8x8xbf16>, vector<2x8x16xbf16>, vector<2x8x16xf32> -> vector<2x8x16xf32>
    "tpu.trace_stop"() : () -> ()
    %163 = vector.shape_cast %162 : vector<2x8x16xf32> to vector<16x16xf32>
    %164 = vector.extract_strided_slice %11 {offsets = [0, 96], sizes = [16, 16], strides = [1, 1]} : vector<16x128xf32> to vector<16x16xf32>
    %165 = vector.shape_cast %164 : vector<16x16xf32> to vector<2x8x16xf32>
    %166 = arith.truncf %165 : vector<2x8x16xf32> to vector<2x8x16xbf16>
    %167 = vector.extract_strided_slice %18 {offsets = [0, 96], sizes = [16, 16], strides = [1, 1]} : vector<16x128xf32> to vector<16x16xf32>
    %168 = vector.shape_cast %167 : vector<16x16xf32> to vector<2x8x16xf32>
    %169 = arith.truncf %168 : vector<2x8x16xf32> to vector<2x8x16xbf16>
    %170 = vector.extract_strided_slice %25 {offsets = [0, 96], sizes = [16, 16], strides = [1, 1]} : vector<16x128xf32> to vector<16x16xf32>
    %171 = vector.shape_cast %170 : vector<16x16xf32> to vector<2x8x16xf32>
    %172 = arith.truncf %171 : vector<2x8x16xf32> to vector<2x8x16xbf16>
    "tpu.trace_start"() <{level = 10 : i32, message = "bqd,bkd->bqk"}> : () -> ()
    %cst_46 = arith.constant dense<0.000000e+00> : vector<2x8x8xf32>
    %173 = tpu.matmul %166, %169, %cst_46 {dimension_numbers = #tpu.dot_dimension_numbers<[2], [2], [1], [1], [0, 0, 0, 1, 1, 1], [0], [0]>} : vector<2x8x16xbf16>, vector<2x8x16xbf16>, vector<2x8x8xf32> -> vector<2x8x8xf32>
    "tpu.trace_stop"() : () -> ()
    %cst_47 = arith.constant dense<0xFF800000> : vector<2x8xf32>
    %174 = vector.multi_reduction <maximumf>, %173, %cst_47 [2] : vector<2x8x8xf32> to vector<2x8xf32>
    %175 = vector.shape_cast %174 : vector<2x8xf32> to vector<2x8x1xf32>
    %176 = vector.broadcast %175 : vector<2x8x1xf32> to vector<2x8x8xf32>
    %177 = arith.subf %173, %176 : vector<2x8x8xf32>
    %178 = math.exp %177 : vector<2x8x8xf32>
    %cst_48 = arith.constant dense<0.000000e+00> : vector<2x8xf32>
    %179 = vector.multi_reduction <add>, %178, %cst_48 [2] : vector<2x8x8xf32> to vector<2x8xf32>
    %180 = vector.shape_cast %179 : vector<2x8xf32> to vector<2x8x1xf32>
    %181 = tpu.reciprocal %180 {approx = true} : vector<2x8x1xf32> -> vector<2x8x1xf32>
    %182 = vector.broadcast %181 : vector<2x8x1xf32> to vector<2x8x8xf32>
    %183 = arith.mulf %178, %182 : vector<2x8x8xf32>
    %184 = arith.truncf %183 : vector<2x8x8xf32> to vector<2x8x8xbf16>
    "tpu.trace_start"() <{level = 10 : i32, message = "bqk,bkd->bqd"}> : () -> ()
    %cst_49 = arith.constant dense<0.000000e+00> : vector<2x8x16xf32>
    %185 = tpu.matmul %184, %172, %cst_49 {dimension_numbers = #tpu.dot_dimension_numbers<[2], [1], [1], [2], [0, 0, 0, 1, 1, 2], [0], [0]>} : vector<2x8x8xbf16>, vector<2x8x16xbf16>, vector<2x8x16xf32> -> vector<2x8x16xf32>
    "tpu.trace_stop"() : () -> ()
    %186 = vector.shape_cast %185 : vector<2x8x16xf32> to vector<16x16xf32>
    %187 = vector.extract_strided_slice %11 {offsets = [0, 112], sizes = [16, 16], strides = [1, 1]} : vector<16x128xf32> to vector<16x16xf32>
    %188 = vector.shape_cast %187 : vector<16x16xf32> to vector<2x8x16xf32>
    %189 = arith.truncf %188 : vector<2x8x16xf32> to vector<2x8x16xbf16>
    %190 = vector.extract_strided_slice %18 {offsets = [0, 112], sizes = [16, 16], strides = [1, 1]} : vector<16x128xf32> to vector<16x16xf32>
    %191 = vector.shape_cast %190 : vector<16x16xf32> to vector<2x8x16xf32>
    %192 = arith.truncf %191 : vector<2x8x16xf32> to vector<2x8x16xbf16>
    %193 = vector.extract_strided_slice %25 {offsets = [0, 112], sizes = [16, 16], strides = [1, 1]} : vector<16x128xf32> to vector<16x16xf32>
    %194 = vector.shape_cast %193 : vector<16x16xf32> to vector<2x8x16xf32>
    %195 = arith.truncf %194 : vector<2x8x16xf32> to vector<2x8x16xbf16>
    "tpu.trace_start"() <{level = 10 : i32, message = "bqd,bkd->bqk"}> : () -> ()
    %cst_50 = arith.constant dense<0.000000e+00> : vector<2x8x8xf32>
    %196 = tpu.matmul %189, %192, %cst_50 {dimension_numbers = #tpu.dot_dimension_numbers<[2], [2], [1], [1], [0, 0, 0, 1, 1, 1], [0], [0]>} : vector<2x8x16xbf16>, vector<2x8x16xbf16>, vector<2x8x8xf32> -> vector<2x8x8xf32>
    "tpu.trace_stop"() : () -> ()
    %cst_51 = arith.constant dense<0xFF800000> : vector<2x8xf32>
    %197 = vector.multi_reduction <maximumf>, %196, %cst_51 [2] : vector<2x8x8xf32> to vector<2x8xf32>
    %198 = vector.shape_cast %197 : vector<2x8xf32> to vector<2x8x1xf32>
    %199 = vector.broadcast %198 : vector<2x8x1xf32> to vector<2x8x8xf32>
    %200 = arith.subf %196, %199 : vector<2x8x8xf32>
    %201 = math.exp %200 : vector<2x8x8xf32>
    %cst_52 = arith.constant dense<0.000000e+00> : vector<2x8xf32>
    %202 = vector.multi_reduction <add>, %201, %cst_52 [2] : vector<2x8x8xf32> to vector<2x8xf32>
    %203 = vector.shape_cast %202 : vector<2x8xf32> to vector<2x8x1xf32>
    %204 = tpu.reciprocal %203 {approx = true} : vector<2x8x1xf32> -> vector<2x8x1xf32>
    %205 = vector.broadcast %204 : vector<2x8x1xf32> to vector<2x8x8xf32>
    %206 = arith.mulf %201, %205 : vector<2x8x8xf32>
    %207 = arith.truncf %206 : vector<2x8x8xf32> to vector<2x8x8xbf16>
    "tpu.trace_start"() <{level = 10 : i32, message = "bqk,bkd->bqd"}> : () -> ()
    %cst_53 = arith.constant dense<0.000000e+00> : vector<2x8x16xf32>
    %208 = tpu.matmul %207, %195, %cst_53 {dimension_numbers = #tpu.dot_dimension_numbers<[2], [1], [1], [2], [0, 0, 0, 1, 1, 2], [0], [0]>} : vector<2x8x8xbf16>, vector<2x8x16xbf16>, vector<2x8x16xf32> -> vector<2x8x16xf32>
    "tpu.trace_stop"() : () -> ()
    %209 = vector.shape_cast %208 : vector<2x8x16xf32> to vector<16x16xf32>
    %210 = tpu.concatenate %48, %71, %94, %117, %140, %163, %186, %209 in 1 : vector<16x16xf32>, vector<16x16xf32>, vector<16x16xf32>, vector<16x16xf32>, vector<16x16xf32>, vector<16x16xf32>, vector<16x16xf32>, vector<16x16xf32> -> vector<16x128xf32>
    %211 = arith.truncf %210 : vector<16x128xf32> to vector<16x128xbf16>
    %c0_54 = arith.constant 0 : index
    %c0_55 = arith.constant 0 : index
    %c0_56 = arith.constant 0 : index
    %212 = vector.load %arg9[%c0_54, %c0_55, %c0_56] : memref<1x128x128xbf16, #tpu.memory_space<vmem>>, vector<1x128x128xbf16>
    %213 = vector.shape_cast %212 : vector<1x128x128xbf16> to vector<128x128xbf16>
    %cst_57 = arith.constant dense<0.000000e+00> : vector<16x128xf32>
    %214 = tpu.matmul %211, %213, %cst_57 {dimension_numbers = #tpu.dot_dimension_numbers<[1], [0], [0], [1], [0, 0, 1, 1], [], []>} : vector<16x128xbf16>, vector<128x128xbf16>, vector<16x128xf32> -> vector<16x128xf32>
    %c0_58 = arith.constant 0 : index
    %c0_59 = arith.constant 0 : index
    %c0_60 = arith.constant 0 : index
    %215 = vector.load %arg10[%c0_58, %c0_59, %c0_60] : memref<1x1x128xf32, #tpu.memory_space<vmem>>, vector<1x1x128xf32>
    %216 = vector.shape_cast %215 : vector<1x1x128xf32> to vector<1x128xf32>
    %217 = vector.broadcast %216 : vector<1x128xf32> to vector<16x128xf32>
    %218 = arith.addf %214, %217 : vector<16x128xf32>
    %219 = arith.addf %3, %218 : vector<16x128xf32>
    %c0_61 = arith.constant 0 : index
    %c0_62 = arith.constant 0 : index
    %c0_63 = arith.constant 0 : index
    %220 = vector.load %arg11[%c0_61, %c0_62, %c0_63] : memref<1x1x128xf32, #tpu.memory_space<vmem>>, vector<1x1x128xf32>
    %221 = vector.shape_cast %220 : vector<1x1x128xf32> to vector<1x128xf32>
    %c0_64 = arith.constant 0 : index
    %c0_65 = arith.constant 0 : index
    %c0_66 = arith.constant 0 : index
    %222 = vector.load %arg12[%c0_64, %c0_65, %c0_66] : memref<1x1x128xf32, #tpu.memory_space<vmem>>, vector<1x1x128xf32>
    %223 = vector.shape_cast %222 : vector<1x1x128xf32> to vector<1x128xf32>
    %cst_67 = arith.constant dense<0.000000e+00> : vector<16xf32>
    %224 = vector.multi_reduction <add>, %219, %cst_67 [1] : vector<16x128xf32> to vector<16xf32>
    %225 = vector.shape_cast %224 : vector<16xf32> to vector<16x1xf32>
    %cst_68 = arith.constant 1.280000e+02 : f32
    %226 = vector.broadcast %cst_68 : f32 to vector<16x1xf32>
    %227 = arith.divf %225, %226 : vector<16x1xf32>
    %228 = vector.broadcast %227 : vector<16x1xf32> to vector<16x128xf32>
    %229 = arith.subf %219, %228 : vector<16x128xf32>
    %230 = arith.mulf %229, %229 : vector<16x128xf32>
    %cst_69 = arith.constant dense<0.000000e+00> : vector<16xf32>
    %231 = vector.multi_reduction <add>, %230, %cst_69 [1] : vector<16x128xf32> to vector<16xf32>
    %232 = vector.shape_cast %231 : vector<16xf32> to vector<16x1xf32>
    %cst_70 = arith.constant 1.280000e+02 : f32
    %233 = vector.broadcast %cst_70 : f32 to vector<16x1xf32>
    %234 = arith.divf %232, %233 : vector<16x1xf32>
    %cst_71 = arith.constant 9.99999974E-6 : f32
    %235 = vector.broadcast %cst_71 : f32 to vector<16x1xf32>
    %236 = arith.addf %234, %235 : vector<16x1xf32>
    %237 = math.rsqrt %236 : vector<16x1xf32>
    %238 = vector.broadcast %237 : vector<16x1xf32> to vector<16x128xf32>
    %239 = arith.mulf %229, %238 : vector<16x128xf32>
    %240 = vector.broadcast %221 : vector<1x128xf32> to vector<16x128xf32>
    %241 = arith.mulf %239, %240 : vector<16x128xf32>
    %242 = vector.broadcast %223 : vector<1x128xf32> to vector<16x128xf32>
    %243 = arith.addf %241, %242 : vector<16x128xf32>
    %244 = arith.truncf %243 : vector<16x128xf32> to vector<16x128xbf16>
    %c0_72 = arith.constant 0 : index
    %c0_73 = arith.constant 0 : index
    %c0_74 = arith.constant 0 : index
    %245 = vector.load %arg13[%c0_72, %c0_73, %c0_74] : memref<1x128x2048xbf16, #tpu.memory_space<vmem>>, vector<1x128x2048xbf16>
    %246 = vector.shape_cast %245 : vector<1x128x2048xbf16> to vector<128x2048xbf16>
    %cst_75 = arith.constant dense<0.000000e+00> : vector<16x2048xf32>
    %247 = tpu.matmul %244, %246, %cst_75 {dimension_numbers = #tpu.dot_dimension_numbers<[1], [0], [0], [1], [0, 0, 1, 1], [], []>} : vector<16x128xbf16>, vector<128x2048xbf16>, vector<16x2048xf32> -> vector<16x2048xf32>
    %c0_76 = arith.constant 0 : index
    %c0_77 = arith.constant 0 : index
    %c0_78 = arith.constant 0 : index
    %248 = vector.load %arg14[%c0_76, %c0_77, %c0_78] : memref<1x1x2048xf32, #tpu.memory_space<vmem>>, vector<1x1x2048xf32>
    %249 = vector.shape_cast %248 : vector<1x1x2048xf32> to vector<1x2048xf32>
    %250 = vector.broadcast %249 : vector<1x2048xf32> to vector<16x2048xf32>
    %251 = arith.addf %247, %250 : vector<16x2048xf32>
    %cst_79 = arith.constant 0.000000e+00 : f32
    %252 = vector.broadcast %cst_79 : f32 to vector<16x2048xf32>
    %253 = arith.maximumf %251, %252 : vector<16x2048xf32>
    %254 = arith.truncf %253 : vector<16x2048xf32> to vector<16x2048xbf16>
    %c0_80 = arith.constant 0 : index
    %c0_81 = arith.constant 0 : index
    %c0_82 = arith.constant 0 : index
    %255 = vector.load %arg15[%c0_80, %c0_81, %c0_82] : memref<1x2048x128xbf16, #tpu.memory_space<vmem>>, vector<1x2048x128xbf16>
    %256 = vector.shape_cast %255 : vector<1x2048x128xbf16> to vector<2048x128xbf16>
    %cst_83 = arith.constant dense<0.000000e+00> : vector<16x128xf32>
    %257 = tpu.matmul %254, %256, %cst_83 {dimension_numbers = #tpu.dot_dimension_numbers<[1], [0], [0], [1], [0, 0, 1, 1], [], []>} : vector<16x2048xbf16>, vector<2048x128xbf16>, vector<16x128xf32> -> vector<16x128xf32>
    %c0_84 = arith.constant 0 : index
    %c0_85 = arith.constant 0 : index
    %c0_86 = arith.constant 0 : index
    %258 = vector.load %arg16[%c0_84, %c0_85, %c0_86] : memref<1x1x128xf32, #tpu.memory_space<vmem>>, vector<1x1x128xf32>
    %259 = vector.shape_cast %258 : vector<1x1x128xf32> to vector<1x128xf32>
    %260 = vector.broadcast %259 : vector<1x128xf32> to vector<16x128xf32>
    %261 = arith.addf %257, %260 : vector<16x128xf32>
    %262 = arith.addf %243, %261 : vector<16x128xf32>
    %c0_87 = arith.constant 0 : index
    %c0_88 = arith.constant 0 : index
    %c0_89 = arith.constant 0 : index
    %263 = vector.load %arg17[%c0_87, %c0_88, %c0_89] : memref<1x1x128xf32, #tpu.memory_space<vmem>>, vector<1x1x128xf32>
    %264 = vector.shape_cast %263 : vector<1x1x128xf32> to vector<1x128xf32>
    %c0_90 = arith.constant 0 : index
    %c0_91 = arith.constant 0 : index
    %c0_92 = arith.constant 0 : index
    %265 = vector.load %arg18[%c0_90, %c0_91, %c0_92] : memref<1x1x128xf32, #tpu.memory_space<vmem>>, vector<1x1x128xf32>
    %266 = vector.shape_cast %265 : vector<1x1x128xf32> to vector<1x128xf32>
    %cst_93 = arith.constant dense<0.000000e+00> : vector<16xf32>
    %267 = vector.multi_reduction <add>, %262, %cst_93 [1] : vector<16x128xf32> to vector<16xf32>
    %268 = vector.shape_cast %267 : vector<16xf32> to vector<16x1xf32>
    %cst_94 = arith.constant 1.280000e+02 : f32
    %269 = vector.broadcast %cst_94 : f32 to vector<16x1xf32>
    %270 = arith.divf %268, %269 : vector<16x1xf32>
    %271 = vector.broadcast %270 : vector<16x1xf32> to vector<16x128xf32>
    %272 = arith.subf %262, %271 : vector<16x128xf32>
    %273 = arith.mulf %272, %272 : vector<16x128xf32>
    %cst_95 = arith.constant dense<0.000000e+00> : vector<16xf32>
    %274 = vector.multi_reduction <add>, %273, %cst_95 [1] : vector<16x128xf32> to vector<16xf32>
    %275 = vector.shape_cast %274 : vector<16xf32> to vector<16x1xf32>
    %cst_96 = arith.constant 1.280000e+02 : f32
    %276 = vector.broadcast %cst_96 : f32 to vector<16x1xf32>
    %277 = arith.divf %275, %276 : vector<16x1xf32>
    %cst_97 = arith.constant 9.99999974E-6 : f32
    %278 = vector.broadcast %cst_97 : f32 to vector<16x1xf32>
    %279 = arith.addf %277, %278 : vector<16x1xf32>
    %280 = math.rsqrt %279 : vector<16x1xf32>
    %281 = vector.broadcast %280 : vector<16x1xf32> to vector<16x128xf32>
    %282 = arith.mulf %272, %281 : vector<16x128xf32>
    %283 = vector.broadcast %264 : vector<1x128xf32> to vector<16x128xf32>
    %284 = arith.mulf %282, %283 : vector<16x128xf32>
    %285 = vector.broadcast %266 : vector<1x128xf32> to vector<16x128xf32>
    %286 = arith.addf %284, %285 : vector<16x128xf32>
    %c0_98 = arith.constant 0 : index
    %c0_99 = arith.constant 0 : index
    %287 = vector.load %arg22[%c0_98, %c0_99] : memref<16x128xf32, #tpu.memory_space<vmem>>, vector<16x128xf32>
    tpu.vector_store %arg22[%c0_98, %c0_99], %286 {strides = array<i32>} : memref<16x128xf32, #tpu.memory_space<vmem>>, vector<16x128xf32>,
    %c1_i32 = arith.constant 1 : i32
    %288 = arith.cmpi eq, %arg0, %c1_i32 : i32
    %289 = arith.extui %288 : i1 to i32
    %c0_i32_100 = arith.constant 0 : i32
    %290 = arith.cmpi ne, %289, %c0_i32_100 : i32
    scf.if %290 {
      %291 = vector.shape_cast %286 : vector<16x128xf32> to vector<2x8x128xf32>
      %cst_101 = arith.constant dense<0.000000e+00> : vector<2x128xf32>
      %292 = vector.multi_reduction <add>, %291, %cst_101 [1] : vector<2x8x128xf32> to vector<2x128xf32>
      %cst_102 = arith.constant 1.250000e-01 : f32
      %293 = vector.broadcast %cst_102 : f32 to vector<2x128xf32>
      %294 = arith.mulf %292, %293 : vector<2x128xf32>
      %295 = arith.truncf %294 : vector<2x128xf32> to vector<2x128xbf16>
      %c0_103 = arith.constant 0 : index
      %c0_104 = arith.constant 0 : index
      %296 = vector.load %arg19[%c0_103, %c0_104] : memref<128x2048xbf16, #tpu.memory_space<vmem>>, vector<128x2048xbf16>
      %cst_105 = arith.constant dense<0.000000e+00> : vector<2x2048xf32>
      %297 = tpu.matmul %295, %296, %cst_105 {dimension_numbers = #tpu.dot_dimension_numbers<[1], [0], [0], [1], [0, 0, 1, 1], [], []>} : vector<2x128xbf16>, vector<128x2048xbf16>, vector<2x2048xf32> -> vector<2x2048xf32>
      %c0_106 = arith.constant 0 : index
      %c0_107 = arith.constant 0 : index
      %298 = vector.load %arg20[%c0_106, %c0_107] : memref<1x2048xf32, #tpu.memory_space<vmem>>, vector<1x2048xf32>
      %299 = vector.broadcast %298 : vector<1x2048xf32> to vector<2x2048xf32>
      %300 = arith.addf %297, %299 : vector<2x2048xf32>
      %c0_108 = arith.constant 0 : index
      %c0_109 = arith.constant 0 : index
      %301 = vector.load %arg21[%c0_108, %c0_109] : memref<2x2048xf32, #tpu.memory_space<vmem>>, vector<2x2048xf32>
      tpu.vector_store %arg21[%c0_108, %c0_109], %300 {strides = array<i32>} : memref<2x2048xf32, #tpu.memory_space<vmem>>, vector<2x2048xf32>,
    } else {
    }
    return
  }
  func.func @transform_0(%arg0: i32, %arg1: memref<16xi32, #tpu.memory_space<smem>>) -> (i32, i32) {
    %c0_i32 = arith.constant 0 : i32
    %c0_i32_0 = arith.constant 0 : i32
    %c0_i32_1 = arith.constant 0 : i32
    return %c0_i32, %c0_i32_0 : i32, i32
  }
  func.func @transform_1(%arg0: i32, %arg1: memref<16xi32, #tpu.memory_space<smem>>) -> (i32, i32, i32) {
    %c0_i32 = arith.constant 0 : i32
    %c0_i32_0 = arith.constant 0 : i32
    %c0_i32_1 = arith.constant 0 : i32
    return %arg0, %c0_i32, %c0_i32_0 : i32, i32, i32
  }
  func.func @transform_2(%arg0: i32, %arg1: memref<16xi32, #tpu.memory_space<smem>>) -> (i32, i32, i32) {
    %c0_i32 = arith.constant 0 : i32
    %c0_i32_0 = arith.constant 0 : i32
    %c0_i32_1 = arith.constant 0 : i32
    return %arg0, %c0_i32, %c0_i32_0 : i32, i32, i32
  }
  func.func @transform_3(%arg0: i32, %arg1: memref<16xi32, #tpu.memory_space<smem>>) -> (i32, i32, i32) {
    %c0_i32 = arith.constant 0 : i32
    %c0_i32_0 = arith.constant 0 : i32
    %c0_i32_1 = arith.constant 0 : i32
    return %arg0, %c0_i32, %c0_i32_0 : i32, i32, i32
  }
  func.func @transform_4(%arg0: i32, %arg1: memref<16xi32, #tpu.memory_space<smem>>) -> (i32, i32, i32) {
    %c0_i32 = arith.constant 0 : i32
    %c0_i32_0 = arith.constant 0 : i32
    %c0_i32_1 = arith.constant 0 : i32
    return %arg0, %c0_i32, %c0_i32_0 : i32, i32, i32
  }
  func.func @transform_5(%arg0: i32, %arg1: memref<16xi32, #tpu.memory_space<smem>>) -> (i32, i32, i32) {
    %c0_i32 = arith.constant 0 : i32
    %c0_i32_0 = arith.constant 0 : i32
    %c0_i32_1 = arith.constant 0 : i32
    return %arg0, %c0_i32, %c0_i32_0 : i32, i32, i32
  }
  func.func @transform_6(%arg0: i32, %arg1: memref<16xi32, #tpu.memory_space<smem>>) -> (i32, i32, i32) {
    %c0_i32 = arith.constant 0 : i32
    %c0_i32_0 = arith.constant 0 : i32
    %c0_i32_1 = arith.constant 0 : i32
    return %arg0, %c0_i32, %c0_i32_0 : i32, i32, i32
  }
  func.func @transform_7(%arg0: i32, %arg1: memref<16xi32, #tpu.memory_space<smem>>) -> (i32, i32, i32) {
    %c0_i32 = arith.constant 0 : i32
    %c0_i32_0 = arith.constant 0 : i32
    %c0_i32_1 = arith.constant 0 : i32
    return %arg0, %c0_i32, %c0_i32_0 : i32, i32, i32
  }
  func.func @transform_8(%arg0: i32, %arg1: memref<16xi32, #tpu.memory_space<smem>>) -> (i32, i32, i32) {
    %c0_i32 = arith.constant 0 : i32
    %c0_i32_0 = arith.constant 0 : i32
    %c0_i32_1 = arith.constant 0 : i32
    return %arg0, %c0_i32, %c0_i32_0 : i32, i32, i32
  }
  func.func @transform_9(%arg0: i32, %arg1: memref<16xi32, #tpu.memory_space<smem>>) -> (i32, i32, i32) {
    %c0_i32 = arith.constant 0 : i32
    %c0_i32_0 = arith.constant 0 : i32
    %c0_i32_1 = arith.constant 0 : i32
    return %arg0, %c0_i32, %c0_i32_0 : i32, i32, i32
  }
  func.func @transform_10(%arg0: i32, %arg1: memref<16xi32, #tpu.memory_space<smem>>) -> (i32, i32, i32) {
    %c0_i32 = arith.constant 0 : i32
    %c0_i32_0 = arith.constant 0 : i32
    %c0_i32_1 = arith.constant 0 : i32
    return %arg0, %c0_i32, %c0_i32_0 : i32, i32, i32
  }
  func.func @transform_11(%arg0: i32, %arg1: memref<16xi32, #tpu.memory_space<smem>>) -> (i32, i32, i32) {
    %c0_i32 = arith.constant 0 : i32
    %c0_i32_0 = arith.constant 0 : i32
    %c0_i32_1 = arith.constant 0 : i32
    return %arg0, %c0_i32, %c0_i32_0 : i32, i32, i32
  }
  func.func @transform_12(%arg0: i32, %arg1: memref<16xi32, #tpu.memory_space<smem>>) -> (i32, i32, i32) {
    %c0_i32 = arith.constant 0 : i32
    %c0_i32_0 = arith.constant 0 : i32
    %c0_i32_1 = arith.constant 0 : i32
    return %arg0, %c0_i32, %c0_i32_0 : i32, i32, i32
  }
  func.func @transform_13(%arg0: i32, %arg1: memref<16xi32, #tpu.memory_space<smem>>) -> (i32, i32, i32) {
    %c0_i32 = arith.constant 0 : i32
    %c0_i32_0 = arith.constant 0 : i32
    %c0_i32_1 = arith.constant 0 : i32
    return %arg0, %c0_i32, %c0_i32_0 : i32, i32, i32
  }
  func.func @transform_14(%arg0: i32, %arg1: memref<16xi32, #tpu.memory_space<smem>>) -> (i32, i32, i32) {
    %c0_i32 = arith.constant 0 : i32
    %c0_i32_0 = arith.constant 0 : i32
    %c0_i32_1 = arith.constant 0 : i32
    return %arg0, %c0_i32, %c0_i32_0 : i32, i32, i32
  }
  func.func @transform_15(%arg0: i32, %arg1: memref<16xi32, #tpu.memory_space<smem>>) -> (i32, i32, i32) {
    %c0_i32 = arith.constant 0 : i32
    %c0_i32_0 = arith.constant 0 : i32
    %c0_i32_1 = arith.constant 0 : i32
    return %arg0, %c0_i32, %c0_i32_0 : i32, i32, i32
  }
  func.func @transform_16(%arg0: i32, %arg1: memref<16xi32, #tpu.memory_space<smem>>) -> (i32, i32, i32) {
    %c0_i32 = arith.constant 0 : i32
    %c0_i32_0 = arith.constant 0 : i32
    %c0_i32_1 = arith.constant 0 : i32
    return %arg0, %c0_i32, %c0_i32_0 : i32, i32, i32
  }
  func.func @transform_17(%arg0: i32, %arg1: memref<16xi32, #tpu.memory_space<smem>>) -> (i32, i32) {
    %c0_i32 = arith.constant 0 : i32
    %c0_i32_0 = arith.constant 0 : i32
    %c0_i32_1 = arith.constant 0 : i32
    return %c0_i32, %c0_i32_0 : i32, i32
  }
  func.func @transform_18(%arg0: i32, %arg1: memref<16xi32, #tpu.memory_space<smem>>) -> (i32, i32) {
    %c0_i32 = arith.constant 0 : i32
    %c0_i32_0 = arith.constant 0 : i32
    %c0_i32_1 = arith.constant 0 : i32
    return %c0_i32, %c0_i32_0 : i32, i32
  }
  func.func @transform_19(%arg0: i32, %arg1: memref<16xi32, #tpu.memory_space<smem>>) -> (i32, i32) {
    %c0_i32 = arith.constant 0 : i32
    %c0_i32_0 = arith.constant 0 : i32
    %c0_i32_1 = arith.constant 0 : i32
    return %c0_i32, %c0_i32_0 : i32, i32
  }
}

</mosaic_0001>

<llo_original>
// kernel: encoder_forward.1
$region0: #{encoder_forward.1}
  #allocation0 [shape = 'u32[]', space=smem, size = 0x4, offset = 0x4, fixed_abs, tag = 'smem constant byte address 0x4 - core index']
  #allocation1 [shape = 'u32[144,128]{1,0:T(1,128)}', space=vmem, size = 0x12000, scoped, tag = 'internal scratch']
  #allocation2 [shape = 'f32[16,128]{1,0:T(8,128)}', space=vmem, size = 0x2000, scoped, tag = 'scratch operand']
  #allocation3 [shape = 's32[1]{0}', space=sflag, size = 0x4, scoped, tag = 'scoped memory for encoder_forward.1']
  #allocation4 [shape = 'u8[512]{0}', space=smem, size = 0x200, scoped, tag = 'prefetched SMEM operand 0']
  %s0 = inlined_call_operand.vmem [shape: s32[16], index: 0, kind: input, shape index: {}]
  %s1 = inlined_call_operand.hbm [shape: f32[64,128], index: 1, kind: input, shape index: {}]
  %s2 = inlined_call_operand.hbm [shape: bf16[2,128,128], index: 2, kind: input, shape index: {}]
  %s3 = inlined_call_operand.vmem [shape: f32[2,1,128], index: 3, kind: input, shape index: {}]
  %s4 = inlined_call_operand.hbm [shape: bf16[2,128,128], index: 4, kind: input, shape index: {}]
  %s5 = inlined_call_operand.vmem [shape: f32[2,1,128], index: 5, kind: input, shape index: {}]
  %s6 = inlined_call_operand.hbm [shape: bf16[2,128,128], index: 6, kind: input, shape index: {}]
  %s7 = inlined_call_operand.vmem [shape: f32[2,1,128], index: 7, kind: input, shape index: {}]
  %s8 = inlined_call_operand.hbm [shape: bf16[2,128,128], index: 8, kind: input, shape index: {}]
  %s9 = inlined_call_operand.hbm [shape: f32[2,1,128], index: 9, kind: input, shape index: {}]
  %s10 = inlined_call_operand.hbm [shape: f32[2,1,128], index: 10, kind: input, shape index: {}]
  %s11 = inlined_call_operand.hbm [shape: f32[2,1,128], index: 11, kind: input, shape index: {}]
  %s12 = inlined_call_operand.hbm [shape: bf16[2,128,2048], index: 12, kind: input, shape index: {}]
  %s13 = inlined_call_operand.hbm [shape: f32[2,1,2048], index: 13, kind: input, shape index: {}]
  %s14 = inlined_call_operand.hbm [shape: bf16[2,2048,128], index: 14, kind: input, shape index: {}]
  %s15 = inlined_call_operand.hbm [shape: f32[2,1,128], index: 15, kind: input, shape index: {}]
  %s16 = inlined_call_operand.hbm [shape: f32[2,1,128], index: 16, kind: input, shape index: {}]
  %s17 = inlined_call_operand.hbm [shape: f32[2,1,128], index: 17, kind: input, shape index: {}]
  %s18 = inlined_call_operand.hbm [shape: bf16[128,2048], index: 18, kind: input, shape index: {}]
  %s19 = inlined_call_operand.vmem [shape: f32[1,2048], index: 19, kind: input, shape index: {}]
  %s20 = inlined_call_operand.hbm [shape: f32[2,2048], index: 20, kind: output, shape index: {}]
  %s21 = sld [smem:[#allocation0]]
  $region177: #{encoder_forward.1} parent=0
    _
  %s23 = ssub.s32 1, %s21
  %s24 = scalar_select 0, %s23, %s21
  %s25 = sshll.u32 %s0, 4
  %s26 = int_to_ptr.vmem [resolvable:$true] %s25
  %28 = dma.vmem_to_smem %s26, 16, [#allocation4], [#allocation3]
  %29 = dma.done [#allocation3], 16
  %30 = sfence
  $region1: #{encoder_forward.1} parent=0
    #allocation5 [shape = 'u8[32768]{0}', space=vmem, size = 0x8000, scoped, tag = 'input window, operand 1, single buffered']
    #allocation6 [shape = 's32[2]{0}', space=sflag, size = 0x8, scoped, tag = 'scoped memory for encoder_forward.1']
    #allocation7 [shape = 's32[2]{0}', space=sflag, size = 0x8, scoped, tag = 'scoped memory for encoder_forward.1']
    #allocation8 [shape = 'u8[65536]{0}', space=vmem, size = 0x10000, scoped, tag = 'input window, operand 2']
    #allocation9 [shape = 's32[2]{0}', space=sflag, size = 0x8, scoped, tag = 'scoped memory for encoder_forward.1']
    #allocation10 [shape = 'u8[65536]{0}', space=vmem, size = 0x10000, scoped, tag = 'input window, operand 4']
    #allocation11 [shape = 'u8[65536]{0}', space=vmem, size = 0x10000, scoped, tag = 'input window, operand 6']
    #allocation12 [shape = 's32[2]{0}', space=sflag, size = 0x8, scoped, tag = 'scoped memory for encoder_forward.1']
    #allocation13 [shape = 'u8[65536]{0}', space=vmem, size = 0x10000, scoped, tag = 'input window, operand 8']
    #allocation14 [shape = 'u8[1024]{0}', space=vmem, size = 0x400, scoped, tag = 'input window, operand 9']
    #allocation15 [shape = 's32[2]{0}', space=sflag, size = 0x8, scoped, tag = 'scoped memory for encoder_forward.1']
    #allocation16 [shape = 'u8[1024]{0}', space=vmem, size = 0x400, scoped, tag = 'input window, operand 10']
    #allocation17 [shape = 'u8[1024]{0}', space=vmem, size = 0x400, scoped, tag = 'input window, operand 11']
    #allocation18 [shape = 's32[2]{0}', space=sflag, size = 0x8, scoped, tag = 'scoped memory for encoder_forward.1']
    #allocation19 [shape = 'u8[1048576]{0}', space=vmem, size = 0x100000, scoped, tag = 'input window, operand 12']
    #allocation20 [shape = 'u8[16384]{0}', space=vmem, size = 0x4000, scoped, tag = 'input window, operand 13']
    #allocation21 [shape = 's32[2]{0}', space=sflag, size = 0x8, scoped, tag = 'scoped memory for encoder_forward.1']
    #allocation22 [shape = 'u8[1048576]{0}', space=vmem, size = 0x100000, scoped, tag = 'input window, operand 14']
    #allocation23 [shape = 'u8[1024]{0}', space=vmem, size = 0x400, scoped, tag = 'input window, operand 15']
    #allocation24 [shape = 's32[2]{0}', space=sflag, size = 0x8, scoped, tag = 'scoped memory for encoder_forward.1']
    #allocation25 [shape = 'u8[1024]{0}', space=vmem, size = 0x400, scoped, tag = 'input window, operand 16']
    #allocation26 [shape = 'u8[1024]{0}', space=vmem, size = 0x400, scoped, tag = 'input window, operand 17']
    #allocation27 [shape = 's32[2]{0}', space=sflag, size = 0x8, scoped, tag = 'scoped memory for encoder_forward.1']
    #allocation28 [shape = 'u8[524288]{0}', space=vmem, size = 0x80000, scoped, tag = 'input window, operand 18, single buffered']
    #allocation29 [shape = 'u8[16384]{0}', space=vmem, size = 0x4000, scoped, tag = 'output window, operand 0, single buffered']
    %31 = vsyncpa [#allocation6], 0
    %32 = vsyncpa [#allocation9], 0
    %s33 = scalar_lea.sflag [#allocation9], 1
    %34 = vsyncpa %s33, 0
    %35 = vsyncpa [#allocation12], 0
    %s36 = scalar_lea.sflag [#allocation12], 1
    %37 = vsyncpa %s36, 0
    %38 = vsyncpa [#allocation15], 0
    %s39 = scalar_lea.sflag [#allocation15], 1
    %40 = vsyncpa %s39, 0
    %41 = vsyncpa [#allocation18], 0
    %s42 = scalar_lea.sflag [#allocation18], 1
    %43 = vsyncpa %s42, 0
    %44 = vsyncpa [#allocation21], 0
    %s45 = scalar_lea.sflag [#allocation21], 1
    %46 = vsyncpa %s45, 0
    %47 = vsyncpa [#allocation24], 0
    %s48 = scalar_lea.sflag [#allocation24], 1
    %49 = vsyncpa %s48, 0
    %50 = vsyncpa [#allocation27], 0
    %s51 = scalar_lea.sflag [#allocation27], 1
    %52 = vsyncpa %s51, 0
    %53 = vsyncpa [#allocation7], 0
    loop: start=0, step=1, limit=4
    $region2: #{encoder_forward.1} parent=1 // loop_pre_header
      _
    $region3: #{encoder_forward.1} parent=1 // loop_header
      %s55 = sphi 0, %s59
      %p56 = scmp.ge.s32.totalorder %s55, 4
      %s63 = sphi 0, %s63
      %s65 = sphi 0, %s63
      %s66 = sphi 0, %s65
      %s80 = sphi 0, %s66
      %s86 = sphi 0, %s88
      %s89 = sphi 0, %s86
      %s90 = sphi 0, %s89
      %s106 = sphi 0, %s90
      %s112 = sphi 0, %s114
      %s115 = sphi 0, %s112
      %s116 = sphi 0, %s115
      %s132 = sphi 0, %s116
      %s138 = sphi 0, %s140
      %s141 = sphi 0, %s138
      %s142 = sphi 0, %s141
      %s158 = sphi 0, %s142
      %s164 = sphi 0, %s166
      %s167 = sphi 0, %s164
      %s168 = sphi 0, %s167
      %s184 = sphi 0, %s168
      %s190 = sphi 0, %s192
      %s193 = sphi 0, %s190
      %s194 = sphi 0, %s193
      %s210 = sphi 0, %s194
      %s216 = sphi 0, %s218
      %s219 = sphi 0, %s216
      %s220 = sphi 0, %s219
      %s236 = sphi 0, %s220
      %s242 = sphi 0, %s244
      %s245 = sphi 0, %s242
      %s246 = sphi 0, %s245
      %s262 = sphi 0, %s246
      %s268 = sphi 0, %s270
      %s271 = sphi 0, %s268
      %s272 = sphi 0, %s271
      %s288 = sphi 0, %s272
      %s294 = sphi 0, %s296
      %s297 = sphi 0, %s294
      %s298 = sphi 0, %s297
      %s314 = sphi 0, %s298
      %s320 = sphi 0, %s322
      %s323 = sphi 0, %s320
      %s324 = sphi 0, %s323
      %s340 = sphi 0, %s324
      %s346 = sphi 0, %s348
      %s349 = sphi 0, %s346
      %s350 = sphi 0, %s349
      %s366 = sphi 0, %s350
      %s372 = sphi 0, %s374
      %s375 = sphi 0, %s372
      %s376 = sphi 0, %s375
      %s392 = sphi 0, %s376
      %s398 = sphi 0, %s400
      %s401 = sphi 0, %s398
      %s402 = sphi 0, %s401
      %s418 = sphi 0, %s402
      %s424 = sphi 0, %s426
      %s427 = sphi 0, %s424
      %s428 = sphi 0, %s427
      %s444 = sphi 0, %s428
      %s450 = sphi 0, %s452
      %s453 = sphi 0, %s450
      %s454 = sphi 0, %s453
      %s470 = sphi 0, %s454
      %s476 = sphi 0, %s478
      %s479 = sphi 0, %s476
      %s480 = sphi 0, %s479
      %s496 = sphi 0, %s480
      %s500 = sphi 0, %s500
      %s502 = sphi 0, %s500
      %s503 = sphi 0, %s502
      %s517 = sphi 0, %s503
      %s521 = sphi 0, %s521
      %s523 = sphi 0, %s521
      %s524 = sphi 0, %s523
      %s538 = sphi 0, %s524
      %s542 = sphi 0, %s542
      %s544 = sphi 0, %s542
      %s545 = sphi 0, %s544
      %s559 = sphi 0, %s545
    $region4: #{encoder_forward.1} parent=1 // loop_header_branch
      %58 = sbr.rel (%p56) target = $region8
    $region5: #{encoder_forward.1} parent=1 // loop_body
      %s60 = ssub.s32 %s55, 1
      %s61 = ssub.s32 %s55, 2
      %s62 = sadd.s32 %s55, 1
      %s64 = sadd.s32 %s63, 1
      %p67 = scmp.eq.s32.totalorder %s55, 1
      %p68 = scmp.ne.s32.totalorder %s63, %s65
      %p69 = scmp.eq.s32.totalorder %s55, 0
      %p70 = por %p68, %p69
      %p71 = scmp.ne.s32.totalorder %s63, %s65
      %p72 = scmp.eq.s32.totalorder %s60, 1
      %p73 = por %p71, %p72
      %p74 = scmp.ne.s32.totalorder %s65, %s66
      %p75 = scmp.eq.s32.totalorder %s60, 0
      %p76 = por %p74, %p75
      %p77 = scmp.ne.s32.totalorder %s65, %s66
      %p78 = scmp.eq.s32.totalorder %s61, 1
      %p79 = por %p77, %p78
      %p81 = scmp.ne.s32.totalorder %s66, %s80
      %p82 = scmp.eq.s32.totalorder %s61, 0
      %p83 = por %p81, %p82
      %s84 = ssub.s32 %s55, %s62
      %p85 = scmp.eq.s32.totalorder %s84, 0
      %s87 = sadd.s32 %s86, 1
      %s88 = scalar_select %p85, %s86, %s87
      %p91 = pneg %p85
      %p92 = scmp.eq.s32.totalorder %s55, 1
      %p93 = por %p91, %p92
      %p94 = scmp.ne.s32.totalorder %s86, %s89
      %p95 = scmp.eq.s32.totalorder %s55, 0
      %p96 = por %p94, %p95
      %p97 = scmp.ne.s32.totalorder %s86, %s89
      %p98 = scmp.eq.s32.totalorder %s60, 1
      %p99 = por %p97, %p98
      %p100 = scmp.ne.s32.totalorder %s89, %s90
      %p101 = scmp.eq.s32.totalorder %s60, 0
      %p102 = por %p100, %p101
      %p103 = scmp.ne.s32.totalorder %s89, %s90
      %p104 = scmp.eq.s32.totalorder %s61, 1
      %p105 = por %p103, %p104
      %p107 = scmp.ne.s32.totalorder %s90, %s106
      %p108 = scmp.eq.s32.totalorder %s61, 0
      %p109 = por %p107, %p108
      %s110 = ssub.s32 %s55, %s62
      %p111 = scmp.eq.s32.totalorder %s110, 0
      %s113 = sadd.s32 %s112, 1
      %s114 = scalar_select %p111, %s112, %s113
      %p117 = pneg %p111
      %p118 = scmp.eq.s32.totalorder %s55, 1
      %p119 = por %p117, %p118
      %p120 = scmp.ne.s32.totalorder %s112, %s115
      %p121 = scmp.eq.s32.totalorder %s55, 0
      %p122 = por %p120, %p121
      %p123 = scmp.ne.s32.totalorder %s112, %s115
      %p124 = scmp.eq.s32.totalorder %s60, 1
      %p125 = por %p123, %p124
      %p126 = scmp.ne.s32.totalorder %s115, %s116
      %p127 = scmp.eq.s32.totalorder %s60, 0
      %p128 = por %p126, %p127
      %p129 = scmp.ne.s32.totalorder %s115, %s116
      %p130 = scmp.eq.s32.totalorder %s61, 1
      %p131 = por %p129, %p130
      %p133 = scmp.ne.s32.totalorder %s116, %s132
      %p134 = scmp.eq.s32.totalorder %s61, 0
      %p135 = por %p133, %p134
      %s136 = ssub.s32 %s55, %s62
      %p137 = scmp.eq.s32.totalorder %s136, 0
      %s139 = sadd.s32 %s138, 1
      %s140 = scalar_select %p137, %s138, %s139
      %p143 = pneg %p137
      %p144 = scmp.eq.s32.totalorder %s55, 1
      %p145 = por %p143, %p144
      %p146 = scmp.ne.s32.totalorder %s138, %s141
      %p147 = scmp.eq.s32.totalorder %s55, 0
      %p148 = por %p146, %p147
      %p149 = scmp.ne.s32.totalorder %s138, %s141
      %p150 = scmp.eq.s32.totalorder %s60, 1
      %p151 = por %p149, %p150
      %p152 = scmp.ne.s32.totalorder %s141, %s142
      %p153 = scmp.eq.s32.totalorder %s60, 0
      %p154 = por %p152, %p153
      %p155 = scmp.ne.s32.totalorder %s141, %s142
      %p156 = scmp.eq.s32.totalorder %s61, 1
      %p157 = por %p155, %p156
      %p159 = scmp.ne.s32.totalorder %s142, %s158
      %p160 = scmp.eq.s32.totalorder %s61, 0
      %p161 = por %p159, %p160
      %s162 = ssub.s32 %s55, %s62
      %p163 = scmp.eq.s32.totalorder %s162, 0
      %s165 = sadd.s32 %s164, 1
      %s166 = scalar_select %p163, %s164, %s165
      %p169 = pneg %p163
      %p170 = scmp.eq.s32.totalorder %s55, 1
      %p171 = por %p169, %p170
      %p172 = scmp.ne.s32.totalorder %s164, %s167
      %p173 = scmp.eq.s32.totalorder %s55, 0
      %p174 = por %p172, %p173
      %p175 = scmp.ne.s32.totalorder %s164, %s167
      %p176 = scmp.eq.s32.totalorder %s60, 1
      %p177 = por %p175, %p176
      %p178 = scmp.ne.s32.totalorder %s167, %s168
      %p179 = scmp.eq.s32.totalorder %s60, 0
      %p180 = por %p178, %p179
      %p181 = scmp.ne.s32.totalorder %s167, %s168
      %p182 = scmp.eq.s32.totalorder %s61, 1
      %p183 = por %p181, %p182
      %p185 = scmp.ne.s32.totalorder %s168, %s184
      %p186 = scmp.eq.s32.totalorder %s61, 0
      %p187 = por %p185, %p186
      %s188 = ssub.s32 %s55, %s62
      %p189 = scmp.eq.s32.totalorder %s188, 0
      %s191 = sadd.s32 %s190, 1
      %s192 = scalar_select %p189, %s190, %s191
      %p195 = pneg %p189
      %p196 = scmp.eq.s32.totalorder %s55, 1
      %p197 = por %p195, %p196
      %p198 = scmp.ne.s32.totalorder %s190, %s193
      %p199 = scmp.eq.s32.totalorder %s55, 0
      %p200 = por %p198, %p199
      %p201 = scmp.ne.s32.totalorder %s190, %s193
      %p202 = scmp.eq.s32.totalorder %s60, 1
      %p203 = por %p201, %p202
      %p204 = scmp.ne.s32.totalorder %s193, %s194
      %p205 = scmp.eq.s32.totalorder %s60, 0
      %p206 = por %p204, %p205
      %p207 = scmp.ne.s32.totalorder %s193, %s194
      %p208 = scmp.eq.s32.totalorder %s61, 1
      %p209 = por %p207, %p208
      %p211 = scmp.ne.s32.totalorder %s194, %s210
      %p212 = scmp.eq.s32.totalorder %s61, 0
      %p213 = por %p211, %p212
      %s214 = ssub.s32 %s55, %s62
      %p215 = scmp.eq.s32.totalorder %s214, 0
      %s217 = sadd.s32 %s216, 1
      %s218 = scalar_select %p215, %s216, %s217
      %p221 = pneg %p215
      %p222 = scmp.eq.s32.totalorder %s55, 1
      %p223 = por %p221, %p222
      %p224 = scmp.ne.s32.totalorder %s216, %s219
      %p225 = scmp.eq.s32.totalorder %s55, 0
      %p226 = por %p224, %p225
      %p227 = scmp.ne.s32.totalorder %s216, %s219
      %p228 = scmp.eq.s32.totalorder %s60, 1
      %p229 = por %p227, %p228
      %p230 = scmp.ne.s32.totalorder %s219, %s220
      %p231 = scmp.eq.s32.totalorder %s60, 0
      %p232 = por %p230, %p231
      %p233 = scmp.ne.s32.totalorder %s219, %s220
      %p234 = scmp.eq.s32.totalorder %s61, 1
      %p235 = por %p233, %p234
      %p237 = scmp.ne.s32.totalorder %s220, %s236
      %p238 = scmp.eq.s32.totalorder %s61, 0
      %p239 = por %p237, %p238
      %s240 = ssub.s32 %s55, %s62
      %p241 = scmp.eq.s32.totalorder %s240, 0
      %s243 = sadd.s32 %s242, 1
      %s244 = scalar_select %p241, %s242, %s243
      %p247 = pneg %p241
      %p248 = scmp.eq.s32.totalorder %s55, 1
      %p249 = por %p247, %p248
      %p250 = scmp.ne.s32.totalorder %s242, %s245
      %p251 = scmp.eq.s32.totalorder %s55, 0
      %p252 = por %p250, %p251
      %p253 = scmp.ne.s32.totalorder %s242, %s245
      %p254 = scmp.eq.s32.totalorder %s60, 1
      %p255 = por %p253, %p254
      %p256 = scmp.ne.s32.totalorder %s245, %s246
      %p257 = scmp.eq.s32.totalorder %s60, 0
      %p258 = por %p256, %p257
      %p259 = scmp.ne.s32.totalorder %s245, %s246
      %p260 = scmp.eq.s32.totalorder %s61, 1
      %p261 = por %p259, %p260
      %p263 = scmp.ne.s32.totalorder %s246, %s262
      %p264 = scmp.eq.s32.totalorder %s61, 0
      %p265 = por %p263, %p264
      %s266 = ssub.s32 %s55, %s62
      %p267 = scmp.eq.s32.totalorder %s266, 0
      %s269 = sadd.s32 %s268, 1
      %s270 = scalar_select %p267, %s268, %s269
      %p273 = pneg %p267
      %p274 = scmp.eq.s32.totalorder %s55, 1
      %p275 = por %p273, %p274
      %p276 = scmp.ne.s32.totalorder %s268, %s271
      %p277 = scmp.eq.s32.totalorder %s55, 0
      %p278 = por %p276, %p277
      %p279 = scmp.ne.s32.totalorder %s268, %s271
      %p280 = scmp.eq.s32.totalorder %s60, 1
      %p281 = por %p279, %p280
      %p282 = scmp.ne.s32.totalorder %s271, %s272
      %p283 = scmp.eq.s32.totalorder %s60, 0
      %p284 = por %p282, %p283
      %p285 = scmp.ne.s32.totalorder %s271, %s272
      %p286 = scmp.eq.s32.totalorder %s61, 1
      %p287 = por %p285, %p286
      %p289 = scmp.ne.s32.totalorder %s272, %s288
      %p290 = scmp.eq.s32.totalorder %s61, 0
      %p291 = por %p289, %p290
      %s292 = ssub.s32 %s55, %s62
      %p293 = scmp.eq.s32.totalorder %s292, 0
      %s295 = sadd.s32 %s294, 1
      %s296 = scalar_select %p293, %s294, %s295
      %p299 = pneg %p293
      %p300 = scmp.eq.s32.totalorder %s55, 1
      %p301 = por %p299, %p300
      %p302 = scmp.ne.s32.totalorder %s294, %s297
      %p303 = scmp.eq.s32.totalorder %s55, 0
      %p304 = por %p302, %p303
      %p305 = scmp.ne.s32.totalorder %s294, %s297
      %p306 = scmp.eq.s32.totalorder %s60, 1
      %p307 = por %p305, %p306
      %p308 = scmp.ne.s32.totalorder %s297, %s298
      %p309 = scmp.eq.s32.totalorder %s60, 0
      %p310 = por %p308, %p309
      %p311 = scmp.ne.s32.totalorder %s297, %s298
      %p312 = scmp.eq.s32.totalorder %s61, 1
      %p313 = por %p311, %p312
      %p315 = scmp.ne.s32.totalorder %s298, %s314
      %p316 = scmp.eq.s32.totalorder %s61, 0
      %p317 = por %p315, %p316
      %s318 = ssub.s32 %s55, %s62
      %p319 = scmp.eq.s32.totalorder %s318, 0
      %s321 = sadd.s32 %s320, 1
      %s322 = scalar_select %p319, %s320, %s321
      %p325 = pneg %p319
      %p326 = scmp.eq.s32.totalorder %s55, 1
      %p327 = por %p325, %p326
      %p328 = scmp.ne.s32.totalorder %s320, %s323
      %p329 = scmp.eq.s32.totalorder %s55, 0
      %p330 = por %p328, %p329
      %p331 = scmp.ne.s32.totalorder %s320, %s323
      %p332 = scmp.eq.s32.totalorder %s60, 1
      %p333 = por %p331, %p332
      %p334 = scmp.ne.s32.totalorder %s323, %s324
      %p335 = scmp.eq.s32.totalorder %s60, 0
      %p336 = por %p334, %p335
      %p337 = scmp.ne.s32.totalorder %s323, %s324
      %p338 = scmp.eq.s32.totalorder %s61, 1
      %p339 = por %p337, %p338
      %p341 = scmp.ne.s32.totalorder %s324, %s340
      %p342 = scmp.eq.s32.totalorder %s61, 0
      %p343 = por %p341, %p342
      %s344 = ssub.s32 %s55, %s62
      %p345 = scmp.eq.s32.totalorder %s344, 0
      %s347 = sadd.s32 %s346, 1
      %s348 = scalar_select %p345, %s346, %s347
      %p351 = pneg %p345
      %p352 = scmp.eq.s32.totalorder %s55, 1
      %p353 = por %p351, %p352
      %p354 = scmp.ne.s32.totalorder %s346, %s349
      %p355 = scmp.eq.s32.totalorder %s55, 0
      %p356 = por %p354, %p355
      %p357 = scmp.ne.s32.totalorder %s346, %s349
      %p358 = scmp.eq.s32.totalorder %s60, 1
      %p359 = por %p357, %p358
      %p360 = scmp.ne.s32.totalorder %s349, %s350
      %p361 = scmp.eq.s32.totalorder %s60, 0
      %p362 = por %p360, %p361
      %p363 = scmp.ne.s32.totalorder %s349, %s350
      %p364 = scmp.eq.s32.totalorder %s61, 1
      %p365 = por %p363, %p364
      %p367 = scmp.ne.s32.totalorder %s350, %s366
      %p368 = scmp.eq.s32.totalorder %s61, 0
      %p369 = por %p367, %p368
      %s370 = ssub.s32 %s55, %s62
      %p371 = scmp.eq.s32.totalorder %s370, 0
      %s373 = sadd.s32 %s372, 1
      %s374 = scalar_select %p371, %s372, %s373
      %p377 = pneg %p371
      %p378 = scmp.eq.s32.totalorder %s55, 1
      %p379 = por %p377, %p378
      %p380 = scmp.ne.s32.totalorder %s372, %s375
      %p381 = scmp.eq.s32.totalorder %s55, 0
      %p382 = por %p380, %p381
      %p383 = scmp.ne.s32.totalorder %s372, %s375
      %p384 = scmp.eq.s32.totalorder %s60, 1
      %p385 = por %p383, %p384
      %p386 = scmp.ne.s32.totalorder %s375, %s376
      %p387 = scmp.eq.s32.totalorder %s60, 0
      %p388 = por %p386, %p387
      %p389 = scmp.ne.s32.totalorder %s375, %s376
      %p390 = scmp.eq.s32.totalorder %s61, 1
      %p391 = por %p389, %p390
      %p393 = scmp.ne.s32.totalorder %s376, %s392
      %p394 = scmp.eq.s32.totalorder %s61, 0
      %p395 = por %p393, %p394
      %s396 = ssub.s32 %s55, %s62
      %p397 = scmp.eq.s32.totalorder %s396, 0
      %s399 = sadd.s32 %s398, 1
      %s400 = scalar_select %p397, %s398, %s399
      %p403 = pneg %p397
      %p404 = scmp.eq.s32.totalorder %s55, 1
      %p405 = por %p403, %p404
      %p406 = scmp.ne.s32.totalorder %s398, %s401
      %p407 = scmp.eq.s32.totalorder %s55, 0
      %p408 = por %p406, %p407
      %p409 = scmp.ne.s32.totalorder %s398, %s401
      %p410 = scmp.eq.s32.totalorder %s60, 1
      %p411 = por %p409, %p410
      %p412 = scmp.ne.s32.totalorder %s401, %s402
      %p413 = scmp.eq.s32.totalorder %s60, 0
      %p414 = por %p412, %p413
      %p415 = scmp.ne.s32.totalorder %s401, %s402
      %p416 = scmp.eq.s32.totalorder %s61, 1
      %p417 = por %p415, %p416
      %p419 = scmp.ne.s32.totalorder %s402, %s418
      %p420 = scmp.eq.s32.totalorder %s61, 0
      %p421 = por %p419, %p420
      %s422 = ssub.s32 %s55, %s62
      %p423 = scmp.eq.s32.totalorder %s422, 0
      %s425 = sadd.s32 %s424, 1
      %s426 = scalar_select %p423, %s424, %s425
      %p429 = pneg %p423
      %p430 = scmp.eq.s32.totalorder %s55, 1
      %p431 = por %p429, %p430
      %p432 = scmp.ne.s32.totalorder %s424, %s427
      %p433 = scmp.eq.s32.totalorder %s55, 0
      %p434 = por %p432, %p433
      %p435 = scmp.ne.s32.totalorder %s424, %s427
      %p436 = scmp.eq.s32.totalorder %s60, 1
      %p437 = por %p435, %p436
      %p438 = scmp.ne.s32.totalorder %s427, %s428
      %p439 = scmp.eq.s32.totalorder %s60, 0
      %p440 = por %p438, %p439
      %p441 = scmp.ne.s32.totalorder %s427, %s428
      %p442 = scmp.eq.s32.totalorder %s61, 1
      %p443 = por %p441, %p442
      %p445 = scmp.ne.s32.totalorder %s428, %s444
      %p446 = scmp.eq.s32.totalorder %s61, 0
      %p447 = por %p445, %p446
      %s448 = ssub.s32 %s55, %s62
      %p449 = scmp.eq.s32.totalorder %s448, 0
      %s451 = sadd.s32 %s450, 1
      %s452 = scalar_select %p449, %s450, %s451
      %p455 = pneg %p449
      %p456 = scmp.eq.s32.totalorder %s55, 1
      %p457 = por %p455, %p456
      %p458 = scmp.ne.s32.totalorder %s450, %s453
      %p459 = scmp.eq.s32.totalorder %s55, 0
      %p460 = por %p458, %p459
      %p461 = scmp.ne.s32.totalorder %s450, %s453
      %p462 = scmp.eq.s32.totalorder %s60, 1
      %p463 = por %p461, %p462
      %p464 = scmp.ne.s32.totalorder %s453, %s454
      %p465 = scmp.eq.s32.totalorder %s60, 0
      %p466 = por %p464, %p465
      %p467 = scmp.ne.s32.totalorder %s453, %s454
      %p468 = scmp.eq.s32.totalorder %s61, 1
      %p469 = por %p467, %p468
      %p471 = scmp.ne.s32.totalorder %s454, %s470
      %p472 = scmp.eq.s32.totalorder %s61, 0
      %p473 = por %p471, %p472
      %s474 = ssub.s32 %s55, %s62
      %p475 = scmp.eq.s32.totalorder %s474, 0
      %s477 = sadd.s32 %s476, 1
      %s478 = scalar_select %p475, %s476, %s477
      %p481 = pneg %p475
      %p482 = scmp.eq.s32.totalorder %s55, 1
      %p483 = por %p481, %p482
      %p484 = scmp.ne.s32.totalorder %s476, %s479
      %p485 = scmp.eq.s32.totalorder %s55, 0
      %p486 = por %p484, %p485
      %p487 = scmp.ne.s32.totalorder %s476, %s479
      %p488 = scmp.eq.s32.totalorder %s60, 1
      %p489 = por %p487, %p488
      %p490 = scmp.ne.s32.totalorder %s479, %s480
      %p491 = scmp.eq.s32.totalorder %s60, 0
      %p492 = por %p490, %p491
      %p493 = scmp.ne.s32.totalorder %s479, %s480
      %p494 = scmp.eq.s32.totalorder %s61, 1
      %p495 = por %p493, %p494
      %p497 = scmp.ne.s32.totalorder %s480, %s496
      %p498 = scmp.eq.s32.totalorder %s61, 0
      %p499 = por %p497, %p498
      %s501 = sadd.s32 %s500, 1
      %p504 = scmp.eq.s32.totalorder %s55, 1
      %p505 = scmp.ne.s32.totalorder %s500, %s502
      %p506 = scmp.eq.s32.totalorder %s55, 0
      %p507 = por %p505, %p506
      %p508 = scmp.ne.s32.totalorder %s500, %s502
      %p509 = scmp.eq.s32.totalorder %s60, 1
      %p510 = por %p508, %p509
      %p511 = scmp.ne.s32.totalorder %s502, %s503
      %p512 = scmp.eq.s32.totalorder %s60, 0
      %p513 = por %p511, %p512
      %p514 = scmp.ne.s32.totalorder %s502, %s503
      %p515 = scmp.eq.s32.totalorder %s61, 1
      %p516 = por %p514, %p515
      %p518 = scmp.ne.s32.totalorder %s503, %s517
      %p519 = scmp.eq.s32.totalorder %s61, 0
      %p520 = por %p518, %p519
      %s522 = sadd.s32 %s521, 1
      %p525 = scmp.eq.s32.totalorder %s55, 1
      %p526 = scmp.ne.s32.totalorder %s521, %s523
      %p527 = scmp.eq.s32.totalorder %s55, 0
      %p528 = por %p526, %p527
      %p529 = scmp.ne.s32.totalorder %s521, %s523
      %p530 = scmp.eq.s32.totalorder %s60, 1
      %p531 = por %p529, %p530
      %p532 = scmp.ne.s32.totalorder %s523, %s524
      %p533 = scmp.eq.s32.totalorder %s60, 0
      %p534 = por %p532, %p533
      %p535 = scmp.ne.s32.totalorder %s523, %s524
      %p536 = scmp.eq.s32.totalorder %s61, 1
      %p537 = por %p535, %p536
      %p539 = scmp.ne.s32.totalorder %s524, %s538
      %p540 = scmp.eq.s32.totalorder %s61, 0
      %p541 = por %p539, %p540
      %s543 = sadd.s32 %s542, 1
      %p546 = scmp.eq.s32.totalorder %s55, 1
      %p547 = scmp.ne.s32.totalorder %s542, %s544
      %p548 = scmp.eq.s32.totalorder %s55, 0
      %p549 = por %p547, %p548
      %p550 = scmp.ne.s32.totalorder %s542, %s544
      %p551 = scmp.eq.s32.totalorder %s60, 1
      %p552 = por %p550, %p551
      %p553 = scmp.ne.s32.totalorder %s544, %s545
      %p554 = scmp.eq.s32.totalorder %s60, 0
      %p555 = por %p553, %p554
      %p556 = scmp.ne.s32.totalorder %s544, %s545
      %p557 = scmp.eq.s32.totalorder %s61, 1
      %p558 = por %p556, %p557
      %p560 = scmp.ne.s32.totalorder %s545, %s559
      %p561 = scmp.eq.s32.totalorder %s61, 0
      %p562 = por %p560, %p561
      %p563 = scmp.le.s32.totalorder 1, %s55
      %p564 = scmp.lt.s32.totalorder %s55, 3
      %p565 = pnand %p563, %p564
      %p566 = pneg %p565
      // Predicated region
      $region9: #{encoder_forward.1} parent=5 // pred_check
        _
      $region10: #{encoder_forward.1} parent=5 // pred_check_branch
        %568 = sbr.rel (%p565) target = $region12
      $region11: #{encoder_forward.1} parent=5 // pred_region
        %s569 = ssub.s32 %s55, 1
        // Predicated region
        $region13: #{encoder_forward.1} parent=11 // pred_check
          %p570 = pneg %p76
        $region14: #{encoder_forward.1} parent=11 // pred_check_branch
          %572 = sbr.rel (%p570) target = $region16
        $region15: #{encoder_forward.1} parent=11 // pred_region
          %s574 = ssub.s32 1024, 1024
          %575 = vsyncadd [#allocation6], %s574
          %s576 = sshll.u32 [#allocation5], 4
          %s577 = int_to_ptr.vmem [resolvable:$true] %s576
          %582 = dma.hbm_to_vmem [thread:$0]  %s1, 1024, %s577, [#allocation6], 128, 128, 8
        $region16: #{encoder_forward.1} parent=11 // pred_fallthru
          _
        // Predicated region
        $region17: #{encoder_forward.1} parent=11 // pred_check
          %p583 = pneg %p513
        $region18: #{encoder_forward.1} parent=11 // pred_check_branch
          %585 = sbr.rel (%p583) target = $region20
        $region19: #{encoder_forward.1} parent=11 // pred_region
          %s587 = ssub.s32 16384, 16384
          %588 = vsyncadd [#allocation27], %s587
          %s589 = sshll.u32 [#allocation28], 4
          %s590 = int_to_ptr.vmem [resolvable:$true] %s589
          %595 = dma.hbm_to_vmem [thread:$0]  %s18, 16384, %s590, [#allocation27], 1024, 1024, 64
        $region20: #{encoder_forward.1} parent=11 // pred_fallthru
          _
        // Predicated region
        $region21: #{encoder_forward.1} parent=11 // pred_check
          %p596 = pneg %p534
        $region22: #{encoder_forward.1} parent=11 // pred_check_branch
          %598 = sbr.rel (%p596) target = $region24
        $region23: #{encoder_forward.1} parent=11 // pred_region
          _
        $region24: #{encoder_forward.1} parent=11 // pred_fallthru
          _
      $region12: #{encoder_forward.1} parent=5 // pred_fallthru
        _
      %p599 = scmp.lt.s32.totalorder %s55, 2
      // Predicated region
      $region25: #{encoder_forward.1} parent=5 // pred_check
        %p600 = pneg %p599
      $region26: #{encoder_forward.1} parent=5 // pred_check_branch
        %602 = sbr.rel (%p600) target = $region28
      $region27: #{encoder_forward.1} parent=5 // pred_region
        // Predicated region
        $region29: #{encoder_forward.1} parent=27 // pred_check
          %p603 = pneg %p96
        $region30: #{encoder_forward.1} parent=27 // pred_check_branch
          %605 = sbr.rel (%p603) target = $region32
        $region31: #{encoder_forward.1} parent=27 // pred_region
          %s606 = sand.u32 %s55, 1
          %s607 = scalar_lea.sflag [#allocation9], %s606
          %s608 = sand.u32 %s86, 1
          %s609 = smul.addr %s608, 64
          %s610 = scalar_lea.vmem [#allocation8], %s609
          %s612 = ssub.s32 1024, 1024
          %613 = vsyncadd %s607, %s612
          %s614 = smul.addr %s55, 16
          %s615 = smul.addr %s614, 64
          %s616 = scalar_lea.hbm %s2, %s615
          %s617 = sshll.u32 %s610, 4
          %s618 = int_to_ptr.vmem [resolvable:$true] %s617
          %623 = dma.hbm_to_vmem [thread:$0]  %s616, 1024, %s618, %s607, 64, 64, 4
        $region32: #{encoder_forward.1} parent=27 // pred_fallthru
          _
        // Predicated region
        $region33: #{encoder_forward.1} parent=27 // pred_check
          %p624 = pneg %p122
        $region34: #{encoder_forward.1} parent=27 // pred_check_branch
          %626 = sbr.rel (%p624) target = $region36
        $region35: #{encoder_forward.1} parent=27 // pred_region
          %p627 = scmp.lt.s32.totalorder %s55, 1
          %s628 = scalar_select %p627, %s55, 1
          %s629 = scalar_lea.vmem %s3, %s628
        $region36: #{encoder_forward.1} parent=27 // pred_fallthru
          _
        // Predicated region
        $region37: #{encoder_forward.1} parent=27 // pred_check
          %p630 = pneg %p148
        $region38: #{encoder_forward.1} parent=27 // pred_check_branch
          %632 = sbr.rel (%p630) target = $region40
        $region39: #{encoder_forward.1} parent=27 // pred_region
          %s633 = sand.u32 %s55, 1
          %s634 = scalar_lea.sflag [#allocation9], %s633
          %s635 = sand.u32 %s138, 1
          %s636 = smul.addr %s635, 64
          %s637 = scalar_lea.vmem [#allocation10], %s636
          %s639 = ssub.s32 1024, 1024
          %640 = vsyncadd %s634, %s639
          %s641 = smul.addr %s55, 16
          %s642 = smul.addr %s641, 64
          %s643 = scalar_lea.hbm %s4, %s642
          %s644 = sshll.u32 %s637, 4
          %s645 = int_to_ptr.vmem [resolvable:$true] %s644
          %650 = dma.hbm_to_vmem [thread:$0]  %s643, 1024, %s645, %s634, 64, 64, 4
        $region40: #{encoder_forward.1} parent=27 // pred_fallthru
          _
        // Predicated region
        $region41: #{encoder_forward.1} parent=27 // pred_check
          %p651 = pneg %p174
        $region42: #{encoder_forward.1} parent=27 // pred_check_branch
          %653 = sbr.rel (%p651) target = $region44
        $region43: #{encoder_forward.1} parent=27 // pred_region
          %p654 = scmp.lt.s32.totalorder %s55, 1
          %s655 = scalar_select %p654, %s55, 1
          %s656 = scalar_lea.vmem %s5, %s655
        $region44: #{encoder_forward.1} parent=27 // pred_fallthru
          _
        // Predicated region
        $region45: #{encoder_forward.1} parent=27 // pred_check
          %p657 = pneg %p200
        $region46: #{encoder_forward.1} parent=27 // pred_check_branch
          %659 = sbr.rel (%p657) target = $region48
        $region47: #{encoder_forward.1} parent=27 // pred_region
          %s660 = sand.u32 %s55, 1
          %s661 = scalar_lea.sflag [#allocation12], %s660
          %s662 = sand.u32 %s190, 1
          %s663 = smul.addr %s662, 64
          %s664 = scalar_lea.vmem [#allocation11], %s663
          %s666 = ssub.s32 1024, 1024
          %667 = vsyncadd %s661, %s666
          %s668 = smul.addr %s55, 16
          %s669 = smul.addr %s668, 64
          %s670 = scalar_lea.hbm %s6, %s669
          %s671 = sshll.u32 %s664, 4
          %s672 = int_to_ptr.vmem [resolvable:$true] %s671
          %677 = dma.hbm_to_vmem [thread:$0]  %s670, 1024, %s672, %s661, 64, 64, 4
        $region48: #{encoder_forward.1} parent=27 // pred_fallthru
          _
        // Predicated region
        $region49: #{encoder_forward.1} parent=27 // pred_check
          %p678 = pneg %p226
        $region50: #{encoder_forward.1} parent=27 // pred_check_branch
          %680 = sbr.rel (%p678) target = $region52
        $region51: #{encoder_forward.1} parent=27 // pred_region
          %p681 = scmp.lt.s32.totalorder %s55, 1
          %s682 = scalar_select %p681, %s55, 1
          %s683 = scalar_lea.vmem %s7, %s682
        $region52: #{encoder_forward.1} parent=27 // pred_fallthru
          _
        // Predicated region
        $region53: #{encoder_forward.1} parent=27 // pred_check
          %p684 = pneg %p252
        $region54: #{encoder_forward.1} parent=27 // pred_check_branch
          %686 = sbr.rel (%p684) target = $region56
        $region55: #{encoder_forward.1} parent=27 // pred_region
          %s687 = sand.u32 %s55, 1
          %s688 = scalar_lea.sflag [#allocation12], %s687
          %s689 = sand.u32 %s242, 1
          %s690 = smul.addr %s689, 64
          %s691 = scalar_lea.vmem [#allocation13], %s690
          %s693 = ssub.s32 1024, 1024
          %694 = vsyncadd %s688, %s693
          %s695 = smul.addr %s55, 16
          %s696 = smul.addr %s695, 64
          %s697 = scalar_lea.hbm %s8, %s696
          %s698 = sshll.u32 %s691, 4
          %s699 = int_to_ptr.vmem [resolvable:$true] %s698
          %704 = dma.hbm_to_vmem [thread:$0]  %s697, 1024, %s699, %s688, 64, 64, 4
        $region56: #{encoder_forward.1} parent=27 // pred_fallthru
          _
        // Predicated region
        $region57: #{encoder_forward.1} parent=27 // pred_check
          %p705 = pneg %p278
        $region58: #{encoder_forward.1} parent=27 // pred_check_branch
          %707 = sbr.rel (%p705) target = $region60
        $region59: #{encoder_forward.1} parent=27 // pred_region
          %s708 = sand.u32 %s55, 1
          %s709 = scalar_lea.sflag [#allocation15], %s708
          %s710 = sand.u32 %s268, 1
          %s711 = scalar_lea.vmem [#allocation14], %s710
          %s713 = ssub.s32 16, 16
          %714 = vsyncadd %s709, %s713
          %s715 = smul.addr %s55, 16
          %s716 = scalar_lea.hbm %s9, %s715
          %s718 = sshll.u32 %s711, 4
          %s719 = int_to_ptr.vmem [resolvable:$true] %s718
          %721 = dma.hbm_to_vmem [thread:$0]  %s716, 16, %s719, %s709
        $region60: #{encoder_forward.1} parent=27 // pred_fallthru
          _
        // Predicated region
        $region61: #{encoder_forward.1} parent=27 // pred_check
          %p722 = pneg %p304
        $region62: #{encoder_forward.1} parent=27 // pred_check_branch
          %724 = sbr.rel (%p722) target = $region64
        $region63: #{encoder_forward.1} parent=27 // pred_region
          %s725 = sand.u32 %s55, 1
          %s726 = scalar_lea.sflag [#allocation15], %s725
          %s727 = sand.u32 %s294, 1
          %s728 = scalar_lea.vmem [#allocation16], %s727
          %s730 = ssub.s32 16, 16
          %731 = vsyncadd %s726, %s730
          %s732 = smul.addr %s55, 16
          %s733 = scalar_lea.hbm %s10, %s732
          %s735 = sshll.u32 %s728, 4
          %s736 = int_to_ptr.vmem [resolvable:$true] %s735
          %738 = dma.hbm_to_vmem [thread:$0]  %s733, 16, %s736, %s726
        $region64: #{encoder_forward.1} parent=27 // pred_fallthru
          _
        // Predicated region
        $region65: #{encoder_forward.1} parent=27 // pred_check
          %p739 = pneg %p330
        $region66: #{encoder_forward.1} parent=27 // pred_check_branch
          %741 = sbr.rel (%p739) target = $region68
        $region67: #{encoder_forward.1} parent=27 // pred_region
          %s742 = sand.u32 %s55, 1
          %s743 = scalar_lea.sflag [#allocation18], %s742
          %s744 = sand.u32 %s320, 1
          %s745 = scalar_lea.vmem [#allocation17], %s744
          %s747 = ssub.s32 16, 16
          %748 = vsyncadd %s743, %s747
          %s749 = smul.addr %s55, 16
          %s750 = scalar_lea.hbm %s11, %s749
          %s752 = sshll.u32 %s745, 4
          %s753 = int_to_ptr.vmem [resolvable:$true] %s752
          %755 = dma.hbm_to_vmem [thread:$0]  %s750, 16, %s753, %s743
        $region68: #{encoder_forward.1} parent=27 // pred_fallthru
          _
        // Predicated region
        $region69: #{encoder_forward.1} parent=27 // pred_check
          %p756 = pneg %p356
        $region70: #{encoder_forward.1} parent=27 // pred_check_branch
          %758 = sbr.rel (%p756) target = $region72
        $region71: #{encoder_forward.1} parent=27 // pred_region
          %s759 = sand.u32 %s55, 1
          %s760 = scalar_lea.sflag [#allocation18], %s759
          %s761 = sand.u32 %s346, 1
          %s762 = smul.addr %s761, 1024
          %s763 = scalar_lea.vmem [#allocation19], %s762
          %s765 = ssub.s32 16384, 16384
          %766 = vsyncadd %s760, %s765
          %s767 = smul.addr %s55, 256
          %s768 = smul.addr %s767, 64
          %s769 = scalar_lea.hbm %s12, %s768
          %s770 = sshll.u32 %s763, 4
          %s771 = int_to_ptr.vmem [resolvable:$true] %s770
          %776 = dma.hbm_to_vmem [thread:$0]  %s769, 16384, %s771, %s760, 1024, 1024, 64
        $region72: #{encoder_forward.1} parent=27 // pred_fallthru
          _
        // Predicated region
        $region73: #{encoder_forward.1} parent=27 // pred_check
          %p777 = pneg %p382
        $region74: #{encoder_forward.1} parent=27 // pred_check_branch
          %779 = sbr.rel (%p777) target = $region76
        $region75: #{encoder_forward.1} parent=27 // pred_region
          %s780 = sand.u32 %s55, 1
          %s781 = scalar_lea.sflag [#allocation21], %s780
          %s782 = sand.u32 %s372, 1
          %s783 = smul.addr %s782, 16
          %s784 = scalar_lea.vmem [#allocation20], %s783
          %s786 = ssub.s32 256, 256
          %787 = vsyncadd %s781, %s786
          %s788 = smul.addr %s55, 16
          %s789 = smul.addr %s788, 16
          %s790 = scalar_lea.hbm %s13, %s789
          %s792 = sshll.u32 %s784, 4
          %s793 = int_to_ptr.vmem [resolvable:$true] %s792
          %795 = dma.hbm_to_vmem [thread:$0]  %s790, 256, %s793, %s781
        $region76: #{encoder_forward.1} parent=27 // pred_fallthru
          _
        // Predicated region
        $region77: #{encoder_forward.1} parent=27 // pred_check
          %p796 = pneg %p408
        $region78: #{encoder_forward.1} parent=27 // pred_check_branch
          %798 = sbr.rel (%p796) target = $region80
        $region79: #{encoder_forward.1} parent=27 // pred_region
          %s799 = sand.u32 %s55, 1
          %s800 = scalar_lea.sflag [#allocation21], %s799
          %s801 = sand.u32 %s398, 1
          %s802 = smul.addr %s801, 1024
          %s803 = scalar_lea.vmem [#allocation22], %s802
          %s805 = ssub.s32 16384, 16384
          %806 = vsyncadd %s800, %s805
          %s807 = smul.addr %s55, 256
          %s808 = smul.addr %s807, 64
          %s809 = scalar_lea.hbm %s14, %s808
          %s810 = sshll.u32 %s803, 4
          %s811 = int_to_ptr.vmem [resolvable:$true] %s810
          %816 = dma.hbm_to_vmem [thread:$0]  %s809, 16384, %s811, %s800, 64, 64, 4
        $region80: #{encoder_forward.1} parent=27 // pred_fallthru
          _
        // Predicated region
        $region81: #{encoder_forward.1} parent=27 // pred_check
          %p817 = pneg %p434
        $region82: #{encoder_forward.1} parent=27 // pred_check_branch
          %819 = sbr.rel (%p817) target = $region84
        $region83: #{encoder_forward.1} parent=27 // pred_region
          %s820 = sand.u32 %s55, 1
          %s821 = scalar_lea.sflag [#allocation24], %s820
          %s822 = sand.u32 %s424, 1
          %s823 = scalar_lea.vmem [#allocation23], %s822
          %s825 = ssub.s32 16, 16
          %826 = vsyncadd %s821, %s825
          %s827 = smul.addr %s55, 16
          %s828 = scalar_lea.hbm %s15, %s827
          %s830 = sshll.u32 %s823, 4
          %s831 = int_to_ptr.vmem [resolvable:$true] %s830
          %833 = dma.hbm_to_vmem [thread:$0]  %s828, 16, %s831, %s821
        $region84: #{encoder_forward.1} parent=27 // pred_fallthru
          _
        // Predicated region
        $region85: #{encoder_forward.1} parent=27 // pred_check
          %p834 = pneg %p460
        $region86: #{encoder_forward.1} parent=27 // pred_check_branch
          %836 = sbr.rel (%p834) target = $region88
        $region87: #{encoder_forward.1} parent=27 // pred_region
          %s837 = sand.u32 %s55, 1
          %s838 = scalar_lea.sflag [#allocation24], %s837
          %s839 = sand.u32 %s450, 1
          %s840 = scalar_lea.vmem [#allocation25], %s839
          %s842 = ssub.s32 16, 16
          %843 = vsyncadd %s838, %s842
          %s844 = smul.addr %s55, 16
          %s845 = scalar_lea.hbm %s16, %s844
          %s847 = sshll.u32 %s840, 4
          %s848 = int_to_ptr.vmem [resolvable:$true] %s847
          %850 = dma.hbm_to_vmem [thread:$0]  %s845, 16, %s848, %s838
        $region88: #{encoder_forward.1} parent=27 // pred_fallthru
          _
        // Predicated region
        $region89: #{encoder_forward.1} parent=27 // pred_check
          %p851 = pneg %p486
        $region90: #{encoder_forward.1} parent=27 // pred_check_branch
          %853 = sbr.rel (%p851) target = $region92
        $region91: #{encoder_forward.1} parent=27 // pred_region
          %s854 = sand.u32 %s55, 1
          %s855 = scalar_lea.sflag [#allocation27], %s854
          %s856 = sand.u32 %s476, 1
          %s857 = scalar_lea.vmem [#allocation26], %s856
          %s859 = ssub.s32 16, 16
          %860 = vsyncadd %s855, %s859
          %s861 = smul.addr %s55, 16
          %s862 = scalar_lea.hbm %s17, %s861
          %s864 = sshll.u32 %s857, 4
          %s865 = int_to_ptr.vmem [resolvable:$true] %s864
          %867 = dma.hbm_to_vmem [thread:$0]  %s862, 16, %s865, %s855
        $region92: #{encoder_forward.1} parent=27 // pred_fallthru
          _
      $region28: #{encoder_forward.1} parent=5 // pred_fallthru
        _
      %p868 = scmp.le.s32.totalorder 1, %s55
      %p869 = scmp.lt.s32.totalorder %s55, 3
      %p870 = pnand %p868, %p869
      %p871 = pneg %p870
      // Predicated region
      $region93: #{encoder_forward.1} parent=5 // pred_check
        _
      $region94: #{encoder_forward.1} parent=5 // pred_check_branch
        %873 = sbr.rel (%p870) target = $region96
      $region95: #{encoder_forward.1} parent=5 // pred_region
        %s874 = ssub.s32 %s55, 1
        // Predicated region
        $region97: #{encoder_forward.1} parent=95 // pred_check
          %p875 = pneg %p76
        $region98: #{encoder_forward.1} parent=95 // pred_check_branch
          %877 = sbr.rel (%p875) target = $region100
        $region99: #{encoder_forward.1} parent=95 // pred_region
          %878 = dma.done [#allocation6], 1024
        $region100: #{encoder_forward.1} parent=95 // pred_fallthru
          _
        %s879 = sand.u32 %s60, 1
        %s880 = scalar_lea.sflag [#allocation9], %s879
        %s881 = sand.u32 %s89, 1
        %s882 = smul.addr %s881, 64
        %s883 = scalar_lea.vmem [#allocation8], %s882
        // Predicated region
        $region101: #{encoder_forward.1} parent=95 // pred_check
          %p884 = pneg %p102
        $region102: #{encoder_forward.1} parent=95 // pred_check_branch
          %886 = sbr.rel (%p884) target = $region104
        $region103: #{encoder_forward.1} parent=95 // pred_region
          %887 = dma.done %s880, 1024
        $region104: #{encoder_forward.1} parent=95 // pred_fallthru
          _
        %s888 = sand.u32 %s60, 1
        %s889 = scalar_lea.sflag [#allocation9], %s888
        %s890 = sand.u32 %s141, 1
        %s891 = smul.addr %s890, 64
        %s892 = scalar_lea.vmem [#allocation10], %s891
        // Predicated region
        $region105: #{encoder_forward.1} parent=95 // pred_check
          %p893 = pneg %p154
        $region106: #{encoder_forward.1} parent=95 // pred_check_branch
          %895 = sbr.rel (%p893) target = $region108
        $region107: #{encoder_forward.1} parent=95 // pred_region
          %896 = dma.done %s889, 1024
        $region108: #{encoder_forward.1} parent=95 // pred_fallthru
          _
        %s897 = sand.u32 %s60, 1
        %s898 = scalar_lea.sflag [#allocation12], %s897
        %s899 = sand.u32 %s193, 1
        %s900 = smul.addr %s899, 64
        %s901 = scalar_lea.vmem [#allocation11], %s900
        // Predicated region
        $region109: #{encoder_forward.1} parent=95 // pred_check
          %p902 = pneg %p206
        $region110: #{encoder_forward.1} parent=95 // pred_check_branch
          %904 = sbr.rel (%p902) target = $region112
        $region111: #{encoder_forward.1} parent=95 // pred_region
          %905 = dma.done %s898, 1024
        $region112: #{encoder_forward.1} parent=95 // pred_fallthru
          _
        %s906 = sand.u32 %s60, 1
        %s907 = scalar_lea.sflag [#allocation12], %s906
        %s908 = sand.u32 %s245, 1
        %s909 = smul.addr %s908, 64
        %s910 = scalar_lea.vmem [#allocation13], %s909
        // Predicated region
        $region113: #{encoder_forward.1} parent=95 // pred_check
          %p911 = pneg %p258
        $region114: #{encoder_forward.1} parent=95 // pred_check_branch
          %913 = sbr.rel (%p911) target = $region116
        $region115: #{encoder_forward.1} parent=95 // pred_region
          %914 = dma.done %s907, 1024
        $region116: #{encoder_forward.1} parent=95 // pred_fallthru
          _
        %s915 = sand.u32 %s60, 1
        %s916 = scalar_lea.sflag [#allocation15], %s915
        %s917 = sand.u32 %s271, 1
        %s918 = scalar_lea.vmem [#allocation14], %s917
        // Predicated region
        $region117: #{encoder_forward.1} parent=95 // pred_check
          %p919 = pneg %p284
        $region118: #{encoder_forward.1} parent=95 // pred_check_branch
          %921 = sbr.rel (%p919) target = $region120
        $region119: #{encoder_forward.1} parent=95 // pred_region
          %922 = dma.done %s916, 16
        $region120: #{encoder_forward.1} parent=95 // pred_fallthru
          _
        %s923 = sand.u32 %s60, 1
        %s924 = scalar_lea.sflag [#allocation15], %s923
        %s925 = sand.u32 %s297, 1
        %s926 = scalar_lea.vmem [#allocation16], %s925
        // Predicated region
        $region121: #{encoder_forward.1} parent=95 // pred_check
          %p927 = pneg %p310
        $region122: #{encoder_forward.1} parent=95 // pred_check_branch
          %929 = sbr.rel (%p927) target = $region124
        $region123: #{encoder_forward.1} parent=95 // pred_region
          %930 = dma.done %s924, 16
        $region124: #{encoder_forward.1} parent=95 // pred_fallthru
          _
        %s931 = sand.u32 %s60, 1
        %s932 = scalar_lea.sflag [#allocation18], %s931
        %s933 = sand.u32 %s323, 1
        %s934 = scalar_lea.vmem [#allocation17], %s933
        // Predicated region
        $region125: #{encoder_forward.1} parent=95 // pred_check
          %p935 = pneg %p336
        $region126: #{encoder_forward.1} parent=95 // pred_check_branch
          %937 = sbr.rel (%p935) target = $region128
        $region127: #{encoder_forward.1} parent=95 // pred_region
          %938 = dma.done %s932, 16
        $region128: #{encoder_forward.1} parent=95 // pred_fallthru
          _
        %s939 = sand.u32 %s60, 1
        %s940 = scalar_lea.sflag [#allocation18], %s939
        %s941 = sand.u32 %s349, 1
        %s942 = smul.addr %s941, 1024
        %s943 = scalar_lea.vmem [#allocation19], %s942
        // Predicated region
        $region129: #{encoder_forward.1} parent=95 // pred_check
          %p944 = pneg %p362
        $region130: #{encoder_forward.1} parent=95 // pred_check_branch
          %946 = sbr.rel (%p944) target = $region132
        $region131: #{encoder_forward.1} parent=95 // pred_region
          %947 = dma.done %s940, 16384
        $region132: #{encoder_forward.1} parent=95 // pred_fallthru
          _
        %s948 = sand.u32 %s60, 1
        %s949 = scalar_lea.sflag [#allocation21], %s948
        %s950 = sand.u32 %s375, 1
        %s951 = smul.addr %s950, 16
        %s952 = scalar_lea.vmem [#allocation20], %s951
        // Predicated region
        $region133: #{encoder_forward.1} parent=95 // pred_check
          %p953 = pneg %p388
        $region134: #{encoder_forward.1} parent=95 // pred_check_branch
          %955 = sbr.rel (%p953) target = $region136
        $region135: #{encoder_forward.1} parent=95 // pred_region
          %956 = dma.done %s949, 256
        $region136: #{encoder_forward.1} parent=95 // pred_fallthru
          _
        %s957 = sand.u32 %s60, 1
        %s958 = scalar_lea.sflag [#allocation21], %s957
        %s959 = sand.u32 %s401, 1
        %s960 = smul.addr %s959, 1024
        %s961 = scalar_lea.vmem [#allocation22], %s960
        // Predicated region
        $region137: #{encoder_forward.1} parent=95 // pred_check
          %p962 = pneg %p414
        $region138: #{encoder_forward.1} parent=95 // pred_check_branch
          %964 = sbr.rel (%p962) target = $region140
        $region139: #{encoder_forward.1} parent=95 // pred_region
          %965 = dma.done %s958, 16384
        $region140: #{encoder_forward.1} parent=95 // pred_fallthru
          _
        %s966 = sand.u32 %s60, 1
        %s967 = scalar_lea.sflag [#allocation24], %s966
        %s968 = sand.u32 %s427, 1
        %s969 = scalar_lea.vmem [#allocation23], %s968
        // Predicated region
        $region141: #{encoder_forward.1} parent=95 // pred_check
          %p970 = pneg %p440
        $region142: #{encoder_forward.1} parent=95 // pred_check_branch
          %972 = sbr.rel (%p970) target = $region144
        $region143: #{encoder_forward.1} parent=95 // pred_region
          %973 = dma.done %s967, 16
        $region144: #{encoder_forward.1} parent=95 // pred_fallthru
          _
        %s974 = sand.u32 %s60, 1
        %s975 = scalar_lea.sflag [#allocation24], %s974
        %s976 = sand.u32 %s453, 1
        %s977 = scalar_lea.vmem [#allocation25], %s976
        // Predicated region
        $region145: #{encoder_forward.1} parent=95 // pred_check
          %p978 = pneg %p466
        $region146: #{encoder_forward.1} parent=95 // pred_check_branch
          %980 = sbr.rel (%p978) target = $region148
        $region147: #{encoder_forward.1} parent=95 // pred_region
          %981 = dma.done %s975, 16
        $region148: #{encoder_forward.1} parent=95 // pred_fallthru
          _
        %s982 = sand.u32 %s60, 1
        %s983 = scalar_lea.sflag [#allocation27], %s982
        %s984 = sand.u32 %s479, 1
        %s985 = scalar_lea.vmem [#allocation26], %s984
        // Predicated region
        $region149: #{encoder_forward.1} parent=95 // pred_check
          %p986 = pneg %p492
        $region150: #{encoder_forward.1} parent=95 // pred_check_branch
          %988 = sbr.rel (%p986) target = $region152
        $region151: #{encoder_forward.1} parent=95 // pred_region
          %989 = dma.done %s983, 16
        $region152: #{encoder_forward.1} parent=95 // pred_fallthru
          _
        // Predicated region
        $region153: #{encoder_forward.1} parent=95 // pred_check
          %p990 = pneg %p513
        $region154: #{encoder_forward.1} parent=95 // pred_check_branch
          %992 = sbr.rel (%p990) target = $region156
        $region155: #{encoder_forward.1} parent=95 // pred_region
          %993 = dma.done [#allocation27], 16384
        $region156: #{encoder_forward.1} parent=95 // pred_fallthru
          _
        %p994 = pneg %p76
        %p995 = pneg %p73
        %s996 = sand.u32 %s60, 1
        %s997 = scalar_lea.sflag [#allocation9], %s996
        %s998 = sand.u32 %s89, 1
        %s999 = smul.addr %s998, 64
        %s1000 = scalar_lea.vmem [#allocation8], %s999
        %p1001 = pneg %p102
        %p1002 = pneg %p99
        %p1003 = scmp.lt.s32.totalorder %s60, 1
        %s1004 = scalar_select %p1003, %s60, 1
        %s1005 = scalar_lea.vmem %s3, %s1004
        %p1006 = pneg %p128
        %p1007 = pneg %p125
        %s1008 = sand.u32 %s60, 1
        %s1009 = scalar_lea.sflag [#allocation9], %s1008
        %s1010 = sand.u32 %s141, 1
        %s1011 = smul.addr %s1010, 64
        %s1012 = scalar_lea.vmem [#allocation10], %s1011
        %p1013 = pneg %p154
        %p1014 = pneg %p151
        %p1015 = scmp.lt.s32.totalorder %s60, 1
        %s1016 = scalar_select %p1015, %s60, 1
        %s1017 = scalar_lea.vmem %s5, %s1016
        %p1018 = pneg %p180
        %p1019 = pneg %p177
        %s1020 = sand.u32 %s60, 1
        %s1021 = scalar_lea.sflag [#allocation12], %s1020
        %s1022 = sand.u32 %s193, 1
        %s1023 = smul.addr %s1022, 64
        %s1024 = scalar_lea.vmem [#allocation11], %s1023
        %p1025 = pneg %p206
        %p1026 = pneg %p203
        %p1027 = scmp.lt.s32.totalorder %s60, 1
        %s1028 = scalar_select %p1027, %s60, 1
        %s1029 = scalar_lea.vmem %s7, %s1028
        %p1030 = pneg %p232
        %p1031 = pneg %p229
        %s1032 = sand.u32 %s60, 1
        %s1033 = scalar_lea.sflag [#allocation12], %s1032
        %s1034 = sand.u32 %s245, 1
        %s1035 = smul.addr %s1034, 64
        %s1036 = scalar_lea.vmem [#allocation13], %s1035
        %p1037 = pneg %p258
        %p1038 = pneg %p255
        %s1039 = sand.u32 %s60, 1
        %s1040 = scalar_lea.sflag [#allocation15], %s1039
        %s1041 = sand.u32 %s271, 1
        %s1042 = scalar_lea.vmem [#allocation14], %s1041
        %p1043 = pneg %p284
        %p1044 = pneg %p281
        %s1045 = sand.u32 %s60, 1
        %s1046 = scalar_lea.sflag [#allocation15], %s1045
        %s1047 = sand.u32 %s297, 1
        %s1048 = scalar_lea.vmem [#allocation16], %s1047
        %p1049 = pneg %p310
        %p1050 = pneg %p307
        %s1051 = sand.u32 %s60, 1
        %s1052 = scalar_lea.sflag [#allocation18], %s1051
        %s1053 = sand.u32 %s323, 1
        %s1054 = scalar_lea.vmem [#allocation17], %s1053
        %p1055 = pneg %p336
        %p1056 = pneg %p333
        %s1057 = sand.u32 %s60, 1
        %s1058 = scalar_lea.sflag [#allocation18], %s1057
        %s1059 = sand.u32 %s349, 1
        %s1060 = smul.addr %s1059, 1024
        %s1061 = scalar_lea.vmem [#allocation19], %s1060
        %p1062 = pneg %p362
        %p1063 = pneg %p359
        %s1064 = sand.u32 %s60, 1
        %s1065 = scalar_lea.sflag [#allocation21], %s1064
        %s1066 = sand.u32 %s375, 1
        %s1067 = smul.addr %s1066, 16
        %s1068 = scalar_lea.vmem [#allocation20], %s1067
        %p1069 = pneg %p388
        %p1070 = pneg %p385
        %s1071 = sand.u32 %s60, 1
        %s1072 = scalar_lea.sflag [#allocation21], %s1071
        %s1073 = sand.u32 %s401, 1
        %s1074 = smul.addr %s1073, 1024
        %s1075 = scalar_lea.vmem [#allocation22], %s1074
        %p1076 = pneg %p414
        %p1077 = pneg %p411
        %s1078 = sand.u32 %s60, 1
        %s1079 = scalar_lea.sflag [#allocation24], %s1078
        %s1080 = sand.u32 %s427, 1
        %s1081 = scalar_lea.vmem [#allocation23], %s1080
        %p1082 = pneg %p440
        %p1083 = pneg %p437
        %s1084 = sand.u32 %s60, 1
        %s1085 = scalar_lea.sflag [#allocation24], %s1084
        %s1086 = sand.u32 %s453, 1
        %s1087 = scalar_lea.vmem [#allocation25], %s1086
        %p1088 = pneg %p466
        %p1089 = pneg %p463
        %s1090 = sand.u32 %s60, 1
        %s1091 = scalar_lea.sflag [#allocation27], %s1090
        %s1092 = sand.u32 %s479, 1
        %s1093 = scalar_lea.vmem [#allocation26], %s1092
        %p1094 = pneg %p492
        %p1095 = pneg %p489
        %p1096 = pneg %p513
        %p1097 = pneg %p510
        %p1098 = pneg %p534
        %p1099 = pneg %p531
        %p1100 = pneg %p555
        %p1101 = pneg %p552
        %p1102 = scmp.lt.s32.totalorder %s60, 1
        %s1103 = scalar_select %p1102, %s60, 1
        %s1104 = scalar_lea.vmem %s3, %s1103
        %p1105 = scmp.lt.s32.totalorder %s60, 1
        %s1106 = scalar_select %p1105, %s60, 1
        %s1107 = scalar_lea.vmem %s5, %s1106
        %p1108 = scmp.lt.s32.totalorder %s60, 1
        %s1109 = scalar_select %p1108, %s60, 1
        %s1110 = scalar_lea.vmem %s7, %s1109
        %p1112 = scmp.eq.s32.totalorder %s60, 0
        // Predicated region
        $region157: #{encoder_forward.1} parent=95 // pred_check
          %p1113 = pneg %p1112
        $region158: #{encoder_forward.1} parent=95 // pred_check_branch
          %1115 = sbr.rel (%p1113) target = $region160
        $region159: #{encoder_forward.1} parent=95 // pred_region
          %s1116 = sld [smem:[#allocation4]]
          %s1117 = scalar_lea.vmem [#allocation5], %s1116
          %v1118 = vld [vmem:[%s1117] sm:$0x1]
          %1119 = vst [vmem:[#allocation2] sm:$0x1] %v1118
          %s1120 = sld [smem:[#allocation4 + $0x1]]
          %s1121 = scalar_lea.vmem [#allocation5], %s1120
          %v1122 = vld [vmem:[%s1121] sm:$0x1]
          %1123 = vst [vmem:[#allocation2 + $0x1] sm:$0x1] %v1122
          %s1124 = sld [smem:[#allocation4 + $0x2]]
          %s1125 = scalar_lea.vmem [#allocation5], %s1124
          %v1126 = vld [vmem:[%s1125] sm:$0x1]
          %1127 = vst [vmem:[#allocation2 + $0x2] sm:$0x1] %v1126
          %s1128 = sld [smem:[#allocation4 + $0x3]]
          %s1129 = scalar_lea.vmem [#allocation5], %s1128
          %v1130 = vld [vmem:[%s1129] sm:$0x1]
          %1131 = vst [vmem:[#allocation2 + $0x3] sm:$0x1] %v1130
          %s1132 = sld [smem:[#allocation4 + $0x4]]
          %s1133 = scalar_lea.vmem [#allocation5], %s1132
          %v1134 = vld [vmem:[%s1133] sm:$0x1]
          %1135 = vst [vmem:[#allocation2 + $0x4] sm:$0x1] %v1134
          %s1136 = sld [smem:[#allocation4 + $0x5]]
          %s1137 = scalar_lea.vmem [#allocation5], %s1136
          %v1138 = vld [vmem:[%s1137] sm:$0x1]
          %1139 = vst [vmem:[#allocation2 + $0x5] sm:$0x1] %v1138
          %s1140 = sld [smem:[#allocation4 + $0x6]]
          %s1141 = scalar_lea.vmem [#allocation5], %s1140
          %v1142 = vld [vmem:[%s1141] sm:$0x1]
          %1143 = vst [vmem:[#allocation2 + $0x6] sm:$0x1] %v1142
          %s1144 = sld [smem:[#allocation4 + $0x7]]
          %s1145 = scalar_lea.vmem [#allocation5], %s1144
          %v1146 = vld [vmem:[%s1145] sm:$0x1]
          %1147 = vst [vmem:[#allocation2 + $0x7] sm:$0x1] %v1146
          %s1148 = sld [smem:[#allocation4 + $0x8]]
          %s1149 = scalar_lea.vmem [#allocation5], %s1148
          %v1150 = vld [vmem:[%s1149] sm:$0x1]
          %1151 = vst [vmem:[#allocation2 + $0x8] sm:$0x1] %v1150
          %s1152 = sld [smem:[#allocation4 + $0x9]]
          %s1153 = scalar_lea.vmem [#allocation5], %s1152
          %v1154 = vld [vmem:[%s1153] sm:$0x1]
          %1155 = vst [vmem:[#allocation2 + $0x9] sm:$0x1] %v1154
          %s1156 = sld [smem:[#allocation4 + $0xa]]
          %s1157 = scalar_lea.vmem [#allocation5], %s1156
          %v1158 = vld [vmem:[%s1157] sm:$0x1]
          %1159 = vst [vmem:[#allocation2 + $0xa] sm:$0x1] %v1158
          %s1160 = sld [smem:[#allocation4 + $0xb]]
          %s1161 = scalar_lea.vmem [#allocation5], %s1160
          %v1162 = vld [vmem:[%s1161] sm:$0x1]
          %1163 = vst [vmem:[#allocation2 + $0xb] sm:$0x1] %v1162
          %s1164 = sld [smem:[#allocation4 + $0xc]]
          %s1165 = scalar_lea.vmem [#allocation5], %s1164
          %v1166 = vld [vmem:[%s1165] sm:$0x1]
          %1167 = vst [vmem:[#allocation2 + $0xc] sm:$0x1] %v1166
          %s1168 = sld [smem:[#allocation4 + $0xd]]
          %s1169 = scalar_lea.vmem [#allocation5], %s1168
          %v1170 = vld [vmem:[%s1169] sm:$0x1]
          %1171 = vst [vmem:[#allocation2 + $0xd] sm:$0x1] %v1170
          %s1172 = sld [smem:[#allocation4 + $0xe]]
          %s1173 = scalar_lea.vmem [#allocation5], %s1172
          %v1174 = vld [vmem:[%s1173] sm:$0x1]
          %1175 = vst [vmem:[#allocation2 + $0xe] sm:$0x1] %v1174
          %s1176 = sld [smem:[#allocation4 + $0xf]]
          %s1177 = scalar_lea.vmem [#allocation5], %s1176
          %v1178 = vld [vmem:[%s1177] sm:$0x1]
          %1179 = vst [vmem:[#allocation2 + $0xf] sm:$0x1] %v1178
        $region160: #{encoder_forward.1} parent=95 // pred_fallthru
          _
        %v1180 = vld [vmem:[#allocation2] sm:$0xff]
        %v1181 = vld [vmem:[#allocation2 + $0x8] sm:$0xff]
        %v1182 = vpack.c.bf16 %v1181, %v1180
        %v1183 = vld [vmem:[%s883] sm:$0xf]
        %v1184 = vld [vmem:[%s883 + $0x4] sm:$0xf]
        %v1185 = vld [vmem:[%s883 + $0x8] sm:$0xf]
        %v1186 = vld [vmem:[%s883 + $0xc] sm:$0xf]
        %v1187 = vld [vmem:[%s883 + $0x10] sm:$0xf]
        %v1188 = vld [vmem:[%s883 + $0x14] sm:$0xf]
        %v1189 = vld [vmem:[%s883 + $0x18] sm:$0xf]
        %v1190 = vld [vmem:[%s883 + $0x1c] sm:$0xf]
        %v1191 = vld [vmem:[%s883 + $0x20] sm:$0xf]
        %v1192 = vld [vmem:[%s883 + $0x24] sm:$0xf]
        %v1193 = vld [vmem:[%s883 + $0x28] sm:$0xf]
        %v1194 = vld [vmem:[%s883 + $0x2c] sm:$0xf]
        %v1195 = vld [vmem:[%s883 + $0x30] sm:$0xf]
        %v1196 = vld [vmem:[%s883 + $0x34] sm:$0xf]
        %v1197 = vld [vmem:[%s883 + $0x38] sm:$0xf]
        %v1198 = vld [vmem:[%s883 + $0x3c] sm:$0xf]
        %v1199 = vld [vmem:[%s1104] sm:$0x1]
        %v1201 = vlaneseq
        %v1202 = vshrl.u32 %v1201, 7
        %v1203 = vsub.s32 0, %v1202
        %v1204 = vrot.slane %v1199, %v1203
        %v1222 = vunpack.c.l.b16 %v1183
        %v1223 = vunpack.c.l.b16 %v1184
        %v1224 = vunpack.c.l.b16 %v1185
        %v1225 = vunpack.c.l.b16 %v1186
        %v1226 = vunpack.c.l.b16 %v1187
        %v1227 = vunpack.c.l.b16 %v1188
        %v1228 = vunpack.c.l.b16 %v1189
        %v1229 = vunpack.c.l.b16 %v1190
        %v1230 = vunpack.c.l.b16 %v1191
        %v1231 = vunpack.c.l.b16 %v1192
        %v1232 = vunpack.c.l.b16 %v1193
        %v1233 = vunpack.c.l.b16 %v1194
        %v1234 = vunpack.c.l.b16 %v1195
        %v1235 = vunpack.c.l.b16 %v1196
        %v1236 = vunpack.c.l.b16 %v1197
        %v1237 = vunpack.c.l.b16 %v1198
        %v1238 = vpack.c.b16 %v1223, %v1222
        %v1239 = vpack.c.b16 %v1225, %v1224
        %v1240 = vpack.c.b16 %v1227, %v1226
        %v1241 = vpack.c.b16 %v1229, %v1228
        %v1242 = vpack.c.b16 %v1231, %v1230
        %v1243 = vpack.c.b16 %v1233, %v1232
        %v1244 = vpack.c.b16 %v1235, %v1234
        %v1245 = vpack.c.b16 %v1237, %v1236
        %1254 = vmatprep.subr.bf16.mxu0 0
        %1255 = vmatpush1.bf16.msra.mxu0 %v1245
        %1256 = vmatprep.subr.bf16.mxu0 0
        %1257 = vmatpush1.bf16.msra.mxu0 %v1244
        %1258 = vmatprep.subr.bf16.mxu0 0
        %1259 = vmatpush1.bf16.msra.mxu0 %v1243
        %1260 = vmatprep.subr.bf16.mxu0 0
        %1261 = vmatpush1.bf16.msra.mxu0 %v1242
        %1262 = vmatprep.subr.bf16.mxu0 0
        %1263 = vmatpush1.bf16.msra.mxu0 %v1241
        %1264 = vmatprep.subr.bf16.mxu0 0
        %1265 = vmatpush1.bf16.msra.mxu0 %v1240
        %1266 = vmatprep.subr.bf16.mxu0 0
        %1267 = vmatpush1.bf16.msra.mxu0 %v1239
        %1268 = vmatprep.subr.bf16.mxu0 0
        %1269 = vmatpush1.bf16.msra.mxu0 %v1238
        %1270 = vmatprep.subr.bf16.mxu0 0
        %1271 = vmatpush2.bf16.msra.mxu0 0
        %1272 = vmatprep.subr.bf16.mxu0 0
        %1273 = vmatpush2.bf16.msra.mxu0 0
        %1274 = vmatprep.subr.bf16.mxu0 0
        %1275 = vmatpush2.bf16.msra.mxu0 0
        %1276 = vmatprep.subr.bf16.mxu0 0
        %1277 = vmatpush2.bf16.msra.mxu0 0
        %1278 = vmatprep.subr.bf16.mxu0 0
        %1279 = vmatpush2.bf16.msra.mxu0 0
        %1280 = vmatprep.subr.bf16.mxu0 0
        %1281 = vmatpush2.bf16.msra.mxu0 0
        %1282 = vmatprep.subr.bf16.mxu0 0
        %1283 = vmatpush2.bf16.msra.mxu0 0
        %1284 = vmatprep.subr.bf16.mxu0 0
        %1285 = vmatpush2.bf16.msra.mxu0 0
        %1286 = vmatprep.mubr.bf16.mxu0 0
        %1287 = vmatmul.mubr.bf16.gmra.mxu0 %v1182
        %v1288 = vpop.f32.mrf.mxu0
        %v1289 = vadd.f32 %v1204, %v1288
        %v1290 = vpop.f32.mrf.mxu0
        %v1291 = vpop.f32.mrf.mxu0
        %v1292 = vadd.f32 %v1204, %v1291
        %v1293 = vpop.f32.mrf.mxu0
        %1294 = vdwg.mxu0
        %v1295 = vld [vmem:[%s892] sm:$0xf]
        %v1296 = vld [vmem:[%s892 + $0x4] sm:$0xf]
        %v1297 = vld [vmem:[%s892 + $0x8] sm:$0xf]
        %v1298 = vld [vmem:[%s892 + $0xc] sm:$0xf]
        %v1299 = vld [vmem:[%s892 + $0x10] sm:$0xf]
        %v1300 = vld [vmem:[%s892 + $0x14] sm:$0xf]
        %v1301 = vld [vmem:[%s892 + $0x18] sm:$0xf]
        %v1302 = vld [vmem:[%s892 + $0x1c] sm:$0xf]
        %v1303 = vld [vmem:[%s892 + $0x20] sm:$0xf]
        %v1304 = vld [vmem:[%s892 + $0x24] sm:$0xf]
        %v1305 = vld [vmem:[%s892 + $0x28] sm:$0xf]
        %v1306 = vld [vmem:[%s892 + $0x2c] sm:$0xf]
        %v1307 = vld [vmem:[%s892 + $0x30] sm:$0xf]
        %v1308 = vld [vmem:[%s892 + $0x34] sm:$0xf]
        %v1309 = vld [vmem:[%s892 + $0x38] sm:$0xf]
        %v1310 = vld [vmem:[%s892 + $0x3c] sm:$0xf]
        %v1311 = vld [vmem:[%s1107] sm:$0x1]
        %v1313 = vlaneseq
        %v1314 = vshrl.u32 %v1313, 7
        %v1315 = vsub.s32 0, %v1314
        %v1316 = vrot.slane %v1311, %v1315
        %v1334 = vunpack.c.l.b16 %v1295
        %v1335 = vunpack.c.l.b16 %v1296
        %v1336 = vunpack.c.l.b16 %v1297
        %v1337 = vunpack.c.l.b16 %v1298
        %v1338 = vunpack.c.l.b16 %v1299
        %v1339 = vunpack.c.l.b16 %v1300
        %v1340 = vunpack.c.l.b16 %v1301
        %v1341 = vunpack.c.l.b16 %v1302
        %v1342 = vunpack.c.l.b16 %v1303
        %v1343 = vunpack.c.l.b16 %v1304
        %v1344 = vunpack.c.l.b16 %v1305
        %v1345 = vunpack.c.l.b16 %v1306
        %v1346 = vunpack.c.l.b16 %v1307
        %v1347 = vunpack.c.l.b16 %v1308
        %v1348 = vunpack.c.l.b16 %v1309
        %v1349 = vunpack.c.l.b16 %v1310
        %v1350 = vpack.c.b16 %v1335, %v1334
        %v1351 = vpack.c.b16 %v1337, %v1336
        %v1352 = vpack.c.b16 %v1339, %v1338
        %v1353 = vpack.c.b16 %v1341, %v1340
        %v1354 = vpack.c.b16 %v1343, %v1342
        %v1355 = vpack.c.b16 %v1345, %v1344
        %v1356 = vpack.c.b16 %v1347, %v1346
        %v1357 = vpack.c.b16 %v1349, %v1348
        %1366 = vmatprep.subr.bf16.mxu0 0
        %1367 = vmatpush1.bf16.msra.mxu0 %v1357
        %1368 = vmatprep.subr.bf16.mxu0 0
        %1369 = vmatpush1.bf16.msra.mxu0 %v1356
        %1370 = vmatprep.subr.bf16.mxu0 0
        %1371 = vmatpush1.bf16.msra.mxu0 %v1355
        %1372 = vmatprep.subr.bf16.mxu0 0
        %1373 = vmatpush1.bf16.msra.mxu0 %v1354
        %1374 = vmatprep.subr.bf16.mxu0 0
        %1375 = vmatpush1.bf16.msra.mxu0 %v1353
        %1376 = vmatprep.subr.bf16.mxu0 0
        %1377 = vmatpush1.bf16.msra.mxu0 %v1352
        %1378 = vmatprep.subr.bf16.mxu0 0
        %1379 = vmatpush1.bf16.msra.mxu0 %v1351
        %1380 = vmatprep.subr.bf16.mxu0 0
        %1381 = vmatpush1.bf16.msra.mxu0 %v1350
        %1382 = vmatprep.subr.bf16.mxu0 0
        %1383 = vmatpush2.bf16.msra.mxu0 0
        %1384 = vmatprep.subr.bf16.mxu0 0
        %1385 = vmatpush2.bf16.msra.mxu0 0
        %1386 = vmatprep.subr.bf16.mxu0 0
        %1387 = vmatpush2.bf16.msra.mxu0 0
        %1388 = vmatprep.subr.bf16.mxu0 0
        %1389 = vmatpush2.bf16.msra.mxu0 0
        %1390 = vmatprep.subr.bf16.mxu0 0
        %1391 = vmatpush2.bf16.msra.mxu0 0
        %1392 = vmatprep.subr.bf16.mxu0 0
        %1393 = vmatpush2.bf16.msra.mxu0 0
        %1394 = vmatprep.subr.bf16.mxu0 0
        %1395 = vmatpush2.bf16.msra.mxu0 0
        %1396 = vmatprep.subr.bf16.mxu0 0
        %1397 = vmatpush2.bf16.msra.mxu0 0
        %1398 = vmatprep.mubr.bf16.mxu0 0
        %1399 = vmatmul.mubr.bf16.gmra.mxu0 %v1182
        %v1400 = vpop.f32.mrf.mxu0
        %v1401 = vadd.f32 %v1316, %v1400
        %v1402 = vpop.f32.mrf.mxu0
        %v1403 = vpop.f32.mrf.mxu0
        %v1404 = vadd.f32 %v1316, %v1403
        %v1405 = vpop.f32.mrf.mxu0
        %1406 = vdwg.mxu0
        %v1407 = vld [vmem:[%s901] sm:$0xf]
        %v1408 = vld [vmem:[%s901 + $0x4] sm:$0xf]
        %v1409 = vld [vmem:[%s901 + $0x8] sm:$0xf]
        %v1410 = vld [vmem:[%s901 + $0xc] sm:$0xf]
        %v1411 = vld [vmem:[%s901 + $0x10] sm:$0xf]
        %v1412 = vld [vmem:[%s901 + $0x14] sm:$0xf]
        %v1413 = vld [vmem:[%s901 + $0x18] sm:$0xf]
        %v1414 = vld [vmem:[%s901 + $0x1c] sm:$0xf]
        %v1415 = vld [vmem:[%s901 + $0x20] sm:$0xf]
        %v1416 = vld [vmem:[%s901 + $0x24] sm:$0xf]
        %v1417 = vld [vmem:[%s901 + $0x28] sm:$0xf]
        %v1418 = vld [vmem:[%s901 + $0x2c] sm:$0xf]
        %v1419 = vld [vmem:[%s901 + $0x30] sm:$0xf]
        %v1420 = vld [vmem:[%s901 + $0x34] sm:$0xf]
        %v1421 = vld [vmem:[%s901 + $0x38] sm:$0xf]
        %v1422 = vld [vmem:[%s901 + $0x3c] sm:$0xf]
        %v1423 = vld [vmem:[%s1110] sm:$0x1]
        %v1425 = vlaneseq
        %v1426 = vshrl.u32 %v1425, 7
        %v1427 = vsub.s32 0, %v1426
        %v1428 = vrot.slane %v1423, %v1427
        %v1446 = vunpack.c.l.b16 %v1407
        %v1447 = vunpack.c.l.b16 %v1408
        %v1448 = vunpack.c.l.b16 %v1409
        %v1449 = vunpack.c.l.b16 %v1410
        %v1450 = vunpack.c.l.b16 %v1411
        %v1451 = vunpack.c.l.b16 %v1412
        %v1452 = vunpack.c.l.b16 %v1413
        %v1453 = vunpack.c.l.b16 %v1414
        %v1454 = vunpack.c.l.b16 %v1415
        %v1455 = vunpack.c.l.b16 %v1416
        %v1456 = vunpack.c.l.b16 %v1417
        %v1457 = vunpack.c.l.b16 %v1418
        %v1458 = vunpack.c.l.b16 %v1419
        %v1459 = vunpack.c.l.b16 %v1420
        %v1460 = vunpack.c.l.b16 %v1421
        %v1461 = vunpack.c.l.b16 %v1422
        %v1462 = vpack.c.b16 %v1447, %v1446
        %v1463 = vpack.c.b16 %v1449, %v1448
        %v1464 = vpack.c.b16 %v1451, %v1450
        %v1465 = vpack.c.b16 %v1453, %v1452
        %v1466 = vpack.c.b16 %v1455, %v1454
        %v1467 = vpack.c.b16 %v1457, %v1456
        %v1468 = vpack.c.b16 %v1459, %v1458
        %v1469 = vpack.c.b16 %v1461, %v1460
        %1478 = vmatprep.subr.bf16.mxu0 0
        %1479 = vmatpush1.bf16.msra.mxu0 %v1469
        %1480 = vmatprep.subr.bf16.mxu0 0
        %1481 = vmatpush1.bf16.msra.mxu0 %v1468
        %1482 = vmatprep.subr.bf16.mxu0 0
        %1483 = vmatpush1.bf16.msra.mxu0 %v1467
        %1484 = vmatprep.subr.bf16.mxu0 0
        %1485 = vmatpush1.bf16.msra.mxu0 %v1466
        %1486 = vmatprep.subr.bf16.mxu0 0
        %1487 = vmatpush1.bf16.msra.mxu0 %v1465
        %1488 = vmatprep.subr.bf16.mxu0 0
        %1489 = vmatpush1.bf16.msra.mxu0 %v1464
        %1490 = vmatprep.subr.bf16.mxu0 0
        %1491 = vmatpush1.bf16.msra.mxu0 %v1463
        %1492 = vmatprep.subr.bf16.mxu0 0
        %1493 = vmatpush1.bf16.msra.mxu0 %v1462
        %1494 = vmatprep.subr.bf16.mxu0 0
        %1495 = vmatpush2.bf16.msra.mxu0 0
        %1496 = vmatprep.subr.bf16.mxu0 0
        %1497 = vmatpush2.bf16.msra.mxu0 0
        %1498 = vmatprep.subr.bf16.mxu0 0
        %1499 = vmatpush2.bf16.msra.mxu0 0
        %1500 = vmatprep.subr.bf16.mxu0 0
        %1501 = vmatpush2.bf16.msra.mxu0 0
        %1502 = vmatprep.subr.bf16.mxu0 0
        %1503 = vmatpush2.bf16.msra.mxu0 0
        %1504 = vmatprep.subr.bf16.mxu0 0
        %1505 = vmatpush2.bf16.msra.mxu0 0
        %1506 = vmatprep.subr.bf16.mxu0 0
        %1507 = vmatpush2.bf16.msra.mxu0 0
        %1508 = vmatprep.subr.bf16.mxu0 0
        %1509 = vmatpush2.bf16.msra.mxu0 0
        %1510 = vmatprep.mubr.bf16.mxu0 0
        %1511 = vmatmul.mubr.bf16.gmra.mxu0 %v1182
        %v1512 = vpop.f32.mrf.mxu0
        %v1513 = vadd.f32 %v1428, %v1512
        %v1514 = vpop.f32.mrf.mxu0
        %v1515 = vpop.f32.mrf.mxu0
        %v1516 = vadd.f32 %v1428, %v1515
        %v1517 = vpop.f32.mrf.mxu0
        %1518 = vdwg.mxu0
        %v1519 = vpack.c.bf16 %v1289, %v1289
        %v1520 = vpack.c.bf16 %v1292, %v1292
        %v1521 = vpack.c.bf16 %v1401, %v1401
        %v1522 = vpack.c.bf16 %v1404, %v1404
        %v1523 = vpack.c.bf16 %v1513, %v1513
        %v1524 = vpack.c.bf16 %v1516, %v1516
        %vm1525 = vcmask 130048
        %v1527 = vsel %vm1525, %v1519, 0
        %v1530 = vsel %vm1525, %v1521, 0
        %1532 = vmatprep.subr.bf16.mxu0 0
        %1533 = vmatpush1.bf16.xpose.msra.mxu0 0
        %1534 = vmatprep.subr.bf16.mxu0 0
        %1535 = vmatpush1.bf16.xpose.msra.mxu0 0
        %1536 = vmatprep.subr.bf16.mxu0 0
        %1537 = vmatpush1.bf16.xpose.msra.mxu0 0
        %1538 = vmatprep.subr.bf16.mxu0 0
        %1539 = vmatpush1.bf16.xpose.msra.mxu0 0
        %1540 = vmatprep.subr.bf16.mxu0 0
        %1541 = vmatpush1.bf16.xpose.msra.mxu0 0
        %1542 = vmatprep.subr.bf16.mxu0 0
        %1543 = vmatpush1.bf16.xpose.msra.mxu0 0
        %1544 = vmatprep.subr.bf16.mxu0 0
        %1545 = vmatpush1.bf16.xpose.msra.mxu0 0
        %1546 = vmatprep.subr.bf16.mxu0 0
        %1547 = vmatpush1.bf16.xpose.msra.mxu0 %v1530
        %1548 = vmatprep.subr.bf16.mxu0 0
        %1549 = vmatpush2.bf16.xpose.msra.mxu0 0
        %1550 = vmatprep.subr.bf16.mxu0 0
        %1551 = vmatpush2.bf16.xpose.msra.mxu0 0
        %1552 = vmatprep.subr.bf16.mxu0 0
        %1553 = vmatpush2.bf16.xpose.msra.mxu0 0
        %1554 = vmatprep.subr.bf16.mxu0 0
        %1555 = vmatpush2.bf16.xpose.msra.mxu0 0
        %1556 = vmatprep.subr.bf16.mxu0 0
        %1557 = vmatpush2.bf16.xpose.msra.mxu0 0
        %1558 = vmatprep.subr.bf16.mxu0 0
        %1559 = vmatpush2.bf16.xpose.msra.mxu0 0
        %1560 = vmatprep.subr.bf16.mxu0 0
        %1561 = vmatpush2.bf16.xpose.msra.mxu0 0
        %1562 = vmatprep.subr.bf16.mxu0 0
        %1563 = vmatpush2.bf16.xpose.msra.mxu0 0
        %1564 = vmatprep.mubr.bf16.mxu0 0
        %1565 = vmatmul.mubr.bf16.gmra.mxu0 %v1527
        %v1566 = vpop.f32.mrf.mxu0
        %v1567 = vadd.f32 0.0, %v1566
        %v1568 = vpop.f32.mrf.mxu0
        %v1569 = vpop.f32.mrf.mxu0
        %v1570 = vpop.f32.mrf.mxu0
        %1571 = vdwg.mxu0
        %v1573 = vsel %vm1525, %v1520, 0
        %v1576 = vsel %vm1525, %v1522, 0
        %1578 = vmatprep.subr.bf16.mxu0 0
        %1579 = vmatpush1.bf16.xpose.msra.mxu0 0
        %1580 = vmatprep.subr.bf16.mxu0 0
        %1581 = vmatpush1.bf16.xpose.msra.mxu0 0
        %1582 = vmatprep.subr.bf16.mxu0 0
        %1583 = vmatpush1.bf16.xpose.msra.mxu0 0
        %1584 = vmatprep.subr.bf16.mxu0 0
        %1585 = vmatpush1.bf16.xpose.msra.mxu0 0
        %1586 = vmatprep.subr.bf16.mxu0 0
        %1587 = vmatpush1.bf16.xpose.msra.mxu0 0
        %1588 = vmatprep.subr.bf16.mxu0 0
        %1589 = vmatpush1.bf16.xpose.msra.mxu0 0
        %1590 = vmatprep.subr.bf16.mxu0 0
        %1591 = vmatpush1.bf16.xpose.msra.mxu0 0
        %1592 = vmatprep.subr.bf16.mxu0 0
        %1593 = vmatpush1.bf16.xpose.msra.mxu0 %v1576
        %1594 = vmatprep.subr.bf16.mxu0 0
        %1595 = vmatpush2.bf16.xpose.msra.mxu0 0
        %1596 = vmatprep.subr.bf16.mxu0 0
        %1597 = vmatpush2.bf16.xpose.msra.mxu0 0
        %1598 = vmatprep.subr.bf16.mxu0 0
        %1599 = vmatpush2.bf16.xpose.msra.mxu0 0
        %1600 = vmatprep.subr.bf16.mxu0 0
        %1601 = vmatpush2.bf16.xpose.msra.mxu0 0
        %1602 = vmatprep.subr.bf16.mxu0 0
        %1603 = vmatpush2.bf16.xpose.msra.mxu0 0
        %1604 = vmatprep.subr.bf16.mxu0 0
        %1605 = vmatpush2.bf16.xpose.msra.mxu0 0
        %1606 = vmatprep.subr.bf16.mxu0 0
        %1607 = vmatpush2.bf16.xpose.msra.mxu0 0
        %1608 = vmatprep.subr.bf16.mxu0 0
        %1609 = vmatpush2.bf16.xpose.msra.mxu0 0
        %1610 = vmatprep.mubr.bf16.mxu0 0
        %1611 = vmatmul.mubr.bf16.gmra.mxu0 %v1573
        %v1612 = vpop.f32.mrf.mxu0
        %v1613 = vadd.f32 0.0, %v1612
        %v1614 = vpop.f32.mrf.mxu0
        %v1615 = vpop.f32.mrf.mxu0
        %v1616 = vpop.f32.mrf.mxu0
        %1617 = vdwg.mxu0
        %vm1618 = vcmask 64512
        %v1619 = vsel %vm1618, %v1567, -inf
        %1620 = vmax.xlane.f32.xlu0 %v1619
        %v1621 = vpop.xlane.xlu0 %1620
        %v1622 = vsel %vm1618, %v1613, -inf
        %1623 = vmax.xlane.f32.xlu0 %v1622
        %v1624 = vpop.xlane.xlu0 %1623
        %v1625 = vsub.f32 %v1567, %v1621
        %v1626 = vsub.f32 %v1613, %v1624
        %v1627 = vmul.f32 %v1625, 1.442695
        %v1628 = vpow.pop %v1627
        %v1629 = vmul.f32 %v1626, 1.442695
        %v1630 = vpow.pop %v1629
        %v1631 = vsel %vm1618, %v1628, 0.0
        %1632 = vadd.xlane.f32.xlu0 %v1631
        %v1633 = vpop.xlane.xlu0 %1632
        %v1634 = vsel %vm1618, %v1630, 0.0
        %1635 = vadd.xlane.f32.xlu0 %v1634
        %v1636 = vpop.xlane.xlu0 %1635
        %v1637 = vrcp.pop %v1633
        %v1638 = vrcp.pop %v1636
        %v1639 = vmul.f32 %v1628, %v1637
        %v1640 = vmul.f32 %v1630, %v1638
        %v1641 = vpack.c.bf16 %v1639, %v1639
        %v1642 = vpack.c.bf16 %v1640, %v1640
        %v1644 = vsel %vm1618, %v1641, 0
        %vm1646 = vcmask 1043456
        %v1648 = vsel %vm1646, %v1523, 0
        %1650 = vmatprep.subr.bf16.mxu0 0
        %1651 = vmatpush1.bf16.msra.mxu0 0
        %1652 = vmatprep.subr.bf16.mxu0 0
        %1653 = vmatpush1.bf16.msra.mxu0 0
        %1654 = vmatprep.subr.bf16.mxu0 0
        %1655 = vmatpush1.bf16.msra.mxu0 0
        %1656 = vmatprep.subr.bf16.mxu0 0
        %1657 = vmatpush1.bf16.msra.mxu0 0
        %1658 = vmatprep.subr.bf16.mxu0 0
        %1659 = vmatpush1.bf16.msra.mxu0 0
        %1660 = vmatprep.subr.bf16.mxu0 0
        %1661 = vmatpush1.bf16.msra.mxu0 0
        %1662 = vmatprep.subr.bf16.mxu0 0
        %1663 = vmatpush1.bf16.msra.mxu0 0
        %1664 = vmatprep.subr.bf16.mxu0 0
        %1665 = vmatpush1.bf16.msra.mxu0 %v1648
        %1666 = vmatprep.subr.bf16.mxu0 0
        %1667 = vmatpush2.bf16.msra.mxu0 0
        %1668 = vmatprep.subr.bf16.mxu0 0
        %1669 = vmatpush2.bf16.msra.mxu0 0
        %1670 = vmatprep.subr.bf16.mxu0 0
        %1671 = vmatpush2.bf16.msra.mxu0 0
        %1672 = vmatprep.subr.bf16.mxu0 0
        %1673 = vmatpush2.bf16.msra.mxu0 0
        %1674 = vmatprep.subr.bf16.mxu0 0
        %1675 = vmatpush2.bf16.msra.mxu0 0
        %1676 = vmatprep.subr.bf16.mxu0 0
        %1677 = vmatpush2.bf16.msra.mxu0 0
        %1678 = vmatprep.subr.bf16.mxu0 0
        %1679 = vmatpush2.bf16.msra.mxu0 0
        %1680 = vmatprep.subr.bf16.mxu0 0
        %1681 = vmatpush2.bf16.msra.mxu0 0
        %1682 = vmatprep.mubr.bf16.mxu0 0
        %1683 = vmatmul.mubr.bf16.gmra.mxu0 %v1644
        %v1684 = vpop.f32.mrf.mxu0
        %v1685 = vadd.f32 0.0, %v1684
        %v1686 = vpop.f32.mrf.mxu0
        %v1687 = vpop.f32.mrf.mxu0
        %v1688 = vpop.f32.mrf.mxu0
        %1689 = vdwg.mxu0
        %v1691 = vsel %vm1618, %v1642, 0
        %v1694 = vsel %vm1646, %v1524, 0
        %1696 = vmatprep.subr.bf16.mxu0 0
        %1697 = vmatpush1.bf16.msra.mxu0 0
        %1698 = vmatprep.subr.bf16.mxu0 0
        %1699 = vmatpush1.bf16.msra.mxu0 0
        %1700 = vmatprep.subr.bf16.mxu0 0
        %1701 = vmatpush1.bf16.msra.mxu0 0
        %1702 = vmatprep.subr.bf16.mxu0 0
        %1703 = vmatpush1.bf16.msra.mxu0 0
        %1704 = vmatprep.subr.bf16.mxu0 0
        %1705 = vmatpush1.bf16.msra.mxu0 0
        %1706 = vmatprep.subr.bf16.mxu0 0
        %1707 = vmatpush1.bf16.msra.mxu0 0
        %1708 = vmatprep.subr.bf16.mxu0 0
        %1709 = vmatpush1.bf16.msra.mxu0 0
        %1710 = vmatprep.subr.bf16.mxu0 0
        %1711 = vmatpush1.bf16.msra.mxu0 %v1694
        %1712 = vmatprep.subr.bf16.mxu0 0
        %1713 = vmatpush2.bf16.msra.mxu0 0
        %1714 = vmatprep.subr.bf16.mxu0 0
        %1715 = vmatpush2.bf16.msra.mxu0 0
        %1716 = vmatprep.subr.bf16.mxu0 0
        %1717 = vmatpush2.bf16.msra.mxu0 0
        %1718 = vmatprep.subr.bf16.mxu0 0
        %1719 = vmatpush2.bf16.msra.mxu0 0
        %1720 = vmatprep.subr.bf16.mxu0 0
        %1721 = vmatpush2.bf16.msra.mxu0 0
        %1722 = vmatprep.subr.bf16.mxu0 0
        %1723 = vmatpush2.bf16.msra.mxu0 0
        %1724 = vmatprep.subr.bf16.mxu0 0
        %1725 = vmatpush2.bf16.msra.mxu0 0
        %1726 = vmatprep.subr.bf16.mxu0 0
        %1727 = vmatpush2.bf16.msra.mxu0 0
        %1728 = vmatprep.mubr.bf16.mxu0 0
        %1729 = vmatmul.mubr.bf16.gmra.mxu0 %v1691
        %v1730 = vpop.f32.mrf.mxu0
        %v1731 = vadd.f32 0.0, %v1730
        %v1732 = vpop.f32.mrf.mxu0
        %v1733 = vpop.f32.mrf.mxu0
        %v1734 = vpop.f32.mrf.mxu0
        %1735 = vdwg.mxu0
        %1737 = vrot.lane.b32.xlu0 %v1519, 112
        %v1738 = vpop.permute.xlu0 %1737
        %1740 = vrot.lane.b32.xlu0 %v1521, 112
        %v1741 = vpop.permute.xlu0 %1740
        %v1743 = vsel %vm1525, %v1738, 0
        %v1746 = vsel %vm1525, %v1741, 0
        %1748 = vmatprep.subr.bf16.mxu0 0
        %1749 = vmatpush1.bf16.xpose.msra.mxu0 0
        %1750 = vmatprep.subr.bf16.mxu0 0
        %1751 = vmatpush1.bf16.xpose.msra.mxu0 0
        %1752 = vmatprep.subr.bf16.mxu0 0
        %1753 = vmatpush1.bf16.xpose.msra.mxu0 0
        %1754 = vmatprep.subr.bf16.mxu0 0
        %1755 = vmatpush1.bf16.xpose.msra.mxu0 0
        %1756 = vmatprep.subr.bf16.mxu0 0
        %1757 = vmatpush1.bf16.xpose.msra.mxu0 0
        %1758 = vmatprep.subr.bf16.mxu0 0
        %1759 = vmatpush1.bf16.xpose.msra.mxu0 0
        %1760 = vmatprep.subr.bf16.mxu0 0
        %1761 = vmatpush1.bf16.xpose.msra.mxu0 0
        %1762 = vmatprep.subr.bf16.mxu0 0
        %1763 = vmatpush1.bf16.xpose.msra.mxu0 %v1746
        %1764 = vmatprep.subr.bf16.mxu0 0
        %1765 = vmatpush2.bf16.xpose.msra.mxu0 0
        %1766 = vmatprep.subr.bf16.mxu0 0
        %1767 = vmatpush2.bf16.xpose.msra.mxu0 0
        %1768 = vmatprep.subr.bf16.mxu0 0
        %1769 = vmatpush2.bf16.xpose.msra.mxu0 0
        %1770 = vmatprep.subr.bf16.mxu0 0
        %1771 = vmatpush2.bf16.xpose.msra.mxu0 0
        %1772 = vmatprep.subr.bf16.mxu0 0
        %1773 = vmatpush2.bf16.xpose.msra.mxu0 0
        %1774 = vmatprep.subr.bf16.mxu0 0
        %1775 = vmatpush2.bf16.xpose.msra.mxu0 0
        %1776 = vmatprep.subr.bf16.mxu0 0
        %1777 = vmatpush2.bf16.xpose.msra.mxu0 0
        %1778 = vmatprep.subr.bf16.mxu0 0
        %1779 = vmatpush2.bf16.xpose.msra.mxu0 0
        %1780 = vmatprep.mubr.bf16.mxu0 0
        %1781 = vmatmul.mubr.bf16.gmra.mxu0 %v1743
        %v1782 = vpop.f32.mrf.mxu0
        %v1783 = vadd.f32 0.0, %v1782
        %v1784 = vpop.f32.mrf.mxu0
        %v1785 = vpop.f32.mrf.mxu0
        %v1786 = vpop.f32.mrf.mxu0
        %1787 = vdwg.mxu0
        %1789 = vrot.lane.b32.xlu0 %v1520, 112
        %v1790 = vpop.permute.xlu0 %1789
        %1792 = vrot.lane.b32.xlu0 %v1522, 112
        %v1793 = vpop.permute.xlu0 %1792
        %v1795 = vsel %vm1525, %v1790, 0
        %v1798 = vsel %vm1525, %v1793, 0
        %1800 = vmatprep.subr.bf16.mxu0 0
        %1801 = vmatpush1.bf16.xpose.msra.mxu0 0
        %1802 = vmatprep.subr.bf16.mxu0 0
        %1803 = vmatpush1.bf16.xpose.msra.mxu0 0
        %1804 = vmatprep.subr.bf16.mxu0 0
        %1805 = vmatpush1.bf16.xpose.msra.mxu0 0
        %1806 = vmatprep.subr.bf16.mxu0 0
        %1807 = vmatpush1.bf16.xpose.msra.mxu0 0
        %1808 = vmatprep.subr.bf16.mxu0 0
        %1809 = vmatpush1.bf16.xpose.msra.mxu0 0
        %1810 = vmatprep.subr.bf16.mxu0 0
        %1811 = vmatpush1.bf16.xpose.msra.mxu0 0
        %1812 = vmatprep.subr.bf16.mxu0 0
        %1813 = vmatpush1.bf16.xpose.msra.mxu0 0
        %1814 = vmatprep.subr.bf16.mxu0 0
        %1815 = vmatpush1.bf16.xpose.msra.mxu0 %v1798
        %1816 = vmatprep.subr.bf16.mxu0 0
        %1817 = vmatpush2.bf16.xpose.msra.mxu0 0
        %1818 = vmatprep.subr.bf16.mxu0 0
        %1819 = vmatpush2.bf16.xpose.msra.mxu0 0
        %1820 = vmatprep.subr.bf16.mxu0 0
        %1821 = vmatpush2.bf16.xpose.msra.mxu0 0
        %1822 = vmatprep.subr.bf16.mxu0 0
        %1823 = vmatpush2.bf16.xpose.msra.mxu0 0
        %1824 = vmatprep.subr.bf16.mxu0 0
        %1825 = vmatpush2.bf16.xpose.msra.mxu0 0
        %1826 = vmatprep.subr.bf16.mxu0 0
        %1827 = vmatpush2.bf16.xpose.msra.mxu0 0
        %1828 = vmatprep.subr.bf16.mxu0 0
        %1829 = vmatpush2.bf16.xpose.msra.mxu0 0
        %1830 = vmatprep.subr.bf16.mxu0 0
        %1831 = vmatpush2.bf16.xpose.msra.mxu0 0
        %1832 = vmatprep.mubr.bf16.mxu0 0
        %1833 = vmatmul.mubr.bf16.gmra.mxu0 %v1795
        %v1834 = vpop.f32.mrf.mxu0
        %v1835 = vadd.f32 0.0, %v1834
        %v1836 = vpop.f32.mrf.mxu0
        %v1837 = vpop.f32.mrf.mxu0
        %v1838 = vpop.f32.mrf.mxu0
        %1839 = vdwg.mxu0
        %v1840 = vsel %vm1618, %v1783, -inf
        %1841 = vmax.xlane.f32.xlu0 %v1840
        %v1842 = vpop.xlane.xlu0 %1841
        %v1843 = vsel %vm1618, %v1835, -inf
        %1844 = vmax.xlane.f32.xlu0 %v1843
        %v1845 = vpop.xlane.xlu0 %1844
        %v1846 = vsub.f32 %v1783, %v1842
        %v1847 = vsub.f32 %v1835, %v1845
        %v1848 = vmul.f32 %v1846, 1.442695
        %v1849 = vpow.pop %v1848
        %v1850 = vmul.f32 %v1847, 1.442695
        %v1851 = vpow.pop %v1850
        %v1852 = vsel %vm1618, %v1849, 0.0
        %1853 = vadd.xlane.f32.xlu0 %v1852
        %v1854 = vpop.xlane.xlu0 %1853
        %v1855 = vsel %vm1618, %v1851, 0.0
        %1856 = vadd.xlane.f32.xlu0 %v1855
        %v1857 = vpop.xlane.xlu0 %1856
        %v1858 = vrcp.pop %v1854
        %v1859 = vrcp.pop %v1857
        %v1860 = vmul.f32 %v1849, %v1858
        %v1861 = vmul.f32 %v1851, %v1859
        %v1862 = vpack.c.bf16 %v1860, %v1860
        %v1863 = vpack.c.bf16 %v1861, %v1861
        %1865 = vrot.lane.b32.xlu0 %v1523, 112
        %v1866 = vpop.permute.xlu0 %1865
        %v1868 = vsel %vm1618, %v1862, 0
        %v1871 = vsel %vm1646, %v1866, 0
        %1873 = vmatprep.subr.bf16.mxu0 0
        %1874 = vmatpush1.bf16.msra.mxu0 0
        %1875 = vmatprep.subr.bf16.mxu0 0
        %1876 = vmatpush1.bf16.msra.mxu0 0
        %1877 = vmatprep.subr.bf16.mxu0 0
        %1878 = vmatpush1.bf16.msra.mxu0 0
        %1879 = vmatprep.subr.bf16.mxu0 0
        %1880 = vmatpush1.bf16.msra.mxu0 0
        %1881 = vmatprep.subr.bf16.mxu0 0
        %1882 = vmatpush1.bf16.msra.mxu0 0
        %1883 = vmatprep.subr.bf16.mxu0 0
        %1884 = vmatpush1.bf16.msra.mxu0 0
        %1885 = vmatprep.subr.bf16.mxu0 0
        %1886 = vmatpush1.bf16.msra.mxu0 0
        %1887 = vmatprep.subr.bf16.mxu0 0
        %1888 = vmatpush1.bf16.msra.mxu0 %v1871
        %1889 = vmatprep.subr.bf16.mxu0 0
        %1890 = vmatpush2.bf16.msra.mxu0 0
        %1891 = vmatprep.subr.bf16.mxu0 0
        %1892 = vmatpush2.bf16.msra.mxu0 0
        %1893 = vmatprep.subr.bf16.mxu0 0
        %1894 = vmatpush2.bf16.msra.mxu0 0
        %1895 = vmatprep.subr.bf16.mxu0 0
        %1896 = vmatpush2.bf16.msra.mxu0 0
        %1897 = vmatprep.subr.bf16.mxu0 0
        %1898 = vmatpush2.bf16.msra.mxu0 0
        %1899 = vmatprep.subr.bf16.mxu0 0
        %1900 = vmatpush2.bf16.msra.mxu0 0
        %1901 = vmatprep.subr.bf16.mxu0 0
        %1902 = vmatpush2.bf16.msra.mxu0 0
        %1903 = vmatprep.subr.bf16.mxu0 0
        %1904 = vmatpush2.bf16.msra.mxu0 0
        %1905 = vmatprep.mubr.bf16.mxu0 0
        %1906 = vmatmul.mubr.bf16.gmra.mxu0 %v1868
        %v1907 = vpop.f32.mrf.mxu0
        %v1908 = vadd.f32 0.0, %v1907
        %v1909 = vpop.f32.mrf.mxu0
        %v1910 = vpop.f32.mrf.mxu0
        %v1911 = vpop.f32.mrf.mxu0
        %1912 = vdwg.mxu0
        %1914 = vrot.lane.b32.xlu0 %v1524, 112
        %v1915 = vpop.permute.xlu0 %1914
        %v1917 = vsel %vm1618, %v1863, 0
        %v1920 = vsel %vm1646, %v1915, 0
        %1922 = vmatprep.subr.bf16.mxu0 0
        %1923 = vmatpush1.bf16.msra.mxu0 0
        %1924 = vmatprep.subr.bf16.mxu0 0
        %1925 = vmatpush1.bf16.msra.mxu0 0
        %1926 = vmatprep.subr.bf16.mxu0 0
        %1927 = vmatpush1.bf16.msra.mxu0 0
        %1928 = vmatprep.subr.bf16.mxu0 0
        %1929 = vmatpush1.bf16.msra.mxu0 0
        %1930 = vmatprep.subr.bf16.mxu0 0
        %1931 = vmatpush1.bf16.msra.mxu0 0
        %1932 = vmatprep.subr.bf16.mxu0 0
        %1933 = vmatpush1.bf16.msra.mxu0 0
        %1934 = vmatprep.subr.bf16.mxu0 0
        %1935 = vmatpush1.bf16.msra.mxu0 0
        %1936 = vmatprep.subr.bf16.mxu0 0
        %1937 = vmatpush1.bf16.msra.mxu0 %v1920
        %1938 = vmatprep.subr.bf16.mxu0 0
        %1939 = vmatpush2.bf16.msra.mxu0 0
        %1940 = vmatprep.subr.bf16.mxu0 0
        %1941 = vmatpush2.bf16.msra.mxu0 0
        %1942 = vmatprep.subr.bf16.mxu0 0
        %1943 = vmatpush2.bf16.msra.mxu0 0
        %1944 = vmatprep.subr.bf16.mxu0 0
        %1945 = vmatpush2.bf16.msra.mxu0 0
        %1946 = vmatprep.subr.bf16.mxu0 0
        %1947 = vmatpush2.bf16.msra.mxu0 0
        %1948 = vmatprep.subr.bf16.mxu0 0
        %1949 = vmatpush2.bf16.msra.mxu0 0
        %1950 = vmatprep.subr.bf16.mxu0 0
        %1951 = vmatpush2.bf16.msra.mxu0 0
        %1952 = vmatprep.subr.bf16.mxu0 0
        %1953 = vmatpush2.bf16.msra.mxu0 0
        %1954 = vmatprep.mubr.bf16.mxu0 0
        %1955 = vmatmul.mubr.bf16.gmra.mxu0 %v1917
        %v1956 = vpop.f32.mrf.mxu0
        %v1957 = vadd.f32 0.0, %v1956
        %v1958 = vpop.f32.mrf.mxu0
        %v1959 = vpop.f32.mrf.mxu0
        %v1960 = vpop.f32.mrf.mxu0
        %1961 = vdwg.mxu0
        %1962 = vrot.lane.b32.xlu0 %v1519, 96
        %v1963 = vpop.permute.xlu0 %1962
        %1964 = vrot.lane.b32.xlu0 %v1521, 96
        %v1965 = vpop.permute.xlu0 %1964
        %v1967 = vsel %vm1525, %v1963, 0
        %v1970 = vsel %vm1525, %v1965, 0
        %1972 = vmatprep.subr.bf16.mxu0 0
        %1973 = vmatpush1.bf16.xpose.msra.mxu0 0
        %1974 = vmatprep.subr.bf16.mxu0 0
        %1975 = vmatpush1.bf16.xpose.msra.mxu0 0
        %1976 = vmatprep.subr.bf16.mxu0 0
        %1977 = vmatpush1.bf16.xpose.msra.mxu0 0
        %1978 = vmatprep.subr.bf16.mxu0 0
        %1979 = vmatpush1.bf16.xpose.msra.mxu0 0
        %1980 = vmatprep.subr.bf16.mxu0 0
        %1981 = vmatpush1.bf16.xpose.msra.mxu0 0
        %1982 = vmatprep.subr.bf16.mxu0 0
        %1983 = vmatpush1.bf16.xpose.msra.mxu0 0
        %1984 = vmatprep.subr.bf16.mxu0 0
        %1985 = vmatpush1.bf16.xpose.msra.mxu0 0
        %1986 = vmatprep.subr.bf16.mxu0 0
        %1987 = vmatpush1.bf16.xpose.msra.mxu0 %v1970
        %1988 = vmatprep.subr.bf16.mxu0 0
        %1989 = vmatpush2.bf16.xpose.msra.mxu0 0
        %1990 = vmatprep.subr.bf16.mxu0 0
        %1991 = vmatpush2.bf16.xpose.msra.mxu0 0
        %1992 = vmatprep.subr.bf16.mxu0 0
        %1993 = vmatpush2.bf16.xpose.msra.mxu0 0
        %1994 = vmatprep.subr.bf16.mxu0 0
        %1995 = vmatpush2.bf16.xpose.msra.mxu0 0
        %1996 = vmatprep.subr.bf16.mxu0 0
        %1997 = vmatpush2.bf16.xpose.msra.mxu0 0
        %1998 = vmatprep.subr.bf16.mxu0 0
        %1999 = vmatpush2.bf16.xpose.msra.mxu0 0
        %2000 = vmatprep.subr.bf16.mxu0 0
        %2001 = vmatpush2.bf16.xpose.msra.mxu0 0
        %2002 = vmatprep.subr.bf16.mxu0 0
        %2003 = vmatpush2.bf16.xpose.msra.mxu0 0
        %2004 = vmatprep.mubr.bf16.mxu0 0
        %2005 = vmatmul.mubr.bf16.gmra.mxu0 %v1967
        %v2006 = vpop.f32.mrf.mxu0
        %v2007 = vadd.f32 0.0, %v2006
        %v2008 = vpop.f32.mrf.mxu0
        %v2009 = vpop.f32.mrf.mxu0
        %v2010 = vpop.f32.mrf.mxu0
        %2011 = vdwg.mxu0
        %2012 = vrot.lane.b32.xlu0 %v1520, 96
        %v2013 = vpop.permute.xlu0 %2012
        %2014 = vrot.lane.b32.xlu0 %v1522, 96
        %v2015 = vpop.permute.xlu0 %2014
        %v2017 = vsel %vm1525, %v2013, 0
        %v2020 = vsel %vm1525, %v2015, 0
        %2022 = vmatprep.subr.bf16.mxu0 0
        %2023 = vmatpush1.bf16.xpose.msra.mxu0 0
        %2024 = vmatprep.subr.bf16.mxu0 0
        %2025 = vmatpush1.bf16.xpose.msra.mxu0 0
        %2026 = vmatprep.subr.bf16.mxu0 0
        %2027 = vmatpush1.bf16.xpose.msra.mxu0 0
        %2028 = vmatprep.subr.bf16.mxu0 0
        %2029 = vmatpush1.bf16.xpose.msra.mxu0 0
        %2030 = vmatprep.subr.bf16.mxu0 0
        %2031 = vmatpush1.bf16.xpose.msra.mxu0 0
        %2032 = vmatprep.subr.bf16.mxu0 0
        %2033 = vmatpush1.bf16.xpose.msra.mxu0 0
        %2034 = vmatprep.subr.bf16.mxu0 0
        %2035 = vmatpush1.bf16.xpose.msra.mxu0 0
        %2036 = vmatprep.subr.bf16.mxu0 0
        %2037 = vmatpush1.bf16.xpose.msra.mxu0 %v2020
        %2038 = vmatprep.subr.bf16.mxu0 0
        %2039 = vmatpush2.bf16.xpose.msra.mxu0 0
        %2040 = vmatprep.subr.bf16.mxu0 0
        %2041 = vmatpush2.bf16.xpose.msra.mxu0 0
        %2042 = vmatprep.subr.bf16.mxu0 0
        %2043 = vmatpush2.bf16.xpose.msra.mxu0 0
        %2044 = vmatprep.subr.bf16.mxu0 0
        %2045 = vmatpush2.bf16.xpose.msra.mxu0 0
        %2046 = vmatprep.subr.bf16.mxu0 0
        %2047 = vmatpush2.bf16.xpose.msra.mxu0 0
        %2048 = vmatprep.subr.bf16.mxu0 0
        %2049 = vmatpush2.bf16.xpose.msra.mxu0 0
        %2050 = vmatprep.subr.bf16.mxu0 0
        %2051 = vmatpush2.bf16.xpose.msra.mxu0 0
        %2052 = vmatprep.subr.bf16.mxu0 0
        %2053 = vmatpush2.bf16.xpose.msra.mxu0 0
        %2054 = vmatprep.mubr.bf16.mxu0 0
        %2055 = vmatmul.mubr.bf16.gmra.mxu0 %v2017
        %v2056 = vpop.f32.mrf.mxu0
        %v2057 = vadd.f32 0.0, %v2056
        %v2058 = vpop.f32.mrf.mxu0
        %v2059 = vpop.f32.mrf.mxu0
        %v2060 = vpop.f32.mrf.mxu0
        %2061 = vdwg.mxu0
        %v2062 = vsel %vm1618, %v2007, -inf
        %2063 = vmax.xlane.f32.xlu0 %v2062
        %v2064 = vpop.xlane.xlu0 %2063
        %v2065 = vsel %vm1618, %v2057, -inf
        %2066 = vmax.xlane.f32.xlu0 %v2065
        %v2067 = vpop.xlane.xlu0 %2066
        %v2068 = vsub.f32 %v2007, %v2064
        %v2069 = vsub.f32 %v2057, %v2067
        %v2070 = vmul.f32 %v2068, 1.442695
        %v2071 = vpow.pop %v2070
        %v2072 = vmul.f32 %v2069, 1.442695
        %v2073 = vpow.pop %v2072
        %v2074 = vsel %vm1618, %v2071, 0.0
        %2075 = vadd.xlane.f32.xlu0 %v2074
        %v2076 = vpop.xlane.xlu0 %2075
        %v2077 = vsel %vm1618, %v2073, 0.0
        %2078 = vadd.xlane.f32.xlu0 %v2077
        %v2079 = vpop.xlane.xlu0 %2078
        %v2080 = vrcp.pop %v2076
        %v2081 = vrcp.pop %v2079
        %v2082 = vmul.f32 %v2071, %v2080
        %v2083 = vmul.f32 %v2073, %v2081
        %v2084 = vpack.c.bf16 %v2082, %v2082
        %v2085 = vpack.c.bf16 %v2083, %v2083
        %2086 = vrot.lane.b32.xlu0 %v1523, 96
        %v2087 = vpop.permute.xlu0 %2086
        %v2089 = vsel %vm1618, %v2084, 0
        %v2092 = vsel %vm1646, %v2087, 0
        %2094 = vmatprep.subr.bf16.mxu0 0
        %2095 = vmatpush1.bf16.msra.mxu0 0
        %2096 = vmatprep.subr.bf16.mxu0 0
        %2097 = vmatpush1.bf16.msra.mxu0 0
        %2098 = vmatprep.subr.bf16.mxu0 0
        %2099 = vmatpush1.bf16.msra.mxu0 0
        %2100 = vmatprep.subr.bf16.mxu0 0
        %2101 = vmatpush1.bf16.msra.mxu0 0
        %2102 = vmatprep.subr.bf16.mxu0 0
        %2103 = vmatpush1.bf16.msra.mxu0 0
        %2104 = vmatprep.subr.bf16.mxu0 0
        %2105 = vmatpush1.bf16.msra.mxu0 0
        %2106 = vmatprep.subr.bf16.mxu0 0
        %2107 = vmatpush1.bf16.msra.mxu0 0
        %2108 = vmatprep.subr.bf16.mxu0 0
        %2109 = vmatpush1.bf16.msra.mxu0 %v2092
        %2110 = vmatprep.subr.bf16.mxu0 0
        %2111 = vmatpush2.bf16.msra.mxu0 0
        %2112 = vmatprep.subr.bf16.mxu0 0
        %2113 = vmatpush2.bf16.msra.mxu0 0
        %2114 = vmatprep.subr.bf16.mxu0 0
        %2115 = vmatpush2.bf16.msra.mxu0 0
        %2116 = vmatprep.subr.bf16.mxu0 0
        %2117 = vmatpush2.bf16.msra.mxu0 0
        %2118 = vmatprep.subr.bf16.mxu0 0
        %2119 = vmatpush2.bf16.msra.mxu0 0
        %2120 = vmatprep.subr.bf16.mxu0 0
        %2121 = vmatpush2.bf16.msra.mxu0 0
        %2122 = vmatprep.subr.bf16.mxu0 0
        %2123 = vmatpush2.bf16.msra.mxu0 0
        %2124 = vmatprep.subr.bf16.mxu0 0
        %2125 = vmatpush2.bf16.msra.mxu0 0
        %2126 = vmatprep.mubr.bf16.mxu0 0
        %2127 = vmatmul.mubr.bf16.gmra.mxu0 %v2089
        %v2128 = vpop.f32.mrf.mxu0
        %v2129 = vadd.f32 0.0, %v2128
        %v2130 = vpop.f32.mrf.mxu0
        %v2131 = vpop.f32.mrf.mxu0
        %v2132 = vpop.f32.mrf.mxu0
        %2133 = vdwg.mxu0
        %2134 = vrot.lane.b32.xlu0 %v1524, 96
        %v2135 = vpop.permute.xlu0 %2134
        %v2137 = vsel %vm1618, %v2085, 0
        %v2140 = vsel %vm1646, %v2135, 0
        %2142 = vmatprep.subr.bf16.mxu0 0
        %2143 = vmatpush1.bf16.msra.mxu0 0
        %2144 = vmatprep.subr.bf16.mxu0 0
        %2145 = vmatpush1.bf16.msra.mxu0 0
        %2146 = vmatprep.subr.bf16.mxu0 0
        %2147 = vmatpush1.bf16.msra.mxu0 0
        %2148 = vmatprep.subr.bf16.mxu0 0
        %2149 = vmatpush1.bf16.msra.mxu0 0
        %2150 = vmatprep.subr.bf16.mxu0 0
        %2151 = vmatpush1.bf16.msra.mxu0 0
        %2152 = vmatprep.subr.bf16.mxu0 0
        %2153 = vmatpush1.bf16.msra.mxu0 0
        %2154 = vmatprep.subr.bf16.mxu0 0
        %2155 = vmatpush1.bf16.msra.mxu0 0
        %2156 = vmatprep.subr.bf16.mxu0 0
        %2157 = vmatpush1.bf16.msra.mxu0 %v2140
        %2158 = vmatprep.subr.bf16.mxu0 0
        %2159 = vmatpush2.bf16.msra.mxu0 0
        %2160 = vmatprep.subr.bf16.mxu0 0
        %2161 = vmatpush2.bf16.msra.mxu0 0
        %2162 = vmatprep.subr.bf16.mxu0 0
        %2163 = vmatpush2.bf16.msra.mxu0 0
        %2164 = vmatprep.subr.bf16.mxu0 0
        %2165 = vmatpush2.bf16.msra.mxu0 0
        %2166 = vmatprep.subr.bf16.mxu0 0
        %2167 = vmatpush2.bf16.msra.mxu0 0
        %2168 = vmatprep.subr.bf16.mxu0 0
        %2169 = vmatpush2.bf16.msra.mxu0 0
        %2170 = vmatprep.subr.bf16.mxu0 0
        %2171 = vmatpush2.bf16.msra.mxu0 0
        %2172 = vmatprep.subr.bf16.mxu0 0
        %2173 = vmatpush2.bf16.msra.mxu0 0
        %2174 = vmatprep.mubr.bf16.mxu0 0
        %2175 = vmatmul.mubr.bf16.gmra.mxu0 %v2137
        %v2176 = vpop.f32.mrf.mxu0
        %v2177 = vadd.f32 0.0, %v2176
        %v2178 = vpop.f32.mrf.mxu0
        %v2179 = vpop.f32.mrf.mxu0
        %v2180 = vpop.f32.mrf.mxu0
        %2181 = vdwg.mxu0
        %2182 = vrot.lane.b32.xlu0 %v1519, 80
        %v2183 = vpop.permute.xlu0 %2182
        %2184 = vrot.lane.b32.xlu0 %v1521, 80
        %v2185 = vpop.permute.xlu0 %2184
        %v2187 = vsel %vm1525, %v2183, 0
        %v2190 = vsel %vm1525, %v2185, 0
        %2192 = vmatprep.subr.bf16.mxu0 0
        %2193 = vmatpush1.bf16.xpose.msra.mxu0 0
        %2194 = vmatprep.subr.bf16.mxu0 0
        %2195 = vmatpush1.bf16.xpose.msra.mxu0 0
        %2196 = vmatprep.subr.bf16.mxu0 0
        %2197 = vmatpush1.bf16.xpose.msra.mxu0 0
        %2198 = vmatprep.subr.bf16.mxu0 0
        %2199 = vmatpush1.bf16.xpose.msra.mxu0 0
        %2200 = vmatprep.subr.bf16.mxu0 0
        %2201 = vmatpush1.bf16.xpose.msra.mxu0 0
        %2202 = vmatprep.subr.bf16.mxu0 0
        %2203 = vmatpush1.bf16.xpose.msra.mxu0 0
        %2204 = vmatprep.subr.bf16.mxu0 0
        %2205 = vmatpush1.bf16.xpose.msra.mxu0 0
        %2206 = vmatprep.subr.bf16.mxu0 0
        %2207 = vmatpush1.bf16.xpose.msra.mxu0 %v2190
        %2208 = vmatprep.subr.bf16.mxu0 0
        %2209 = vmatpush2.bf16.xpose.msra.mxu0 0
        %2210 = vmatprep.subr.bf16.mxu0 0
        %2211 = vmatpush2.bf16.xpose.msra.mxu0 0
        %2212 = vmatprep.subr.bf16.mxu0 0
        %2213 = vmatpush2.bf16.xpose.msra.mxu0 0
        %2214 = vmatprep.subr.bf16.mxu0 0
        %2215 = vmatpush2.bf16.xpose.msra.mxu0 0
        %2216 = vmatprep.subr.bf16.mxu0 0
        %2217 = vmatpush2.bf16.xpose.msra.mxu0 0
        %2218 = vmatprep.subr.bf16.mxu0 0
        %2219 = vmatpush2.bf16.xpose.msra.mxu0 0
        %2220 = vmatprep.subr.bf16.mxu0 0
        %2221 = vmatpush2.bf16.xpose.msra.mxu0 0
        %2222 = vmatprep.subr.bf16.mxu0 0
        %2223 = vmatpush2.bf16.xpose.msra.mxu0 0
        %2224 = vmatprep.mubr.bf16.mxu0 0
        %2225 = vmatmul.mubr.bf16.gmra.mxu0 %v2187
        %v2226 = vpop.f32.mrf.mxu0
        %v2227 = vadd.f32 0.0, %v2226
        %v2228 = vpop.f32.mrf.mxu0
        %v2229 = vpop.f32.mrf.mxu0
        %v2230 = vpop.f32.mrf.mxu0
        %2231 = vdwg.mxu0
        %2232 = vrot.lane.b32.xlu0 %v1520, 80
        %v2233 = vpop.permute.xlu0 %2232
        %2234 = vrot.lane.b32.xlu0 %v1522, 80
        %v2235 = vpop.permute.xlu0 %2234
        %v2237 = vsel %vm1525, %v2233, 0
        %v2240 = vsel %vm1525, %v2235, 0
        %2242 = vmatprep.subr.bf16.mxu0 0
        %2243 = vmatpush1.bf16.xpose.msra.mxu0 0
        %2244 = vmatprep.subr.bf16.mxu0 0
        %2245 = vmatpush1.bf16.xpose.msra.mxu0 0
        %2246 = vmatprep.subr.bf16.mxu0 0
        %2247 = vmatpush1.bf16.xpose.msra.mxu0 0
        %2248 = vmatprep.subr.bf16.mxu0 0
        %2249 = vmatpush1.bf16.xpose.msra.mxu0 0
        %2250 = vmatprep.subr.bf16.mxu0 0
        %2251 = vmatpush1.bf16.xpose.msra.mxu0 0
        %2252 = vmatprep.subr.bf16.mxu0 0
        %2253 = vmatpush1.bf16.xpose.msra.mxu0 0
        %2254 = vmatprep.subr.bf16.mxu0 0
        %2255 = vmatpush1.bf16.xpose.msra.mxu0 0
        %2256 = vmatprep.subr.bf16.mxu0 0
        %2257 = vmatpush1.bf16.xpose.msra.mxu0 %v2240
        %2258 = vmatprep.subr.bf16.mxu0 0
        %2259 = vmatpush2.bf16.xpose.msra.mxu0 0
        %2260 = vmatprep.subr.bf16.mxu0 0
        %2261 = vmatpush2.bf16.xpose.msra.mxu0 0
        %2262 = vmatprep.subr.bf16.mxu0 0
        %2263 = vmatpush2.bf16.xpose.msra.mxu0 0
        %2264 = vmatprep.subr.bf16.mxu0 0
        %2265 = vmatpush2.bf16.xpose.msra.mxu0 0
        %2266 = vmatprep.subr.bf16.mxu0 0
        %2267 = vmatpush2.bf16.xpose.msra.mxu0 0
        %2268 = vmatprep.subr.bf16.mxu0 0
        %2269 = vmatpush2.bf16.xpose.msra.mxu0 0
        %2270 = vmatprep.subr.bf16.mxu0 0
        %2271 = vmatpush2.bf16.xpose.msra.mxu0 0
        %2272 = vmatprep.subr.bf16.mxu0 0
        %2273 = vmatpush2.bf16.xpose.msra.mxu0 0
        %2274 = vmatprep.mubr.bf16.mxu0 0
        %2275 = vmatmul.mubr.bf16.gmra.mxu0 %v2237
        %v2276 = vpop.f32.mrf.mxu0
        %v2277 = vadd.f32 0.0, %v2276
        %v2278 = vpop.f32.mrf.mxu0
        %v2279 = vpop.f32.mrf.mxu0
        %v2280 = vpop.f32.mrf.mxu0
        %2281 = vdwg.mxu0
        %v2282 = vsel %vm1618, %v2227, -inf
        %2283 = vmax.xlane.f32.xlu0 %v2282
        %v2284 = vpop.xlane.xlu0 %2283
        %v2285 = vsel %vm1618, %v2277, -inf
        %2286 = vmax.xlane.f32.xlu0 %v2285
        %v2287 = vpop.xlane.xlu0 %2286
        %v2288 = vsub.f32 %v2227, %v2284
        %v2289 = vsub.f32 %v2277, %v2287
        %v2290 = vmul.f32 %v2288, 1.442695
        %v2291 = vpow.pop %v2290
        %v2292 = vmul.f32 %v2289, 1.442695
        %v2293 = vpow.pop %v2292
        %v2294 = vsel %vm1618, %v2291, 0.0
        %2295 = vadd.xlane.f32.xlu0 %v2294
        %v2296 = vpop.xlane.xlu0 %2295
        %v2297 = vsel %vm1618, %v2293, 0.0
        %2298 = vadd.xlane.f32.xlu0 %v2297
        %v2299 = vpop.xlane.xlu0 %2298
        %v2300 = vrcp.pop %v2296
        %v2301 = vrcp.pop %v2299
        %v2302 = vmul.f32 %v2291, %v2300
        %v2303 = vmul.f32 %v2293, %v2301
        %v2304 = vpack.c.bf16 %v2302, %v2302
        %v2305 = vpack.c.bf16 %v2303, %v2303
        %2306 = vrot.lane.b32.xlu0 %v1523, 80
        %v2307 = vpop.permute.xlu0 %2306
        %v2309 = vsel %vm1618, %v2304, 0
        %v2312 = vsel %vm1646, %v2307, 0
        %2314 = vmatprep.subr.bf16.mxu0 0
        %2315 = vmatpush1.bf16.msra.mxu0 0
        %2316 = vmatprep.subr.bf16.mxu0 0
        %2317 = vmatpush1.bf16.msra.mxu0 0
        %2318 = vmatprep.subr.bf16.mxu0 0
        %2319 = vmatpush1.bf16.msra.mxu0 0
        %2320 = vmatprep.subr.bf16.mxu0 0
        %2321 = vmatpush1.bf16.msra.mxu0 0
        %2322 = vmatprep.subr.bf16.mxu0 0
        %2323 = vmatpush1.bf16.msra.mxu0 0
        %2324 = vmatprep.subr.bf16.mxu0 0
        %2325 = vmatpush1.bf16.msra.mxu0 0
        %2326 = vmatprep.subr.bf16.mxu0 0
        %2327 = vmatpush1.bf16.msra.mxu0 0
        %2328 = vmatprep.subr.bf16.mxu0 0
        %2329 = vmatpush1.bf16.msra.mxu0 %v2312
        %2330 = vmatprep.subr.bf16.mxu0 0
        %2331 = vmatpush2.bf16.msra.mxu0 0
        %2332 = vmatprep.subr.bf16.mxu0 0
        %2333 = vmatpush2.bf16.msra.mxu0 0
        %2334 = vmatprep.subr.bf16.mxu0 0
        %2335 = vmatpush2.bf16.msra.mxu0 0
        %2336 = vmatprep.subr.bf16.mxu0 0
        %2337 = vmatpush2.bf16.msra.mxu0 0
        %2338 = vmatprep.subr.bf16.mxu0 0
        %2339 = vmatpush2.bf16.msra.mxu0 0
        %2340 = vmatprep.subr.bf16.mxu0 0
        %2341 = vmatpush2.bf16.msra.mxu0 0
        %2342 = vmatprep.subr.bf16.mxu0 0
        %2343 = vmatpush2.bf16.msra.mxu0 0
        %2344 = vmatprep.subr.bf16.mxu0 0
        %2345 = vmatpush2.bf16.msra.mxu0 0
        %2346 = vmatprep.mubr.bf16.mxu0 0
        %2347 = vmatmul.mubr.bf16.gmra.mxu0 %v2309
        %v2348 = vpop.f32.mrf.mxu0
        %v2349 = vadd.f32 0.0, %v2348
        %v2350 = vpop.f32.mrf.mxu0
        %v2351 = vpop.f32.mrf.mxu0
        %v2352 = vpop.f32.mrf.mxu0
        %2353 = vdwg.mxu0
        %2354 = vrot.lane.b32.xlu0 %v1524, 80
        %v2355 = vpop.permute.xlu0 %2354
        %v2357 = vsel %vm1618, %v2305, 0
        %v2360 = vsel %vm1646, %v2355, 0
        %2362 = vmatprep.subr.bf16.mxu0 0
        %2363 = vmatpush1.bf16.msra.mxu0 0
        %2364 = vmatprep.subr.bf16.mxu0 0
        %2365 = vmatpush1.bf16.msra.mxu0 0
        %2366 = vmatprep.subr.bf16.mxu0 0
        %2367 = vmatpush1.bf16.msra.mxu0 0
        %2368 = vmatprep.subr.bf16.mxu0 0
        %2369 = vmatpush1.bf16.msra.mxu0 0
        %2370 = vmatprep.subr.bf16.mxu0 0
        %2371 = vmatpush1.bf16.msra.mxu0 0
        %2372 = vmatprep.subr.bf16.mxu0 0
        %2373 = vmatpush1.bf16.msra.mxu0 0
        %2374 = vmatprep.subr.bf16.mxu0 0
        %2375 = vmatpush1.bf16.msra.mxu0 0
        %2376 = vmatprep.subr.bf16.mxu0 0
        %2377 = vmatpush1.bf16.msra.mxu0 %v2360
        %2378 = vmatprep.subr.bf16.mxu0 0
        %2379 = vmatpush2.bf16.msra.mxu0 0
        %2380 = vmatprep.subr.bf16.mxu0 0
        %2381 = vmatpush2.bf16.msra.mxu0 0
        %2382 = vmatprep.subr.bf16.mxu0 0
        %2383 = vmatpush2.bf16.msra.mxu0 0
        %2384 = vmatprep.subr.bf16.mxu0 0
        %2385 = vmatpush2.bf16.msra.mxu0 0
        %2386 = vmatprep.subr.bf16.mxu0 0
        %2387 = vmatpush2.bf16.msra.mxu0 0
        %2388 = vmatprep.subr.bf16.mxu0 0
        %2389 = vmatpush2.bf16.msra.mxu0 0
        %2390 = vmatprep.subr.bf16.mxu0 0
        %2391 = vmatpush2.bf16.msra.mxu0 0
        %2392 = vmatprep.subr.bf16.mxu0 0
        %2393 = vmatpush2.bf16.msra.mxu0 0
        %2394 = vmatprep.mubr.bf16.mxu0 0
        %2395 = vmatmul.mubr.bf16.gmra.mxu0 %v2357
        %v2396 = vpop.f32.mrf.mxu0
        %v2397 = vadd.f32 0.0, %v2396
        %v2398 = vpop.f32.mrf.mxu0
        %v2399 = vpop.f32.mrf.mxu0
        %v2400 = vpop.f32.mrf.mxu0
        %2401 = vdwg.mxu0
        %2402 = vrot.lane.b32.xlu0 %v1519, 64
        %v2403 = vpop.permute.xlu0 %2402
        %2404 = vrot.lane.b32.xlu0 %v1521, 64
        %v2405 = vpop.permute.xlu0 %2404
        %v2407 = vsel %vm1525, %v2403, 0
        %v2410 = vsel %vm1525, %v2405, 0
        %2412 = vmatprep.subr.bf16.mxu0 0
        %2413 = vmatpush1.bf16.xpose.msra.mxu0 0
        %2414 = vmatprep.subr.bf16.mxu0 0
        %2415 = vmatpush1.bf16.xpose.msra.mxu0 0
        %2416 = vmatprep.subr.bf16.mxu0 0
        %2417 = vmatpush1.bf16.xpose.msra.mxu0 0
        %2418 = vmatprep.subr.bf16.mxu0 0
        %2419 = vmatpush1.bf16.xpose.msra.mxu0 0
        %2420 = vmatprep.subr.bf16.mxu0 0
        %2421 = vmatpush1.bf16.xpose.msra.mxu0 0
        %2422 = vmatprep.subr.bf16.mxu0 0
        %2423 = vmatpush1.bf16.xpose.msra.mxu0 0
        %2424 = vmatprep.subr.bf16.mxu0 0
        %2425 = vmatpush1.bf16.xpose.msra.mxu0 0
        %2426 = vmatprep.subr.bf16.mxu0 0
        %2427 = vmatpush1.bf16.xpose.msra.mxu0 %v2410
        %2428 = vmatprep.subr.bf16.mxu0 0
        %2429 = vmatpush2.bf16.xpose.msra.mxu0 0
        %2430 = vmatprep.subr.bf16.mxu0 0
        %2431 = vmatpush2.bf16.xpose.msra.mxu0 0
        %2432 = vmatprep.subr.bf16.mxu0 0
        %2433 = vmatpush2.bf16.xpose.msra.mxu0 0
        %2434 = vmatprep.subr.bf16.mxu0 0
        %2435 = vmatpush2.bf16.xpose.msra.mxu0 0
        %2436 = vmatprep.subr.bf16.mxu0 0
        %2437 = vmatpush2.bf16.xpose.msra.mxu0 0
        %2438 = vmatprep.subr.bf16.mxu0 0
        %2439 = vmatpush2.bf16.xpose.msra.mxu0 0
        %2440 = vmatprep.subr.bf16.mxu0 0
        %2441 = vmatpush2.bf16.xpose.msra.mxu0 0
        %2442 = vmatprep.subr.bf16.mxu0 0
        %2443 = vmatpush2.bf16.xpose.msra.mxu0 0
        %2444 = vmatprep.mubr.bf16.mxu0 0
        %2445 = vmatmul.mubr.bf16.gmra.mxu0 %v2407
        %v2446 = vpop.f32.mrf.mxu0
        %v2447 = vadd.f32 0.0, %v2446
        %v2448 = vpop.f32.mrf.mxu0
        %v2449 = vpop.f32.mrf.mxu0
        %v2450 = vpop.f32.mrf.mxu0
        %2451 = vdwg.mxu0
        %2452 = vrot.lane.b32.xlu0 %v1520, 64
        %v2453 = vpop.permute.xlu0 %2452
        %2454 = vrot.lane.b32.xlu0 %v1522, 64
        %v2455 = vpop.permute.xlu0 %2454
        %v2457 = vsel %vm1525, %v2453, 0
        %v2460 = vsel %vm1525, %v2455, 0
        %2462 = vmatprep.subr.bf16.mxu0 0
        %2463 = vmatpush1.bf16.xpose.msra.mxu0 0
        %2464 = vmatprep.subr.bf16.mxu0 0
        %2465 = vmatpush1.bf16.xpose.msra.mxu0 0
        %2466 = vmatprep.subr.bf16.mxu0 0
        %2467 = vmatpush1.bf16.xpose.msra.mxu0 0
        %2468 = vmatprep.subr.bf16.mxu0 0
        %2469 = vmatpush1.bf16.xpose.msra.mxu0 0
        %2470 = vmatprep.subr.bf16.mxu0 0
        %2471 = vmatpush1.bf16.xpose.msra.mxu0 0
        %2472 = vmatprep.subr.bf16.mxu0 0
        %2473 = vmatpush1.bf16.xpose.msra.mxu0 0
        %2474 = vmatprep.subr.bf16.mxu0 0
        %2475 = vmatpush1.bf16.xpose.msra.mxu0 0
        %2476 = vmatprep.subr.bf16.mxu0 0
        %2477 = vmatpush1.bf16.xpose.msra.mxu0 %v2460
        %2478 = vmatprep.subr.bf16.mxu0 0
        %2479 = vmatpush2.bf16.xpose.msra.mxu0 0
        %2480 = vmatprep.subr.bf16.mxu0 0
        %2481 = vmatpush2.bf16.xpose.msra.mxu0 0
        %2482 = vmatprep.subr.bf16.mxu0 0
        %2483 = vmatpush2.bf16.xpose.msra.mxu0 0
        %2484 = vmatprep.subr.bf16.mxu0 0
        %2485 = vmatpush2.bf16.xpose.msra.mxu0 0
        %2486 = vmatprep.subr.bf16.mxu0 0
        %2487 = vmatpush2.bf16.xpose.msra.mxu0 0
        %2488 = vmatprep.subr.bf16.mxu0 0
        %2489 = vmatpush2.bf16.xpose.msra.mxu0 0
        %2490 = vmatprep.subr.bf16.mxu0 0
        %2491 = vmatpush2.bf16.xpose.msra.mxu0 0
        %2492 = vmatprep.subr.bf16.mxu0 0
        %2493 = vmatpush2.bf16.xpose.msra.mxu0 0
        %2494 = vmatprep.mubr.bf16.mxu0 0
        %2495 = vmatmul.mubr.bf16.gmra.mxu0 %v2457
        %v2496 = vpop.f32.mrf.mxu0
        %v2497 = vadd.f32 0.0, %v2496
        %v2498 = vpop.f32.mrf.mxu0
        %v2499 = vpop.f32.mrf.mxu0
        %v2500 = vpop.f32.mrf.mxu0
        %2501 = vdwg.mxu0
        %v2502 = vsel %vm1618, %v2447, -inf
        %2503 = vmax.xlane.f32.xlu0 %v2502
        %v2504 = vpop.xlane.xlu0 %2503
        %v2505 = vsel %vm1618, %v2497, -inf
        %2506 = vmax.xlane.f32.xlu0 %v2505
        %v2507 = vpop.xlane.xlu0 %2506
        %v2508 = vsub.f32 %v2447, %v2504
        %v2509 = vsub.f32 %v2497, %v2507
        %v2510 = vmul.f32 %v2508, 1.442695
        %v2511 = vpow.pop %v2510
        %v2512 = vmul.f32 %v2509, 1.442695
        %v2513 = vpow.pop %v2512
        %v2514 = vsel %vm1618, %v2511, 0.0
        %2515 = vadd.xlane.f32.xlu0 %v2514
        %v2516 = vpop.xlane.xlu0 %2515
        %v2517 = vsel %vm1618, %v2513, 0.0
        %2518 = vadd.xlane.f32.xlu0 %v2517
        %v2519 = vpop.xlane.xlu0 %2518
        %v2520 = vrcp.pop %v2516
        %v2521 = vrcp.pop %v2519
        %v2522 = vmul.f32 %v2511, %v2520
        %v2523 = vmul.f32 %v2513, %v2521
        %v2524 = vpack.c.bf16 %v2522, %v2522
        %v2525 = vpack.c.bf16 %v2523, %v2523
        %2526 = vrot.lane.b32.xlu0 %v1523, 64
        %v2527 = vpop.permute.xlu0 %2526
        %v2529 = vsel %vm1618, %v2524, 0
        %v2532 = vsel %vm1646, %v2527, 0
        %2534 = vmatprep.subr.bf16.mxu0 0
        %2535 = vmatpush1.bf16.msra.mxu0 0
        %2536 = vmatprep.subr.bf16.mxu0 0
        %2537 = vmatpush1.bf16.msra.mxu0 0
        %2538 = vmatprep.subr.bf16.mxu0 0
        %2539 = vmatpush1.bf16.msra.mxu0 0
        %2540 = vmatprep.subr.bf16.mxu0 0
        %2541 = vmatpush1.bf16.msra.mxu0 0
        %2542 = vmatprep.subr.bf16.mxu0 0
        %2543 = vmatpush1.bf16.msra.mxu0 0
        %2544 = vmatprep.subr.bf16.mxu0 0
        %2545 = vmatpush1.bf16.msra.mxu0 0
        %2546 = vmatprep.subr.bf16.mxu0 0
        %2547 = vmatpush1.bf16.msra.mxu0 0
        %2548 = vmatprep.subr.bf16.mxu0 0
        %2549 = vmatpush1.bf16.msra.mxu0 %v2532
        %2550 = vmatprep.subr.bf16.mxu0 0
        %2551 = vmatpush2.bf16.msra.mxu0 0
        %2552 = vmatprep.subr.bf16.mxu0 0
        %2553 = vmatpush2.bf16.msra.mxu0 0
        %2554 = vmatprep.subr.bf16.mxu0 0
        %2555 = vmatpush2.bf16.msra.mxu0 0
        %2556 = vmatprep.subr.bf16.mxu0 0
        %2557 = vmatpush2.bf16.msra.mxu0 0
        %2558 = vmatprep.subr.bf16.mxu0 0
        %2559 = vmatpush2.bf16.msra.mxu0 0
        %2560 = vmatprep.subr.bf16.mxu0 0
        %2561 = vmatpush2.bf16.msra.mxu0 0
        %2562 = vmatprep.subr.bf16.mxu0 0
        %2563 = vmatpush2.bf16.msra.mxu0 0
        %2564 = vmatprep.subr.bf16.mxu0 0
        %2565 = vmatpush2.bf16.msra.mxu0 0
        %2566 = vmatprep.mubr.bf16.mxu0 0
        %2567 = vmatmul.mubr.bf16.gmra.mxu0 %v2529
        %v2568 = vpop.f32.mrf.mxu0
        %v2569 = vadd.f32 0.0, %v2568
        %v2570 = vpop.f32.mrf.mxu0
        %v2571 = vpop.f32.mrf.mxu0
        %v2572 = vpop.f32.mrf.mxu0
        %2573 = vdwg.mxu0
        %2574 = vrot.lane.b32.xlu0 %v1524, 64
        %v2575 = vpop.permute.xlu0 %2574
        %v2577 = vsel %vm1618, %v2525, 0
        %v2580 = vsel %vm1646, %v2575, 0
        %2582 = vmatprep.subr.bf16.mxu0 0
        %2583 = vmatpush1.bf16.msra.mxu0 0
        %2584 = vmatprep.subr.bf16.mxu0 0
        %2585 = vmatpush1.bf16.msra.mxu0 0
        %2586 = vmatprep.subr.bf16.mxu0 0
        %2587 = vmatpush1.bf16.msra.mxu0 0
        %2588 = vmatprep.subr.bf16.mxu0 0
        %2589 = vmatpush1.bf16.msra.mxu0 0
        %2590 = vmatprep.subr.bf16.mxu0 0
        %2591 = vmatpush1.bf16.msra.mxu0 0
        %2592 = vmatprep.subr.bf16.mxu0 0
        %2593 = vmatpush1.bf16.msra.mxu0 0
        %2594 = vmatprep.subr.bf16.mxu0 0
        %2595 = vmatpush1.bf16.msra.mxu0 0
        %2596 = vmatprep.subr.bf16.mxu0 0
        %2597 = vmatpush1.bf16.msra.mxu0 %v2580
        %2598 = vmatprep.subr.bf16.mxu0 0
        %2599 = vmatpush2.bf16.msra.mxu0 0
        %2600 = vmatprep.subr.bf16.mxu0 0
        %2601 = vmatpush2.bf16.msra.mxu0 0
        %2602 = vmatprep.subr.bf16.mxu0 0
        %2603 = vmatpush2.bf16.msra.mxu0 0
        %2604 = vmatprep.subr.bf16.mxu0 0
        %2605 = vmatpush2.bf16.msra.mxu0 0
        %2606 = vmatprep.subr.bf16.mxu0 0
        %2607 = vmatpush2.bf16.msra.mxu0 0
        %2608 = vmatprep.subr.bf16.mxu0 0
        %2609 = vmatpush2.bf16.msra.mxu0 0
        %2610 = vmatprep.subr.bf16.mxu0 0
        %2611 = vmatpush2.bf16.msra.mxu0 0
        %2612 = vmatprep.subr.bf16.mxu0 0
        %2613 = vmatpush2.bf16.msra.mxu0 0
        %2614 = vmatprep.mubr.bf16.mxu0 0
        %2615 = vmatmul.mubr.bf16.gmra.mxu0 %v2577
        %v2616 = vpop.f32.mrf.mxu0
        %v2617 = vadd.f32 0.0, %v2616
        %v2618 = vpop.f32.mrf.mxu0
        %v2619 = vpop.f32.mrf.mxu0
        %v2620 = vpop.f32.mrf.mxu0
        %2621 = vdwg.mxu0
        %2622 = vrot.lane.b32.xlu0 %v1519, 48
        %v2623 = vpop.permute.xlu0 %2622
        %2624 = vrot.lane.b32.xlu0 %v1521, 48
        %v2625 = vpop.permute.xlu0 %2624
        %v2627 = vsel %vm1525, %v2623, 0
        %v2630 = vsel %vm1525, %v2625, 0
        %2632 = vmatprep.subr.bf16.mxu0 0
        %2633 = vmatpush1.bf16.xpose.msra.mxu0 0
        %2634 = vmatprep.subr.bf16.mxu0 0
        %2635 = vmatpush1.bf16.xpose.msra.mxu0 0
        %2636 = vmatprep.subr.bf16.mxu0 0
        %2637 = vmatpush1.bf16.xpose.msra.mxu0 0
        %2638 = vmatprep.subr.bf16.mxu0 0
        %2639 = vmatpush1.bf16.xpose.msra.mxu0 0
        %2640 = vmatprep.subr.bf16.mxu0 0
        %2641 = vmatpush1.bf16.xpose.msra.mxu0 0
        %2642 = vmatprep.subr.bf16.mxu0 0
        %2643 = vmatpush1.bf16.xpose.msra.mxu0 0
        %2644 = vmatprep.subr.bf16.mxu0 0
        %2645 = vmatpush1.bf16.xpose.msra.mxu0 0
        %2646 = vmatprep.subr.bf16.mxu0 0
        %2647 = vmatpush1.bf16.xpose.msra.mxu0 %v2630
        %2648 = vmatprep.subr.bf16.mxu0 0
        %2649 = vmatpush2.bf16.xpose.msra.mxu0 0
        %2650 = vmatprep.subr.bf16.mxu0 0
        %2651 = vmatpush2.bf16.xpose.msra.mxu0 0
        %2652 = vmatprep.subr.bf16.mxu0 0
        %2653 = vmatpush2.bf16.xpose.msra.mxu0 0
        %2654 = vmatprep.subr.bf16.mxu0 0
        %2655 = vmatpush2.bf16.xpose.msra.mxu0 0
        %2656 = vmatprep.subr.bf16.mxu0 0
        %2657 = vmatpush2.bf16.xpose.msra.mxu0 0
        %2658 = vmatprep.subr.bf16.mxu0 0
        %2659 = vmatpush2.bf16.xpose.msra.mxu0 0
        %2660 = vmatprep.subr.bf16.mxu0 0
        %2661 = vmatpush2.bf16.xpose.msra.mxu0 0
        %2662 = vmatprep.subr.bf16.mxu0 0
        %2663 = vmatpush2.bf16.xpose.msra.mxu0 0
        %2664 = vmatprep.mubr.bf16.mxu0 0
        %2665 = vmatmul.mubr.bf16.gmra.mxu0 %v2627
        %v2666 = vpop.f32.mrf.mxu0
        %v2667 = vadd.f32 0.0, %v2666
        %v2668 = vpop.f32.mrf.mxu0
        %v2669 = vpop.f32.mrf.mxu0
        %v2670 = vpop.f32.mrf.mxu0
        %2671 = vdwg.mxu0
        %2672 = vrot.lane.b32.xlu0 %v1520, 48
        %v2673 = vpop.permute.xlu0 %2672
        %2674 = vrot.lane.b32.xlu0 %v1522, 48
        %v2675 = vpop.permute.xlu0 %2674
        %v2677 = vsel %vm1525, %v2673, 0
        %v2680 = vsel %vm1525, %v2675, 0
        %2682 = vmatprep.subr.bf16.mxu0 0
        %2683 = vmatpush1.bf16.xpose.msra.mxu0 0
        %2684 = vmatprep.subr.bf16.mxu0 0
        %2685 = vmatpush1.bf16.xpose.msra.mxu0 0
        %2686 = vmatprep.subr.bf16.mxu0 0
        %2687 = vmatpush1.bf16.xpose.msra.mxu0 0
        %2688 = vmatprep.subr.bf16.mxu0 0
        %2689 = vmatpush1.bf16.xpose.msra.mxu0 0
        %2690 = vmatprep.subr.bf16.mxu0 0
        %2691 = vmatpush1.bf16.xpose.msra.mxu0 0
        %2692 = vmatprep.subr.bf16.mxu0 0
        %2693 = vmatpush1.bf16.xpose.msra.mxu0 0
        %2694 = vmatprep.subr.bf16.mxu0 0
        %2695 = vmatpush1.bf16.xpose.msra.mxu0 0
        %2696 = vmatprep.subr.bf16.mxu0 0
        %2697 = vmatpush1.bf16.xpose.msra.mxu0 %v2680
        %2698 = vmatprep.subr.bf16.mxu0 0
        %2699 = vmatpush2.bf16.xpose.msra.mxu0 0
        %2700 = vmatprep.subr.bf16.mxu0 0
        %2701 = vmatpush2.bf16.xpose.msra.mxu0 0
        %2702 = vmatprep.subr.bf16.mxu0 0
        %2703 = vmatpush2.bf16.xpose.msra.mxu0 0
        %2704 = vmatprep.subr.bf16.mxu0 0
        %2705 = vmatpush2.bf16.xpose.msra.mxu0 0
        %2706 = vmatprep.subr.bf16.mxu0 0
        %2707 = vmatpush2.bf16.xpose.msra.mxu0 0
        %2708 = vmatprep.subr.bf16.mxu0 0
        %2709 = vmatpush2.bf16.xpose.msra.mxu0 0
        %2710 = vmatprep.subr.bf16.mxu0 0
        %2711 = vmatpush2.bf16.xpose.msra.mxu0 0
        %2712 = vmatprep.subr.bf16.mxu0 0
        %2713 = vmatpush2.bf16.xpose.msra.mxu0 0
        %2714 = vmatprep.mubr.bf16.mxu0 0
        %2715 = vmatmul.mubr.bf16.gmra.mxu0 %v2677
        %v2716 = vpop.f32.mrf.mxu0
        %v2717 = vadd.f32 0.0, %v2716
        %v2718 = vpop.f32.mrf.mxu0
        %v2719 = vpop.f32.mrf.mxu0
        %v2720 = vpop.f32.mrf.mxu0
        %2721 = vdwg.mxu0
        %v2722 = vsel %vm1618, %v2667, -inf
        %2723 = vmax.xlane.f32.xlu0 %v2722
        %v2724 = vpop.xlane.xlu0 %2723
        %v2725 = vsel %vm1618, %v2717, -inf
        %2726 = vmax.xlane.f32.xlu0 %v2725
        %v2727 = vpop.xlane.xlu0 %2726
        %v2728 = vsub.f32 %v2667, %v2724
        %v2729 = vsub.f32 %v2717, %v2727
        %v2730 = vmul.f32 %v2728, 1.442695
        %v2731 = vpow.pop %v2730
        %v2732 = vmul.f32 %v2729, 1.442695
        %v2733 = vpow.pop %v2732
        %v2734 = vsel %vm1618, %v2731, 0.0
        %2735 = vadd.xlane.f32.xlu0 %v2734
        %v2736 = vpop.xlane.xlu0 %2735
        %v2737 = vsel %vm1618, %v2733, 0.0
        %2738 = vadd.xlane.f32.xlu0 %v2737
        %v2739 = vpop.xlane.xlu0 %2738
        %v2740 = vrcp.pop %v2736
        %v2741 = vrcp.pop %v2739
        %v2742 = vmul.f32 %v2731, %v2740
        %v2743 = vmul.f32 %v2733, %v2741
        %v2744 = vpack.c.bf16 %v2742, %v2742
        %v2745 = vpack.c.bf16 %v2743, %v2743
        %2746 = vrot.lane.b32.xlu0 %v1523, 48
        %v2747 = vpop.permute.xlu0 %2746
        %v2749 = vsel %vm1618, %v2744, 0
        %v2752 = vsel %vm1646, %v2747, 0
        %2754 = vmatprep.subr.bf16.mxu0 0
        %2755 = vmatpush1.bf16.msra.mxu0 0
        %2756 = vmatprep.subr.bf16.mxu0 0
        %2757 = vmatpush1.bf16.msra.mxu0 0
        %2758 = vmatprep.subr.bf16.mxu0 0
        %2759 = vmatpush1.bf16.msra.mxu0 0
        %2760 = vmatprep.subr.bf16.mxu0 0
        %2761 = vmatpush1.bf16.msra.mxu0 0
        %2762 = vmatprep.subr.bf16.mxu0 0
        %2763 = vmatpush1.bf16.msra.mxu0 0
        %2764 = vmatprep.subr.bf16.mxu0 0
        %2765 = vmatpush1.bf16.msra.mxu0 0
        %2766 = vmatprep.subr.bf16.mxu0 0
        %2767 = vmatpush1.bf16.msra.mxu0 0
        %2768 = vmatprep.subr.bf16.mxu0 0
        %2769 = vmatpush1.bf16.msra.mxu0 %v2752
        %2770 = vmatprep.subr.bf16.mxu0 0
        %2771 = vmatpush2.bf16.msra.mxu0 0
        %2772 = vmatprep.subr.bf16.mxu0 0
        %2773 = vmatpush2.bf16.msra.mxu0 0
        %2774 = vmatprep.subr.bf16.mxu0 0
        %2775 = vmatpush2.bf16.msra.mxu0 0
        %2776 = vmatprep.subr.bf16.mxu0 0
        %2777 = vmatpush2.bf16.msra.mxu0 0
        %2778 = vmatprep.subr.bf16.mxu0 0
        %2779 = vmatpush2.bf16.msra.mxu0 0
        %2780 = vmatprep.subr.bf16.mxu0 0
        %2781 = vmatpush2.bf16.msra.mxu0 0
        %2782 = vmatprep.subr.bf16.mxu0 0
        %2783 = vmatpush2.bf16.msra.mxu0 0
        %2784 = vmatprep.subr.bf16.mxu0 0
        %2785 = vmatpush2.bf16.msra.mxu0 0
        %2786 = vmatprep.mubr.bf16.mxu0 0
        %2787 = vmatmul.mubr.bf16.gmra.mxu0 %v2749
        %v2788 = vpop.f32.mrf.mxu0
        %v2789 = vadd.f32 0.0, %v2788
        %v2790 = vpop.f32.mrf.mxu0
        %v2791 = vpop.f32.mrf.mxu0
        %v2792 = vpop.f32.mrf.mxu0
        %2793 = vdwg.mxu0
        %2794 = vrot.lane.b32.xlu0 %v1524, 48
        %v2795 = vpop.permute.xlu0 %2794
        %v2797 = vsel %vm1618, %v2745, 0
        %v2800 = vsel %vm1646, %v2795, 0
        %2802 = vmatprep.subr.bf16.mxu0 0
        %2803 = vmatpush1.bf16.msra.mxu0 0
        %2804 = vmatprep.subr.bf16.mxu0 0
        %2805 = vmatpush1.bf16.msra.mxu0 0
        %2806 = vmatprep.subr.bf16.mxu0 0
        %2807 = vmatpush1.bf16.msra.mxu0 0
        %2808 = vmatprep.subr.bf16.mxu0 0
        %2809 = vmatpush1.bf16.msra.mxu0 0
        %2810 = vmatprep.subr.bf16.mxu0 0
        %2811 = vmatpush1.bf16.msra.mxu0 0
        %2812 = vmatprep.subr.bf16.mxu0 0
        %2813 = vmatpush1.bf16.msra.mxu0 0
        %2814 = vmatprep.subr.bf16.mxu0 0
        %2815 = vmatpush1.bf16.msra.mxu0 0
        %2816 = vmatprep.subr.bf16.mxu0 0
        %2817 = vmatpush1.bf16.msra.mxu0 %v2800
        %2818 = vmatprep.subr.bf16.mxu0 0
        %2819 = vmatpush2.bf16.msra.mxu0 0
        %2820 = vmatprep.subr.bf16.mxu0 0
        %2821 = vmatpush2.bf16.msra.mxu0 0
        %2822 = vmatprep.subr.bf16.mxu0 0
        %2823 = vmatpush2.bf16.msra.mxu0 0
        %2824 = vmatprep.subr.bf16.mxu0 0
        %2825 = vmatpush2.bf16.msra.mxu0 0
        %2826 = vmatprep.subr.bf16.mxu0 0
        %2827 = vmatpush2.bf16.msra.mxu0 0
        %2828 = vmatprep.subr.bf16.mxu0 0
        %2829 = vmatpush2.bf16.msra.mxu0 0
        %2830 = vmatprep.subr.bf16.mxu0 0
        %2831 = vmatpush2.bf16.msra.mxu0 0
        %2832 = vmatprep.subr.bf16.mxu0 0
        %2833 = vmatpush2.bf16.msra.mxu0 0
        %2834 = vmatprep.mubr.bf16.mxu0 0
        %2835 = vmatmul.mubr.bf16.gmra.mxu0 %v2797
        %v2836 = vpop.f32.mrf.mxu0
        %v2837 = vadd.f32 0.0, %v2836
        %v2838 = vpop.f32.mrf.mxu0
        %v2839 = vpop.f32.mrf.mxu0
        %v2840 = vpop.f32.mrf.mxu0
        %2841 = vdwg.mxu0
        %2842 = vrot.lane.b32.xlu0 %v1519, 32
        %v2843 = vpop.permute.xlu0 %2842
        %2844 = vrot.lane.b32.xlu0 %v1521, 32
        %v2845 = vpop.permute.xlu0 %2844
        %v2847 = vsel %vm1525, %v2843, 0
        %v2850 = vsel %vm1525, %v2845, 0
        %2852 = vmatprep.subr.bf16.mxu0 0
        %2853 = vmatpush1.bf16.xpose.msra.mxu0 0
        %2854 = vmatprep.subr.bf16.mxu0 0
        %2855 = vmatpush1.bf16.xpose.msra.mxu0 0
        %2856 = vmatprep.subr.bf16.mxu0 0
        %2857 = vmatpush1.bf16.xpose.msra.mxu0 0
        %2858 = vmatprep.subr.bf16.mxu0 0
        %2859 = vmatpush1.bf16.xpose.msra.mxu0 0
        %2860 = vmatprep.subr.bf16.mxu0 0
        %2861 = vmatpush1.bf16.xpose.msra.mxu0 0
        %2862 = vmatprep.subr.bf16.mxu0 0
        %2863 = vmatpush1.bf16.xpose.msra.mxu0 0
        %2864 = vmatprep.subr.bf16.mxu0 0
        %2865 = vmatpush1.bf16.xpose.msra.mxu0 0
        %2866 = vmatprep.subr.bf16.mxu0 0
        %2867 = vmatpush1.bf16.xpose.msra.mxu0 %v2850
        %2868 = vmatprep.subr.bf16.mxu0 0
        %2869 = vmatpush2.bf16.xpose.msra.mxu0 0
        %2870 = vmatprep.subr.bf16.mxu0 0
        %2871 = vmatpush2.bf16.xpose.msra.mxu0 0
        %2872 = vmatprep.subr.bf16.mxu0 0
        %2873 = vmatpush2.bf16.xpose.msra.mxu0 0
        %2874 = vmatprep.subr.bf16.mxu0 0
        %2875 = vmatpush2.bf16.xpose.msra.mxu0 0
        %2876 = vmatprep.subr.bf16.mxu0 0
        %2877 = vmatpush2.bf16.xpose.msra.mxu0 0
        %2878 = vmatprep.subr.bf16.mxu0 0
        %2879 = vmatpush2.bf16.xpose.msra.mxu0 0
        %2880 = vmatprep.subr.bf16.mxu0 0
        %2881 = vmatpush2.bf16.xpose.msra.mxu0 0
        %2882 = vmatprep.subr.bf16.mxu0 0
        %2883 = vmatpush2.bf16.xpose.msra.mxu0 0
        %2884 = vmatprep.mubr.bf16.mxu0 0
        %2885 = vmatmul.mubr.bf16.gmra.mxu0 %v2847
        %v2886 = vpop.f32.mrf.mxu0
        %v2887 = vadd.f32 0.0, %v2886
        %v2888 = vpop.f32.mrf.mxu0
        %v2889 = vpop.f32.mrf.mxu0
        %v2890 = vpop.f32.mrf.mxu0
        %2891 = vdwg.mxu0
        %2892 = vrot.lane.b32.xlu0 %v1520, 32
        %v2893 = vpop.permute.xlu0 %2892
        %2894 = vrot.lane.b32.xlu0 %v1522, 32
        %v2895 = vpop.permute.xlu0 %2894
        %v2897 = vsel %vm1525, %v2893, 0
        %v2900 = vsel %vm1525, %v2895, 0
        %2902 = vmatprep.subr.bf16.mxu0 0
        %2903 = vmatpush1.bf16.xpose.msra.mxu0 0
        %2904 = vmatprep.subr.bf16.mxu0 0
        %2905 = vmatpush1.bf16.xpose.msra.mxu0 0
        %2906 = vmatprep.subr.bf16.mxu0 0
        %2907 = vmatpush1.bf16.xpose.msra.mxu0 0
        %2908 = vmatprep.subr.bf16.mxu0 0
        %2909 = vmatpush1.bf16.xpose.msra.mxu0 0
        %2910 = vmatprep.subr.bf16.mxu0 0
        %2911 = vmatpush1.bf16.xpose.msra.mxu0 0
        %2912 = vmatprep.subr.bf16.mxu0 0
        %2913 = vmatpush1.bf16.xpose.msra.mxu0 0
        %2914 = vmatprep.subr.bf16.mxu0 0
        %2915 = vmatpush1.bf16.xpose.msra.mxu0 0
        %2916 = vmatprep.subr.bf16.mxu0 0
        %2917 = vmatpush1.bf16.xpose.msra.mxu0 %v2900
        %2918 = vmatprep.subr.bf16.mxu0 0
        %2919 = vmatpush2.bf16.xpose.msra.mxu0 0
        %2920 = vmatprep.subr.bf16.mxu0 0
        %2921 = vmatpush2.bf16.xpose.msra.mxu0 0
        %2922 = vmatprep.subr.bf16.mxu0 0
        %2923 = vmatpush2.bf16.xpose.msra.mxu0 0
        %2924 = vmatprep.subr.bf16.mxu0 0
        %2925 = vmatpush2.bf16.xpose.msra.mxu0 0
        %2926 = vmatprep.subr.bf16.mxu0 0
        %2927 = vmatpush2.bf16.xpose.msra.mxu0 0
        %2928 = vmatprep.subr.bf16.mxu0 0
        %2929 = vmatpush2.bf16.xpose.msra.mxu0 0
        %2930 = vmatprep.subr.bf16.mxu0 0
        %2931 = vmatpush2.bf16.xpose.msra.mxu0 0
        %2932 = vmatprep.subr.bf16.mxu0 0
        %2933 = vmatpush2.bf16.xpose.msra.mxu0 0
        %2934 = vmatprep.mubr.bf16.mxu0 0
        %2935 = vmatmul.mubr.bf16.gmra.mxu0 %v2897
        %v2936 = vpop.f32.mrf.mxu0
        %v2937 = vadd.f32 0.0, %v2936
        %v2938 = vpop.f32.mrf.mxu0
        %v2939 = vpop.f32.mrf.mxu0
        %v2940 = vpop.f32.mrf.mxu0
        %2941 = vdwg.mxu0
        %v2942 = vsel %vm1618, %v2887, -inf
        %2943 = vmax.xlane.f32.xlu0 %v2942
        %v2944 = vpop.xlane.xlu0 %2943
        %v2945 = vsel %vm1618, %v2937, -inf
        %2946 = vmax.xlane.f32.xlu0 %v2945
        %v2947 = vpop.xlane.xlu0 %2946
        %v2948 = vsub.f32 %v2887, %v2944
        %v2949 = vsub.f32 %v2937, %v2947
        %v2950 = vmul.f32 %v2948, 1.442695
        %v2951 = vpow.pop %v2950
        %v2952 = vmul.f32 %v2949, 1.442695
        %v2953 = vpow.pop %v2952
        %v2954 = vsel %vm1618, %v2951, 0.0
        %2955 = vadd.xlane.f32.xlu0 %v2954
        %v2956 = vpop.xlane.xlu0 %2955
        %v2957 = vsel %vm1618, %v2953, 0.0
        %2958 = vadd.xlane.f32.xlu0 %v2957
        %v2959 = vpop.xlane.xlu0 %2958
        %v2960 = vrcp.pop %v2956
        %v2961 = vrcp.pop %v2959
        %v2962 = vmul.f32 %v2951, %v2960
        %v2963 = vmul.f32 %v2953, %v2961
        %v2964 = vpack.c.bf16 %v2962, %v2962
        %v2965 = vpack.c.bf16 %v2963, %v2963
        %2966 = vrot.lane.b32.xlu0 %v1523, 32
        %v2967 = vpop.permute.xlu0 %2966
        %v2969 = vsel %vm1618, %v2964, 0
        %v2972 = vsel %vm1646, %v2967, 0
        %2974 = vmatprep.subr.bf16.mxu0 0
        %2975 = vmatpush1.bf16.msra.mxu0 0
        %2976 = vmatprep.subr.bf16.mxu0 0
        %2977 = vmatpush1.bf16.msra.mxu0 0
        %2978 = vmatprep.subr.bf16.mxu0 0
        %2979 = vmatpush1.bf16.msra.mxu0 0
        %2980 = vmatprep.subr.bf16.mxu0 0
        %2981 = vmatpush1.bf16.msra.mxu0 0
        %2982 = vmatprep.subr.bf16.mxu0 0
        %2983 = vmatpush1.bf16.msra.mxu0 0
        %2984 = vmatprep.subr.bf16.mxu0 0
        %2985 = vmatpush1.bf16.msra.mxu0 0
        %2986 = vmatprep.subr.bf16.mxu0 0
        %2987 = vmatpush1.bf16.msra.mxu0 0
        %2988 = vmatprep.subr.bf16.mxu0 0
        %2989 = vmatpush1.bf16.msra.mxu0 %v2972
        %2990 = vmatprep.subr.bf16.mxu0 0
        %2991 = vmatpush2.bf16.msra.mxu0 0
        %2992 = vmatprep.subr.bf16.mxu0 0
        %2993 = vmatpush2.bf16.msra.mxu0 0
        %2994 = vmatprep.subr.bf16.mxu0 0
        %2995 = vmatpush2.bf16.msra.mxu0 0
        %2996 = vmatprep.subr.bf16.mxu0 0
        %2997 = vmatpush2.bf16.msra.mxu0 0
        %2998 = vmatprep.subr.bf16.mxu0 0
        %2999 = vmatpush2.bf16.msra.mxu0 0
        %3000 = vmatprep.subr.bf16.mxu0 0
        %3001 = vmatpush2.bf16.msra.mxu0 0
        %3002 = vmatprep.subr.bf16.mxu0 0
        %3003 = vmatpush2.bf16.msra.mxu0 0
        %3004 = vmatprep.subr.bf16.mxu0 0
        %3005 = vmatpush2.bf16.msra.mxu0 0
        %3006 = vmatprep.mubr.bf16.mxu0 0
        %3007 = vmatmul.mubr.bf16.gmra.mxu0 %v2969
        %v3008 = vpop.f32.mrf.mxu0
        %v3009 = vadd.f32 0.0, %v3008
        %v3010 = vpop.f32.mrf.mxu0
        %v3011 = vpop.f32.mrf.mxu0
        %v3012 = vpop.f32.mrf.mxu0
        %3013 = vdwg.mxu0
        %3014 = vrot.lane.b32.xlu0 %v1524, 32
        %v3015 = vpop.permute.xlu0 %3014
        %v3017 = vsel %vm1618, %v2965, 0
        %v3020 = vsel %vm1646, %v3015, 0
        %3022 = vmatprep.subr.bf16.mxu0 0
        %3023 = vmatpush1.bf16.msra.mxu0 0
        %3024 = vmatprep.subr.bf16.mxu0 0
        %3025 = vmatpush1.bf16.msra.mxu0 0
        %3026 = vmatprep.subr.bf16.mxu0 0
        %3027 = vmatpush1.bf16.msra.mxu0 0
        %3028 = vmatprep.subr.bf16.mxu0 0
        %3029 = vmatpush1.bf16.msra.mxu0 0
        %3030 = vmatprep.subr.bf16.mxu0 0
        %3031 = vmatpush1.bf16.msra.mxu0 0
        %3032 = vmatprep.subr.bf16.mxu0 0
        %3033 = vmatpush1.bf16.msra.mxu0 0
        %3034 = vmatprep.subr.bf16.mxu0 0
        %3035 = vmatpush1.bf16.msra.mxu0 0
        %3036 = vmatprep.subr.bf16.mxu0 0
        %3037 = vmatpush1.bf16.msra.mxu0 %v3020
        %3038 = vmatprep.subr.bf16.mxu0 0
        %3039 = vmatpush2.bf16.msra.mxu0 0
        %3040 = vmatprep.subr.bf16.mxu0 0
        %3041 = vmatpush2.bf16.msra.mxu0 0
        %3042 = vmatprep.subr.bf16.mxu0 0
        %3043 = vmatpush2.bf16.msra.mxu0 0
        %3044 = vmatprep.subr.bf16.mxu0 0
        %3045 = vmatpush2.bf16.msra.mxu0 0
        %3046 = vmatprep.subr.bf16.mxu0 0
        %3047 = vmatpush2.bf16.msra.mxu0 0
        %3048 = vmatprep.subr.bf16.mxu0 0
        %3049 = vmatpush2.bf16.msra.mxu0 0
        %3050 = vmatprep.subr.bf16.mxu0 0
        %3051 = vmatpush2.bf16.msra.mxu0 0
        %3052 = vmatprep.subr.bf16.mxu0 0
        %3053 = vmatpush2.bf16.msra.mxu0 0
        %3054 = vmatprep.mubr.bf16.mxu0 0
        %3055 = vmatmul.mubr.bf16.gmra.mxu0 %v3017
        %v3056 = vpop.f32.mrf.mxu0
        %v3057 = vadd.f32 0.0, %v3056
        %v3058 = vpop.f32.mrf.mxu0
        %v3059 = vpop.f32.mrf.mxu0
        %v3060 = vpop.f32.mrf.mxu0
        %3061 = vdwg.mxu0
        %3062 = vrot.lane.b32.xlu0 %v1519, 16
        %v3063 = vpop.permute.xlu0 %3062
        %3064 = vrot.lane.b32.xlu0 %v1521, 16
        %v3065 = vpop.permute.xlu0 %3064
        %v3067 = vsel %vm1525, %v3063, 0
        %v3070 = vsel %vm1525, %v3065, 0
        %3072 = vmatprep.subr.bf16.mxu0 0
        %3073 = vmatpush1.bf16.xpose.msra.mxu0 0
        %3074 = vmatprep.subr.bf16.mxu0 0
        %3075 = vmatpush1.bf16.xpose.msra.mxu0 0
        %3076 = vmatprep.subr.bf16.mxu0 0
        %3077 = vmatpush1.bf16.xpose.msra.mxu0 0
        %3078 = vmatprep.subr.bf16.mxu0 0
        %3079 = vmatpush1.bf16.xpose.msra.mxu0 0
        %3080 = vmatprep.subr.bf16.mxu0 0
        %3081 = vmatpush1.bf16.xpose.msra.mxu0 0
        %3082 = vmatprep.subr.bf16.mxu0 0
        %3083 = vmatpush1.bf16.xpose.msra.mxu0 0
        %3084 = vmatprep.subr.bf16.mxu0 0
        %3085 = vmatpush1.bf16.xpose.msra.mxu0 0
        %3086 = vmatprep.subr.bf16.mxu0 0
        %3087 = vmatpush1.bf16.xpose.msra.mxu0 %v3070
        %3088 = vmatprep.subr.bf16.mxu0 0
        %3089 = vmatpush2.bf16.xpose.msra.mxu0 0
        %3090 = vmatprep.subr.bf16.mxu0 0
        %3091 = vmatpush2.bf16.xpose.msra.mxu0 0
        %3092 = vmatprep.subr.bf16.mxu0 0
        %3093 = vmatpush2.bf16.xpose.msra.mxu0 0
        %3094 = vmatprep.subr.bf16.mxu0 0
        %3095 = vmatpush2.bf16.xpose.msra.mxu0 0
        %3096 = vmatprep.subr.bf16.mxu0 0
        %3097 = vmatpush2.bf16.xpose.msra.mxu0 0
        %3098 = vmatprep.subr.bf16.mxu0 0
        %3099 = vmatpush2.bf16.xpose.msra.mxu0 0
        %3100 = vmatprep.subr.bf16.mxu0 0
        %3101 = vmatpush2.bf16.xpose.msra.mxu0 0
        %3102 = vmatprep.subr.bf16.mxu0 0
        %3103 = vmatpush2.bf16.xpose.msra.mxu0 0
        %3104 = vmatprep.mubr.bf16.mxu0 0
        %3105 = vmatmul.mubr.bf16.gmra.mxu0 %v3067
        %v3106 = vpop.f32.mrf.mxu0
        %v3107 = vadd.f32 0.0, %v3106
        %v3108 = vpop.f32.mrf.mxu0
        %v3109 = vpop.f32.mrf.mxu0
        %v3110 = vpop.f32.mrf.mxu0
        %3111 = vdwg.mxu0
        %3112 = vrot.lane.b32.xlu0 %v1520, 16
        %v3113 = vpop.permute.xlu0 %3112
        %3114 = vrot.lane.b32.xlu0 %v1522, 16
        %v3115 = vpop.permute.xlu0 %3114
        %v3117 = vsel %vm1525, %v3113, 0
        %v3120 = vsel %vm1525, %v3115, 0
        %3122 = vmatprep.subr.bf16.mxu0 0
        %3123 = vmatpush1.bf16.xpose.msra.mxu0 0
        %3124 = vmatprep.subr.bf16.mxu0 0
        %3125 = vmatpush1.bf16.xpose.msra.mxu0 0
        %3126 = vmatprep.subr.bf16.mxu0 0
        %3127 = vmatpush1.bf16.xpose.msra.mxu0 0
        %3128 = vmatprep.subr.bf16.mxu0 0
        %3129 = vmatpush1.bf16.xpose.msra.mxu0 0
        %3130 = vmatprep.subr.bf16.mxu0 0
        %3131 = vmatpush1.bf16.xpose.msra.mxu0 0
        %3132 = vmatprep.subr.bf16.mxu0 0
        %3133 = vmatpush1.bf16.xpose.msra.mxu0 0
        %3134 = vmatprep.subr.bf16.mxu0 0
        %3135 = vmatpush1.bf16.xpose.msra.mxu0 0
        %3136 = vmatprep.subr.bf16.mxu0 0
        %3137 = vmatpush1.bf16.xpose.msra.mxu0 %v3120
        %3138 = vmatprep.subr.bf16.mxu0 0
        %3139 = vmatpush2.bf16.xpose.msra.mxu0 0
        %3140 = vmatprep.subr.bf16.mxu0 0
        %3141 = vmatpush2.bf16.xpose.msra.mxu0 0
        %3142 = vmatprep.subr.bf16.mxu0 0
        %3143 = vmatpush2.bf16.xpose.msra.mxu0 0
        %3144 = vmatprep.subr.bf16.mxu0 0
        %3145 = vmatpush2.bf16.xpose.msra.mxu0 0
        %3146 = vmatprep.subr.bf16.mxu0 0
        %3147 = vmatpush2.bf16.xpose.msra.mxu0 0
        %3148 = vmatprep.subr.bf16.mxu0 0
        %3149 = vmatpush2.bf16.xpose.msra.mxu0 0
        %3150 = vmatprep.subr.bf16.mxu0 0
        %3151 = vmatpush2.bf16.xpose.msra.mxu0 0
        %3152 = vmatprep.subr.bf16.mxu0 0
        %3153 = vmatpush2.bf16.xpose.msra.mxu0 0
        %3154 = vmatprep.mubr.bf16.mxu0 0
        %3155 = vmatmul.mubr.bf16.gmra.mxu0 %v3117
        %v3156 = vpop.f32.mrf.mxu0
        %v3157 = vadd.f32 0.0, %v3156
        %v3158 = vpop.f32.mrf.mxu0
        %v3159 = vpop.f32.mrf.mxu0
        %v3160 = vpop.f32.mrf.mxu0
        %3161 = vdwg.mxu0
        %v3162 = vsel %vm1618, %v3107, -inf
        %3163 = vmax.xlane.f32.xlu0 %v3162
        %v3164 = vpop.xlane.xlu0 %3163
        %v3165 = vsel %vm1618, %v3157, -inf
        %3166 = vmax.xlane.f32.xlu0 %v3165
        %v3167 = vpop.xlane.xlu0 %3166
        %v3168 = vsub.f32 %v3107, %v3164
        %v3169 = vsub.f32 %v3157, %v3167
        %v3170 = vmul.f32 %v3168, 1.442695
        %v3171 = vpow.pop %v3170
        %v3172 = vmul.f32 %v3169, 1.442695
        %v3173 = vpow.pop %v3172
        %v3174 = vsel %vm1618, %v3171, 0.0
        %3175 = vadd.xlane.f32.xlu0 %v3174
        %v3176 = vpop.xlane.xlu0 %3175
        %v3177 = vsel %vm1618, %v3173, 0.0
        %3178 = vadd.xlane.f32.xlu0 %v3177
        %v3179 = vpop.xlane.xlu0 %3178
        %v3180 = vrcp.pop %v3176
        %v3181 = vrcp.pop %v3179
        %v3182 = vmul.f32 %v3171, %v3180
        %v3183 = vmul.f32 %v3173, %v3181
        %v3184 = vpack.c.bf16 %v3182, %v3182
        %v3185 = vpack.c.bf16 %v3183, %v3183
        %3186 = vrot.lane.b32.xlu0 %v1523, 16
        %v3187 = vpop.permute.xlu0 %3186
        %v3189 = vsel %vm1618, %v3184, 0
        %v3192 = vsel %vm1646, %v3187, 0
        %3194 = vmatprep.subr.bf16.mxu0 0
        %3195 = vmatpush1.bf16.msra.mxu0 0
        %3196 = vmatprep.subr.bf16.mxu0 0
        %3197 = vmatpush1.bf16.msra.mxu0 0
        %3198 = vmatprep.subr.bf16.mxu0 0
        %3199 = vmatpush1.bf16.msra.mxu0 0
        %3200 = vmatprep.subr.bf16.mxu0 0
        %3201 = vmatpush1.bf16.msra.mxu0 0
        %3202 = vmatprep.subr.bf16.mxu0 0
        %3203 = vmatpush1.bf16.msra.mxu0 0
        %3204 = vmatprep.subr.bf16.mxu0 0
        %3205 = vmatpush1.bf16.msra.mxu0 0
        %3206 = vmatprep.subr.bf16.mxu0 0
        %3207 = vmatpush1.bf16.msra.mxu0 0
        %3208 = vmatprep.subr.bf16.mxu0 0
        %3209 = vmatpush1.bf16.msra.mxu0 %v3192
        %3210 = vmatprep.subr.bf16.mxu0 0
        %3211 = vmatpush2.bf16.msra.mxu0 0
        %3212 = vmatprep.subr.bf16.mxu0 0
        %3213 = vmatpush2.bf16.msra.mxu0 0
        %3214 = vmatprep.subr.bf16.mxu0 0
        %3215 = vmatpush2.bf16.msra.mxu0 0
        %3216 = vmatprep.subr.bf16.mxu0 0
        %3217 = vmatpush2.bf16.msra.mxu0 0
        %3218 = vmatprep.subr.bf16.mxu0 0
        %3219 = vmatpush2.bf16.msra.mxu0 0
        %3220 = vmatprep.subr.bf16.mxu0 0
        %3221 = vmatpush2.bf16.msra.mxu0 0
        %3222 = vmatprep.subr.bf16.mxu0 0
        %3223 = vmatpush2.bf16.msra.mxu0 0
        %3224 = vmatprep.subr.bf16.mxu0 0
        %3225 = vmatpush2.bf16.msra.mxu0 0
        %3226 = vmatprep.mubr.bf16.mxu0 0
        %3227 = vmatmul.mubr.bf16.gmra.mxu0 %v3189
        %v3228 = vpop.f32.mrf.mxu0
        %v3229 = vadd.f32 0.0, %v3228
        %v3230 = vpop.f32.mrf.mxu0
        %v3231 = vpop.f32.mrf.mxu0
        %v3232 = vpop.f32.mrf.mxu0
        %3233 = vdwg.mxu0
        %3234 = vrot.lane.b32.xlu0 %v1524, 16
        %v3235 = vpop.permute.xlu0 %3234
        %v3237 = vsel %vm1618, %v3185, 0
        %v3240 = vsel %vm1646, %v3235, 0
        %3242 = vmatprep.subr.bf16.mxu0 0
        %3243 = vmatpush1.bf16.msra.mxu0 0
        %3244 = vmatprep.subr.bf16.mxu0 0
        %3245 = vmatpush1.bf16.msra.mxu0 0
        %3246 = vmatprep.subr.bf16.mxu0 0
        %3247 = vmatpush1.bf16.msra.mxu0 0
        %3248 = vmatprep.subr.bf16.mxu0 0
        %3249 = vmatpush1.bf16.msra.mxu0 0
        %3250 = vmatprep.subr.bf16.mxu0 0
        %3251 = vmatpush1.bf16.msra.mxu0 0
        %3252 = vmatprep.subr.bf16.mxu0 0
        %3253 = vmatpush1.bf16.msra.mxu0 0
        %3254 = vmatprep.subr.bf16.mxu0 0
        %3255 = vmatpush1.bf16.msra.mxu0 0
        %3256 = vmatprep.subr.bf16.mxu0 0
        %3257 = vmatpush1.bf16.msra.mxu0 %v3240
        %3258 = vmatprep.subr.bf16.mxu0 0
        %3259 = vmatpush2.bf16.msra.mxu0 0
        %3260 = vmatprep.subr.bf16.mxu0 0
        %3261 = vmatpush2.bf16.msra.mxu0 0
        %3262 = vmatprep.subr.bf16.mxu0 0
        %3263 = vmatpush2.bf16.msra.mxu0 0
        %3264 = vmatprep.subr.bf16.mxu0 0
        %3265 = vmatpush2.bf16.msra.mxu0 0
        %3266 = vmatprep.subr.bf16.mxu0 0
        %3267 = vmatpush2.bf16.msra.mxu0 0
        %3268 = vmatprep.subr.bf16.mxu0 0
        %3269 = vmatpush2.bf16.msra.mxu0 0
        %3270 = vmatprep.subr.bf16.mxu0 0
        %3271 = vmatpush2.bf16.msra.mxu0 0
        %3272 = vmatprep.subr.bf16.mxu0 0
        %3273 = vmatpush2.bf16.msra.mxu0 0
        %3274 = vmatprep.mubr.bf16.mxu0 0
        %3275 = vmatmul.mubr.bf16.gmra.mxu0 %v3237
        %v3276 = vpop.f32.mrf.mxu0
        %v3277 = vadd.f32 0.0, %v3276
        %v3278 = vpop.f32.mrf.mxu0
        %v3279 = vpop.f32.mrf.mxu0
        %v3280 = vpop.f32.mrf.mxu0
        %3281 = vdwg.mxu0
        %3284 = vrot.lane.b32.xlu0 %v1908, 16
        %v3285 = vpop.permute.xlu0 %3284
        %3286 = vrot.lane.b32.xlu0 %v1957, 16
        %v3287 = vpop.permute.xlu0 %3286
        %3292 = vrot.lane.b32.xlu0 %v2129, 32
        %v3293 = vpop.permute.xlu0 %3292
        %3294 = vrot.lane.b32.xlu0 %v2177, 32
        %v3295 = vpop.permute.xlu0 %3294
        %3300 = vrot.lane.b32.xlu0 %v2349, 48
        %v3301 = vpop.permute.xlu0 %3300
        %3302 = vrot.lane.b32.xlu0 %v2397, 48
        %v3303 = vpop.permute.xlu0 %3302
        %3308 = vrot.lane.b32.xlu0 %v2569, 64
        %v3309 = vpop.permute.xlu0 %3308
        %3310 = vrot.lane.b32.xlu0 %v2617, 64
        %v3311 = vpop.permute.xlu0 %3310
        %3316 = vrot.lane.b32.xlu0 %v2789, 80
        %v3317 = vpop.permute.xlu0 %3316
        %3318 = vrot.lane.b32.xlu0 %v2837, 80
        %v3319 = vpop.permute.xlu0 %3318
        %3324 = vrot.lane.b32.xlu0 %v3009, 96
        %v3325 = vpop.permute.xlu0 %3324
        %3326 = vrot.lane.b32.xlu0 %v3057, 96
        %v3327 = vpop.permute.xlu0 %3326
        %3332 = vrot.lane.b32.xlu0 %v3229, 112
        %v3333 = vpop.permute.xlu0 %3332
        %3334 = vrot.lane.b32.xlu0 %v3277, 112
        %v3335 = vpop.permute.xlu0 %3334
        %v3338 = vsel %vm1525, %v1685, %v3285
        %v3339 = vsel %vm1525, %v1731, %v3287
        %vm3340 = vcmask 261120
        %v3341 = vsel %vm3340, %v3338, %v3293
        %v3342 = vsel %vm3340, %v3339, %v3295
        %vm3343 = vcmask 392192
        %v3344 = vsel %vm3343, %v3341, %v3301
        %v3345 = vsel %vm3343, %v3342, %v3303
        %vm3346 = vcmask 523264
        %v3347 = vsel %vm3346, %v3344, %v3309
        %v3348 = vsel %vm3346, %v3345, %v3311
        %vm3349 = vcmask 654336
        %v3350 = vsel %vm3349, %v3347, %v3317
        %v3351 = vsel %vm3349, %v3348, %v3319
        %vm3352 = vcmask 785408
        %v3353 = vsel %vm3352, %v3350, %v3325
        %v3354 = vsel %vm3352, %v3351, %v3327
        %vm3355 = vcmask 916480
        %v3356 = vsel %vm3355, %v3353, %v3333
        %v3357 = vsel %vm3355, %v3354, %v3335
        %v3358 = vpack.c.bf16 %v3357, %v3356
        %v3359 = vld [vmem:[%s910] sm:$0xf]
        %v3360 = vld [vmem:[%s910 + $0x4] sm:$0xf]
        %v3361 = vld [vmem:[%s910 + $0x8] sm:$0xf]
        %v3362 = vld [vmem:[%s910 + $0xc] sm:$0xf]
        %v3363 = vld [vmem:[%s910 + $0x10] sm:$0xf]
        %v3364 = vld [vmem:[%s910 + $0x14] sm:$0xf]
        %v3365 = vld [vmem:[%s910 + $0x18] sm:$0xf]
        %v3366 = vld [vmem:[%s910 + $0x1c] sm:$0xf]
        %v3367 = vld [vmem:[%s910 + $0x20] sm:$0xf]
        %v3368 = vld [vmem:[%s910 + $0x24] sm:$0xf]
        %v3369 = vld [vmem:[%s910 + $0x28] sm:$0xf]
        %v3370 = vld [vmem:[%s910 + $0x2c] sm:$0xf]
        %v3371 = vld [vmem:[%s910 + $0x30] sm:$0xf]
        %v3372 = vld [vmem:[%s910 + $0x34] sm:$0xf]
        %v3373 = vld [vmem:[%s910 + $0x38] sm:$0xf]
        %v3374 = vld [vmem:[%s910 + $0x3c] sm:$0xf]
        %v3375 = vld [vmem:[%s918] sm:$0x1]
        %v3377 = vlaneseq
        %v3378 = vshrl.u32 %v3377, 7
        %v3379 = vsub.s32 0, %v3378
        %v3380 = vrot.slane %v3375, %v3379
        %v3398 = vunpack.c.l.b16 %v3359
        %v3399 = vunpack.c.l.b16 %v3360
        %v3400 = vunpack.c.l.b16 %v3361
        %v3401 = vunpack.c.l.b16 %v3362
        %v3402 = vunpack.c.l.b16 %v3363
        %v3403 = vunpack.c.l.b16 %v3364
        %v3404 = vunpack.c.l.b16 %v3365
        %v3405 = vunpack.c.l.b16 %v3366
        %v3406 = vunpack.c.l.b16 %v3367
        %v3407 = vunpack.c.l.b16 %v3368
        %v3408 = vunpack.c.l.b16 %v3369
        %v3409 = vunpack.c.l.b16 %v3370
        %v3410 = vunpack.c.l.b16 %v3371
        %v3411 = vunpack.c.l.b16 %v3372
        %v3412 = vunpack.c.l.b16 %v3373
        %v3413 = vunpack.c.l.b16 %v3374
        %v3414 = vpack.c.b16 %v3399, %v3398
        %v3415 = vpack.c.b16 %v3401, %v3400
        %v3416 = vpack.c.b16 %v3403, %v3402
        %v3417 = vpack.c.b16 %v3405, %v3404
        %v3418 = vpack.c.b16 %v3407, %v3406
        %v3419 = vpack.c.b16 %v3409, %v3408
        %v3420 = vpack.c.b16 %v3411, %v3410
        %v3421 = vpack.c.b16 %v3413, %v3412
        %3430 = vmatprep.subr.bf16.mxu0 0
        %3431 = vmatpush1.bf16.msra.mxu0 %v3421
        %3432 = vmatprep.subr.bf16.mxu0 0
        %3433 = vmatpush1.bf16.msra.mxu0 %v3420
        %3434 = vmatprep.subr.bf16.mxu0 0
        %3435 = vmatpush1.bf16.msra.mxu0 %v3419
        %3436 = vmatprep.subr.bf16.mxu0 0
        %3437 = vmatpush1.bf16.msra.mxu0 %v3418
        %3438 = vmatprep.subr.bf16.mxu0 0
        %3439 = vmatpush1.bf16.msra.mxu0 %v3417
        %3440 = vmatprep.subr.bf16.mxu0 0
        %3441 = vmatpush1.bf16.msra.mxu0 %v3416
        %3442 = vmatprep.subr.bf16.mxu0 0
        %3443 = vmatpush1.bf16.msra.mxu0 %v3415
        %3444 = vmatprep.subr.bf16.mxu0 0
        %3445 = vmatpush1.bf16.msra.mxu0 %v3414
        %3446 = vmatprep.subr.bf16.mxu0 0
        %3447 = vmatpush2.bf16.msra.mxu0 0
        %3448 = vmatprep.subr.bf16.mxu0 0
        %3449 = vmatpush2.bf16.msra.mxu0 0
        %3450 = vmatprep.subr.bf16.mxu0 0
        %3451 = vmatpush2.bf16.msra.mxu0 0
        %3452 = vmatprep.subr.bf16.mxu0 0
        %3453 = vmatpush2.bf16.msra.mxu0 0
        %3454 = vmatprep.subr.bf16.mxu0 0
        %3455 = vmatpush2.bf16.msra.mxu0 0
        %3456 = vmatprep.subr.bf16.mxu0 0
        %3457 = vmatpush2.bf16.msra.mxu0 0
        %3458 = vmatprep.subr.bf16.mxu0 0
        %3459 = vmatpush2.bf16.msra.mxu0 0
        %3460 = vmatprep.subr.bf16.mxu0 0
        %3461 = vmatpush2.bf16.msra.mxu0 0
        %3462 = vmatprep.mubr.bf16.mxu0 0
        %3463 = vmatmul.mubr.bf16.gmra.mxu0 %v3358
        %v3464 = vpop.f32.mrf.mxu0
        %v3465 = vadd.f32 %v3380, %v3464
        %v3466 = vpop.f32.mrf.mxu0
        %v3467 = vpop.f32.mrf.mxu0
        %v3468 = vadd.f32 %v3380, %v3467
        %v3469 = vpop.f32.mrf.mxu0
        %3470 = vdwg.mxu0
        %v3471 = vadd.f32 %v1180, %v3465
        %v3472 = vadd.f32 %v1181, %v3468
        %v3473 = vld [vmem:[%s926] sm:$0x1]
        %v3474 = vld [vmem:[%s934] sm:$0x1]
        %3475 = vadd.xlane.f32.xlu0 %v3471
        %v3476 = vpop.xlane.xlu0 %3475
        %3477 = vadd.xlane.f32.xlu0 %v3472
        %v3478 = vpop.xlane.xlu0 %3477
        %v3479 = vrcp.pop 128.0
        %v3480 = vmul.f32 %v3476, %v3479
        %v3481 = vmul.f32 %v3478, %v3479
        %v3482 = vsub.f32 %v3471, %v3480
        %v3483 = vsub.f32 %v3472, %v3481
        %v3484 = vmul.f32 %v3482, %v3482
        %v3485 = vmul.f32 %v3483, %v3483
        %3486 = vadd.xlane.f32.xlu0 %v3484
        %v3487 = vpop.xlane.xlu0 %3486
        %3488 = vadd.xlane.f32.xlu0 %v3485
        %v3489 = vpop.xlane.xlu0 %3488
        %v3490 = vmul.f32 %v3487, %v3479
        %v3491 = vmul.f32 %v3489, %v3479
        %v3492 = vadd.f32 %v3490, 1e-05
        %v3493 = vadd.f32 %v3491, 1e-05
        %v3494 = vrsqrt.pop %v3492
        %v3495 = vrsqrt.pop %v3493
        %v3496 = vmul.f32 %v3482, %v3494
        %v3497 = vmul.f32 %v3483, %v3495
        %v3499 = vlaneseq
        %v3500 = vshrl.u32 %v3499, 7
        %v3501 = vsub.s32 0, %v3500
        %v3502 = vrot.slane %v3473, %v3501
        %v3504 = vmul.f32 %v3496, %v3502
        %v3505 = vmul.f32 %v3497, %v3502
        %v3507 = vlaneseq
        %v3508 = vshrl.u32 %v3507, 7
        %v3509 = vsub.s32 0, %v3508
        %v3510 = vrot.slane %v3474, %v3509
        %v3512 = vadd.f32 %v3504, %v3510
        %v3513 = vadd.f32 %v3505, %v3510
        %v3514 = vpack.c.bf16 %v3513, %v3512
        %v3515 = vld [vmem:[%s943] sm:$0xff]
        %v3516 = vld [vmem:[%s943 + $0x8] sm:$0xff]
        %v3517 = vld [vmem:[%s943 + $0x10] sm:$0xff]
        %v3518 = vld [vmem:[%s943 + $0x18] sm:$0xff]
        %v3519 = vld [vmem:[%s943 + $0x20] sm:$0xff]
        %v3520 = vld [vmem:[%s943 + $0x28] sm:$0xff]
        %v3521 = vld [vmem:[%s943 + $0x30] sm:$0xff]
        %v3522 = vld [vmem:[%s943 + $0x38] sm:$0xff]
        %v3523 = vld [vmem:[%s943 + $0x40] sm:$0xff]
        %v3524 = vld [vmem:[%s943 + $0x48] sm:$0xff]
        %v3525 = vld [vmem:[%s943 + $0x50] sm:$0xff]
        %v3526 = vld [vmem:[%s943 + $0x58] sm:$0xff]
        %v3527 = vld [vmem:[%s943 + $0x60] sm:$0xff]
        %v3528 = vld [vmem:[%s943 + $0x68] sm:$0xff]
        %v3529 = vld [vmem:[%s943 + $0x70] sm:$0xff]
        %v3530 = vld [vmem:[%s943 + $0x78] sm:$0xff]
        %v3531 = vld [vmem:[%s943 + $0x80] sm:$0xff]
        %v3532 = vld [vmem:[%s943 + $0x88] sm:$0xff]
        %v3533 = vld [vmem:[%s943 + $0x90] sm:$0xff]
        %v3534 = vld [vmem:[%s943 + $0x98] sm:$0xff]
        %v3535 = vld [vmem:[%s943 + $0xa0] sm:$0xff]
        %v3536 = vld [vmem:[%s943 + $0xa8] sm:$0xff]
        %v3537 = vld [vmem:[%s943 + $0xb0] sm:$0xff]
        %v3538 = vld [vmem:[%s943 + $0xb8] sm:$0xff]
        %v3539 = vld [vmem:[%s943 + $0xc0] sm:$0xff]
        %v3540 = vld [vmem:[%s943 + $0xc8] sm:$0xff]
        %v3541 = vld [vmem:[%s943 + $0xd0] sm:$0xff]
        %v3542 = vld [vmem:[%s943 + $0xd8] sm:$0xff]
        %v3543 = vld [vmem:[%s943 + $0xe0] sm:$0xff]
        %v3544 = vld [vmem:[%s943 + $0xe8] sm:$0xff]
        %v3545 = vld [vmem:[%s943 + $0xf0] sm:$0xff]
        %v3546 = vld [vmem:[%s943 + $0xf8] sm:$0xff]
        %v3547 = vld [vmem:[%s943 + $0x100] sm:$0xff]
        %v3548 = vld [vmem:[%s943 + $0x108] sm:$0xff]
        %v3549 = vld [vmem:[%s943 + $0x110] sm:$0xff]
        %v3550 = vld [vmem:[%s943 + $0x118] sm:$0xff]
        %v3551 = vld [vmem:[%s943 + $0x120] sm:$0xff]
        %v3552 = vld [vmem:[%s943 + $0x128] sm:$0xff]
        %v3553 = vld [vmem:[%s943 + $0x130] sm:$0xff]
        %v3554 = vld [vmem:[%s943 + $0x138] sm:$0xff]
        %v3555 = vld [vmem:[%s943 + $0x140] sm:$0xff]
        %v3556 = vld [vmem:[%s943 + $0x148] sm:$0xff]
        %v3557 = vld [vmem:[%s943 + $0x150] sm:$0xff]
        %v3558 = vld [vmem:[%s943 + $0x158] sm:$0xff]
        %v3559 = vld [vmem:[%s943 + $0x160] sm:$0xff]
        %v3560 = vld [vmem:[%s943 + $0x168] sm:$0xff]
        %v3561 = vld [vmem:[%s943 + $0x170] sm:$0xff]
        %v3562 = vld [vmem:[%s943 + $0x178] sm:$0xff]
        %v3563 = vld [vmem:[%s943 + $0x180] sm:$0xff]
        %v3564 = vld [vmem:[%s943 + $0x188] sm:$0xff]
        %v3565 = vld [vmem:[%s943 + $0x190] sm:$0xff]
        %v3566 = vld [vmem:[%s943 + $0x198] sm:$0xff]
        %v3567 = vld [vmem:[%s943 + $0x1a0] sm:$0xff]
        %v3568 = vld [vmem:[%s943 + $0x1a8] sm:$0xff]
        %v3569 = vld [vmem:[%s943 + $0x1b0] sm:$0xff]
        %v3570 = vld [vmem:[%s943 + $0x1b8] sm:$0xff]
        %v3571 = vld [vmem:[%s943 + $0x1c0] sm:$0xff]
        %v3572 = vld [vmem:[%s943 + $0x1c8] sm:$0xff]
        %v3573 = vld [vmem:[%s943 + $0x1d0] sm:$0xff]
        %v3574 = vld [vmem:[%s943 + $0x1d8] sm:$0xff]
        %v3575 = vld [vmem:[%s943 + $0x1e0] sm:$0xff]
        %v3576 = vld [vmem:[%s943 + $0x1e8] sm:$0xff]
        %v3577 = vld [vmem:[%s943 + $0x1f0] sm:$0xff]
        %v3578 = vld [vmem:[%s943 + $0x1f8] sm:$0xff]
        %v3579 = vld [vmem:[%s943 + $0x200] sm:$0xff]
        %v3580 = vld [vmem:[%s943 + $0x208] sm:$0xff]
        %v3581 = vld [vmem:[%s943 + $0x210] sm:$0xff]
        %v3582 = vld [vmem:[%s943 + $0x218] sm:$0xff]
        %v3583 = vld [vmem:[%s943 + $0x220] sm:$0xff]
        %v3584 = vld [vmem:[%s943 + $0x228] sm:$0xff]
        %v3585 = vld [vmem:[%s943 + $0x230] sm:$0xff]
        %v3586 = vld [vmem:[%s943 + $0x238] sm:$0xff]
        %v3587 = vld [vmem:[%s943 + $0x240] sm:$0xff]
        %v3588 = vld [vmem:[%s943 + $0x248] sm:$0xff]
        %v3589 = vld [vmem:[%s943 + $0x250] sm:$0xff]
        %v3590 = vld [vmem:[%s943 + $0x258] sm:$0xff]
        %v3591 = vld [vmem:[%s943 + $0x260] sm:$0xff]
        %v3592 = vld [vmem:[%s943 + $0x268] sm:$0xff]
        %v3593 = vld [vmem:[%s943 + $0x270] sm:$0xff]
        %v3594 = vld [vmem:[%s943 + $0x278] sm:$0xff]
        %v3595 = vld [vmem:[%s943 + $0x280] sm:$0xff]
        %v3596 = vld [vmem:[%s943 + $0x288] sm:$0xff]
        %v3597 = vld [vmem:[%s943 + $0x290] sm:$0xff]
        %v3598 = vld [vmem:[%s943 + $0x298] sm:$0xff]
        %v3599 = vld [vmem:[%s943 + $0x2a0] sm:$0xff]
        %v3600 = vld [vmem:[%s943 + $0x2a8] sm:$0xff]
        %v3601 = vld [vmem:[%s943 + $0x2b0] sm:$0xff]
        %v3602 = vld [vmem:[%s943 + $0x2b8] sm:$0xff]
        %v3603 = vld [vmem:[%s943 + $0x2c0] sm:$0xff]
        %v3604 = vld [vmem:[%s943 + $0x2c8] sm:$0xff]
        %v3605 = vld [vmem:[%s943 + $0x2d0] sm:$0xff]
        %v3606 = vld [vmem:[%s943 + $0x2d8] sm:$0xff]
        %v3607 = vld [vmem:[%s943 + $0x2e0] sm:$0xff]
        %v3608 = vld [vmem:[%s943 + $0x2e8] sm:$0xff]
        %v3609 = vld [vmem:[%s943 + $0x2f0] sm:$0xff]
        %v3610 = vld [vmem:[%s943 + $0x2f8] sm:$0xff]
        %v3611 = vld [vmem:[%s943 + $0x300] sm:$0xff]
        %v3612 = vld [vmem:[%s943 + $0x308] sm:$0xff]
        %v3613 = vld [vmem:[%s943 + $0x310] sm:$0xff]
        %v3614 = vld [vmem:[%s943 + $0x318] sm:$0xff]
        %v3615 = vld [vmem:[%s943 + $0x320] sm:$0xff]
        %v3616 = vld [vmem:[%s943 + $0x328] sm:$0xff]
        %v3617 = vld [vmem:[%s943 + $0x330] sm:$0xff]
        %v3618 = vld [vmem:[%s943 + $0x338] sm:$0xff]
        %v3619 = vld [vmem:[%s943 + $0x340] sm:$0xff]
        %v3620 = vld [vmem:[%s943 + $0x348] sm:$0xff]
        %v3621 = vld [vmem:[%s943 + $0x350] sm:$0xff]
        %v3622 = vld [vmem:[%s943 + $0x358] sm:$0xff]
        %v3623 = vld [vmem:[%s943 + $0x360] sm:$0xff]
        %v3624 = vld [vmem:[%s943 + $0x368] sm:$0xff]
        %v3625 = vld [vmem:[%s943 + $0x370] sm:$0xff]
        %v3626 = vld [vmem:[%s943 + $0x378] sm:$0xff]
        %v3627 = vld [vmem:[%s943 + $0x380] sm:$0xff]
        %v3628 = vld [vmem:[%s943 + $0x388] sm:$0xff]
        %v3629 = vld [vmem:[%s943 + $0x390] sm:$0xff]
        %v3630 = vld [vmem:[%s943 + $0x398] sm:$0xff]
        %v3631 = vld [vmem:[%s943 + $0x3a0] sm:$0xff]
        %v3632 = vld [vmem:[%s943 + $0x3a8] sm:$0xff]
        %v3633 = vld [vmem:[%s943 + $0x3b0] sm:$0xff]
        %v3634 = vld [vmem:[%s943 + $0x3b8] sm:$0xff]
        %v3635 = vld [vmem:[%s943 + $0x3c0] sm:$0xff]
        %v3636 = vld [vmem:[%s943 + $0x3c8] sm:$0xff]
        %v3637 = vld [vmem:[%s943 + $0x3d0] sm:$0xff]
        %v3638 = vld [vmem:[%s943 + $0x3d8] sm:$0xff]
        %v3639 = vld [vmem:[%s943 + $0x3e0] sm:$0xff]
        %v3640 = vld [vmem:[%s943 + $0x3e8] sm:$0xff]
        %v3641 = vld [vmem:[%s943 + $0x3f0] sm:$0xff]
        %v3642 = vld [vmem:[%s943 + $0x3f8] sm:$0xff]
        %v3643 = vld [vmem:[%s952] sm:$0xff]
        %v3644 = vld [vmem:[%s952 + $0x8] sm:$0xff]
        %v3647 = vlaneseq
        %v3648 = vshrl.u32 %v3647, 7
        %v3649 = vsub.s32 0, %v3648
        %v3650 = vrot.slane %v3643, %v3649
        %v3651 = vlaneseq
        %v3652 = vshrl.u32 %v3651, 7
        %v3653 = vsub.s32 1, %v3652
        %v3654 = vrot.slane %v3643, %v3653
        %v3655 = vlaneseq
        %v3656 = vshrl.u32 %v3655, 7
        %v3657 = vsub.s32 2, %v3656
        %v3658 = vrot.slane %v3643, %v3657
        %v3659 = vlaneseq
        %v3660 = vshrl.u32 %v3659, 7
        %v3661 = vsub.s32 3, %v3660
        %v3662 = vrot.slane %v3643, %v3661
        %v3663 = vlaneseq
        %v3664 = vshrl.u32 %v3663, 7
        %v3665 = vsub.s32 4, %v3664
        %v3666 = vrot.slane %v3643, %v3665
        %v3667 = vlaneseq
        %v3668 = vshrl.u32 %v3667, 7
        %v3669 = vsub.s32 5, %v3668
        %v3670 = vrot.slane %v3643, %v3669
        %v3671 = vlaneseq
        %v3672 = vshrl.u32 %v3671, 7
        %v3673 = vsub.s32 6, %v3672
        %v3674 = vrot.slane %v3643, %v3673
        %v3675 = vlaneseq
        %v3676 = vshrl.u32 %v3675, 7
        %v3677 = vsub.s32 7, %v3676
        %v3678 = vrot.slane %v3643, %v3677
        %v3679 = vlaneseq
        %v3680 = vshrl.u32 %v3679, 7
        %v3681 = vsub.s32 0, %v3680
        %v3682 = vrot.slane %v3644, %v3681
        %v3683 = vlaneseq
        %v3684 = vshrl.u32 %v3683, 7
        %v3685 = vsub.s32 1, %v3684
        %v3686 = vrot.slane %v3644, %v3685
        %v3687 = vlaneseq
        %v3688 = vshrl.u32 %v3687, 7
        %v3689 = vsub.s32 2, %v3688
        %v3690 = vrot.slane %v3644, %v3689
        %v3691 = vlaneseq
        %v3692 = vshrl.u32 %v3691, 7
        %v3693 = vsub.s32 3, %v3692
        %v3694 = vrot.slane %v3644, %v3693
        %v3695 = vlaneseq
        %v3696 = vshrl.u32 %v3695, 7
        %v3697 = vsub.s32 4, %v3696
        %v3698 = vrot.slane %v3644, %v3697
        %v3699 = vlaneseq
        %v3700 = vshrl.u32 %v3699, 7
        %v3701 = vsub.s32 5, %v3700
        %v3702 = vrot.slane %v3644, %v3701
        %v3703 = vlaneseq
        %v3704 = vshrl.u32 %v3703, 7
        %v3705 = vsub.s32 6, %v3704
        %v3706 = vrot.slane %v3644, %v3705
        %v3707 = vlaneseq
        %v3708 = vshrl.u32 %v3707, 7
        %v3709 = vsub.s32 7, %v3708
        %v3710 = vrot.slane %v3644, %v3709
        %v3855 = vunpack.c.l.b16 %v3515
        %v3856 = vunpack.c.h.b16 %v3515
        %v3857 = vunpack.c.l.b16 %v3516
        %v3858 = vunpack.c.h.b16 %v3516
        %v3859 = vunpack.c.l.b16 %v3517
        %v3860 = vunpack.c.h.b16 %v3517
        %v3861 = vunpack.c.l.b16 %v3518
        %v3862 = vunpack.c.h.b16 %v3518
        %v3863 = vunpack.c.l.b16 %v3519
        %v3864 = vunpack.c.h.b16 %v3519
        %v3865 = vunpack.c.l.b16 %v3520
        %v3866 = vunpack.c.h.b16 %v3520
        %v3867 = vunpack.c.l.b16 %v3521
        %v3868 = vunpack.c.h.b16 %v3521
        %v3869 = vunpack.c.l.b16 %v3522
        %v3870 = vunpack.c.h.b16 %v3522
        %v3871 = vunpack.c.l.b16 %v3523
        %v3872 = vunpack.c.h.b16 %v3523
        %v3873 = vunpack.c.l.b16 %v3524
        %v3874 = vunpack.c.h.b16 %v3524
        %v3875 = vunpack.c.l.b16 %v3525
        %v3876 = vunpack.c.h.b16 %v3525
        %v3877 = vunpack.c.l.b16 %v3526
        %v3878 = vunpack.c.h.b16 %v3526
        %v3879 = vunpack.c.l.b16 %v3527
        %v3880 = vunpack.c.h.b16 %v3527
        %v3881 = vunpack.c.l.b16 %v3528
        %v3882 = vunpack.c.h.b16 %v3528
        %v3883 = vunpack.c.l.b16 %v3529
        %v3884 = vunpack.c.h.b16 %v3529
        %v3885 = vunpack.c.l.b16 %v3530
        %v3886 = vunpack.c.h.b16 %v3530
        %v3887 = vunpack.c.l.b16 %v3531
        %v3888 = vunpack.c.h.b16 %v3531
        %v3889 = vunpack.c.l.b16 %v3532
        %v3890 = vunpack.c.h.b16 %v3532
        %v3891 = vunpack.c.l.b16 %v3533
        %v3892 = vunpack.c.h.b16 %v3533
        %v3893 = vunpack.c.l.b16 %v3534
        %v3894 = vunpack.c.h.b16 %v3534
        %v3895 = vunpack.c.l.b16 %v3535
        %v3896 = vunpack.c.h.b16 %v3535
        %v3897 = vunpack.c.l.b16 %v3536
        %v3898 = vunpack.c.h.b16 %v3536
        %v3899 = vunpack.c.l.b16 %v3537
        %v3900 = vunpack.c.h.b16 %v3537
        %v3901 = vunpack.c.l.b16 %v3538
        %v3902 = vunpack.c.h.b16 %v3538
        %v3903 = vunpack.c.l.b16 %v3539
        %v3904 = vunpack.c.h.b16 %v3539
        %v3905 = vunpack.c.l.b16 %v3540
        %v3906 = vunpack.c.h.b16 %v3540
        %v3907 = vunpack.c.l.b16 %v3541
        %v3908 = vunpack.c.h.b16 %v3541
        %v3909 = vunpack.c.l.b16 %v3542
        %v3910 = vunpack.c.h.b16 %v3542
        %v3911 = vunpack.c.l.b16 %v3543
        %v3912 = vunpack.c.h.b16 %v3543
        %v3913 = vunpack.c.l.b16 %v3544
        %v3914 = vunpack.c.h.b16 %v3544
        %v3915 = vunpack.c.l.b16 %v3545
        %v3916 = vunpack.c.h.b16 %v3545
        %v3917 = vunpack.c.l.b16 %v3546
        %v3918 = vunpack.c.h.b16 %v3546
        %v3919 = vunpack.c.l.b16 %v3547
        %v3920 = vunpack.c.h.b16 %v3547
        %v3921 = vunpack.c.l.b16 %v3548
        %v3922 = vunpack.c.h.b16 %v3548
        %v3923 = vunpack.c.l.b16 %v3549
        %v3924 = vunpack.c.h.b16 %v3549
        %v3925 = vunpack.c.l.b16 %v3550
        %v3926 = vunpack.c.h.b16 %v3550
        %v3927 = vunpack.c.l.b16 %v3551
        %v3928 = vunpack.c.h.b16 %v3551
        %v3929 = vunpack.c.l.b16 %v3552
        %v3930 = vunpack.c.h.b16 %v3552
        %v3931 = vunpack.c.l.b16 %v3553
        %v3932 = vunpack.c.h.b16 %v3553
        %v3933 = vunpack.c.l.b16 %v3554
        %v3934 = vunpack.c.h.b16 %v3554
        %v3935 = vunpack.c.l.b16 %v3555
        %v3936 = vunpack.c.h.b16 %v3555
        %v3937 = vunpack.c.l.b16 %v3556
        %v3938 = vunpack.c.h.b16 %v3556
        %v3939 = vunpack.c.l.b16 %v3557
        %v3940 = vunpack.c.h.b16 %v3557
        %v3941 = vunpack.c.l.b16 %v3558
        %v3942 = vunpack.c.h.b16 %v3558
        %v3943 = vunpack.c.l.b16 %v3559
        %v3944 = vunpack.c.h.b16 %v3559
        %v3945 = vunpack.c.l.b16 %v3560
        %v3946 = vunpack.c.h.b16 %v3560
        %v3947 = vunpack.c.l.b16 %v3561
        %v3948 = vunpack.c.h.b16 %v3561
        %v3949 = vunpack.c.l.b16 %v3562
        %v3950 = vunpack.c.h.b16 %v3562
        %v3951 = vunpack.c.l.b16 %v3563
        %v3952 = vunpack.c.h.b16 %v3563
        %v3953 = vunpack.c.l.b16 %v3564
        %v3954 = vunpack.c.h.b16 %v3564
        %v3955 = vunpack.c.l.b16 %v3565
        %v3956 = vunpack.c.h.b16 %v3565
        %v3957 = vunpack.c.l.b16 %v3566
        %v3958 = vunpack.c.h.b16 %v3566
        %v3959 = vunpack.c.l.b16 %v3567
        %v3960 = vunpack.c.h.b16 %v3567
        %v3961 = vunpack.c.l.b16 %v3568
        %v3962 = vunpack.c.h.b16 %v3568
        %v3963 = vunpack.c.l.b16 %v3569
        %v3964 = vunpack.c.h.b16 %v3569
        %v3965 = vunpack.c.l.b16 %v3570
        %v3966 = vunpack.c.h.b16 %v3570
        %v3967 = vunpack.c.l.b16 %v3571
        %v3968 = vunpack.c.h.b16 %v3571
        %v3969 = vunpack.c.l.b16 %v3572
        %v3970 = vunpack.c.h.b16 %v3572
        %v3971 = vunpack.c.l.b16 %v3573
        %v3972 = vunpack.c.h.b16 %v3573
        %v3973 = vunpack.c.l.b16 %v3574
        %v3974 = vunpack.c.h.b16 %v3574
        %v3975 = vunpack.c.l.b16 %v3575
        %v3976 = vunpack.c.h.b16 %v3575
        %v3977 = vunpack.c.l.b16 %v3576
        %v3978 = vunpack.c.h.b16 %v3576
        %v3979 = vunpack.c.l.b16 %v3577
        %v3980 = vunpack.c.h.b16 %v3577
        %v3981 = vunpack.c.l.b16 %v3578
        %v3982 = vunpack.c.h.b16 %v3578
        %v3983 = vunpack.c.l.b16 %v3579
        %v3984 = vunpack.c.h.b16 %v3579
        %v3985 = vunpack.c.l.b16 %v3580
        %v3986 = vunpack.c.h.b16 %v3580
        %v3987 = vunpack.c.l.b16 %v3581
        %v3988 = vunpack.c.h.b16 %v3581
        %v3989 = vunpack.c.l.b16 %v3582
        %v3990 = vunpack.c.h.b16 %v3582
        %v3991 = vunpack.c.l.b16 %v3583
        %v3992 = vunpack.c.h.b16 %v3583
        %v3993 = vunpack.c.l.b16 %v3584
        %v3994 = vunpack.c.h.b16 %v3584
        %v3995 = vunpack.c.l.b16 %v3585
        %v3996 = vunpack.c.h.b16 %v3585
        %v3997 = vunpack.c.l.b16 %v3586
        %v3998 = vunpack.c.h.b16 %v3586
        %v3999 = vunpack.c.l.b16 %v3587
        %v4000 = vunpack.c.h.b16 %v3587
        %v4001 = vunpack.c.l.b16 %v3588
        %v4002 = vunpack.c.h.b16 %v3588
        %v4003 = vunpack.c.l.b16 %v3589
        %v4004 = vunpack.c.h.b16 %v3589
        %v4005 = vunpack.c.l.b16 %v3590
        %v4006 = vunpack.c.h.b16 %v3590
        %v4007 = vunpack.c.l.b16 %v3591
        %v4008 = vunpack.c.h.b16 %v3591
        %v4009 = vunpack.c.l.b16 %v3592
        %v4010 = vunpack.c.h.b16 %v3592
        %v4011 = vunpack.c.l.b16 %v3593
        %v4012 = vunpack.c.h.b16 %v3593
        %v4013 = vunpack.c.l.b16 %v3594
        %v4014 = vunpack.c.h.b16 %v3594
        %v4015 = vunpack.c.l.b16 %v3595
        %v4016 = vunpack.c.h.b16 %v3595
        %v4017 = vunpack.c.l.b16 %v3596
        %v4018 = vunpack.c.h.b16 %v3596
        %v4019 = vunpack.c.l.b16 %v3597
        %v4020 = vunpack.c.h.b16 %v3597
        %v4021 = vunpack.c.l.b16 %v3598
        %v4022 = vunpack.c.h.b16 %v3598
        %v4023 = vunpack.c.l.b16 %v3599
        %v4024 = vunpack.c.h.b16 %v3599
        %v4025 = vunpack.c.l.b16 %v3600
        %v4026 = vunpack.c.h.b16 %v3600
        %v4027 = vunpack.c.l.b16 %v3601
        %v4028 = vunpack.c.h.b16 %v3601
        %v4029 = vunpack.c.l.b16 %v3602
        %v4030 = vunpack.c.h.b16 %v3602
        %v4031 = vunpack.c.l.b16 %v3603
        %v4032 = vunpack.c.h.b16 %v3603
        %v4033 = vunpack.c.l.b16 %v3604
        %v4034 = vunpack.c.h.b16 %v3604
        %v4035 = vunpack.c.l.b16 %v3605
        %v4036 = vunpack.c.h.b16 %v3605
        %v4037 = vunpack.c.l.b16 %v3606
        %v4038 = vunpack.c.h.b16 %v3606
        %v4039 = vunpack.c.l.b16 %v3607
        %v4040 = vunpack.c.h.b16 %v3607
        %v4041 = vunpack.c.l.b16 %v3608
        %v4042 = vunpack.c.h.b16 %v3608
        %v4043 = vunpack.c.l.b16 %v3609
        %v4044 = vunpack.c.h.b16 %v3609
        %v4045 = vunpack.c.l.b16 %v3610
        %v4046 = vunpack.c.h.b16 %v3610
        %v4047 = vunpack.c.l.b16 %v3611
        %v4048 = vunpack.c.h.b16 %v3611
        %v4049 = vunpack.c.l.b16 %v3612
        %v4050 = vunpack.c.h.b16 %v3612
        %v4051 = vunpack.c.l.b16 %v3613
        %v4052 = vunpack.c.h.b16 %v3613
        %v4053 = vunpack.c.l.b16 %v3614
        %v4054 = vunpack.c.h.b16 %v3614
        %v4055 = vunpack.c.l.b16 %v3615
        %v4056 = vunpack.c.h.b16 %v3615
        %v4057 = vunpack.c.l.b16 %v3616
        %v4058 = vunpack.c.h.b16 %v3616
        %v4059 = vunpack.c.l.b16 %v3617
        %v4060 = vunpack.c.h.b16 %v3617
        %v4061 = vunpack.c.l.b16 %v3618
        %v4062 = vunpack.c.h.b16 %v3618
        %v4063 = vunpack.c.l.b16 %v3619
        %v4064 = vunpack.c.h.b16 %v3619
        %v4065 = vunpack.c.l.b16 %v3620
        %v4066 = vunpack.c.h.b16 %v3620
        %v4067 = vunpack.c.l.b16 %v3621
        %v4068 = vunpack.c.h.b16 %v3621
        %v4069 = vunpack.c.l.b16 %v3622
        %v4070 = vunpack.c.h.b16 %v3622
        %v4071 = vunpack.c.l.b16 %v3623
        %v4072 = vunpack.c.h.b16 %v3623
        %v4073 = vunpack.c.l.b16 %v3624
        %v4074 = vunpack.c.h.b16 %v3624
        %v4075 = vunpack.c.l.b16 %v3625
        %v4076 = vunpack.c.h.b16 %v3625
        %v4077 = vunpack.c.l.b16 %v3626
        %v4078 = vunpack.c.h.b16 %v3626
        %v4079 = vunpack.c.l.b16 %v3627
        %v4080 = vunpack.c.h.b16 %v3627
        %v4081 = vunpack.c.l.b16 %v3628
        %v4082 = vunpack.c.h.b16 %v3628
        %v4083 = vunpack.c.l.b16 %v3629
        %v4084 = vunpack.c.h.b16 %v3629
        %v4085 = vunpack.c.l.b16 %v3630
        %v4086 = vunpack.c.h.b16 %v3630
        %v4087 = vunpack.c.l.b16 %v3631
        %v4088 = vunpack.c.h.b16 %v3631
        %v4089 = vunpack.c.l.b16 %v3632
        %v4090 = vunpack.c.h.b16 %v3632
        %v4091 = vunpack.c.l.b16 %v3633
        %v4092 = vunpack.c.h.b16 %v3633
        %v4093 = vunpack.c.l.b16 %v3634
        %v4094 = vunpack.c.h.b16 %v3634
        %v4095 = vunpack.c.l.b16 %v3635
        %v4096 = vunpack.c.h.b16 %v3635
        %v4097 = vunpack.c.l.b16 %v3636
        %v4098 = vunpack.c.h.b16 %v3636
        %v4099 = vunpack.c.l.b16 %v3637
        %v4100 = vunpack.c.h.b16 %v3637
        %v4101 = vunpack.c.l.b16 %v3638
        %v4102 = vunpack.c.h.b16 %v3638
        %v4103 = vunpack.c.l.b16 %v3639
        %v4104 = vunpack.c.h.b16 %v3639
        %v4105 = vunpack.c.l.b16 %v3640
        %v4106 = vunpack.c.h.b16 %v3640
        %v4107 = vunpack.c.l.b16 %v3641
        %v4108 = vunpack.c.h.b16 %v3641
        %v4109 = vunpack.c.l.b16 %v3642
        %v4110 = vunpack.c.h.b16 %v3642
        %v4111 = vpack.c.b16 %v3871, %v3855
        %v4112 = vpack.c.b16 %v3872, %v3856
        %v4113 = vpack.c.b16 %v3873, %v3857
        %v4114 = vpack.c.b16 %v3874, %v3858
        %v4115 = vpack.c.b16 %v3875, %v3859
        %v4116 = vpack.c.b16 %v3876, %v3860
        %v4117 = vpack.c.b16 %v3877, %v3861
        %v4118 = vpack.c.b16 %v3878, %v3862
        %v4119 = vpack.c.b16 %v3879, %v3863
        %v4120 = vpack.c.b16 %v3880, %v3864
        %v4121 = vpack.c.b16 %v3881, %v3865
        %v4122 = vpack.c.b16 %v3882, %v3866
        %v4123 = vpack.c.b16 %v3883, %v3867
        %v4124 = vpack.c.b16 %v3884, %v3868
        %v4125 = vpack.c.b16 %v3885, %v3869
        %v4126 = vpack.c.b16 %v3886, %v3870
        %v4127 = vpack.c.b16 %v3903, %v3887
        %v4128 = vpack.c.b16 %v3904, %v3888
        %v4129 = vpack.c.b16 %v3905, %v3889
        %v4130 = vpack.c.b16 %v3906, %v3890
        %v4131 = vpack.c.b16 %v3907, %v3891
        %v4132 = vpack.c.b16 %v3908, %v3892
        %v4133 = vpack.c.b16 %v3909, %v3893
        %v4134 = vpack.c.b16 %v3910, %v3894
        %v4135 = vpack.c.b16 %v3911, %v3895
        %v4136 = vpack.c.b16 %v3912, %v3896
        %v4137 = vpack.c.b16 %v3913, %v3897
        %v4138 = vpack.c.b16 %v3914, %v3898
        %v4139 = vpack.c.b16 %v3915, %v3899
        %v4140 = vpack.c.b16 %v3916, %v3900
        %v4141 = vpack.c.b16 %v3917, %v3901
        %v4142 = vpack.c.b16 %v3918, %v3902
        %v4143 = vpack.c.b16 %v3935, %v3919
        %v4144 = vpack.c.b16 %v3936, %v3920
        %v4145 = vpack.c.b16 %v3937, %v3921
        %v4146 = vpack.c.b16 %v3938, %v3922
        %v4147 = vpack.c.b16 %v3939, %v3923
        %v4148 = vpack.c.b16 %v3940, %v3924
        %v4149 = vpack.c.b16 %v3941, %v3925
        %v4150 = vpack.c.b16 %v3942, %v3926
        %v4151 = vpack.c.b16 %v3943, %v3927
        %v4152 = vpack.c.b16 %v3944, %v3928
        %v4153 = vpack.c.b16 %v3945, %v3929
        %v4154 = vpack.c.b16 %v3946, %v3930
        %v4155 = vpack.c.b16 %v3947, %v3931
        %v4156 = vpack.c.b16 %v3948, %v3932
        %v4157 = vpack.c.b16 %v3949, %v3933
        %v4158 = vpack.c.b16 %v3950, %v3934
        %v4159 = vpack.c.b16 %v3967, %v3951
        %v4160 = vpack.c.b16 %v3968, %v3952
        %v4161 = vpack.c.b16 %v3969, %v3953
        %v4162 = vpack.c.b16 %v3970, %v3954
        %v4163 = vpack.c.b16 %v3971, %v3955
        %v4164 = vpack.c.b16 %v3972, %v3956
        %v4165 = vpack.c.b16 %v3973, %v3957
        %v4166 = vpack.c.b16 %v3974, %v3958
        %v4167 = vpack.c.b16 %v3975, %v3959
        %v4168 = vpack.c.b16 %v3976, %v3960
        %v4169 = vpack.c.b16 %v3977, %v3961
        %v4170 = vpack.c.b16 %v3978, %v3962
        %v4171 = vpack.c.b16 %v3979, %v3963
        %v4172 = vpack.c.b16 %v3980, %v3964
        %v4173 = vpack.c.b16 %v3981, %v3965
        %v4174 = vpack.c.b16 %v3982, %v3966
        %v4175 = vpack.c.b16 %v3999, %v3983
        %v4176 = vpack.c.b16 %v4000, %v3984
        %v4177 = vpack.c.b16 %v4001, %v3985
        %v4178 = vpack.c.b16 %v4002, %v3986
        %v4179 = vpack.c.b16 %v4003, %v3987
        %v4180 = vpack.c.b16 %v4004, %v3988
        %v4181 = vpack.c.b16 %v4005, %v3989
        %v4182 = vpack.c.b16 %v4006, %v3990
        %v4183 = vpack.c.b16 %v4007, %v3991
        %v4184 = vpack.c.b16 %v4008, %v3992
        %v4185 = vpack.c.b16 %v4009, %v3993
        %v4186 = vpack.c.b16 %v4010, %v3994
        %v4187 = vpack.c.b16 %v4011, %v3995
        %v4188 = vpack.c.b16 %v4012, %v3996
        %v4189 = vpack.c.b16 %v4013, %v3997
        %v4190 = vpack.c.b16 %v4014, %v3998
        %v4191 = vpack.c.b16 %v4031, %v4015
        %v4192 = vpack.c.b16 %v4032, %v4016
        %v4193 = vpack.c.b16 %v4033, %v4017
        %v4194 = vpack.c.b16 %v4034, %v4018
        %v4195 = vpack.c.b16 %v4035, %v4019
        %v4196 = vpack.c.b16 %v4036, %v4020
        %v4197 = vpack.c.b16 %v4037, %v4021
        %v4198 = vpack.c.b16 %v4038, %v4022
        %v4199 = vpack.c.b16 %v4039, %v4023
        %v4200 = vpack.c.b16 %v4040, %v4024
        %v4201 = vpack.c.b16 %v4041, %v4025
        %v4202 = vpack.c.b16 %v4042, %v4026
        %v4203 = vpack.c.b16 %v4043, %v4027
        %v4204 = vpack.c.b16 %v4044, %v4028
        %v4205 = vpack.c.b16 %v4045, %v4029
        %v4206 = vpack.c.b16 %v4046, %v4030
        %v4207 = vpack.c.b16 %v4063, %v4047
        %v4208 = vpack.c.b16 %v4064, %v4048
        %v4209 = vpack.c.b16 %v4065, %v4049
        %v4210 = vpack.c.b16 %v4066, %v4050
        %v4211 = vpack.c.b16 %v4067, %v4051
        %v4212 = vpack.c.b16 %v4068, %v4052
        %v4213 = vpack.c.b16 %v4069, %v4053
        %v4214 = vpack.c.b16 %v4070, %v4054
        %v4215 = vpack.c.b16 %v4071, %v4055
        %v4216 = vpack.c.b16 %v4072, %v4056
        %v4217 = vpack.c.b16 %v4073, %v4057
        %v4218 = vpack.c.b16 %v4074, %v4058
        %v4219 = vpack.c.b16 %v4075, %v4059
        %v4220 = vpack.c.b16 %v4076, %v4060
        %v4221 = vpack.c.b16 %v4077, %v4061
        %v4222 = vpack.c.b16 %v4078, %v4062
        %v4223 = vpack.c.b16 %v4095, %v4079
        %v4224 = vpack.c.b16 %v4096, %v4080
        %v4225 = vpack.c.b16 %v4097, %v4081
        %v4226 = vpack.c.b16 %v4098, %v4082
        %v4227 = vpack.c.b16 %v4099, %v4083
        %v4228 = vpack.c.b16 %v4100, %v4084
        %v4229 = vpack.c.b16 %v4101, %v4085
        %v4230 = vpack.c.b16 %v4102, %v4086
        %v4231 = vpack.c.b16 %v4103, %v4087
        %v4232 = vpack.c.b16 %v4104, %v4088
        %v4233 = vpack.c.b16 %v4105, %v4089
        %v4234 = vpack.c.b16 %v4106, %v4090
        %v4235 = vpack.c.b16 %v4107, %v4091
        %v4236 = vpack.c.b16 %v4108, %v4092
        %v4237 = vpack.c.b16 %v4109, %v4093
        %v4238 = vpack.c.b16 %v4110, %v4094
        %4367 = vmatprep.subr.bf16.mxu0 %v4224
        %4368 = vmatpush1.bf16.msra.mxu0 %v4223
        %4369 = vmatprep.subr.bf16.mxu0 %v4208
        %4370 = vmatpush1.bf16.msra.mxu0 %v4207
        %4371 = vmatprep.subr.bf16.mxu0 %v4192
        %4372 = vmatpush1.bf16.msra.mxu0 %v4191
        %4373 = vmatprep.subr.bf16.mxu0 %v4176
        %4374 = vmatpush1.bf16.msra.mxu0 %v4175
        %4375 = vmatprep.subr.bf16.mxu0 %v4160
        %4376 = vmatpush1.bf16.msra.mxu0 %v4159
        %4377 = vmatprep.subr.bf16.mxu0 %v4144
        %4378 = vmatpush1.bf16.msra.mxu0 %v4143
        %4379 = vmatprep.subr.bf16.mxu0 %v4128
        %4380 = vmatpush1.bf16.msra.mxu0 %v4127
        %4381 = vmatprep.subr.bf16.mxu0 %v4112
        %4382 = vmatpush1.bf16.msra.mxu0 %v4111
        %4383 = vmatprep.subr.bf16.mxu0 0
        %4384 = vmatpush2.bf16.msra.mxu0 0
        %4385 = vmatprep.subr.bf16.mxu0 0
        %4386 = vmatpush2.bf16.msra.mxu0 0
        %4387 = vmatprep.subr.bf16.mxu0 0
        %4388 = vmatpush2.bf16.msra.mxu0 0
        %4389 = vmatprep.subr.bf16.mxu0 0
        %4390 = vmatpush2.bf16.msra.mxu0 0
        %4391 = vmatprep.subr.bf16.mxu0 0
        %4392 = vmatpush2.bf16.msra.mxu0 0
        %4393 = vmatprep.subr.bf16.mxu0 0
        %4394 = vmatpush2.bf16.msra.mxu0 0
        %4395 = vmatprep.subr.bf16.mxu0 0
        %4396 = vmatpush2.bf16.msra.mxu0 0
        %4397 = vmatprep.subr.bf16.mxu0 0
        %4398 = vmatpush2.bf16.msra.mxu0 0
        %4399 = vmatprep.mubr.bf16.mxu0 0
        %4400 = vmatmul.mubr.bf16.gmra.mxu0 %v3514
        %v4401 = vpop.f32.mrf.mxu0
        %v4402 = vadd.f32 %v3650, %v4401
        %v4403 = vpop.f32.mrf.mxu0
        %v4404 = vadd.f32 %v3654, %v4403
        %v4405 = vpop.f32.mrf.mxu0
        %v4406 = vadd.f32 %v3650, %v4405
        %v4407 = vpop.f32.mrf.mxu0
        %v4408 = vadd.f32 %v3654, %v4407
        %4409 = vdwg.mxu0
        %4410 = vmatprep.subr.bf16.mxu0 %v4226
        %4411 = vmatpush1.bf16.msra.mxu0 %v4225
        %4412 = vmatprep.subr.bf16.mxu0 %v4210
        %4413 = vmatpush1.bf16.msra.mxu0 %v4209
        %4414 = vmatprep.subr.bf16.mxu0 %v4194
        %4415 = vmatpush1.bf16.msra.mxu0 %v4193
        %4416 = vmatprep.subr.bf16.mxu0 %v4178
        %4417 = vmatpush1.bf16.msra.mxu0 %v4177
        %4418 = vmatprep.subr.bf16.mxu0 %v4162
        %4419 = vmatpush1.bf16.msra.mxu0 %v4161
        %4420 = vmatprep.subr.bf16.mxu0 %v4146
        %4421 = vmatpush1.bf16.msra.mxu0 %v4145
        %4422 = vmatprep.subr.bf16.mxu0 %v4130
        %4423 = vmatpush1.bf16.msra.mxu0 %v4129
        %4424 = vmatprep.subr.bf16.mxu0 %v4114
        %4425 = vmatpush1.bf16.msra.mxu0 %v4113
        %4426 = vmatprep.subr.bf16.mxu0 0
        %4427 = vmatpush2.bf16.msra.mxu0 0
        %4428 = vmatprep.subr.bf16.mxu0 0
        %4429 = vmatpush2.bf16.msra.mxu0 0
        %4430 = vmatprep.subr.bf16.mxu0 0
        %4431 = vmatpush2.bf16.msra.mxu0 0
        %4432 = vmatprep.subr.bf16.mxu0 0
        %4433 = vmatpush2.bf16.msra.mxu0 0
        %4434 = vmatprep.subr.bf16.mxu0 0
        %4435 = vmatpush2.bf16.msra.mxu0 0
        %4436 = vmatprep.subr.bf16.mxu0 0
        %4437 = vmatpush2.bf16.msra.mxu0 0
        %4438 = vmatprep.subr.bf16.mxu0 0
        %4439 = vmatpush2.bf16.msra.mxu0 0
        %4440 = vmatprep.subr.bf16.mxu0 0
        %4441 = vmatpush2.bf16.msra.mxu0 0
        %4442 = vmatprep.mubr.bf16.mxu0 0
        %4443 = vmatmul.mubr.bf16.gmra.mxu0 %v3514
        %v4444 = vpop.f32.mrf.mxu0
        %v4445 = vadd.f32 %v3658, %v4444
        %v4446 = vpop.f32.mrf.mxu0
        %v4447 = vadd.f32 %v3662, %v4446
        %v4448 = vpop.f32.mrf.mxu0
        %v4449 = vadd.f32 %v3658, %v4448
        %v4450 = vpop.f32.mrf.mxu0
        %v4451 = vadd.f32 %v3662, %v4450
        %4452 = vdwg.mxu0
        %4453 = vmatprep.subr.bf16.mxu0 %v4228
        %4454 = vmatpush1.bf16.msra.mxu0 %v4227
        %4455 = vmatprep.subr.bf16.mxu0 %v4212
        %4456 = vmatpush1.bf16.msra.mxu0 %v4211
        %4457 = vmatprep.subr.bf16.mxu0 %v4196
        %4458 = vmatpush1.bf16.msra.mxu0 %v4195
        %4459 = vmatprep.subr.bf16.mxu0 %v4180
        %4460 = vmatpush1.bf16.msra.mxu0 %v4179
        %4461 = vmatprep.subr.bf16.mxu0 %v4164
        %4462 = vmatpush1.bf16.msra.mxu0 %v4163
        %4463 = vmatprep.subr.bf16.mxu0 %v4148
        %4464 = vmatpush1.bf16.msra.mxu0 %v4147
        %4465 = vmatprep.subr.bf16.mxu0 %v4132
        %4466 = vmatpush1.bf16.msra.mxu0 %v4131
        %4467 = vmatprep.subr.bf16.mxu0 %v4116
        %4468 = vmatpush1.bf16.msra.mxu0 %v4115
        %4469 = vmatprep.subr.bf16.mxu0 0
        %4470 = vmatpush2.bf16.msra.mxu0 0
        %4471 = vmatprep.subr.bf16.mxu0 0
        %4472 = vmatpush2.bf16.msra.mxu0 0
        %4473 = vmatprep.subr.bf16.mxu0 0
        %4474 = vmatpush2.bf16.msra.mxu0 0
        %4475 = vmatprep.subr.bf16.mxu0 0
        %4476 = vmatpush2.bf16.msra.mxu0 0
        %4477 = vmatprep.subr.bf16.mxu0 0
        %4478 = vmatpush2.bf16.msra.mxu0 0
        %4479 = vmatprep.subr.bf16.mxu0 0
        %4480 = vmatpush2.bf16.msra.mxu0 0
        %4481 = vmatprep.subr.bf16.mxu0 0
        %4482 = vmatpush2.bf16.msra.mxu0 0
        %4483 = vmatprep.subr.bf16.mxu0 0
        %4484 = vmatpush2.bf16.msra.mxu0 0
        %4485 = vmatprep.mubr.bf16.mxu0 0
        %4486 = vmatmul.mubr.bf16.gmra.mxu0 %v3514
        %v4487 = vpop.f32.mrf.mxu0
        %v4488 = vadd.f32 %v3666, %v4487
        %v4489 = vpop.f32.mrf.mxu0
        %v4490 = vadd.f32 %v3670, %v4489
        %v4491 = vpop.f32.mrf.mxu0
        %v4492 = vadd.f32 %v3666, %v4491
        %v4493 = vpop.f32.mrf.mxu0
        %v4494 = vadd.f32 %v3670, %v4493
        %4495 = vdwg.mxu0
        %4496 = vmatprep.subr.bf16.mxu0 %v4230
        %4497 = vmatpush1.bf16.msra.mxu0 %v4229
        %4498 = vmatprep.subr.bf16.mxu0 %v4214
        %4499 = vmatpush1.bf16.msra.mxu0 %v4213
        %4500 = vmatprep.subr.bf16.mxu0 %v4198
        %4501 = vmatpush1.bf16.msra.mxu0 %v4197
        %4502 = vmatprep.subr.bf16.mxu0 %v4182
        %4503 = vmatpush1.bf16.msra.mxu0 %v4181
        %4504 = vmatprep.subr.bf16.mxu0 %v4166
        %4505 = vmatpush1.bf16.msra.mxu0 %v4165
        %4506 = vmatprep.subr.bf16.mxu0 %v4150
        %4507 = vmatpush1.bf16.msra.mxu0 %v4149
        %4508 = vmatprep.subr.bf16.mxu0 %v4134
        %4509 = vmatpush1.bf16.msra.mxu0 %v4133
        %4510 = vmatprep.subr.bf16.mxu0 %v4118
        %4511 = vmatpush1.bf16.msra.mxu0 %v4117
        %4512 = vmatprep.subr.bf16.mxu0 0
        %4513 = vmatpush2.bf16.msra.mxu0 0
        %4514 = vmatprep.subr.bf16.mxu0 0
        %4515 = vmatpush2.bf16.msra.mxu0 0
        %4516 = vmatprep.subr.bf16.mxu0 0
        %4517 = vmatpush2.bf16.msra.mxu0 0
        %4518 = vmatprep.subr.bf16.mxu0 0
        %4519 = vmatpush2.bf16.msra.mxu0 0
        %4520 = vmatprep.subr.bf16.mxu0 0
        %4521 = vmatpush2.bf16.msra.mxu0 0
        %4522 = vmatprep.subr.bf16.mxu0 0
        %4523 = vmatpush2.bf16.msra.mxu0 0
        %4524 = vmatprep.subr.bf16.mxu0 0
        %4525 = vmatpush2.bf16.msra.mxu0 0
        %4526 = vmatprep.subr.bf16.mxu0 0
        %4527 = vmatpush2.bf16.msra.mxu0 0
        %4528 = vmatprep.mubr.bf16.mxu0 0
        %4529 = vmatmul.mubr.bf16.gmra.mxu0 %v3514
        %v4530 = vpop.f32.mrf.mxu0
        %v4531 = vadd.f32 %v3674, %v4530
        %v4532 = vpop.f32.mrf.mxu0
        %v4533 = vadd.f32 %v3678, %v4532
        %v4534 = vpop.f32.mrf.mxu0
        %v4535 = vadd.f32 %v3674, %v4534
        %v4536 = vpop.f32.mrf.mxu0
        %v4537 = vadd.f32 %v3678, %v4536
        %4538 = vdwg.mxu0
        %4539 = vmatprep.subr.bf16.mxu0 %v4232
        %4540 = vmatpush1.bf16.msra.mxu0 %v4231
        %4541 = vmatprep.subr.bf16.mxu0 %v4216
        %4542 = vmatpush1.bf16.msra.mxu0 %v4215
        %4543 = vmatprep.subr.bf16.mxu0 %v4200
        %4544 = vmatpush1.bf16.msra.mxu0 %v4199
        %4545 = vmatprep.subr.bf16.mxu0 %v4184
        %4546 = vmatpush1.bf16.msra.mxu0 %v4183
        %4547 = vmatprep.subr.bf16.mxu0 %v4168
        %4548 = vmatpush1.bf16.msra.mxu0 %v4167
        %4549 = vmatprep.subr.bf16.mxu0 %v4152
        %4550 = vmatpush1.bf16.msra.mxu0 %v4151
        %4551 = vmatprep.subr.bf16.mxu0 %v4136
        %4552 = vmatpush1.bf16.msra.mxu0 %v4135
        %4553 = vmatprep.subr.bf16.mxu0 %v4120
        %4554 = vmatpush1.bf16.msra.mxu0 %v4119
        %4555 = vmatprep.subr.bf16.mxu0 0
        %4556 = vmatpush2.bf16.msra.mxu0 0
        %4557 = vmatprep.subr.bf16.mxu0 0
        %4558 = vmatpush2.bf16.msra.mxu0 0
        %4559 = vmatprep.subr.bf16.mxu0 0
        %4560 = vmatpush2.bf16.msra.mxu0 0
        %4561 = vmatprep.subr.bf16.mxu0 0
        %4562 = vmatpush2.bf16.msra.mxu0 0
        %4563 = vmatprep.subr.bf16.mxu0 0
        %4564 = vmatpush2.bf16.msra.mxu0 0
        %4565 = vmatprep.subr.bf16.mxu0 0
        %4566 = vmatpush2.bf16.msra.mxu0 0
        %4567 = vmatprep.subr.bf16.mxu0 0
        %4568 = vmatpush2.bf16.msra.mxu0 0
        %4569 = vmatprep.subr.bf16.mxu0 0
        %4570 = vmatpush2.bf16.msra.mxu0 0
        %4571 = vmatprep.mubr.bf16.mxu0 0
        %4572 = vmatmul.mubr.bf16.gmra.mxu0 %v3514
        %v4573 = vpop.f32.mrf.mxu0
        %v4574 = vadd.f32 %v3682, %v4573
        %v4575 = vpop.f32.mrf.mxu0
        %v4576 = vadd.f32 %v3686, %v4575
        %v4577 = vpop.f32.mrf.mxu0
        %v4578 = vadd.f32 %v3682, %v4577
        %v4579 = vpop.f32.mrf.mxu0
        %v4580 = vadd.f32 %v3686, %v4579
        %4581 = vdwg.mxu0
        %4582 = vmatprep.subr.bf16.mxu0 %v4234
        %4583 = vmatpush1.bf16.msra.mxu0 %v4233
        %4584 = vmatprep.subr.bf16.mxu0 %v4218
        %4585 = vmatpush1.bf16.msra.mxu0 %v4217
        %4586 = vmatprep.subr.bf16.mxu0 %v4202
        %4587 = vmatpush1.bf16.msra.mxu0 %v4201
        %4588 = vmatprep.subr.bf16.mxu0 %v4186
        %4589 = vmatpush1.bf16.msra.mxu0 %v4185
        %4590 = vmatprep.subr.bf16.mxu0 %v4170
        %4591 = vmatpush1.bf16.msra.mxu0 %v4169
        %4592 = vmatprep.subr.bf16.mxu0 %v4154
        %4593 = vmatpush1.bf16.msra.mxu0 %v4153
        %4594 = vmatprep.subr.bf16.mxu0 %v4138
        %4595 = vmatpush1.bf16.msra.mxu0 %v4137
        %4596 = vmatprep.subr.bf16.mxu0 %v4122
        %4597 = vmatpush1.bf16.msra.mxu0 %v4121
        %4598 = vmatprep.subr.bf16.mxu0 0
        %4599 = vmatpush2.bf16.msra.mxu0 0
        %4600 = vmatprep.subr.bf16.mxu0 0
        %4601 = vmatpush2.bf16.msra.mxu0 0
        %4602 = vmatprep.subr.bf16.mxu0 0
        %4603 = vmatpush2.bf16.msra.mxu0 0
        %4604 = vmatprep.subr.bf16.mxu0 0
        %4605 = vmatpush2.bf16.msra.mxu0 0
        %4606 = vmatprep.subr.bf16.mxu0 0
        %4607 = vmatpush2.bf16.msra.mxu0 0
        %4608 = vmatprep.subr.bf16.mxu0 0
        %4609 = vmatpush2.bf16.msra.mxu0 0
        %4610 = vmatprep.subr.bf16.mxu0 0
        %4611 = vmatpush2.bf16.msra.mxu0 0
        %4612 = vmatprep.subr.bf16.mxu0 0
        %4613 = vmatpush2.bf16.msra.mxu0 0
        %4614 = vmatprep.mubr.bf16.mxu0 0
        %4615 = vmatmul.mubr.bf16.gmra.mxu0 %v3514
        %v4616 = vpop.f32.mrf.mxu0
        %v4617 = vadd.f32 %v3690, %v4616
        %v4618 = vpop.f32.mrf.mxu0
        %v4619 = vadd.f32 %v3694, %v4618
        %v4620 = vpop.f32.mrf.mxu0
        %v4621 = vadd.f32 %v3690, %v4620
        %v4622 = vpop.f32.mrf.mxu0
        %v4623 = vadd.f32 %v3694, %v4622
        %4624 = vdwg.mxu0
        %4625 = vmatprep.subr.bf16.mxu0 %v4236
        %4626 = vmatpush1.bf16.msra.mxu0 %v4235
        %4627 = vmatprep.subr.bf16.mxu0 %v4220
        %4628 = vmatpush1.bf16.msra.mxu0 %v4219
        %4629 = vmatprep.subr.bf16.mxu0 %v4204
        %4630 = vmatpush1.bf16.msra.mxu0 %v4203
        %4631 = vmatprep.subr.bf16.mxu0 %v4188
        %4632 = vmatpush1.bf16.msra.mxu0 %v4187
        %4633 = vmatprep.subr.bf16.mxu0 %v4172
        %4634 = vmatpush1.bf16.msra.mxu0 %v4171
        %4635 = vmatprep.subr.bf16.mxu0 %v4156
        %4636 = vmatpush1.bf16.msra.mxu0 %v4155
        %4637 = vmatprep.subr.bf16.mxu0 %v4140
        %4638 = vmatpush1.bf16.msra.mxu0 %v4139
        %4639 = vmatprep.subr.bf16.mxu0 %v4124
        %4640 = vmatpush1.bf16.msra.mxu0 %v4123
        %4641 = vmatprep.subr.bf16.mxu0 0
        %4642 = vmatpush2.bf16.msra.mxu0 0
        %4643 = vmatprep.subr.bf16.mxu0 0
        %4644 = vmatpush2.bf16.msra.mxu0 0
        %4645 = vmatprep.subr.bf16.mxu0 0
        %4646 = vmatpush2.bf16.msra.mxu0 0
        %4647 = vmatprep.subr.bf16.mxu0 0
        %4648 = vmatpush2.bf16.msra.mxu0 0
        %4649 = vmatprep.subr.bf16.mxu0 0
        %4650 = vmatpush2.bf16.msra.mxu0 0
        %4651 = vmatprep.subr.bf16.mxu0 0
        %4652 = vmatpush2.bf16.msra.mxu0 0
        %4653 = vmatprep.subr.bf16.mxu0 0
        %4654 = vmatpush2.bf16.msra.mxu0 0
        %4655 = vmatprep.subr.bf16.mxu0 0
        %4656 = vmatpush2.bf16.msra.mxu0 0
        %4657 = vmatprep.mubr.bf16.mxu0 0
        %4658 = vmatmul.mubr.bf16.gmra.mxu0 %v3514
        %v4659 = vpop.f32.mrf.mxu0
        %v4660 = vadd.f32 %v3698, %v4659
        %v4661 = vpop.f32.mrf.mxu0
        %v4662 = vadd.f32 %v3702, %v4661
        %v4663 = vpop.f32.mrf.mxu0
        %v4664 = vadd.f32 %v3698, %v4663
        %v4665 = vpop.f32.mrf.mxu0
        %v4666 = vadd.f32 %v3702, %v4665
        %4667 = vdwg.mxu0
        %4668 = vmatprep.subr.bf16.mxu0 %v4238
        %4669 = vmatpush1.bf16.msra.mxu0 %v4237
        %4670 = vmatprep.subr.bf16.mxu0 %v4222
        %4671 = vmatpush1.bf16.msra.mxu0 %v4221
        %4672 = vmatprep.subr.bf16.mxu0 %v4206
        %4673 = vmatpush1.bf16.msra.mxu0 %v4205
        %4674 = vmatprep.subr.bf16.mxu0 %v4190
        %4675 = vmatpush1.bf16.msra.mxu0 %v4189
        %4676 = vmatprep.subr.bf16.mxu0 %v4174
        %4677 = vmatpush1.bf16.msra.mxu0 %v4173
        %4678 = vmatprep.subr.bf16.mxu0 %v4158
        %4679 = vmatpush1.bf16.msra.mxu0 %v4157
        %4680 = vmatprep.subr.bf16.mxu0 %v4142
        %4681 = vmatpush1.bf16.msra.mxu0 %v4141
        %4682 = vmatprep.subr.bf16.mxu0 %v4126
        %4683 = vmatpush1.bf16.msra.mxu0 %v4125
        %4684 = vmatprep.subr.bf16.mxu0 0
        %4685 = vmatpush2.bf16.msra.mxu0 0
        %4686 = vmatprep.subr.bf16.mxu0 0
        %4687 = vmatpush2.bf16.msra.mxu0 0
        %4688 = vmatprep.subr.bf16.mxu0 0
        %4689 = vmatpush2.bf16.msra.mxu0 0
        %4690 = vmatprep.subr.bf16.mxu0 0
        %4691 = vmatpush2.bf16.msra.mxu0 0
        %4692 = vmatprep.subr.bf16.mxu0 0
        %4693 = vmatpush2.bf16.msra.mxu0 0
        %4694 = vmatprep.subr.bf16.mxu0 0
        %4695 = vmatpush2.bf16.msra.mxu0 0
        %4696 = vmatprep.subr.bf16.mxu0 0
        %4697 = vmatpush2.bf16.msra.mxu0 0
        %4698 = vmatprep.subr.bf16.mxu0 0
        %4699 = vmatpush2.bf16.msra.mxu0 0
        %4700 = vmatprep.mubr.bf16.mxu0 0
        %4701 = vmatmul.mubr.bf16.gmra.mxu0 %v3514
        %v4702 = vpop.f32.mrf.mxu0
        %v4703 = vadd.f32 %v3706, %v4702
        %v4704 = vpop.f32.mrf.mxu0
        %v4705 = vadd.f32 %v3710, %v4704
        %v4706 = vpop.f32.mrf.mxu0
        %v4707 = vadd.f32 %v3706, %v4706
        %v4708 = vpop.f32.mrf.mxu0
        %v4709 = vadd.f32 %v3710, %v4708
        %4710 = vdwg.mxu0
        %v4711 = vmax.f32 %v4402, 0.0
        %v4712 = vmax.f32 %v4404, 0.0
        %v4713 = vmax.f32 %v4445, 0.0
        %v4714 = vmax.f32 %v4447, 0.0
        %v4715 = vmax.f32 %v4488, 0.0
        %v4716 = vmax.f32 %v4490, 0.0
        %v4717 = vmax.f32 %v4531, 0.0
        %v4718 = vmax.f32 %v4533, 0.0
        %v4719 = vmax.f32 %v4574, 0.0
        %v4720 = vmax.f32 %v4576, 0.0
        %v4721 = vmax.f32 %v4617, 0.0
        %v4722 = vmax.f32 %v4619, 0.0
        %v4723 = vmax.f32 %v4660, 0.0
        %v4724 = vmax.f32 %v4662, 0.0
        %v4725 = vmax.f32 %v4703, 0.0
        %v4726 = vmax.f32 %v4705, 0.0
        %v4727 = vmax.f32 %v4406, 0.0
        %v4728 = vmax.f32 %v4408, 0.0
        %v4729 = vmax.f32 %v4449, 0.0
        %v4730 = vmax.f32 %v4451, 0.0
        %v4731 = vmax.f32 %v4492, 0.0
        %v4732 = vmax.f32 %v4494, 0.0
        %v4733 = vmax.f32 %v4535, 0.0
        %v4734 = vmax.f32 %v4537, 0.0
        %v4735 = vmax.f32 %v4578, 0.0
        %v4736 = vmax.f32 %v4580, 0.0
        %v4737 = vmax.f32 %v4621, 0.0
        %v4738 = vmax.f32 %v4623, 0.0
        %v4739 = vmax.f32 %v4664, 0.0
        %v4740 = vmax.f32 %v4666, 0.0
        %v4741 = vmax.f32 %v4707, 0.0
        %v4742 = vmax.f32 %v4709, 0.0
        %v4743 = vpack.c.bf16 %v4727, %v4711
        %v4744 = vpack.c.bf16 %v4728, %v4712
        %v4745 = vpack.c.bf16 %v4729, %v4713
        %v4746 = vpack.c.bf16 %v4730, %v4714
        %v4747 = vpack.c.bf16 %v4731, %v4715
        %v4748 = vpack.c.bf16 %v4732, %v4716
        %v4749 = vpack.c.bf16 %v4733, %v4717
        %v4750 = vpack.c.bf16 %v4734, %v4718
        %v4751 = vpack.c.bf16 %v4735, %v4719
        %v4752 = vpack.c.bf16 %v4736, %v4720
        %v4753 = vpack.c.bf16 %v4737, %v4721
        %v4754 = vpack.c.bf16 %v4738, %v4722
        %v4755 = vpack.c.bf16 %v4739, %v4723
        %v4756 = vpack.c.bf16 %v4740, %v4724
        %v4757 = vpack.c.bf16 %v4741, %v4725
        %v4758 = vpack.c.bf16 %v4742, %v4726
        %v4759 = vld [vmem:[%s961] sm:$0xf]
        %v4760 = vld [vmem:[%s961 + $0x4] sm:$0xf]
        %v4761 = vld [vmem:[%s961 + $0x8] sm:$0xf]
        %v4762 = vld [vmem:[%s961 + $0xc] sm:$0xf]
        %v4763 = vld [vmem:[%s961 + $0x10] sm:$0xf]
        %v4764 = vld [vmem:[%s961 + $0x14] sm:$0xf]
        %v4765 = vld [vmem:[%s961 + $0x18] sm:$0xf]
        %v4766 = vld [vmem:[%s961 + $0x1c] sm:$0xf]
        %v4767 = vld [vmem:[%s961 + $0x20] sm:$0xf]
        %v4768 = vld [vmem:[%s961 + $0x24] sm:$0xf]
        %v4769 = vld [vmem:[%s961 + $0x28] sm:$0xf]
        %v4770 = vld [vmem:[%s961 + $0x2c] sm:$0xf]
        %v4771 = vld [vmem:[%s961 + $0x30] sm:$0xf]
        %v4772 = vld [vmem:[%s961 + $0x34] sm:$0xf]
        %v4773 = vld [vmem:[%s961 + $0x38] sm:$0xf]
        %v4774 = vld [vmem:[%s961 + $0x3c] sm:$0xf]
        %v4775 = vld [vmem:[%s961 + $0x40] sm:$0xf]
        %v4776 = vld [vmem:[%s961 + $0x44] sm:$0xf]
        %v4777 = vld [vmem:[%s961 + $0x48] sm:$0xf]
        %v4778 = vld [vmem:[%s961 + $0x4c] sm:$0xf]
        %v4779 = vld [vmem:[%s961 + $0x50] sm:$0xf]
        %v4780 = vld [vmem:[%s961 + $0x54] sm:$0xf]
        %v4781 = vld [vmem:[%s961 + $0x58] sm:$0xf]
        %v4782 = vld [vmem:[%s961 + $0x5c] sm:$0xf]
        %v4783 = vld [vmem:[%s961 + $0x60] sm:$0xf]
        %v4784 = vld [vmem:[%s961 + $0x64] sm:$0xf]
        %v4785 = vld [vmem:[%s961 + $0x68] sm:$0xf]
        %v4786 = vld [vmem:[%s961 + $0x6c] sm:$0xf]
        %v4787 = vld [vmem:[%s961 + $0x70] sm:$0xf]
        %v4788 = vld [vmem:[%s961 + $0x74] sm:$0xf]
        %v4789 = vld [vmem:[%s961 + $0x78] sm:$0xf]
        %v4790 = vld [vmem:[%s961 + $0x7c] sm:$0xf]
        %v4791 = vld [vmem:[%s961 + $0x80] sm:$0xf]
        %v4792 = vld [vmem:[%s961 + $0x84] sm:$0xf]
        %v4793 = vld [vmem:[%s961 + $0x88] sm:$0xf]
        %v4794 = vld [vmem:[%s961 + $0x8c] sm:$0xf]
        %v4795 = vld [vmem:[%s961 + $0x90] sm:$0xf]
        %v4796 = vld [vmem:[%s961 + $0x94] sm:$0xf]
        %v4797 = vld [vmem:[%s961 + $0x98] sm:$0xf]
        %v4798 = vld [vmem:[%s961 + $0x9c] sm:$0xf]
        %v4799 = vld [vmem:[%s961 + $0xa0] sm:$0xf]
        %v4800 = vld [vmem:[%s961 + $0xa4] sm:$0xf]
        %v4801 = vld [vmem:[%s961 + $0xa8] sm:$0xf]
        %v4802 = vld [vmem:[%s961 + $0xac] sm:$0xf]
        %v4803 = vld [vmem:[%s961 + $0xb0] sm:$0xf]
        %v4804 = vld [vmem:[%s961 + $0xb4] sm:$0xf]
        %v4805 = vld [vmem:[%s961 + $0xb8] sm:$0xf]
        %v4806 = vld [vmem:[%s961 + $0xbc] sm:$0xf]
        %v4807 = vld [vmem:[%s961 + $0xc0] sm:$0xf]
        %v4808 = vld [vmem:[%s961 + $0xc4] sm:$0xf]
        %v4809 = vld [vmem:[%s961 + $0xc8] sm:$0xf]
        %v4810 = vld [vmem:[%s961 + $0xcc] sm:$0xf]
        %v4811 = vld [vmem:[%s961 + $0xd0] sm:$0xf]
        %v4812 = vld [vmem:[%s961 + $0xd4] sm:$0xf]
        %v4813 = vld [vmem:[%s961 + $0xd8] sm:$0xf]
        %v4814 = vld [vmem:[%s961 + $0xdc] sm:$0xf]
        %v4815 = vld [vmem:[%s961 + $0xe0] sm:$0xf]
        %v4816 = vld [vmem:[%s961 + $0xe4] sm:$0xf]
        %v4817 = vld [vmem:[%s961 + $0xe8] sm:$0xf]
        %v4818 = vld [vmem:[%s961 + $0xec] sm:$0xf]
        %v4819 = vld [vmem:[%s961 + $0xf0] sm:$0xf]
        %v4820 = vld [vmem:[%s961 + $0xf4] sm:$0xf]
        %v4821 = vld [vmem:[%s961 + $0xf8] sm:$0xf]
        %v4822 = vld [vmem:[%s961 + $0xfc] sm:$0xf]
        %v4823 = vld [vmem:[%s961 + $0x100] sm:$0xf]
        %v4824 = vld [vmem:[%s961 + $0x104] sm:$0xf]
        %v4825 = vld [vmem:[%s961 + $0x108] sm:$0xf]
        %v4826 = vld [vmem:[%s961 + $0x10c] sm:$0xf]
        %v4827 = vld [vmem:[%s961 + $0x110] sm:$0xf]
        %v4828 = vld [vmem:[%s961 + $0x114] sm:$0xf]
        %v4829 = vld [vmem:[%s961 + $0x118] sm:$0xf]
        %v4830 = vld [vmem:[%s961 + $0x11c] sm:$0xf]
        %v4831 = vld [vmem:[%s961 + $0x120] sm:$0xf]
        %v4832 = vld [vmem:[%s961 + $0x124] sm:$0xf]
        %v4833 = vld [vmem:[%s961 + $0x128] sm:$0xf]
        %v4834 = vld [vmem:[%s961 + $0x12c] sm:$0xf]
        %v4835 = vld [vmem:[%s961 + $0x130] sm:$0xf]
        %v4836 = vld [vmem:[%s961 + $0x134] sm:$0xf]
        %v4837 = vld [vmem:[%s961 + $0x138] sm:$0xf]
        %v4838 = vld [vmem:[%s961 + $0x13c] sm:$0xf]
        %v4839 = vld [vmem:[%s961 + $0x140] sm:$0xf]
        %v4840 = vld [vmem:[%s961 + $0x144] sm:$0xf]
        %v4841 = vld [vmem:[%s961 + $0x148] sm:$0xf]
        %v4842 = vld [vmem:[%s961 + $0x14c] sm:$0xf]
        %v4843 = vld [vmem:[%s961 + $0x150] sm:$0xf]
        %v4844 = vld [vmem:[%s961 + $0x154] sm:$0xf]
        %v4845 = vld [vmem:[%s961 + $0x158] sm:$0xf]
        %v4846 = vld [vmem:[%s961 + $0x15c] sm:$0xf]
        %v4847 = vld [vmem:[%s961 + $0x160] sm:$0xf]
        %v4848 = vld [vmem:[%s961 + $0x164] sm:$0xf]
        %v4849 = vld [vmem:[%s961 + $0x168] sm:$0xf]
        %v4850 = vld [vmem:[%s961 + $0x16c] sm:$0xf]
        %v4851 = vld [vmem:[%s961 + $0x170] sm:$0xf]
        %v4852 = vld [vmem:[%s961 + $0x174] sm:$0xf]
        %v4853 = vld [vmem:[%s961 + $0x178] sm:$0xf]
        %v4854 = vld [vmem:[%s961 + $0x17c] sm:$0xf]
        %v4855 = vld [vmem:[%s961 + $0x180] sm:$0xf]
        %v4856 = vld [vmem:[%s961 + $0x184] sm:$0xf]
        %v4857 = vld [vmem:[%s961 + $0x188] sm:$0xf]
        %v4858 = vld [vmem:[%s961 + $0x18c] sm:$0xf]
        %v4859 = vld [vmem:[%s961 + $0x190] sm:$0xf]
        %v4860 = vld [vmem:[%s961 + $0x194] sm:$0xf]
        %v4861 = vld [vmem:[%s961 + $0x198] sm:$0xf]
        %v4862 = vld [vmem:[%s961 + $0x19c] sm:$0xf]
        %v4863 = vld [vmem:[%s961 + $0x1a0] sm:$0xf]
        %v4864 = vld [vmem:[%s961 + $0x1a4] sm:$0xf]
        %v4865 = vld [vmem:[%s961 + $0x1a8] sm:$0xf]
        %v4866 = vld [vmem:[%s961 + $0x1ac] sm:$0xf]
        %v4867 = vld [vmem:[%s961 + $0x1b0] sm:$0xf]
        %v4868 = vld [vmem:[%s961 + $0x1b4] sm:$0xf]
        %v4869 = vld [vmem:[%s961 + $0x1b8] sm:$0xf]
        %v4870 = vld [vmem:[%s961 + $0x1bc] sm:$0xf]
        %v4871 = vld [vmem:[%s961 + $0x1c0] sm:$0xf]
        %v4872 = vld [vmem:[%s961 + $0x1c4] sm:$0xf]
        %v4873 = vld [vmem:[%s961 + $0x1c8] sm:$0xf]
        %v4874 = vld [vmem:[%s961 + $0x1cc] sm:$0xf]
        %v4875 = vld [vmem:[%s961 + $0x1d0] sm:$0xf]
        %v4876 = vld [vmem:[%s961 + $0x1d4] sm:$0xf]
        %v4877 = vld [vmem:[%s961 + $0x1d8] sm:$0xf]
        %v4878 = vld [vmem:[%s961 + $0x1dc] sm:$0xf]
        %v4879 = vld [vmem:[%s961 + $0x1e0] sm:$0xf]
        %v4880 = vld [vmem:[%s961 + $0x1e4] sm:$0xf]
        %v4881 = vld [vmem:[%s961 + $0x1e8] sm:$0xf]
        %v4882 = vld [vmem:[%s961 + $0x1ec] sm:$0xf]
        %v4883 = vld [vmem:[%s961 + $0x1f0] sm:$0xf]
        %v4884 = vld [vmem:[%s961 + $0x1f4] sm:$0xf]
        %v4885 = vld [vmem:[%s961 + $0x1f8] sm:$0xf]
        %v4886 = vld [vmem:[%s961 + $0x1fc] sm:$0xf]
        %v4887 = vld [vmem:[%s961 + $0x200] sm:$0xf]
        %v4888 = vld [vmem:[%s961 + $0x204] sm:$0xf]
        %v4889 = vld [vmem:[%s961 + $0x208] sm:$0xf]
        %v4890 = vld [vmem:[%s961 + $0x20c] sm:$0xf]
        %v4891 = vld [vmem:[%s961 + $0x210] sm:$0xf]
        %v4892 = vld [vmem:[%s961 + $0x214] sm:$0xf]
        %v4893 = vld [vmem:[%s961 + $0x218] sm:$0xf]
        %v4894 = vld [vmem:[%s961 + $0x21c] sm:$0xf]
        %v4895 = vld [vmem:[%s961 + $0x220] sm:$0xf]
        %v4896 = vld [vmem:[%s961 + $0x224] sm:$0xf]
        %v4897 = vld [vmem:[%s961 + $0x228] sm:$0xf]
        %v4898 = vld [vmem:[%s961 + $0x22c] sm:$0xf]
        %v4899 = vld [vmem:[%s961 + $0x230] sm:$0xf]
        %v4900 = vld [vmem:[%s961 + $0x234] sm:$0xf]
        %v4901 = vld [vmem:[%s961 + $0x238] sm:$0xf]
        %v4902 = vld [vmem:[%s961 + $0x23c] sm:$0xf]
        %v4903 = vld [vmem:[%s961 + $0x240] sm:$0xf]
        %v4904 = vld [vmem:[%s961 + $0x244] sm:$0xf]
        %v4905 = vld [vmem:[%s961 + $0x248] sm:$0xf]
        %v4906 = vld [vmem:[%s961 + $0x24c] sm:$0xf]
        %v4907 = vld [vmem:[%s961 + $0x250] sm:$0xf]
        %v4908 = vld [vmem:[%s961 + $0x254] sm:$0xf]
        %v4909 = vld [vmem:[%s961 + $0x258] sm:$0xf]
        %v4910 = vld [vmem:[%s961 + $0x25c] sm:$0xf]
        %v4911 = vld [vmem:[%s961 + $0x260] sm:$0xf]
        %v4912 = vld [vmem:[%s961 + $0x264] sm:$0xf]
        %v4913 = vld [vmem:[%s961 + $0x268] sm:$0xf]
        %v4914 = vld [vmem:[%s961 + $0x26c] sm:$0xf]
        %v4915 = vld [vmem:[%s961 + $0x270] sm:$0xf]
        %v4916 = vld [vmem:[%s961 + $0x274] sm:$0xf]
        %v4917 = vld [vmem:[%s961 + $0x278] sm:$0xf]
        %v4918 = vld [vmem:[%s961 + $0x27c] sm:$0xf]
        %v4919 = vld [vmem:[%s961 + $0x280] sm:$0xf]
        %v4920 = vld [vmem:[%s961 + $0x284] sm:$0xf]
        %v4921 = vld [vmem:[%s961 + $0x288] sm:$0xf]
        %v4922 = vld [vmem:[%s961 + $0x28c] sm:$0xf]
        %v4923 = vld [vmem:[%s961 + $0x290] sm:$0xf]
        %v4924 = vld [vmem:[%s961 + $0x294] sm:$0xf]
        %v4925 = vld [vmem:[%s961 + $0x298] sm:$0xf]
        %v4926 = vld [vmem:[%s961 + $0x29c] sm:$0xf]
        %v4927 = vld [vmem:[%s961 + $0x2a0] sm:$0xf]
        %v4928 = vld [vmem:[%s961 + $0x2a4] sm:$0xf]
        %v4929 = vld [vmem:[%s961 + $0x2a8] sm:$0xf]
        %v4930 = vld [vmem:[%s961 + $0x2ac] sm:$0xf]
        %v4931 = vld [vmem:[%s961 + $0x2b0] sm:$0xf]
        %v4932 = vld [vmem:[%s961 + $0x2b4] sm:$0xf]
        %v4933 = vld [vmem:[%s961 + $0x2b8] sm:$0xf]
        %v4934 = vld [vmem:[%s961 + $0x2bc] sm:$0xf]
        %v4935 = vld [vmem:[%s961 + $0x2c0] sm:$0xf]
        %v4936 = vld [vmem:[%s961 + $0x2c4] sm:$0xf]
        %v4937 = vld [vmem:[%s961 + $0x2c8] sm:$0xf]
        %v4938 = vld [vmem:[%s961 + $0x2cc] sm:$0xf]
        %v4939 = vld [vmem:[%s961 + $0x2d0] sm:$0xf]
        %v4940 = vld [vmem:[%s961 + $0x2d4] sm:$0xf]
        %v4941 = vld [vmem:[%s961 + $0x2d8] sm:$0xf]
        %v4942 = vld [vmem:[%s961 + $0x2dc] sm:$0xf]
        %v4943 = vld [vmem:[%s961 + $0x2e0] sm:$0xf]
        %v4944 = vld [vmem:[%s961 + $0x2e4] sm:$0xf]
        %v4945 = vld [vmem:[%s961 + $0x2e8] sm:$0xf]
        %v4946 = vld [vmem:[%s961 + $0x2ec] sm:$0xf]
        %v4947 = vld [vmem:[%s961 + $0x2f0] sm:$0xf]
        %v4948 = vld [vmem:[%s961 + $0x2f4] sm:$0xf]
        %v4949 = vld [vmem:[%s961 + $0x2f8] sm:$0xf]
        %v4950 = vld [vmem:[%s961 + $0x2fc] sm:$0xf]
        %v4951 = vld [vmem:[%s961 + $0x300] sm:$0xf]
        %v4952 = vld [vmem:[%s961 + $0x304] sm:$0xf]
        %v4953 = vld [vmem:[%s961 + $0x308] sm:$0xf]
        %v4954 = vld [vmem:[%s961 + $0x30c] sm:$0xf]
        %v4955 = vld [vmem:[%s961 + $0x310] sm:$0xf]
        %v4956 = vld [vmem:[%s961 + $0x314] sm:$0xf]
        %v4957 = vld [vmem:[%s961 + $0x318] sm:$0xf]
        %v4958 = vld [vmem:[%s961 + $0x31c] sm:$0xf]
        %v4959 = vld [vmem:[%s961 + $0x320] sm:$0xf]
        %v4960 = vld [vmem:[%s961 + $0x324] sm:$0xf]
        %v4961 = vld [vmem:[%s961 + $0x328] sm:$0xf]
        %v4962 = vld [vmem:[%s961 + $0x32c] sm:$0xf]
        %v4963 = vld [vmem:[%s961 + $0x330] sm:$0xf]
        %v4964 = vld [vmem:[%s961 + $0x334] sm:$0xf]
        %v4965 = vld [vmem:[%s961 + $0x338] sm:$0xf]
        %v4966 = vld [vmem:[%s961 + $0x33c] sm:$0xf]
        %v4967 = vld [vmem:[%s961 + $0x340] sm:$0xf]
        %v4968 = vld [vmem:[%s961 + $0x344] sm:$0xf]
        %v4969 = vld [vmem:[%s961 + $0x348] sm:$0xf]
        %v4970 = vld [vmem:[%s961 + $0x34c] sm:$0xf]
        %v4971 = vld [vmem:[%s961 + $0x350] sm:$0xf]
        %v4972 = vld [vmem:[%s961 + $0x354] sm:$0xf]
        %v4973 = vld [vmem:[%s961 + $0x358] sm:$0xf]
        %v4974 = vld [vmem:[%s961 + $0x35c] sm:$0xf]
        %v4975 = vld [vmem:[%s961 + $0x360] sm:$0xf]
        %v4976 = vld [vmem:[%s961 + $0x364] sm:$0xf]
        %v4977 = vld [vmem:[%s961 + $0x368] sm:$0xf]
        %v4978 = vld [vmem:[%s961 + $0x36c] sm:$0xf]
        %v4979 = vld [vmem:[%s961 + $0x370] sm:$0xf]
        %v4980 = vld [vmem:[%s961 + $0x374] sm:$0xf]
        %v4981 = vld [vmem:[%s961 + $0x378] sm:$0xf]
        %v4982 = vld [vmem:[%s961 + $0x37c] sm:$0xf]
        %v4983 = vld [vmem:[%s961 + $0x380] sm:$0xf]
        %v4984 = vld [vmem:[%s961 + $0x384] sm:$0xf]
        %v4985 = vld [vmem:[%s961 + $0x388] sm:$0xf]
        %v4986 = vld [vmem:[%s961 + $0x38c] sm:$0xf]
        %v4987 = vld [vmem:[%s961 + $0x390] sm:$0xf]
        %v4988 = vld [vmem:[%s961 + $0x394] sm:$0xf]
        %v4989 = vld [vmem:[%s961 + $0x398] sm:$0xf]
        %v4990 = vld [vmem:[%s961 + $0x39c] sm:$0xf]
        %v4991 = vld [vmem:[%s961 + $0x3a0] sm:$0xf]
        %v4992 = vld [vmem:[%s961 + $0x3a4] sm:$0xf]
        %v4993 = vld [vmem:[%s961 + $0x3a8] sm:$0xf]
        %v4994 = vld [vmem:[%s961 + $0x3ac] sm:$0xf]
        %v4995 = vld [vmem:[%s961 + $0x3b0] sm:$0xf]
        %v4996 = vld [vmem:[%s961 + $0x3b4] sm:$0xf]
        %v4997 = vld [vmem:[%s961 + $0x3b8] sm:$0xf]
        %v4998 = vld [vmem:[%s961 + $0x3bc] sm:$0xf]
        %v4999 = vld [vmem:[%s961 + $0x3c0] sm:$0xf]
        %v5000 = vld [vmem:[%s961 + $0x3c4] sm:$0xf]
        %v5001 = vld [vmem:[%s961 + $0x3c8] sm:$0xf]
        %v5002 = vld [vmem:[%s961 + $0x3cc] sm:$0xf]
        %v5003 = vld [vmem:[%s961 + $0x3d0] sm:$0xf]
        %v5004 = vld [vmem:[%s961 + $0x3d4] sm:$0xf]
        %v5005 = vld [vmem:[%s961 + $0x3d8] sm:$0xf]
        %v5006 = vld [vmem:[%s961 + $0x3dc] sm:$0xf]
        %v5007 = vld [vmem:[%s961 + $0x3e0] sm:$0xf]
        %v5008 = vld [vmem:[%s961 + $0x3e4] sm:$0xf]
        %v5009 = vld [vmem:[%s961 + $0x3e8] sm:$0xf]
        %v5010 = vld [vmem:[%s961 + $0x3ec] sm:$0xf]
        %v5011 = vld [vmem:[%s961 + $0x3f0] sm:$0xf]
        %v5012 = vld [vmem:[%s961 + $0x3f4] sm:$0xf]
        %v5013 = vld [vmem:[%s961 + $0x3f8] sm:$0xf]
        %v5014 = vld [vmem:[%s961 + $0x3fc] sm:$0xf]
        %v5015 = vld [vmem:[%s969] sm:$0x1]
        %v5017 = vlaneseq
        %v5018 = vshrl.u32 %v5017, 7
        %v5019 = vsub.s32 0, %v5018
        %v5020 = vrot.slane %v5015, %v5019
        %v5278 = vunpack.c.l.b16 %v4759
        %v5279 = vunpack.c.l.b16 %v4760
        %v5280 = vunpack.c.l.b16 %v4761
        %v5281 = vunpack.c.l.b16 %v4762
        %v5282 = vunpack.c.l.b16 %v4763
        %v5283 = vunpack.c.l.b16 %v4764
        %v5284 = vunpack.c.l.b16 %v4765
        %v5285 = vunpack.c.l.b16 %v4766
        %v5286 = vunpack.c.l.b16 %v4767
        %v5287 = vunpack.c.l.b16 %v4768
        %v5288 = vunpack.c.l.b16 %v4769
        %v5289 = vunpack.c.l.b16 %v4770
        %v5290 = vunpack.c.l.b16 %v4771
        %v5291 = vunpack.c.l.b16 %v4772
        %v5292 = vunpack.c.l.b16 %v4773
        %v5293 = vunpack.c.l.b16 %v4774
        %v5294 = vunpack.c.l.b16 %v4775
        %v5295 = vunpack.c.l.b16 %v4776
        %v5296 = vunpack.c.l.b16 %v4777
        %v5297 = vunpack.c.l.b16 %v4778
        %v5298 = vunpack.c.l.b16 %v4779
        %v5299 = vunpack.c.l.b16 %v4780
        %v5300 = vunpack.c.l.b16 %v4781
        %v5301 = vunpack.c.l.b16 %v4782
        %v5302 = vunpack.c.l.b16 %v4783
        %v5303 = vunpack.c.l.b16 %v4784
        %v5304 = vunpack.c.l.b16 %v4785
        %v5305 = vunpack.c.l.b16 %v4786
        %v5306 = vunpack.c.l.b16 %v4787
        %v5307 = vunpack.c.l.b16 %v4788
        %v5308 = vunpack.c.l.b16 %v4789
        %v5309 = vunpack.c.l.b16 %v4790
        %v5310 = vunpack.c.l.b16 %v4791
        %v5311 = vunpack.c.l.b16 %v4792
        %v5312 = vunpack.c.l.b16 %v4793
        %v5313 = vunpack.c.l.b16 %v4794
        %v5314 = vunpack.c.l.b16 %v4795
        %v5315 = vunpack.c.l.b16 %v4796
        %v5316 = vunpack.c.l.b16 %v4797
        %v5317 = vunpack.c.l.b16 %v4798
        %v5318 = vunpack.c.l.b16 %v4799
        %v5319 = vunpack.c.l.b16 %v4800
        %v5320 = vunpack.c.l.b16 %v4801
        %v5321 = vunpack.c.l.b16 %v4802
        %v5322 = vunpack.c.l.b16 %v4803
        %v5323 = vunpack.c.l.b16 %v4804
        %v5324 = vunpack.c.l.b16 %v4805
        %v5325 = vunpack.c.l.b16 %v4806
        %v5326 = vunpack.c.l.b16 %v4807
        %v5327 = vunpack.c.l.b16 %v4808
        %v5328 = vunpack.c.l.b16 %v4809
        %v5329 = vunpack.c.l.b16 %v4810
        %v5330 = vunpack.c.l.b16 %v4811
        %v5331 = vunpack.c.l.b16 %v4812
        %v5332 = vunpack.c.l.b16 %v4813
        %v5333 = vunpack.c.l.b16 %v4814
        %v5334 = vunpack.c.l.b16 %v4815
        %v5335 = vunpack.c.l.b16 %v4816
        %v5336 = vunpack.c.l.b16 %v4817
        %v5337 = vunpack.c.l.b16 %v4818
        %v5338 = vunpack.c.l.b16 %v4819
        %v5339 = vunpack.c.l.b16 %v4820
        %v5340 = vunpack.c.l.b16 %v4821
        %v5341 = vunpack.c.l.b16 %v4822
        %v5342 = vunpack.c.l.b16 %v4823
        %v5343 = vunpack.c.l.b16 %v4824
        %v5344 = vunpack.c.l.b16 %v4825
        %v5345 = vunpack.c.l.b16 %v4826
        %v5346 = vunpack.c.l.b16 %v4827
        %v5347 = vunpack.c.l.b16 %v4828
        %v5348 = vunpack.c.l.b16 %v4829
        %v5349 = vunpack.c.l.b16 %v4830
        %v5350 = vunpack.c.l.b16 %v4831
        %v5351 = vunpack.c.l.b16 %v4832
        %v5352 = vunpack.c.l.b16 %v4833
        %v5353 = vunpack.c.l.b16 %v4834
        %v5354 = vunpack.c.l.b16 %v4835
        %v5355 = vunpack.c.l.b16 %v4836
        %v5356 = vunpack.c.l.b16 %v4837
        %v5357 = vunpack.c.l.b16 %v4838
        %v5358 = vunpack.c.l.b16 %v4839
        %v5359 = vunpack.c.l.b16 %v4840
        %v5360 = vunpack.c.l.b16 %v4841
        %v5361 = vunpack.c.l.b16 %v4842
        %v5362 = vunpack.c.l.b16 %v4843
        %v5363 = vunpack.c.l.b16 %v4844
        %v5364 = vunpack.c.l.b16 %v4845
        %v5365 = vunpack.c.l.b16 %v4846
        %v5366 = vunpack.c.l.b16 %v4847
        %v5367 = vunpack.c.l.b16 %v4848
        %v5368 = vunpack.c.l.b16 %v4849
        %v5369 = vunpack.c.l.b16 %v4850
        %v5370 = vunpack.c.l.b16 %v4851
        %v5371 = vunpack.c.l.b16 %v4852
        %v5372 = vunpack.c.l.b16 %v4853
        %v5373 = vunpack.c.l.b16 %v4854
        %v5374 = vunpack.c.l.b16 %v4855
        %v5375 = vunpack.c.l.b16 %v4856
        %v5376 = vunpack.c.l.b16 %v4857
        %v5377 = vunpack.c.l.b16 %v4858
        %v5378 = vunpack.c.l.b16 %v4859
        %v5379 = vunpack.c.l.b16 %v4860
        %v5380 = vunpack.c.l.b16 %v4861
        %v5381 = vunpack.c.l.b16 %v4862
        %v5382 = vunpack.c.l.b16 %v4863
        %v5383 = vunpack.c.l.b16 %v4864
        %v5384 = vunpack.c.l.b16 %v4865
        %v5385 = vunpack.c.l.b16 %v4866
        %v5386 = vunpack.c.l.b16 %v4867
        %v5387 = vunpack.c.l.b16 %v4868
        %v5388 = vunpack.c.l.b16 %v4869
        %v5389 = vunpack.c.l.b16 %v4870
        %v5390 = vunpack.c.l.b16 %v4871
        %v5391 = vunpack.c.l.b16 %v4872
        %v5392 = vunpack.c.l.b16 %v4873
        %v5393 = vunpack.c.l.b16 %v4874
        %v5394 = vunpack.c.l.b16 %v4875
        %v5395 = vunpack.c.l.b16 %v4876
        %v5396 = vunpack.c.l.b16 %v4877
        %v5397 = vunpack.c.l.b16 %v4878
        %v5398 = vunpack.c.l.b16 %v4879
        %v5399 = vunpack.c.l.b16 %v4880
        %v5400 = vunpack.c.l.b16 %v4881
        %v5401 = vunpack.c.l.b16 %v4882
        %v5402 = vunpack.c.l.b16 %v4883
        %v5403 = vunpack.c.l.b16 %v4884
        %v5404 = vunpack.c.l.b16 %v4885
        %v5405 = vunpack.c.l.b16 %v4886
        %v5406 = vunpack.c.l.b16 %v4887
        %v5407 = vunpack.c.l.b16 %v4888
        %v5408 = vunpack.c.l.b16 %v4889
        %v5409 = vunpack.c.l.b16 %v4890
        %v5410 = vunpack.c.l.b16 %v4891
        %v5411 = vunpack.c.l.b16 %v4892
        %v5412 = vunpack.c.l.b16 %v4893
        %v5413 = vunpack.c.l.b16 %v4894
        %v5414 = vunpack.c.l.b16 %v4895
        %v5415 = vunpack.c.l.b16 %v4896
        %v5416 = vunpack.c.l.b16 %v4897
        %v5417 = vunpack.c.l.b16 %v4898
        %v5418 = vunpack.c.l.b16 %v4899
        %v5419 = vunpack.c.l.b16 %v4900
        %v5420 = vunpack.c.l.b16 %v4901
        %v5421 = vunpack.c.l.b16 %v4902
        %v5422 = vunpack.c.l.b16 %v4903
        %v5423 = vunpack.c.l.b16 %v4904
        %v5424 = vunpack.c.l.b16 %v4905
        %v5425 = vunpack.c.l.b16 %v4906
        %v5426 = vunpack.c.l.b16 %v4907
        %v5427 = vunpack.c.l.b16 %v4908
        %v5428 = vunpack.c.l.b16 %v4909
        %v5429 = vunpack.c.l.b16 %v4910
        %v5430 = vunpack.c.l.b16 %v4911
        %v5431 = vunpack.c.l.b16 %v4912
        %v5432 = vunpack.c.l.b16 %v4913
        %v5433 = vunpack.c.l.b16 %v4914
        %v5434 = vunpack.c.l.b16 %v4915
        %v5435 = vunpack.c.l.b16 %v4916
        %v5436 = vunpack.c.l.b16 %v4917
        %v5437 = vunpack.c.l.b16 %v4918
        %v5438 = vunpack.c.l.b16 %v4919
        %v5439 = vunpack.c.l.b16 %v4920
        %v5440 = vunpack.c.l.b16 %v4921
        %v5441 = vunpack.c.l.b16 %v4922
        %v5442 = vunpack.c.l.b16 %v4923
        %v5443 = vunpack.c.l.b16 %v4924
        %v5444 = vunpack.c.l.b16 %v4925
        %v5445 = vunpack.c.l.b16 %v4926
        %v5446 = vunpack.c.l.b16 %v4927
        %v5447 = vunpack.c.l.b16 %v4928
        %v5448 = vunpack.c.l.b16 %v4929
        %v5449 = vunpack.c.l.b16 %v4930
        %v5450 = vunpack.c.l.b16 %v4931
        %v5451 = vunpack.c.l.b16 %v4932
        %v5452 = vunpack.c.l.b16 %v4933
        %v5453 = vunpack.c.l.b16 %v4934
        %v5454 = vunpack.c.l.b16 %v4935
        %v5455 = vunpack.c.l.b16 %v4936
        %v5456 = vunpack.c.l.b16 %v4937
        %v5457 = vunpack.c.l.b16 %v4938
        %v5458 = vunpack.c.l.b16 %v4939
        %v5459 = vunpack.c.l.b16 %v4940
        %v5460 = vunpack.c.l.b16 %v4941
        %v5461 = vunpack.c.l.b16 %v4942
        %v5462 = vunpack.c.l.b16 %v4943
        %v5463 = vunpack.c.l.b16 %v4944
        %v5464 = vunpack.c.l.b16 %v4945
        %v5465 = vunpack.c.l.b16 %v4946
        %v5466 = vunpack.c.l.b16 %v4947
        %v5467 = vunpack.c.l.b16 %v4948
        %v5468 = vunpack.c.l.b16 %v4949
        %v5469 = vunpack.c.l.b16 %v4950
        %v5470 = vunpack.c.l.b16 %v4951
        %v5471 = vunpack.c.l.b16 %v4952
        %v5472 = vunpack.c.l.b16 %v4953
        %v5473 = vunpack.c.l.b16 %v4954
        %v5474 = vunpack.c.l.b16 %v4955
        %v5475 = vunpack.c.l.b16 %v4956
        %v5476 = vunpack.c.l.b16 %v4957
        %v5477 = vunpack.c.l.b16 %v4958
        %v5478 = vunpack.c.l.b16 %v4959
        %v5479 = vunpack.c.l.b16 %v4960
        %v5480 = vunpack.c.l.b16 %v4961
        %v5481 = vunpack.c.l.b16 %v4962
        %v5482 = vunpack.c.l.b16 %v4963
        %v5483 = vunpack.c.l.b16 %v4964
        %v5484 = vunpack.c.l.b16 %v4965
        %v5485 = vunpack.c.l.b16 %v4966
        %v5486 = vunpack.c.l.b16 %v4967
        %v5487 = vunpack.c.l.b16 %v4968
        %v5488 = vunpack.c.l.b16 %v4969
        %v5489 = vunpack.c.l.b16 %v4970
        %v5490 = vunpack.c.l.b16 %v4971
        %v5491 = vunpack.c.l.b16 %v4972
        %v5492 = vunpack.c.l.b16 %v4973
        %v5493 = vunpack.c.l.b16 %v4974
        %v5494 = vunpack.c.l.b16 %v4975
        %v5495 = vunpack.c.l.b16 %v4976
        %v5496 = vunpack.c.l.b16 %v4977
        %v5497 = vunpack.c.l.b16 %v4978
        %v5498 = vunpack.c.l.b16 %v4979
        %v5499 = vunpack.c.l.b16 %v4980
        %v5500 = vunpack.c.l.b16 %v4981
        %v5501 = vunpack.c.l.b16 %v4982
        %v5502 = vunpack.c.l.b16 %v4983
        %v5503 = vunpack.c.l.b16 %v4984
        %v5504 = vunpack.c.l.b16 %v4985
        %v5505 = vunpack.c.l.b16 %v4986
        %v5506 = vunpack.c.l.b16 %v4987
        %v5507 = vunpack.c.l.b16 %v4988
        %v5508 = vunpack.c.l.b16 %v4989
        %v5509 = vunpack.c.l.b16 %v4990
        %v5510 = vunpack.c.l.b16 %v4991
        %v5511 = vunpack.c.l.b16 %v4992
        %v5512 = vunpack.c.l.b16 %v4993
        %v5513 = vunpack.c.l.b16 %v4994
        %v5514 = vunpack.c.l.b16 %v4995
        %v5515 = vunpack.c.l.b16 %v4996
        %v5516 = vunpack.c.l.b16 %v4997
        %v5517 = vunpack.c.l.b16 %v4998
        %v5518 = vunpack.c.l.b16 %v4999
        %v5519 = vunpack.c.l.b16 %v5000
        %v5520 = vunpack.c.l.b16 %v5001
        %v5521 = vunpack.c.l.b16 %v5002
        %v5522 = vunpack.c.l.b16 %v5003
        %v5523 = vunpack.c.l.b16 %v5004
        %v5524 = vunpack.c.l.b16 %v5005
        %v5525 = vunpack.c.l.b16 %v5006
        %v5526 = vunpack.c.l.b16 %v5007
        %v5527 = vunpack.c.l.b16 %v5008
        %v5528 = vunpack.c.l.b16 %v5009
        %v5529 = vunpack.c.l.b16 %v5010
        %v5530 = vunpack.c.l.b16 %v5011
        %v5531 = vunpack.c.l.b16 %v5012
        %v5532 = vunpack.c.l.b16 %v5013
        %v5533 = vunpack.c.l.b16 %v5014
        %v5534 = vpack.c.b16 %v5279, %v5278
        %v5535 = vpack.c.b16 %v5281, %v5280
        %v5536 = vpack.c.b16 %v5283, %v5282
        %v5537 = vpack.c.b16 %v5285, %v5284
        %v5538 = vpack.c.b16 %v5287, %v5286
        %v5539 = vpack.c.b16 %v5289, %v5288
        %v5540 = vpack.c.b16 %v5291, %v5290
        %v5541 = vpack.c.b16 %v5293, %v5292
        %v5542 = vpack.c.b16 %v5295, %v5294
        %v5543 = vpack.c.b16 %v5297, %v5296
        %v5544 = vpack.c.b16 %v5299, %v5298
        %v5545 = vpack.c.b16 %v5301, %v5300
        %v5546 = vpack.c.b16 %v5303, %v5302
        %v5547 = vpack.c.b16 %v5305, %v5304
        %v5548 = vpack.c.b16 %v5307, %v5306
        %v5549 = vpack.c.b16 %v5309, %v5308
        %v5550 = vpack.c.b16 %v5311, %v5310
        %v5551 = vpack.c.b16 %v5313, %v5312
        %v5552 = vpack.c.b16 %v5315, %v5314
        %v5553 = vpack.c.b16 %v5317, %v5316
        %v5554 = vpack.c.b16 %v5319, %v5318
        %v5555 = vpack.c.b16 %v5321, %v5320
        %v5556 = vpack.c.b16 %v5323, %v5322
        %v5557 = vpack.c.b16 %v5325, %v5324
        %v5558 = vpack.c.b16 %v5327, %v5326
        %v5559 = vpack.c.b16 %v5329, %v5328
        %v5560 = vpack.c.b16 %v5331, %v5330
        %v5561 = vpack.c.b16 %v5333, %v5332
        %v5562 = vpack.c.b16 %v5335, %v5334
        %v5563 = vpack.c.b16 %v5337, %v5336
        %v5564 = vpack.c.b16 %v5339, %v5338
        %v5565 = vpack.c.b16 %v5341, %v5340
        %v5566 = vpack.c.b16 %v5343, %v5342
        %v5567 = vpack.c.b16 %v5345, %v5344
        %v5568 = vpack.c.b16 %v5347, %v5346
        %v5569 = vpack.c.b16 %v5349, %v5348
        %v5570 = vpack.c.b16 %v5351, %v5350
        %v5571 = vpack.c.b16 %v5353, %v5352
        %v5572 = vpack.c.b16 %v5355, %v5354
        %v5573 = vpack.c.b16 %v5357, %v5356
        %v5574 = vpack.c.b16 %v5359, %v5358
        %v5575 = vpack.c.b16 %v5361, %v5360
        %v5576 = vpack.c.b16 %v5363, %v5362
        %v5577 = vpack.c.b16 %v5365, %v5364
        %v5578 = vpack.c.b16 %v5367, %v5366
        %v5579 = vpack.c.b16 %v5369, %v5368
        %v5580 = vpack.c.b16 %v5371, %v5370
        %v5581 = vpack.c.b16 %v5373, %v5372
        %v5582 = vpack.c.b16 %v5375, %v5374
        %v5583 = vpack.c.b16 %v5377, %v5376
        %v5584 = vpack.c.b16 %v5379, %v5378
        %v5585 = vpack.c.b16 %v5381, %v5380
        %v5586 = vpack.c.b16 %v5383, %v5382
        %v5587 = vpack.c.b16 %v5385, %v5384
        %v5588 = vpack.c.b16 %v5387, %v5386
        %v5589 = vpack.c.b16 %v5389, %v5388
        %v5590 = vpack.c.b16 %v5391, %v5390
        %v5591 = vpack.c.b16 %v5393, %v5392
        %v5592 = vpack.c.b16 %v5395, %v5394
        %v5593 = vpack.c.b16 %v5397, %v5396
        %v5594 = vpack.c.b16 %v5399, %v5398
        %v5595 = vpack.c.b16 %v5401, %v5400
        %v5596 = vpack.c.b16 %v5403, %v5402
        %v5597 = vpack.c.b16 %v5405, %v5404
        %v5598 = vpack.c.b16 %v5407, %v5406
        %v5599 = vpack.c.b16 %v5409, %v5408
        %v5600 = vpack.c.b16 %v5411, %v5410
        %v5601 = vpack.c.b16 %v5413, %v5412
        %v5602 = vpack.c.b16 %v5415, %v5414
        %v5603 = vpack.c.b16 %v5417, %v5416
        %v5604 = vpack.c.b16 %v5419, %v5418
        %v5605 = vpack.c.b16 %v5421, %v5420
        %v5606 = vpack.c.b16 %v5423, %v5422
        %v5607 = vpack.c.b16 %v5425, %v5424
        %v5608 = vpack.c.b16 %v5427, %v5426
        %v5609 = vpack.c.b16 %v5429, %v5428
        %v5610 = vpack.c.b16 %v5431, %v5430
        %v5611 = vpack.c.b16 %v5433, %v5432
        %v5612 = vpack.c.b16 %v5435, %v5434
        %v5613 = vpack.c.b16 %v5437, %v5436
        %v5614 = vpack.c.b16 %v5439, %v5438
        %v5615 = vpack.c.b16 %v5441, %v5440
        %v5616 = vpack.c.b16 %v5443, %v5442
        %v5617 = vpack.c.b16 %v5445, %v5444
        %v5618 = vpack.c.b16 %v5447, %v5446
        %v5619 = vpack.c.b16 %v5449, %v5448
        %v5620 = vpack.c.b16 %v5451, %v5450
        %v5621 = vpack.c.b16 %v5453, %v5452
        %v5622 = vpack.c.b16 %v5455, %v5454
        %v5623 = vpack.c.b16 %v5457, %v5456
        %v5624 = vpack.c.b16 %v5459, %v5458
        %v5625 = vpack.c.b16 %v5461, %v5460
        %v5626 = vpack.c.b16 %v5463, %v5462
        %v5627 = vpack.c.b16 %v5465, %v5464
        %v5628 = vpack.c.b16 %v5467, %v5466
        %v5629 = vpack.c.b16 %v5469, %v5468
        %v5630 = vpack.c.b16 %v5471, %v5470
        %v5631 = vpack.c.b16 %v5473, %v5472
        %v5632 = vpack.c.b16 %v5475, %v5474
        %v5633 = vpack.c.b16 %v5477, %v5476
        %v5634 = vpack.c.b16 %v5479, %v5478
        %v5635 = vpack.c.b16 %v5481, %v5480
        %v5636 = vpack.c.b16 %v5483, %v5482
        %v5637 = vpack.c.b16 %v5485, %v5484
        %v5638 = vpack.c.b16 %v5487, %v5486
        %v5639 = vpack.c.b16 %v5489, %v5488
        %v5640 = vpack.c.b16 %v5491, %v5490
        %v5641 = vpack.c.b16 %v5493, %v5492
        %v5642 = vpack.c.b16 %v5495, %v5494
        %v5643 = vpack.c.b16 %v5497, %v5496
        %v5644 = vpack.c.b16 %v5499, %v5498
        %v5645 = vpack.c.b16 %v5501, %v5500
        %v5646 = vpack.c.b16 %v5503, %v5502
        %v5647 = vpack.c.b16 %v5505, %v5504
        %v5648 = vpack.c.b16 %v5507, %v5506
        %v5649 = vpack.c.b16 %v5509, %v5508
        %v5650 = vpack.c.b16 %v5511, %v5510
        %v5651 = vpack.c.b16 %v5513, %v5512
        %v5652 = vpack.c.b16 %v5515, %v5514
        %v5653 = vpack.c.b16 %v5517, %v5516
        %v5654 = vpack.c.b16 %v5519, %v5518
        %v5655 = vpack.c.b16 %v5521, %v5520
        %v5656 = vpack.c.b16 %v5523, %v5522
        %v5657 = vpack.c.b16 %v5525, %v5524
        %v5658 = vpack.c.b16 %v5527, %v5526
        %v5659 = vpack.c.b16 %v5529, %v5528
        %v5660 = vpack.c.b16 %v5531, %v5530
        %v5661 = vpack.c.b16 %v5533, %v5532
        %5790 = vmatprep.subr.bf16.mxu0 0
        %5791 = vmatpush1.bf16.msra.mxu0 %v5541
        %5792 = vmatprep.subr.bf16.mxu0 0
        %5793 = vmatpush1.bf16.msra.mxu0 %v5540
        %5794 = vmatprep.subr.bf16.mxu0 0
        %5795 = vmatpush1.bf16.msra.mxu0 %v5539
        %5796 = vmatprep.subr.bf16.mxu0 0
        %5797 = vmatpush1.bf16.msra.mxu0 %v5538
        %5798 = vmatprep.subr.bf16.mxu0 0
        %5799 = vmatpush1.bf16.msra.mxu0 %v5537
        %5800 = vmatprep.subr.bf16.mxu0 0
        %5801 = vmatpush1.bf16.msra.mxu0 %v5536
        %5802 = vmatprep.subr.bf16.mxu0 0
        %5803 = vmatpush1.bf16.msra.mxu0 %v5535
        %5804 = vmatprep.subr.bf16.mxu0 0
        %5805 = vmatpush1.bf16.msra.mxu0 %v5534
        %5806 = vmatprep.subr.bf16.mxu0 0
        %5807 = vmatpush2.bf16.msra.mxu0 %v5549
        %5808 = vmatprep.subr.bf16.mxu0 0
        %5809 = vmatpush2.bf16.msra.mxu0 %v5548
        %5810 = vmatprep.subr.bf16.mxu0 0
        %5811 = vmatpush2.bf16.msra.mxu0 %v5547
        %5812 = vmatprep.subr.bf16.mxu0 0
        %5813 = vmatpush2.bf16.msra.mxu0 %v5546
        %5814 = vmatprep.subr.bf16.mxu0 0
        %5815 = vmatpush2.bf16.msra.mxu0 %v5545
        %5816 = vmatprep.subr.bf16.mxu0 0
        %5817 = vmatpush2.bf16.msra.mxu0 %v5544
        %5818 = vmatprep.subr.bf16.mxu0 0
        %5819 = vmatpush2.bf16.msra.mxu0 %v5543
        %5820 = vmatprep.subr.bf16.mxu0 0
        %5821 = vmatpush2.bf16.msra.mxu0 %v5542
        %5822 = vmatprep.mubr.bf16.mxu0 %v4744
        %5823 = vmatmul.mubr.bf16.gmra.mxu0 %v4743
        %v5824 = vpop.f32.mrf.mxu0
        %v5825 = vadd.f32 %v5020, %v5824
        %v5826 = vpop.f32.mrf.mxu0
        %v5827 = vpop.f32.mrf.mxu0
        %v5828 = vadd.f32 %v5020, %v5827
        %v5829 = vpop.f32.mrf.mxu0
        %5830 = vdwg.mxu0
        %5831 = vmatprep.subr.bf16.mxu0 0
        %5832 = vmatpush1.bf16.msra.mxu0 %v5557
        %5833 = vmatprep.subr.bf16.mxu0 0
        %5834 = vmatpush1.bf16.msra.mxu0 %v5556
        %5835 = vmatprep.subr.bf16.mxu0 0
        %5836 = vmatpush1.bf16.msra.mxu0 %v5555
        %5837 = vmatprep.subr.bf16.mxu0 0
        %5838 = vmatpush1.bf16.msra.mxu0 %v5554
        %5839 = vmatprep.subr.bf16.mxu0 0
        %5840 = vmatpush1.bf16.msra.mxu0 %v5553
        %5841 = vmatprep.subr.bf16.mxu0 0
        %5842 = vmatpush1.bf16.msra.mxu0 %v5552
        %5843 = vmatprep.subr.bf16.mxu0 0
        %5844 = vmatpush1.bf16.msra.mxu0 %v5551
        %5845 = vmatprep.subr.bf16.mxu0 0
        %5846 = vmatpush1.bf16.msra.mxu0 %v5550
        %5847 = vmatprep.subr.bf16.mxu0 0
        %5848 = vmatpush2.bf16.msra.mxu0 %v5565
        %5849 = vmatprep.subr.bf16.mxu0 0
        %5850 = vmatpush2.bf16.msra.mxu0 %v5564
        %5851 = vmatprep.subr.bf16.mxu0 0
        %5852 = vmatpush2.bf16.msra.mxu0 %v5563
        %5853 = vmatprep.subr.bf16.mxu0 0
        %5854 = vmatpush2.bf16.msra.mxu0 %v5562
        %5855 = vmatprep.subr.bf16.mxu0 0
        %5856 = vmatpush2.bf16.msra.mxu0 %v5561
        %5857 = vmatprep.subr.bf16.mxu0 0
        %5858 = vmatpush2.bf16.msra.mxu0 %v5560
        %5859 = vmatprep.subr.bf16.mxu0 0
        %5860 = vmatpush2.bf16.msra.mxu0 %v5559
        %5861 = vmatprep.subr.bf16.mxu0 0
        %5862 = vmatpush2.bf16.msra.mxu0 %v5558
        %5863 = vmatprep.mubr.bf16.mxu0 %v4746
        %5864 = vmatmul.mubr.bf16.gmra.mxu0 %v4745
        %v5865 = vpop.f32.mrf.mxu0
        %v5866 = vadd.f32 %v5825, %v5865
        %v5867 = vpop.f32.mrf.mxu0
        %v5868 = vpop.f32.mrf.mxu0
        %v5869 = vadd.f32 %v5828, %v5868
        %v5870 = vpop.f32.mrf.mxu0
        %5871 = vdwg.mxu0
        %5872 = vmatprep.subr.bf16.mxu0 0
        %5873 = vmatpush1.bf16.msra.mxu0 %v5573
        %5874 = vmatprep.subr.bf16.mxu0 0
        %5875 = vmatpush1.bf16.msra.mxu0 %v5572
        %5876 = vmatprep.subr.bf16.mxu0 0
        %5877 = vmatpush1.bf16.msra.mxu0 %v5571
        %5878 = vmatprep.subr.bf16.mxu0 0
        %5879 = vmatpush1.bf16.msra.mxu0 %v5570
        %5880 = vmatprep.subr.bf16.mxu0 0
        %5881 = vmatpush1.bf16.msra.mxu0 %v5569
        %5882 = vmatprep.subr.bf16.mxu0 0
        %5883 = vmatpush1.bf16.msra.mxu0 %v5568
        %5884 = vmatprep.subr.bf16.mxu0 0
        %5885 = vmatpush1.bf16.msra.mxu0 %v5567
        %5886 = vmatprep.subr.bf16.mxu0 0
        %5887 = vmatpush1.bf16.msra.mxu0 %v5566
        %5888 = vmatprep.subr.bf16.mxu0 0
        %5889 = vmatpush2.bf16.msra.mxu0 %v5581
        %5890 = vmatprep.subr.bf16.mxu0 0
        %5891 = vmatpush2.bf16.msra.mxu0 %v5580
        %5892 = vmatprep.subr.bf16.mxu0 0
        %5893 = vmatpush2.bf16.msra.mxu0 %v5579
        %5894 = vmatprep.subr.bf16.mxu0 0
        %5895 = vmatpush2.bf16.msra.mxu0 %v5578
        %5896 = vmatprep.subr.bf16.mxu0 0
        %5897 = vmatpush2.bf16.msra.mxu0 %v5577
        %5898 = vmatprep.subr.bf16.mxu0 0
        %5899 = vmatpush2.bf16.msra.mxu0 %v5576
        %5900 = vmatprep.subr.bf16.mxu0 0
        %5901 = vmatpush2.bf16.msra.mxu0 %v5575
        %5902 = vmatprep.subr.bf16.mxu0 0
        %5903 = vmatpush2.bf16.msra.mxu0 %v5574
        %5904 = vmatprep.mubr.bf16.mxu0 %v4748
        %5905 = vmatmul.mubr.bf16.gmra.mxu0 %v4747
        %v5906 = vpop.f32.mrf.mxu0
        %v5907 = vadd.f32 %v5866, %v5906
        %v5908 = vpop.f32.mrf.mxu0
        %v5909 = vpop.f32.mrf.mxu0
        %v5910 = vadd.f32 %v5869, %v5909
        %v5911 = vpop.f32.mrf.mxu0
        %5912 = vdwg.mxu0
        %5913 = vmatprep.subr.bf16.mxu0 0
        %5914 = vmatpush1.bf16.msra.mxu0 %v5589
        %5915 = vmatprep.subr.bf16.mxu0 0
        %5916 = vmatpush1.bf16.msra.mxu0 %v5588
        %5917 = vmatprep.subr.bf16.mxu0 0
        %5918 = vmatpush1.bf16.msra.mxu0 %v5587
        %5919 = vmatprep.subr.bf16.mxu0 0
        %5920 = vmatpush1.bf16.msra.mxu0 %v5586
        %5921 = vmatprep.subr.bf16.mxu0 0
        %5922 = vmatpush1.bf16.msra.mxu0 %v5585
        %5923 = vmatprep.subr.bf16.mxu0 0
        %5924 = vmatpush1.bf16.msra.mxu0 %v5584
        %5925 = vmatprep.subr.bf16.mxu0 0
        %5926 = vmatpush1.bf16.msra.mxu0 %v5583
        %5927 = vmatprep.subr.bf16.mxu0 0
        %5928 = vmatpush1.bf16.msra.mxu0 %v5582
        %5929 = vmatprep.subr.bf16.mxu0 0
        %5930 = vmatpush2.bf16.msra.mxu0 %v5597
        %5931 = vmatprep.subr.bf16.mxu0 0
        %5932 = vmatpush2.bf16.msra.mxu0 %v5596
        %5933 = vmatprep.subr.bf16.mxu0 0
        %5934 = vmatpush2.bf16.msra.mxu0 %v5595
        %5935 = vmatprep.subr.bf16.mxu0 0
        %5936 = vmatpush2.bf16.msra.mxu0 %v5594
        %5937 = vmatprep.subr.bf16.mxu0 0
        %5938 = vmatpush2.bf16.msra.mxu0 %v5593
        %5939 = vmatprep.subr.bf16.mxu0 0
        %5940 = vmatpush2.bf16.msra.mxu0 %v5592
        %5941 = vmatprep.subr.bf16.mxu0 0
        %5942 = vmatpush2.bf16.msra.mxu0 %v5591
        %5943 = vmatprep.subr.bf16.mxu0 0
        %5944 = vmatpush2.bf16.msra.mxu0 %v5590
        %5945 = vmatprep.mubr.bf16.mxu0 %v4750
        %5946 = vmatmul.mubr.bf16.gmra.mxu0 %v4749
        %v5947 = vpop.f32.mrf.mxu0
        %v5948 = vadd.f32 %v5907, %v5947
        %v5949 = vpop.f32.mrf.mxu0
        %v5950 = vpop.f32.mrf.mxu0
        %v5951 = vadd.f32 %v5910, %v5950
        %v5952 = vpop.f32.mrf.mxu0
        %5953 = vdwg.mxu0
        %5954 = vmatprep.subr.bf16.mxu0 0
        %5955 = vmatpush1.bf16.msra.mxu0 %v5605
        %5956 = vmatprep.subr.bf16.mxu0 0
        %5957 = vmatpush1.bf16.msra.mxu0 %v5604
        %5958 = vmatprep.subr.bf16.mxu0 0
        %5959 = vmatpush1.bf16.msra.mxu0 %v5603
        %5960 = vmatprep.subr.bf16.mxu0 0
        %5961 = vmatpush1.bf16.msra.mxu0 %v5602
        %5962 = vmatprep.subr.bf16.mxu0 0
        %5963 = vmatpush1.bf16.msra.mxu0 %v5601
        %5964 = vmatprep.subr.bf16.mxu0 0
        %5965 = vmatpush1.bf16.msra.mxu0 %v5600
        %5966 = vmatprep.subr.bf16.mxu0 0
        %5967 = vmatpush1.bf16.msra.mxu0 %v5599
        %5968 = vmatprep.subr.bf16.mxu0 0
        %5969 = vmatpush1.bf16.msra.mxu0 %v5598
        %5970 = vmatprep.subr.bf16.mxu0 0
        %5971 = vmatpush2.bf16.msra.mxu0 %v5613
        %5972 = vmatprep.subr.bf16.mxu0 0
        %5973 = vmatpush2.bf16.msra.mxu0 %v5612
        %5974 = vmatprep.subr.bf16.mxu0 0
        %5975 = vmatpush2.bf16.msra.mxu0 %v5611
        %5976 = vmatprep.subr.bf16.mxu0 0
        %5977 = vmatpush2.bf16.msra.mxu0 %v5610
        %5978 = vmatprep.subr.bf16.mxu0 0
        %5979 = vmatpush2.bf16.msra.mxu0 %v5609
        %5980 = vmatprep.subr.bf16.mxu0 0
        %5981 = vmatpush2.bf16.msra.mxu0 %v5608
        %5982 = vmatprep.subr.bf16.mxu0 0
        %5983 = vmatpush2.bf16.msra.mxu0 %v5607
        %5984 = vmatprep.subr.bf16.mxu0 0
        %5985 = vmatpush2.bf16.msra.mxu0 %v5606
        %5986 = vmatprep.mubr.bf16.mxu0 %v4752
        %5987 = vmatmul.mubr.bf16.gmra.mxu0 %v4751
        %v5988 = vpop.f32.mrf.mxu0
        %v5989 = vadd.f32 %v5948, %v5988
        %v5990 = vpop.f32.mrf.mxu0
        %v5991 = vpop.f32.mrf.mxu0
        %v5992 = vadd.f32 %v5951, %v5991
        %v5993 = vpop.f32.mrf.mxu0
        %5994 = vdwg.mxu0
        %5995 = vmatprep.subr.bf16.mxu0 0
        %5996 = vmatpush1.bf16.msra.mxu0 %v5621
        %5997 = vmatprep.subr.bf16.mxu0 0
        %5998 = vmatpush1.bf16.msra.mxu0 %v5620
        %5999 = vmatprep.subr.bf16.mxu0 0
        %6000 = vmatpush1.bf16.msra.mxu0 %v5619
        %6001 = vmatprep.subr.bf16.mxu0 0
        %6002 = vmatpush1.bf16.msra.mxu0 %v5618
        %6003 = vmatprep.subr.bf16.mxu0 0
        %6004 = vmatpush1.bf16.msra.mxu0 %v5617
        %6005 = vmatprep.subr.bf16.mxu0 0
        %6006 = vmatpush1.bf16.msra.mxu0 %v5616
        %6007 = vmatprep.subr.bf16.mxu0 0
        %6008 = vmatpush1.bf16.msra.mxu0 %v5615
        %6009 = vmatprep.subr.bf16.mxu0 0
        %6010 = vmatpush1.bf16.msra.mxu0 %v5614
        %6011 = vmatprep.subr.bf16.mxu0 0
        %6012 = vmatpush2.bf16.msra.mxu0 %v5629
        %6013 = vmatprep.subr.bf16.mxu0 0
        %6014 = vmatpush2.bf16.msra.mxu0 %v5628
        %6015 = vmatprep.subr.bf16.mxu0 0
        %6016 = vmatpush2.bf16.msra.mxu0 %v5627
        %6017 = vmatprep.subr.bf16.mxu0 0
        %6018 = vmatpush2.bf16.msra.mxu0 %v5626
        %6019 = vmatprep.subr.bf16.mxu0 0
        %6020 = vmatpush2.bf16.msra.mxu0 %v5625
        %6021 = vmatprep.subr.bf16.mxu0 0
        %6022 = vmatpush2.bf16.msra.mxu0 %v5624
        %6023 = vmatprep.subr.bf16.mxu0 0
        %6024 = vmatpush2.bf16.msra.mxu0 %v5623
        %6025 = vmatprep.subr.bf16.mxu0 0
        %6026 = vmatpush2.bf16.msra.mxu0 %v5622
        %6027 = vmatprep.mubr.bf16.mxu0 %v4754
        %6028 = vmatmul.mubr.bf16.gmra.mxu0 %v4753
        %v6029 = vpop.f32.mrf.mxu0
        %v6030 = vadd.f32 %v5989, %v6029
        %v6031 = vpop.f32.mrf.mxu0
        %v6032 = vpop.f32.mrf.mxu0
        %v6033 = vadd.f32 %v5992, %v6032
        %v6034 = vpop.f32.mrf.mxu0
        %6035 = vdwg.mxu0
        %6036 = vmatprep.subr.bf16.mxu0 0
        %6037 = vmatpush1.bf16.msra.mxu0 %v5637
        %6038 = vmatprep.subr.bf16.mxu0 0
        %6039 = vmatpush1.bf16.msra.mxu0 %v5636
        %6040 = vmatprep.subr.bf16.mxu0 0
        %6041 = vmatpush1.bf16.msra.mxu0 %v5635
        %6042 = vmatprep.subr.bf16.mxu0 0
        %6043 = vmatpush1.bf16.msra.mxu0 %v5634
        %6044 = vmatprep.subr.bf16.mxu0 0
        %6045 = vmatpush1.bf16.msra.mxu0 %v5633
        %6046 = vmatprep.subr.bf16.mxu0 0
        %6047 = vmatpush1.bf16.msra.mxu0 %v5632
        %6048 = vmatprep.subr.bf16.mxu0 0
        %6049 = vmatpush1.bf16.msra.mxu0 %v5631
        %6050 = vmatprep.subr.bf16.mxu0 0
        %6051 = vmatpush1.bf16.msra.mxu0 %v5630
        %6052 = vmatprep.subr.bf16.mxu0 0
        %6053 = vmatpush2.bf16.msra.mxu0 %v5645
        %6054 = vmatprep.subr.bf16.mxu0 0
        %6055 = vmatpush2.bf16.msra.mxu0 %v5644
        %6056 = vmatprep.subr.bf16.mxu0 0
        %6057 = vmatpush2.bf16.msra.mxu0 %v5643
        %6058 = vmatprep.subr.bf16.mxu0 0
        %6059 = vmatpush2.bf16.msra.mxu0 %v5642
        %6060 = vmatprep.subr.bf16.mxu0 0
        %6061 = vmatpush2.bf16.msra.mxu0 %v5641
        %6062 = vmatprep.subr.bf16.mxu0 0
        %6063 = vmatpush2.bf16.msra.mxu0 %v5640
        %6064 = vmatprep.subr.bf16.mxu0 0
        %6065 = vmatpush2.bf16.msra.mxu0 %v5639
        %6066 = vmatprep.subr.bf16.mxu0 0
        %6067 = vmatpush2.bf16.msra.mxu0 %v5638
        %6068 = vmatprep.mubr.bf16.mxu0 %v4756
        %6069 = vmatmul.mubr.bf16.gmra.mxu0 %v4755
        %v6070 = vpop.f32.mrf.mxu0
        %v6071 = vadd.f32 %v6030, %v6070
        %v6072 = vpop.f32.mrf.mxu0
        %v6073 = vpop.f32.mrf.mxu0
        %v6074 = vadd.f32 %v6033, %v6073
        %v6075 = vpop.f32.mrf.mxu0
        %6076 = vdwg.mxu0
        %6077 = vmatprep.subr.bf16.mxu0 0
        %6078 = vmatpush1.bf16.msra.mxu0 %v5653
        %6079 = vmatprep.subr.bf16.mxu0 0
        %6080 = vmatpush1.bf16.msra.mxu0 %v5652
        %6081 = vmatprep.subr.bf16.mxu0 0
        %6082 = vmatpush1.bf16.msra.mxu0 %v5651
        %6083 = vmatprep.subr.bf16.mxu0 0
        %6084 = vmatpush1.bf16.msra.mxu0 %v5650
        %6085 = vmatprep.subr.bf16.mxu0 0
        %6086 = vmatpush1.bf16.msra.mxu0 %v5649
        %6087 = vmatprep.subr.bf16.mxu0 0
        %6088 = vmatpush1.bf16.msra.mxu0 %v5648
        %6089 = vmatprep.subr.bf16.mxu0 0
        %6090 = vmatpush1.bf16.msra.mxu0 %v5647
        %6091 = vmatprep.subr.bf16.mxu0 0
        %6092 = vmatpush1.bf16.msra.mxu0 %v5646
        %6093 = vmatprep.subr.bf16.mxu0 0
        %6094 = vmatpush2.bf16.msra.mxu0 %v5661
        %6095 = vmatprep.subr.bf16.mxu0 0
        %6096 = vmatpush2.bf16.msra.mxu0 %v5660
        %6097 = vmatprep.subr.bf16.mxu0 0
        %6098 = vmatpush2.bf16.msra.mxu0 %v5659
        %6099 = vmatprep.subr.bf16.mxu0 0
        %6100 = vmatpush2.bf16.msra.mxu0 %v5658
        %6101 = vmatprep.subr.bf16.mxu0 0
        %6102 = vmatpush2.bf16.msra.mxu0 %v5657
        %6103 = vmatprep.subr.bf16.mxu0 0
        %6104 = vmatpush2.bf16.msra.mxu0 %v5656
        %6105 = vmatprep.subr.bf16.mxu0 0
        %6106 = vmatpush2.bf16.msra.mxu0 %v5655
        %6107 = vmatprep.subr.bf16.mxu0 0
        %6108 = vmatpush2.bf16.msra.mxu0 %v5654
        %6109 = vmatprep.mubr.bf16.mxu0 %v4758
        %6110 = vmatmul.mubr.bf16.gmra.mxu0 %v4757
        %v6111 = vpop.f32.mrf.mxu0
        %v6112 = vadd.f32 %v6071, %v6111
        %v6113 = vpop.f32.mrf.mxu0
        %v6114 = vpop.f32.mrf.mxu0
        %v6115 = vadd.f32 %v6074, %v6114
        %v6116 = vpop.f32.mrf.mxu0
        %6117 = vdwg.mxu0
        %v6118 = vadd.f32 %v3512, %v6112
        %v6119 = vadd.f32 %v3513, %v6115
        %v6120 = vld [vmem:[%s977] sm:$0x1]
        %v6121 = vld [vmem:[%s985] sm:$0x1]
        %6122 = vadd.xlane.f32.xlu0 %v6118
        %v6123 = vpop.xlane.xlu0 %6122
        %6124 = vadd.xlane.f32.xlu0 %v6119
        %v6125 = vpop.xlane.xlu0 %6124
        %v6126 = vmul.f32 %v6123, %v3479
        %v6127 = vmul.f32 %v6125, %v3479
        %v6128 = vsub.f32 %v6118, %v6126
        %v6129 = vsub.f32 %v6119, %v6127
        %v6130 = vmul.f32 %v6128, %v6128
        %v6131 = vmul.f32 %v6129, %v6129
        %6132 = vadd.xlane.f32.xlu0 %v6130
        %v6133 = vpop.xlane.xlu0 %6132
        %6134 = vadd.xlane.f32.xlu0 %v6131
        %v6135 = vpop.xlane.xlu0 %6134
        %v6136 = vmul.f32 %v6133, %v3479
        %v6137 = vmul.f32 %v6135, %v3479
        %v6138 = vadd.f32 %v6136, 1e-05
        %v6139 = vadd.f32 %v6137, 1e-05
        %v6140 = vrsqrt.pop %v6138
        %v6141 = vrsqrt.pop %v6139
        %v6142 = vmul.f32 %v6128, %v6140
        %v6143 = vmul.f32 %v6129, %v6141
        %v6145 = vlaneseq
        %v6146 = vshrl.u32 %v6145, 7
        %v6147 = vsub.s32 0, %v6146
        %v6148 = vrot.slane %v6120, %v6147
        %v6150 = vmul.f32 %v6142, %v6148
        %v6151 = vmul.f32 %v6143, %v6148
        %v6153 = vlaneseq
        %v6154 = vshrl.u32 %v6153, 7
        %v6155 = vsub.s32 0, %v6154
        %v6156 = vrot.slane %v6121, %v6155
        %v6158 = vadd.f32 %v6150, %v6156
        %v6159 = vadd.f32 %v6151, %v6156
        %6160 = vst [vmem:[#allocation2] sm:$0xff] %v6158
        %6161 = vst [vmem:[#allocation2 + $0x8] sm:$0xff] %v6159
        %p6162 = scmp.eq.s32.totalorder %s60, 1
        // Predicated region
        $region161: #{encoder_forward.1} parent=95 // pred_check
          %p6163 = pneg %p6162
        $region162: #{encoder_forward.1} parent=95 // pred_check_branch
          %6165 = sbr.rel (%p6163) target = $region164
        $region163: #{encoder_forward.1} parent=95 // pred_region
          %v6166 = vrot.slane %v6158, 4
          %v6167 = vadd.f32 %v6158, %v6166
          %v6168 = vrot.slane %v6167, 2
          %v6169 = vadd.f32 %v6167, %v6168
          %v6170 = vrot.slane %v6169, 1
          %v6171 = vadd.f32 %v6169, %v6170
          %v6172 = vrot.slane %v6159, 4
          %v6173 = vadd.f32 %v6159, %v6172
          %v6174 = vrot.slane %v6173, 2
          %v6175 = vadd.f32 %v6173, %v6174
          %v6176 = vrot.slane %v6175, 1
          %v6177 = vadd.f32 %v6175, %v6176
          %v6178 = vmul.f32 %v6171, 0.125
          %v6179 = vmul.f32 %v6177, 0.125
          %v6180 = vpack.c.bf16 %v6178, %v6178
          %v6181 = vpack.c.bf16 %v6179, %v6179
          %v6182 = vld [vmem:[#allocation28] sm:$0xff]
          %v6183 = vld [vmem:[#allocation28 + $0x8] sm:$0xff]
          %v6184 = vld [vmem:[#allocation28 + $0x10] sm:$0xff]
          %v6185 = vld [vmem:[#allocation28 + $0x18] sm:$0xff]
          %v6186 = vld [vmem:[#allocation28 + $0x20] sm:$0xff]
          %v6187 = vld [vmem:[#allocation28 + $0x28] sm:$0xff]
          %v6188 = vld [vmem:[#allocation28 + $0x30] sm:$0xff]
          %v6189 = vld [vmem:[#allocation28 + $0x38] sm:$0xff]
          %v6190 = vld [vmem:[#allocation28 + $0x40] sm:$0xff]
          %v6191 = vld [vmem:[#allocation28 + $0x48] sm:$0xff]
          %v6192 = vld [vmem:[#allocation28 + $0x50] sm:$0xff]
          %v6193 = vld [vmem:[#allocation28 + $0x58] sm:$0xff]
          %v6194 = vld [vmem:[#allocation28 + $0x60] sm:$0xff]
          %v6195 = vld [vmem:[#allocation28 + $0x68] sm:$0xff]
          %v6196 = vld [vmem:[#allocation28 + $0x70] sm:$0xff]
          %v6197 = vld [vmem:[#allocation28 + $0x78] sm:$0xff]
          %v6198 = vld [vmem:[#allocation28 + $0x80] sm:$0xff]
          %v6199 = vld [vmem:[#allocation28 + $0x88] sm:$0xff]
          %v6200 = vld [vmem:[#allocation28 + $0x90] sm:$0xff]
          %v6201 = vld [vmem:[#allocation28 + $0x98] sm:$0xff]
          %v6202 = vld [vmem:[#allocation28 + $0xa0] sm:$0xff]
          %v6203 = vld [vmem:[#allocation28 + $0xa8] sm:$0xff]
          %v6204 = vld [vmem:[#allocation28 + $0xb0] sm:$0xff]
          %v6205 = vld [vmem:[#allocation28 + $0xb8] sm:$0xff]
          %v6206 = vld [vmem:[#allocation28 + $0xc0] sm:$0xff]
          %v6207 = vld [vmem:[#allocation28 + $0xc8] sm:$0xff]
          %v6208 = vld [vmem:[#allocation28 + $0xd0] sm:$0xff]
          %v6209 = vld [vmem:[#allocation28 + $0xd8] sm:$0xff]
          %v6210 = vld [vmem:[#allocation28 + $0xe0] sm:$0xff]
          %v6211 = vld [vmem:[#allocation28 + $0xe8] sm:$0xff]
          %v6212 = vld [vmem:[#allocation28 + $0xf0] sm:$0xff]
          %v6213 = vld [vmem:[#allocation28 + $0xf8] sm:$0xff]
          %v6214 = vld [vmem:[#allocation28 + $0x100] sm:$0xff]
          %v6215 = vld [vmem:[#allocation28 + $0x108] sm:$0xff]
          %v6216 = vld [vmem:[#allocation28 + $0x110] sm:$0xff]
          %v6217 = vld [vmem:[#allocation28 + $0x118] sm:$0xff]
          %v6218 = vld [vmem:[#allocation28 + $0x120] sm:$0xff]
          %v6219 = vld [vmem:[#allocation28 + $0x128] sm:$0xff]
          %v6220 = vld [vmem:[#allocation28 + $0x130] sm:$0xff]
          %v6221 = vld [vmem:[#allocation28 + $0x138] sm:$0xff]
          %v6222 = vld [vmem:[#allocation28 + $0x140] sm:$0xff]
          %v6223 = vld [vmem:[#allocation28 + $0x148] sm:$0xff]
          %v6224 = vld [vmem:[#allocation28 + $0x150] sm:$0xff]
          %v6225 = vld [vmem:[#allocation28 + $0x158] sm:$0xff]
          %v6226 = vld [vmem:[#allocation28 + $0x160] sm:$0xff]
          %v6227 = vld [vmem:[#allocation28 + $0x168] sm:$0xff]
          %v6228 = vld [vmem:[#allocation28 + $0x170] sm:$0xff]
          %v6229 = vld [vmem:[#allocation28 + $0x178] sm:$0xff]
          %v6230 = vld [vmem:[#allocation28 + $0x180] sm:$0xff]
          %v6231 = vld [vmem:[#allocation28 + $0x188] sm:$0xff]
          %v6232 = vld [vmem:[#allocation28 + $0x190] sm:$0xff]
          %v6233 = vld [vmem:[#allocation28 + $0x198] sm:$0xff]
          %v6234 = vld [vmem:[#allocation28 + $0x1a0] sm:$0xff]
          %v6235 = vld [vmem:[#allocation28 + $0x1a8] sm:$0xff]
          %v6236 = vld [vmem:[#allocation28 + $0x1b0] sm:$0xff]
          %v6237 = vld [vmem:[#allocation28 + $0x1b8] sm:$0xff]
          %v6238 = vld [vmem:[#allocation28 + $0x1c0] sm:$0xff]
          %v6239 = vld [vmem:[#allocation28 + $0x1c8] sm:$0xff]
          %v6240 = vld [vmem:[#allocation28 + $0x1d0] sm:$0xff]
          %v6241 = vld [vmem:[#allocation28 + $0x1d8] sm:$0xff]
          %v6242 = vld [vmem:[#allocation28 + $0x1e0] sm:$0xff]
          %v6243 = vld [vmem:[#allocation28 + $0x1e8] sm:$0xff]
          %v6244 = vld [vmem:[#allocation28 + $0x1f0] sm:$0xff]
          %v6245 = vld [vmem:[#allocation28 + $0x1f8] sm:$0xff]
          %v6246 = vld [vmem:[#allocation28 + $0x200] sm:$0xff]
          %v6247 = vld [vmem:[#allocation28 + $0x208] sm:$0xff]
          %v6248 = vld [vmem:[#allocation28 + $0x210] sm:$0xff]
          %v6249 = vld [vmem:[#allocation28 + $0x218] sm:$0xff]
          %v6250 = vld [vmem:[#allocation28 + $0x220] sm:$0xff]
          %v6251 = vld [vmem:[#allocation28 + $0x228] sm:$0xff]
          %v6252 = vld [vmem:[#allocation28 + $0x230] sm:$0xff]
          %v6253 = vld [vmem:[#allocation28 + $0x238] sm:$0xff]
          %v6254 = vld [vmem:[#allocation28 + $0x240] sm:$0xff]
          %v6255 = vld [vmem:[#allocation28 + $0x248] sm:$0xff]
          %v6256 = vld [vmem:[#allocation28 + $0x250] sm:$0xff]
          %v6257 = vld [vmem:[#allocation28 + $0x258] sm:$0xff]
          %v6258 = vld [vmem:[#allocation28 + $0x260] sm:$0xff]
          %v6259 = vld [vmem:[#allocation28 + $0x268] sm:$0xff]
          %v6260 = vld [vmem:[#allocation28 + $0x270] sm:$0xff]
          %v6261 = vld [vmem:[#allocation28 + $0x278] sm:$0xff]
          %v6262 = vld [vmem:[#allocation28 + $0x280] sm:$0xff]
          %v6263 = vld [vmem:[#allocation28 + $0x288] sm:$0xff]
          %v6264 = vld [vmem:[#allocation28 + $0x290] sm:$0xff]
          %v6265 = vld [vmem:[#allocation28 + $0x298] sm:$0xff]
          %v6266 = vld [vmem:[#allocation28 + $0x2a0] sm:$0xff]
          %v6267 = vld [vmem:[#allocation28 + $0x2a8] sm:$0xff]
          %v6268 = vld [vmem:[#allocation28 + $0x2b0] sm:$0xff]
          %v6269 = vld [vmem:[#allocation28 + $0x2b8] sm:$0xff]
          %v6270 = vld [vmem:[#allocation28 + $0x2c0] sm:$0xff]
          %v6271 = vld [vmem:[#allocation28 + $0x2c8] sm:$0xff]
          %v6272 = vld [vmem:[#allocation28 + $0x2d0] sm:$0xff]
          %v6273 = vld [vmem:[#allocation28 + $0x2d8] sm:$0xff]
          %v6274 = vld [vmem:[#allocation28 + $0x2e0] sm:$0xff]
          %v6275 = vld [vmem:[#allocation28 + $0x2e8] sm:$0xff]
          %v6276 = vld [vmem:[#allocation28 + $0x2f0] sm:$0xff]
          %v6277 = vld [vmem:[#allocation28 + $0x2f8] sm:$0xff]
          %v6278 = vld [vmem:[#allocation28 + $0x300] sm:$0xff]
          %v6279 = vld [vmem:[#allocation28 + $0x308] sm:$0xff]
          %v6280 = vld [vmem:[#allocation28 + $0x310] sm:$0xff]
          %v6281 = vld [vmem:[#allocation28 + $0x318] sm:$0xff]
          %v6282 = vld [vmem:[#allocation28 + $0x320] sm:$0xff]
          %v6283 = vld [vmem:[#allocation28 + $0x328] sm:$0xff]
          %v6284 = vld [vmem:[#allocation28 + $0x330] sm:$0xff]
          %v6285 = vld [vmem:[#allocation28 + $0x338] sm:$0xff]
          %v6286 = vld [vmem:[#allocation28 + $0x340] sm:$0xff]
          %v6287 = vld [vmem:[#allocation28 + $0x348] sm:$0xff]
          %v6288 = vld [vmem:[#allocation28 + $0x350] sm:$0xff]
          %v6289 = vld [vmem:[#allocation28 + $0x358] sm:$0xff]
          %v6290 = vld [vmem:[#allocation28 + $0x360] sm:$0xff]
          %v6291 = vld [vmem:[#allocation28 + $0x368] sm:$0xff]
          %v6292 = vld [vmem:[#allocation28 + $0x370] sm:$0xff]
          %v6293 = vld [vmem:[#allocation28 + $0x378] sm:$0xff]
          %v6294 = vld [vmem:[#allocation28 + $0x380] sm:$0xff]
          %v6295 = vld [vmem:[#allocation28 + $0x388] sm:$0xff]
          %v6296 = vld [vmem:[#allocation28 + $0x390] sm:$0xff]
          %v6297 = vld [vmem:[#allocation28 + $0x398] sm:$0xff]
          %v6298 = vld [vmem:[#allocation28 + $0x3a0] sm:$0xff]
          %v6299 = vld [vmem:[#allocation28 + $0x3a8] sm:$0xff]
          %v6300 = vld [vmem:[#allocation28 + $0x3b0] sm:$0xff]
          %v6301 = vld [vmem:[#allocation28 + $0x3b8] sm:$0xff]
          %v6302 = vld [vmem:[#allocation28 + $0x3c0] sm:$0xff]
          %v6303 = vld [vmem:[#allocation28 + $0x3c8] sm:$0xff]
          %v6304 = vld [vmem:[#allocation28 + $0x3d0] sm:$0xff]
          %v6305 = vld [vmem:[#allocation28 + $0x3d8] sm:$0xff]
          %v6306 = vld [vmem:[#allocation28 + $0x3e0] sm:$0xff]
          %v6307 = vld [vmem:[#allocation28 + $0x3e8] sm:$0xff]
          %v6308 = vld [vmem:[#allocation28 + $0x3f0] sm:$0xff]
          %v6309 = vld [vmem:[#allocation28 + $0x3f8] sm:$0xff]
          %v6310 = vld [vmem:[%s19] sm:$0xff]
          %v6311 = vld [vmem:[%s19 + $0x8] sm:$0xff]
          %v6314 = vlaneseq
          %v6315 = vshrl.u32 %v6314, 7
          %v6316 = vsub.s32 0, %v6315
          %v6317 = vrot.slane %v6310, %v6316
          %v6318 = vlaneseq
          %v6319 = vshrl.u32 %v6318, 7
          %v6320 = vsub.s32 1, %v6319
          %v6321 = vrot.slane %v6310, %v6320
          %v6322 = vlaneseq
          %v6323 = vshrl.u32 %v6322, 7
          %v6324 = vsub.s32 2, %v6323
          %v6325 = vrot.slane %v6310, %v6324
          %v6326 = vlaneseq
          %v6327 = vshrl.u32 %v6326, 7
          %v6328 = vsub.s32 3, %v6327
          %v6329 = vrot.slane %v6310, %v6328
          %v6330 = vlaneseq
          %v6331 = vshrl.u32 %v6330, 7
          %v6332 = vsub.s32 4, %v6331
          %v6333 = vrot.slane %v6310, %v6332
          %v6334 = vlaneseq
          %v6335 = vshrl.u32 %v6334, 7
          %v6336 = vsub.s32 5, %v6335
          %v6337 = vrot.slane %v6310, %v6336
          %v6338 = vlaneseq
          %v6339 = vshrl.u32 %v6338, 7
          %v6340 = vsub.s32 6, %v6339
          %v6341 = vrot.slane %v6310, %v6340
          %v6342 = vlaneseq
          %v6343 = vshrl.u32 %v6342, 7
          %v6344 = vsub.s32 7, %v6343
          %v6345 = vrot.slane %v6310, %v6344
          %v6346 = vlaneseq
          %v6347 = vshrl.u32 %v6346, 7
          %v6348 = vsub.s32 0, %v6347
          %v6349 = vrot.slane %v6311, %v6348
          %v6350 = vlaneseq
          %v6351 = vshrl.u32 %v6350, 7
          %v6352 = vsub.s32 1, %v6351
          %v6353 = vrot.slane %v6311, %v6352
          %v6354 = vlaneseq
          %v6355 = vshrl.u32 %v6354, 7
          %v6356 = vsub.s32 2, %v6355
          %v6357 = vrot.slane %v6311, %v6356
          %v6358 = vlaneseq
          %v6359 = vshrl.u32 %v6358, 7
          %v6360 = vsub.s32 3, %v6359
          %v6361 = vrot.slane %v6311, %v6360
          %v6362 = vlaneseq
          %v6363 = vshrl.u32 %v6362, 7
          %v6364 = vsub.s32 4, %v6363
          %v6365 = vrot.slane %v6311, %v6364
          %v6366 = vlaneseq
          %v6367 = vshrl.u32 %v6366, 7
          %v6368 = vsub.s32 5, %v6367
          %v6369 = vrot.slane %v6311, %v6368
          %v6370 = vlaneseq
          %v6371 = vshrl.u32 %v6370, 7
          %v6372 = vsub.s32 6, %v6371
          %v6373 = vrot.slane %v6311, %v6372
          %v6374 = vlaneseq
          %v6375 = vshrl.u32 %v6374, 7
          %v6376 = vsub.s32 7, %v6375
          %v6377 = vrot.slane %v6311, %v6376
          %v6396 = vunpack.c.l.b16 %v6180
          %v6397 = vunpack.c.l.b16 %v6181
          %vm6398 = vcmask 1041409
          %v6399 = vsel %vm6398, %v6397, %v6396
          %v6400 = vpack.c.b16 %v6399, %v6399
          %v6530 = vunpack.c.l.b16 %v6182
          %v6531 = vunpack.c.h.b16 %v6182
          %v6532 = vunpack.c.l.b16 %v6183
          %v6533 = vunpack.c.h.b16 %v6183
          %v6534 = vunpack.c.l.b16 %v6184
          %v6535 = vunpack.c.h.b16 %v6184
          %v6536 = vunpack.c.l.b16 %v6185
          %v6537 = vunpack.c.h.b16 %v6185
          %v6538 = vunpack.c.l.b16 %v6186
          %v6539 = vunpack.c.h.b16 %v6186
          %v6540 = vunpack.c.l.b16 %v6187
          %v6541 = vunpack.c.h.b16 %v6187
          %v6542 = vunpack.c.l.b16 %v6188
          %v6543 = vunpack.c.h.b16 %v6188
          %v6544 = vunpack.c.l.b16 %v6189
          %v6545 = vunpack.c.h.b16 %v6189
          %v6546 = vunpack.c.l.b16 %v6190
          %v6547 = vunpack.c.h.b16 %v6190
          %v6548 = vunpack.c.l.b16 %v6191
          %v6549 = vunpack.c.h.b16 %v6191
          %v6550 = vunpack.c.l.b16 %v6192
          %v6551 = vunpack.c.h.b16 %v6192
          %v6552 = vunpack.c.l.b16 %v6193
          %v6553 = vunpack.c.h.b16 %v6193
          %v6554 = vunpack.c.l.b16 %v6194
          %v6555 = vunpack.c.h.b16 %v6194
          %v6556 = vunpack.c.l.b16 %v6195
          %v6557 = vunpack.c.h.b16 %v6195
          %v6558 = vunpack.c.l.b16 %v6196
          %v6559 = vunpack.c.h.b16 %v6196
          %v6560 = vunpack.c.l.b16 %v6197
          %v6561 = vunpack.c.h.b16 %v6197
          %v6562 = vunpack.c.l.b16 %v6198
          %v6563 = vunpack.c.h.b16 %v6198
          %v6564 = vunpack.c.l.b16 %v6199
          %v6565 = vunpack.c.h.b16 %v6199
          %v6566 = vunpack.c.l.b16 %v6200
          %v6567 = vunpack.c.h.b16 %v6200
          %v6568 = vunpack.c.l.b16 %v6201
          %v6569 = vunpack.c.h.b16 %v6201
          %v6570 = vunpack.c.l.b16 %v6202
          %v6571 = vunpack.c.h.b16 %v6202
          %v6572 = vunpack.c.l.b16 %v6203
          %v6573 = vunpack.c.h.b16 %v6203
          %v6574 = vunpack.c.l.b16 %v6204
          %v6575 = vunpack.c.h.b16 %v6204
          %v6576 = vunpack.c.l.b16 %v6205
          %v6577 = vunpack.c.h.b16 %v6205
          %v6578 = vunpack.c.l.b16 %v6206
          %v6579 = vunpack.c.h.b16 %v6206
          %v6580 = vunpack.c.l.b16 %v6207
          %v6581 = vunpack.c.h.b16 %v6207
          %v6582 = vunpack.c.l.b16 %v6208
          %v6583 = vunpack.c.h.b16 %v6208
          %v6584 = vunpack.c.l.b16 %v6209
          %v6585 = vunpack.c.h.b16 %v6209
          %v6586 = vunpack.c.l.b16 %v6210
          %v6587 = vunpack.c.h.b16 %v6210
          %v6588 = vunpack.c.l.b16 %v6211
          %v6589 = vunpack.c.h.b16 %v6211
          %v6590 = vunpack.c.l.b16 %v6212
          %v6591 = vunpack.c.h.b16 %v6212
          %v6592 = vunpack.c.l.b16 %v6213
          %v6593 = vunpack.c.h.b16 %v6213
          %v6594 = vunpack.c.l.b16 %v6214
          %v6595 = vunpack.c.h.b16 %v6214
          %v6596 = vunpack.c.l.b16 %v6215
          %v6597 = vunpack.c.h.b16 %v6215
          %v6598 = vunpack.c.l.b16 %v6216
          %v6599 = vunpack.c.h.b16 %v6216
          %v6600 = vunpack.c.l.b16 %v6217
          %v6601 = vunpack.c.h.b16 %v6217
          %v6602 = vunpack.c.l.b16 %v6218
          %v6603 = vunpack.c.h.b16 %v6218
          %v6604 = vunpack.c.l.b16 %v6219
          %v6605 = vunpack.c.h.b16 %v6219
          %v6606 = vunpack.c.l.b16 %v6220
          %v6607 = vunpack.c.h.b16 %v6220
          %v6608 = vunpack.c.l.b16 %v6221
          %v6609 = vunpack.c.h.b16 %v6221
          %v6610 = vunpack.c.l.b16 %v6222
          %v6611 = vunpack.c.h.b16 %v6222
          %v6612 = vunpack.c.l.b16 %v6223
          %v6613 = vunpack.c.h.b16 %v6223
          %v6614 = vunpack.c.l.b16 %v6224
          %v6615 = vunpack.c.h.b16 %v6224
          %v6616 = vunpack.c.l.b16 %v6225
          %v6617 = vunpack.c.h.b16 %v6225
          %v6618 = vunpack.c.l.b16 %v6226
          %v6619 = vunpack.c.h.b16 %v6226
          %v6620 = vunpack.c.l.b16 %v6227
          %v6621 = vunpack.c.h.b16 %v6227
          %v6622 = vunpack.c.l.b16 %v6228
          %v6623 = vunpack.c.h.b16 %v6228
          %v6624 = vunpack.c.l.b16 %v6229
          %v6625 = vunpack.c.h.b16 %v6229
          %v6626 = vunpack.c.l.b16 %v6230
          %v6627 = vunpack.c.h.b16 %v6230
          %v6628 = vunpack.c.l.b16 %v6231
          %v6629 = vunpack.c.h.b16 %v6231
          %v6630 = vunpack.c.l.b16 %v6232
          %v6631 = vunpack.c.h.b16 %v6232
          %v6632 = vunpack.c.l.b16 %v6233
          %v6633 = vunpack.c.h.b16 %v6233
          %v6634 = vunpack.c.l.b16 %v6234
          %v6635 = vunpack.c.h.b16 %v6234
          %v6636 = vunpack.c.l.b16 %v6235
          %v6637 = vunpack.c.h.b16 %v6235
          %v6638 = vunpack.c.l.b16 %v6236
          %v6639 = vunpack.c.h.b16 %v6236
          %v6640 = vunpack.c.l.b16 %v6237
          %v6641 = vunpack.c.h.b16 %v6237
          %v6642 = vunpack.c.l.b16 %v6238
          %v6643 = vunpack.c.h.b16 %v6238
          %v6644 = vunpack.c.l.b16 %v6239
          %v6645 = vunpack.c.h.b16 %v6239
          %v6646 = vunpack.c.l.b16 %v6240
          %v6647 = vunpack.c.h.b16 %v6240
          %v6648 = vunpack.c.l.b16 %v6241
          %v6649 = vunpack.c.h.b16 %v6241
          %v6650 = vunpack.c.l.b16 %v6242
          %v6651 = vunpack.c.h.b16 %v6242
          %v6652 = vunpack.c.l.b16 %v6243
          %v6653 = vunpack.c.h.b16 %v6243
          %v6654 = vunpack.c.l.b16 %v6244
          %v6655 = vunpack.c.h.b16 %v6244
          %v6656 = vunpack.c.l.b16 %v6245
          %v6657 = vunpack.c.h.b16 %v6245
          %v6658 = vunpack.c.l.b16 %v6246
          %v6659 = vunpack.c.h.b16 %v6246
          %v6660 = vunpack.c.l.b16 %v6247
          %v6661 = vunpack.c.h.b16 %v6247
          %v6662 = vunpack.c.l.b16 %v6248
          %v6663 = vunpack.c.h.b16 %v6248
          %v6664 = vunpack.c.l.b16 %v6249
          %v6665 = vunpack.c.h.b16 %v6249
          %v6666 = vunpack.c.l.b16 %v6250
          %v6667 = vunpack.c.h.b16 %v6250
          %v6668 = vunpack.c.l.b16 %v6251
          %v6669 = vunpack.c.h.b16 %v6251
          %v6670 = vunpack.c.l.b16 %v6252
          %v6671 = vunpack.c.h.b16 %v6252
          %v6672 = vunpack.c.l.b16 %v6253
          %v6673 = vunpack.c.h.b16 %v6253
          %v6674 = vunpack.c.l.b16 %v6254
          %v6675 = vunpack.c.h.b16 %v6254
          %v6676 = vunpack.c.l.b16 %v6255
          %v6677 = vunpack.c.h.b16 %v6255
          %v6678 = vunpack.c.l.b16 %v6256
          %v6679 = vunpack.c.h.b16 %v6256
          %v6680 = vunpack.c.l.b16 %v6257
          %v6681 = vunpack.c.h.b16 %v6257
          %v6682 = vunpack.c.l.b16 %v6258
          %v6683 = vunpack.c.h.b16 %v6258
          %v6684 = vunpack.c.l.b16 %v6259
          %v6685 = vunpack.c.h.b16 %v6259
          %v6686 = vunpack.c.l.b16 %v6260
          %v6687 = vunpack.c.h.b16 %v6260
          %v6688 = vunpack.c.l.b16 %v6261
          %v6689 = vunpack.c.h.b16 %v6261
          %v6690 = vunpack.c.l.b16 %v6262
          %v6691 = vunpack.c.h.b16 %v6262
          %v6692 = vunpack.c.l.b16 %v6263
          %v6693 = vunpack.c.h.b16 %v6263
          %v6694 = vunpack.c.l.b16 %v6264
          %v6695 = vunpack.c.h.b16 %v6264
          %v6696 = vunpack.c.l.b16 %v6265
          %v6697 = vunpack.c.h.b16 %v6265
          %v6698 = vunpack.c.l.b16 %v6266
          %v6699 = vunpack.c.h.b16 %v6266
          %v6700 = vunpack.c.l.b16 %v6267
          %v6701 = vunpack.c.h.b16 %v6267
          %v6702 = vunpack.c.l.b16 %v6268
          %v6703 = vunpack.c.h.b16 %v6268
          %v6704 = vunpack.c.l.b16 %v6269
          %v6705 = vunpack.c.h.b16 %v6269
          %v6706 = vunpack.c.l.b16 %v6270
          %v6707 = vunpack.c.h.b16 %v6270
          %v6708 = vunpack.c.l.b16 %v6271
          %v6709 = vunpack.c.h.b16 %v6271
          %v6710 = vunpack.c.l.b16 %v6272
          %v6711 = vunpack.c.h.b16 %v6272
          %v6712 = vunpack.c.l.b16 %v6273
          %v6713 = vunpack.c.h.b16 %v6273
          %v6714 = vunpack.c.l.b16 %v6274
          %v6715 = vunpack.c.h.b16 %v6274
          %v6716 = vunpack.c.l.b16 %v6275
          %v6717 = vunpack.c.h.b16 %v6275
          %v6718 = vunpack.c.l.b16 %v6276
          %v6719 = vunpack.c.h.b16 %v6276
          %v6720 = vunpack.c.l.b16 %v6277
          %v6721 = vunpack.c.h.b16 %v6277
          %v6722 = vunpack.c.l.b16 %v6278
          %v6723 = vunpack.c.h.b16 %v6278
          %v6724 = vunpack.c.l.b16 %v6279
          %v6725 = vunpack.c.h.b16 %v6279
          %v6726 = vunpack.c.l.b16 %v6280
          %v6727 = vunpack.c.h.b16 %v6280
          %v6728 = vunpack.c.l.b16 %v6281
          %v6729 = vunpack.c.h.b16 %v6281
          %v6730 = vunpack.c.l.b16 %v6282
          %v6731 = vunpack.c.h.b16 %v6282
          %v6732 = vunpack.c.l.b16 %v6283
          %v6733 = vunpack.c.h.b16 %v6283
          %v6734 = vunpack.c.l.b16 %v6284
          %v6735 = vunpack.c.h.b16 %v6284
          %v6736 = vunpack.c.l.b16 %v6285
          %v6737 = vunpack.c.h.b16 %v6285
          %v6738 = vunpack.c.l.b16 %v6286
          %v6739 = vunpack.c.h.b16 %v6286
          %v6740 = vunpack.c.l.b16 %v6287
          %v6741 = vunpack.c.h.b16 %v6287
          %v6742 = vunpack.c.l.b16 %v6288
          %v6743 = vunpack.c.h.b16 %v6288
          %v6744 = vunpack.c.l.b16 %v6289
          %v6745 = vunpack.c.h.b16 %v6289
          %v6746 = vunpack.c.l.b16 %v6290
          %v6747 = vunpack.c.h.b16 %v6290
          %v6748 = vunpack.c.l.b16 %v6291
          %v6749 = vunpack.c.h.b16 %v6291
          %v6750 = vunpack.c.l.b16 %v6292
          %v6751 = vunpack.c.h.b16 %v6292
          %v6752 = vunpack.c.l.b16 %v6293
          %v6753 = vunpack.c.h.b16 %v6293
          %v6754 = vunpack.c.l.b16 %v6294
          %v6755 = vunpack.c.h.b16 %v6294
          %v6756 = vunpack.c.l.b16 %v6295
          %v6757 = vunpack.c.h.b16 %v6295
          %v6758 = vunpack.c.l.b16 %v6296
          %v6759 = vunpack.c.h.b16 %v6296
          %v6760 = vunpack.c.l.b16 %v6297
          %v6761 = vunpack.c.h.b16 %v6297
          %v6762 = vunpack.c.l.b16 %v6298
          %v6763 = vunpack.c.h.b16 %v6298
          %v6764 = vunpack.c.l.b16 %v6299
          %v6765 = vunpack.c.h.b16 %v6299
          %v6766 = vunpack.c.l.b16 %v6300
          %v6767 = vunpack.c.h.b16 %v6300
          %v6768 = vunpack.c.l.b16 %v6301
          %v6769 = vunpack.c.h.b16 %v6301
          %v6770 = vunpack.c.l.b16 %v6302
          %v6771 = vunpack.c.h.b16 %v6302
          %v6772 = vunpack.c.l.b16 %v6303
          %v6773 = vunpack.c.h.b16 %v6303
          %v6774 = vunpack.c.l.b16 %v6304
          %v6775 = vunpack.c.h.b16 %v6304
          %v6776 = vunpack.c.l.b16 %v6305
          %v6777 = vunpack.c.h.b16 %v6305
          %v6778 = vunpack.c.l.b16 %v6306
          %v6779 = vunpack.c.h.b16 %v6306
          %v6780 = vunpack.c.l.b16 %v6307
          %v6781 = vunpack.c.h.b16 %v6307
          %v6782 = vunpack.c.l.b16 %v6308
          %v6783 = vunpack.c.h.b16 %v6308
          %v6784 = vunpack.c.l.b16 %v6309
          %v6785 = vunpack.c.h.b16 %v6309
          %v6786 = vpack.c.b16 %v6546, %v6530
          %v6787 = vpack.c.b16 %v6547, %v6531
          %v6788 = vpack.c.b16 %v6548, %v6532
          %v6789 = vpack.c.b16 %v6549, %v6533
          %v6790 = vpack.c.b16 %v6550, %v6534
          %v6791 = vpack.c.b16 %v6551, %v6535
          %v6792 = vpack.c.b16 %v6552, %v6536
          %v6793 = vpack.c.b16 %v6553, %v6537
          %v6794 = vpack.c.b16 %v6554, %v6538
          %v6795 = vpack.c.b16 %v6555, %v6539
          %v6796 = vpack.c.b16 %v6556, %v6540
          %v6797 = vpack.c.b16 %v6557, %v6541
          %v6798 = vpack.c.b16 %v6558, %v6542
          %v6799 = vpack.c.b16 %v6559, %v6543
          %v6800 = vpack.c.b16 %v6560, %v6544
          %v6801 = vpack.c.b16 %v6561, %v6545
          %v6802 = vpack.c.b16 %v6578, %v6562
          %v6803 = vpack.c.b16 %v6579, %v6563
          %v6804 = vpack.c.b16 %v6580, %v6564
          %v6805 = vpack.c.b16 %v6581, %v6565
          %v6806 = vpack.c.b16 %v6582, %v6566
          %v6807 = vpack.c.b16 %v6583, %v6567
          %v6808 = vpack.c.b16 %v6584, %v6568
          %v6809 = vpack.c.b16 %v6585, %v6569
          %v6810 = vpack.c.b16 %v6586, %v6570
          %v6811 = vpack.c.b16 %v6587, %v6571
          %v6812 = vpack.c.b16 %v6588, %v6572
          %v6813 = vpack.c.b16 %v6589, %v6573
          %v6814 = vpack.c.b16 %v6590, %v6574
          %v6815 = vpack.c.b16 %v6591, %v6575
          %v6816 = vpack.c.b16 %v6592, %v6576
          %v6817 = vpack.c.b16 %v6593, %v6577
          %v6818 = vpack.c.b16 %v6610, %v6594
          %v6819 = vpack.c.b16 %v6611, %v6595
          %v6820 = vpack.c.b16 %v6612, %v6596
          %v6821 = vpack.c.b16 %v6613, %v6597
          %v6822 = vpack.c.b16 %v6614, %v6598
          %v6823 = vpack.c.b16 %v6615, %v6599
          %v6824 = vpack.c.b16 %v6616, %v6600
          %v6825 = vpack.c.b16 %v6617, %v6601
          %v6826 = vpack.c.b16 %v6618, %v6602
          %v6827 = vpack.c.b16 %v6619, %v6603
          %v6828 = vpack.c.b16 %v6620, %v6604
          %v6829 = vpack.c.b16 %v6621, %v6605
          %v6830 = vpack.c.b16 %v6622, %v6606
          %v6831 = vpack.c.b16 %v6623, %v6607
          %v6832 = vpack.c.b16 %v6624, %v6608
          %v6833 = vpack.c.b16 %v6625, %v6609
          %v6834 = vpack.c.b16 %v6642, %v6626
          %v6835 = vpack.c.b16 %v6643, %v6627
          %v6836 = vpack.c.b16 %v6644, %v6628
          %v6837 = vpack.c.b16 %v6645, %v6629
          %v6838 = vpack.c.b16 %v6646, %v6630
          %v6839 = vpack.c.b16 %v6647, %v6631
          %v6840 = vpack.c.b16 %v6648, %v6632
          %v6841 = vpack.c.b16 %v6649, %v6633
          %v6842 = vpack.c.b16 %v6650, %v6634
          %v6843 = vpack.c.b16 %v6651, %v6635
          %v6844 = vpack.c.b16 %v6652, %v6636
          %v6845 = vpack.c.b16 %v6653, %v6637
          %v6846 = vpack.c.b16 %v6654, %v6638
          %v6847 = vpack.c.b16 %v6655, %v6639
          %v6848 = vpack.c.b16 %v6656, %v6640
          %v6849 = vpack.c.b16 %v6657, %v6641
          %v6850 = vpack.c.b16 %v6674, %v6658
          %v6851 = vpack.c.b16 %v6675, %v6659
          %v6852 = vpack.c.b16 %v6676, %v6660
          %v6853 = vpack.c.b16 %v6677, %v6661
          %v6854 = vpack.c.b16 %v6678, %v6662
          %v6855 = vpack.c.b16 %v6679, %v6663
          %v6856 = vpack.c.b16 %v6680, %v6664
          %v6857 = vpack.c.b16 %v6681, %v6665
          %v6858 = vpack.c.b16 %v6682, %v6666
          %v6859 = vpack.c.b16 %v6683, %v6667
          %v6860 = vpack.c.b16 %v6684, %v6668
          %v6861 = vpack.c.b16 %v6685, %v6669
          %v6862 = vpack.c.b16 %v6686, %v6670
          %v6863 = vpack.c.b16 %v6687, %v6671
          %v6864 = vpack.c.b16 %v6688, %v6672
          %v6865 = vpack.c.b16 %v6689, %v6673
          %v6866 = vpack.c.b16 %v6706, %v6690
          %v6867 = vpack.c.b16 %v6707, %v6691
          %v6868 = vpack.c.b16 %v6708, %v6692
          %v6869 = vpack.c.b16 %v6709, %v6693
          %v6870 = vpack.c.b16 %v6710, %v6694
          %v6871 = vpack.c.b16 %v6711, %v6695
          %v6872 = vpack.c.b16 %v6712, %v6696
          %v6873 = vpack.c.b16 %v6713, %v6697
          %v6874 = vpack.c.b16 %v6714, %v6698
          %v6875 = vpack.c.b16 %v6715, %v6699
          %v6876 = vpack.c.b16 %v6716, %v6700
          %v6877 = vpack.c.b16 %v6717, %v6701
          %v6878 = vpack.c.b16 %v6718, %v6702
          %v6879 = vpack.c.b16 %v6719, %v6703
          %v6880 = vpack.c.b16 %v6720, %v6704
          %v6881 = vpack.c.b16 %v6721, %v6705
          %v6882 = vpack.c.b16 %v6738, %v6722
          %v6883 = vpack.c.b16 %v6739, %v6723
          %v6884 = vpack.c.b16 %v6740, %v6724
          %v6885 = vpack.c.b16 %v6741, %v6725
          %v6886 = vpack.c.b16 %v6742, %v6726
          %v6887 = vpack.c.b16 %v6743, %v6727
          %v6888 = vpack.c.b16 %v6744, %v6728
          %v6889 = vpack.c.b16 %v6745, %v6729
          %v6890 = vpack.c.b16 %v6746, %v6730
          %v6891 = vpack.c.b16 %v6747, %v6731
          %v6892 = vpack.c.b16 %v6748, %v6732
          %v6893 = vpack.c.b16 %v6749, %v6733
          %v6894 = vpack.c.b16 %v6750, %v6734
          %v6895 = vpack.c.b16 %v6751, %v6735
          %v6896 = vpack.c.b16 %v6752, %v6736
          %v6897 = vpack.c.b16 %v6753, %v6737
          %v6898 = vpack.c.b16 %v6770, %v6754
          %v6899 = vpack.c.b16 %v6771, %v6755
          %v6900 = vpack.c.b16 %v6772, %v6756
          %v6901 = vpack.c.b16 %v6773, %v6757
          %v6902 = vpack.c.b16 %v6774, %v6758
          %v6903 = vpack.c.b16 %v6775, %v6759
          %v6904 = vpack.c.b16 %v6776, %v6760
          %v6905 = vpack.c.b16 %v6777, %v6761
          %v6906 = vpack.c.b16 %v6778, %v6762
          %v6907 = vpack.c.b16 %v6779, %v6763
          %v6908 = vpack.c.b16 %v6780, %v6764
          %v6909 = vpack.c.b16 %v6781, %v6765
          %v6910 = vpack.c.b16 %v6782, %v6766
          %v6911 = vpack.c.b16 %v6783, %v6767
          %v6912 = vpack.c.b16 %v6784, %v6768
          %v6913 = vpack.c.b16 %v6785, %v6769
          %7042 = vmatprep.subr.bf16.mxu0 %v6899
          %7043 = vmatpush1.bf16.msra.mxu0 %v6898
          %7044 = vmatprep.subr.bf16.mxu0 %v6883
          %7045 = vmatpush1.bf16.msra.mxu0 %v6882
          %7046 = vmatprep.subr.bf16.mxu0 %v6867
          %7047 = vmatpush1.bf16.msra.mxu0 %v6866
          %7048 = vmatprep.subr.bf16.mxu0 %v6851
          %7049 = vmatpush1.bf16.msra.mxu0 %v6850
          %7050 = vmatprep.subr.bf16.mxu0 %v6835
          %7051 = vmatpush1.bf16.msra.mxu0 %v6834
          %7052 = vmatprep.subr.bf16.mxu0 %v6819
          %7053 = vmatpush1.bf16.msra.mxu0 %v6818
          %7054 = vmatprep.subr.bf16.mxu0 %v6803
          %7055 = vmatpush1.bf16.msra.mxu0 %v6802
          %7056 = vmatprep.subr.bf16.mxu0 %v6787
          %7057 = vmatpush1.bf16.msra.mxu0 %v6786
          %7058 = vmatprep.subr.bf16.mxu0 0
          %7059 = vmatpush2.bf16.msra.mxu0 0
          %7060 = vmatprep.subr.bf16.mxu0 0
          %7061 = vmatpush2.bf16.msra.mxu0 0
          %7062 = vmatprep.subr.bf16.mxu0 0
          %7063 = vmatpush2.bf16.msra.mxu0 0
          %7064 = vmatprep.subr.bf16.mxu0 0
          %7065 = vmatpush2.bf16.msra.mxu0 0
          %7066 = vmatprep.subr.bf16.mxu0 0
          %7067 = vmatpush2.bf16.msra.mxu0 0
          %7068 = vmatprep.subr.bf16.mxu0 0
          %7069 = vmatpush2.bf16.msra.mxu0 0
          %7070 = vmatprep.subr.bf16.mxu0 0
          %7071 = vmatpush2.bf16.msra.mxu0 0
          %7072 = vmatprep.subr.bf16.mxu0 0
          %7073 = vmatpush2.bf16.msra.mxu0 0
          %7074 = vmatprep.mubr.bf16.mxu0 0
          %7075 = vmatmul.mubr.bf16.gmra.mxu0 %v6400
          %v7076 = vpop.f32.mrf.mxu0
          %v7077 = vadd.f32 %v6317, %v7076
          %v7078 = vpop.f32.mrf.mxu0
          %v7079 = vadd.f32 %v6321, %v7078
          %v7080 = vpop.f32.mrf.mxu0
          %v7081 = vpop.f32.mrf.mxu0
          %7082 = vdwg.mxu0
          %7083 = vmatprep.subr.bf16.mxu0 %v6901
          %7084 = vmatpush1.bf16.msra.mxu0 %v6900
          %7085 = vmatprep.subr.bf16.mxu0 %v6885
          %7086 = vmatpush1.bf16.msra.mxu0 %v6884
          %7087 = vmatprep.subr.bf16.mxu0 %v6869
          %7088 = vmatpush1.bf16.msra.mxu0 %v6868
          %7089 = vmatprep.subr.bf16.mxu0 %v6853
          %7090 = vmatpush1.bf16.msra.mxu0 %v6852
          %7091 = vmatprep.subr.bf16.mxu0 %v6837
          %7092 = vmatpush1.bf16.msra.mxu0 %v6836
          %7093 = vmatprep.subr.bf16.mxu0 %v6821
          %7094 = vmatpush1.bf16.msra.mxu0 %v6820
          %7095 = vmatprep.subr.bf16.mxu0 %v6805
          %7096 = vmatpush1.bf16.msra.mxu0 %v6804
          %7097 = vmatprep.subr.bf16.mxu0 %v6789
          %7098 = vmatpush1.bf16.msra.mxu0 %v6788
          %7099 = vmatprep.subr.bf16.mxu0 0
          %7100 = vmatpush2.bf16.msra.mxu0 0
          %7101 = vmatprep.subr.bf16.mxu0 0
          %7102 = vmatpush2.bf16.msra.mxu0 0
          %7103 = vmatprep.subr.bf16.mxu0 0
          %7104 = vmatpush2.bf16.msra.mxu0 0
          %7105 = vmatprep.subr.bf16.mxu0 0
          %7106 = vmatpush2.bf16.msra.mxu0 0
          %7107 = vmatprep.subr.bf16.mxu0 0
          %7108 = vmatpush2.bf16.msra.mxu0 0
          %7109 = vmatprep.subr.bf16.mxu0 0
          %7110 = vmatpush2.bf16.msra.mxu0 0
          %7111 = vmatprep.subr.bf16.mxu0 0
          %7112 = vmatpush2.bf16.msra.mxu0 0
          %7113 = vmatprep.subr.bf16.mxu0 0
          %7114 = vmatpush2.bf16.msra.mxu0 0
          %7115 = vmatprep.mubr.bf16.mxu0 0
          %7116 = vmatmul.mubr.bf16.gmra.mxu0 %v6400
          %v7117 = vpop.f32.mrf.mxu0
          %v7118 = vadd.f32 %v6325, %v7117
          %v7119 = vpop.f32.mrf.mxu0
          %v7120 = vadd.f32 %v6329, %v7119
          %v7121 = vpop.f32.mrf.mxu0
          %v7122 = vpop.f32.mrf.mxu0
          %7123 = vdwg.mxu0
          %7124 = vmatprep.subr.bf16.mxu0 %v6903
          %7125 = vmatpush1.bf16.msra.mxu0 %v6902
          %7126 = vmatprep.subr.bf16.mxu0 %v6887
          %7127 = vmatpush1.bf16.msra.mxu0 %v6886
          %7128 = vmatprep.subr.bf16.mxu0 %v6871
          %7129 = vmatpush1.bf16.msra.mxu0 %v6870
          %7130 = vmatprep.subr.bf16.mxu0 %v6855
          %7131 = vmatpush1.bf16.msra.mxu0 %v6854
          %7132 = vmatprep.subr.bf16.mxu0 %v6839
          %7133 = vmatpush1.bf16.msra.mxu0 %v6838
          %7134 = vmatprep.subr.bf16.mxu0 %v6823
          %7135 = vmatpush1.bf16.msra.mxu0 %v6822
          %7136 = vmatprep.subr.bf16.mxu0 %v6807
          %7137 = vmatpush1.bf16.msra.mxu0 %v6806
          %7138 = vmatprep.subr.bf16.mxu0 %v6791
          %7139 = vmatpush1.bf16.msra.mxu0 %v6790
          %7140 = vmatprep.subr.bf16.mxu0 0
          %7141 = vmatpush2.bf16.msra.mxu0 0
          %7142 = vmatprep.subr.bf16.mxu0 0
          %7143 = vmatpush2.bf16.msra.mxu0 0
          %7144 = vmatprep.subr.bf16.mxu0 0
          %7145 = vmatpush2.bf16.msra.mxu0 0
          %7146 = vmatprep.subr.bf16.mxu0 0
          %7147 = vmatpush2.bf16.msra.mxu0 0
          %7148 = vmatprep.subr.bf16.mxu0 0
          %7149 = vmatpush2.bf16.msra.mxu0 0
          %7150 = vmatprep.subr.bf16.mxu0 0
          %7151 = vmatpush2.bf16.msra.mxu0 0
          %7152 = vmatprep.subr.bf16.mxu0 0
          %7153 = vmatpush2.bf16.msra.mxu0 0
          %7154 = vmatprep.subr.bf16.mxu0 0
          %7155 = vmatpush2.bf16.msra.mxu0 0
          %7156 = vmatprep.mubr.bf16.mxu0 0
          %7157 = vmatmul.mubr.bf16.gmra.mxu0 %v6400
          %v7158 = vpop.f32.mrf.mxu0
          %v7159 = vadd.f32 %v6333, %v7158
          %v7160 = vpop.f32.mrf.mxu0
          %v7161 = vadd.f32 %v6337, %v7160
          %v7162 = vpop.f32.mrf.mxu0
          %v7163 = vpop.f32.mrf.mxu0
          %7164 = vdwg.mxu0
          %7165 = vmatprep.subr.bf16.mxu0 %v6905
          %7166 = vmatpush1.bf16.msra.mxu0 %v6904
          %7167 = vmatprep.subr.bf16.mxu0 %v6889
          %7168 = vmatpush1.bf16.msra.mxu0 %v6888
          %7169 = vmatprep.subr.bf16.mxu0 %v6873
          %7170 = vmatpush1.bf16.msra.mxu0 %v6872
          %7171 = vmatprep.subr.bf16.mxu0 %v6857
          %7172 = vmatpush1.bf16.msra.mxu0 %v6856
          %7173 = vmatprep.subr.bf16.mxu0 %v6841
          %7174 = vmatpush1.bf16.msra.mxu0 %v6840
          %7175 = vmatprep.subr.bf16.mxu0 %v6825
          %7176 = vmatpush1.bf16.msra.mxu0 %v6824
          %7177 = vmatprep.subr.bf16.mxu0 %v6809
          %7178 = vmatpush1.bf16.msra.mxu0 %v6808
          %7179 = vmatprep.subr.bf16.mxu0 %v6793
          %7180 = vmatpush1.bf16.msra.mxu0 %v6792
          %7181 = vmatprep.subr.bf16.mxu0 0
          %7182 = vmatpush2.bf16.msra.mxu0 0
          %7183 = vmatprep.subr.bf16.mxu0 0
          %7184 = vmatpush2.bf16.msra.mxu0 0
          %7185 = vmatprep.subr.bf16.mxu0 0
          %7186 = vmatpush2.bf16.msra.mxu0 0
          %7187 = vmatprep.subr.bf16.mxu0 0
          %7188 = vmatpush2.bf16.msra.mxu0 0
          %7189 = vmatprep.subr.bf16.mxu0 0
          %7190 = vmatpush2.bf16.msra.mxu0 0
          %7191 = vmatprep.subr.bf16.mxu0 0
          %7192 = vmatpush2.bf16.msra.mxu0 0
          %7193 = vmatprep.subr.bf16.mxu0 0
          %7194 = vmatpush2.bf16.msra.mxu0 0
          %7195 = vmatprep.subr.bf16.mxu0 0
          %7196 = vmatpush2.bf16.msra.mxu0 0
          %7197 = vmatprep.mubr.bf16.mxu0 0
          %7198 = vmatmul.mubr.bf16.gmra.mxu0 %v6400
          %v7199 = vpop.f32.mrf.mxu0
          %v7200 = vadd.f32 %v6341, %v7199
          %v7201 = vpop.f32.mrf.mxu0
          %v7202 = vadd.f32 %v6345, %v7201
          %v7203 = vpop.f32.mrf.mxu0
          %v7204 = vpop.f32.mrf.mxu0
          %7205 = vdwg.mxu0
          %7206 = vmatprep.subr.bf16.mxu0 %v6907
          %7207 = vmatpush1.bf16.msra.mxu0 %v6906
          %7208 = vmatprep.subr.bf16.mxu0 %v6891
          %7209 = vmatpush1.bf16.msra.mxu0 %v6890
          %7210 = vmatprep.subr.bf16.mxu0 %v6875
          %7211 = vmatpush1.bf16.msra.mxu0 %v6874
          %7212 = vmatprep.subr.bf16.mxu0 %v6859
          %7213 = vmatpush1.bf16.msra.mxu0 %v6858
          %7214 = vmatprep.subr.bf16.mxu0 %v6843
          %7215 = vmatpush1.bf16.msra.mxu0 %v6842
          %7216 = vmatprep.subr.bf16.mxu0 %v6827
          %7217 = vmatpush1.bf16.msra.mxu0 %v6826
          %7218 = vmatprep.subr.bf16.mxu0 %v6811
          %7219 = vmatpush1.bf16.msra.mxu0 %v6810
          %7220 = vmatprep.subr.bf16.mxu0 %v6795
          %7221 = vmatpush1.bf16.msra.mxu0 %v6794
          %7222 = vmatprep.subr.bf16.mxu0 0
          %7223 = vmatpush2.bf16.msra.mxu0 0
          %7224 = vmatprep.subr.bf16.mxu0 0
          %7225 = vmatpush2.bf16.msra.mxu0 0
          %7226 = vmatprep.subr.bf16.mxu0 0
          %7227 = vmatpush2.bf16.msra.mxu0 0
          %7228 = vmatprep.subr.bf16.mxu0 0
          %7229 = vmatpush2.bf16.msra.mxu0 0
          %7230 = vmatprep.subr.bf16.mxu0 0
          %7231 = vmatpush2.bf16.msra.mxu0 0
          %7232 = vmatprep.subr.bf16.mxu0 0
          %7233 = vmatpush2.bf16.msra.mxu0 0
          %7234 = vmatprep.subr.bf16.mxu0 0
          %7235 = vmatpush2.bf16.msra.mxu0 0
          %7236 = vmatprep.subr.bf16.mxu0 0
          %7237 = vmatpush2.bf16.msra.mxu0 0
          %7238 = vmatprep.mubr.bf16.mxu0 0
          %7239 = vmatmul.mubr.bf16.gmra.mxu0 %v6400
          %v7240 = vpop.f32.mrf.mxu0
          %v7241 = vadd.f32 %v6349, %v7240
          %v7242 = vpop.f32.mrf.mxu0
          %v7243 = vadd.f32 %v6353, %v7242
          %v7244 = vpop.f32.mrf.mxu0
          %v7245 = vpop.f32.mrf.mxu0
          %7246 = vdwg.mxu0
          %7247 = vmatprep.subr.bf16.mxu0 %v6909
          %7248 = vmatpush1.bf16.msra.mxu0 %v6908
          %7249 = vmatprep.subr.bf16.mxu0 %v6893
          %7250 = vmatpush1.bf16.msra.mxu0 %v6892
          %7251 = vmatprep.subr.bf16.mxu0 %v6877
          %7252 = vmatpush1.bf16.msra.mxu0 %v6876
          %7253 = vmatprep.subr.bf16.mxu0 %v6861
          %7254 = vmatpush1.bf16.msra.mxu0 %v6860
          %7255 = vmatprep.subr.bf16.mxu0 %v6845
          %7256 = vmatpush1.bf16.msra.mxu0 %v6844
          %7257 = vmatprep.subr.bf16.mxu0 %v6829
          %7258 = vmatpush1.bf16.msra.mxu0 %v6828
          %7259 = vmatprep.subr.bf16.mxu0 %v6813
          %7260 = vmatpush1.bf16.msra.mxu0 %v6812
          %7261 = vmatprep.subr.bf16.mxu0 %v6797
          %7262 = vmatpush1.bf16.msra.mxu0 %v6796
          %7263 = vmatprep.subr.bf16.mxu0 0
          %7264 = vmatpush2.bf16.msra.mxu0 0
          %7265 = vmatprep.subr.bf16.mxu0 0
          %7266 = vmatpush2.bf16.msra.mxu0 0
          %7267 = vmatprep.subr.bf16.mxu0 0
          %7268 = vmatpush2.bf16.msra.mxu0 0
          %7269 = vmatprep.subr.bf16.mxu0 0
          %7270 = vmatpush2.bf16.msra.mxu0 0
          %7271 = vmatprep.subr.bf16.mxu0 0
          %7272 = vmatpush2.bf16.msra.mxu0 0
          %7273 = vmatprep.subr.bf16.mxu0 0
          %7274 = vmatpush2.bf16.msra.mxu0 0
          %7275 = vmatprep.subr.bf16.mxu0 0
          %7276 = vmatpush2.bf16.msra.mxu0 0
          %7277 = vmatprep.subr.bf16.mxu0 0
          %7278 = vmatpush2.bf16.msra.mxu0 0
          %7279 = vmatprep.mubr.bf16.mxu0 0
          %7280 = vmatmul.mubr.bf16.gmra.mxu0 %v6400
          %v7281 = vpop.f32.mrf.mxu0
          %v7282 = vadd.f32 %v6357, %v7281
          %v7283 = vpop.f32.mrf.mxu0
          %v7284 = vadd.f32 %v6361, %v7283
          %v7285 = vpop.f32.mrf.mxu0
          %v7286 = vpop.f32.mrf.mxu0
          %7287 = vdwg.mxu0
          %7288 = vmatprep.subr.bf16.mxu0 %v6911
          %7289 = vmatpush1.bf16.msra.mxu0 %v6910
          %7290 = vmatprep.subr.bf16.mxu0 %v6895
          %7291 = vmatpush1.bf16.msra.mxu0 %v6894
          %7292 = vmatprep.subr.bf16.mxu0 %v6879
          %7293 = vmatpush1.bf16.msra.mxu0 %v6878
          %7294 = vmatprep.subr.bf16.mxu0 %v6863
          %7295 = vmatpush1.bf16.msra.mxu0 %v6862
          %7296 = vmatprep.subr.bf16.mxu0 %v6847
          %7297 = vmatpush1.bf16.msra.mxu0 %v6846
          %7298 = vmatprep.subr.bf16.mxu0 %v6831
          %7299 = vmatpush1.bf16.msra.mxu0 %v6830
          %7300 = vmatprep.subr.bf16.mxu0 %v6815
          %7301 = vmatpush1.bf16.msra.mxu0 %v6814
          %7302 = vmatprep.subr.bf16.mxu0 %v6799
          %7303 = vmatpush1.bf16.msra.mxu0 %v6798
          %7304 = vmatprep.subr.bf16.mxu0 0
          %7305 = vmatpush2.bf16.msra.mxu0 0
          %7306 = vmatprep.subr.bf16.mxu0 0
          %7307 = vmatpush2.bf16.msra.mxu0 0
          %7308 = vmatprep.subr.bf16.mxu0 0
          %7309 = vmatpush2.bf16.msra.mxu0 0
          %7310 = vmatprep.subr.bf16.mxu0 0
          %7311 = vmatpush2.bf16.msra.mxu0 0
          %7312 = vmatprep.subr.bf16.mxu0 0
          %7313 = vmatpush2.bf16.msra.mxu0 0
          %7314 = vmatprep.subr.bf16.mxu0 0
          %7315 = vmatpush2.bf16.msra.mxu0 0
          %7316 = vmatprep.subr.bf16.mxu0 0
          %7317 = vmatpush2.bf16.msra.mxu0 0
          %7318 = vmatprep.subr.bf16.mxu0 0
          %7319 = vmatpush2.bf16.msra.mxu0 0
          %7320 = vmatprep.mubr.bf16.mxu0 0
          %7321 = vmatmul.mubr.bf16.gmra.mxu0 %v6400
          %v7322 = vpop.f32.mrf.mxu0
          %v7323 = vadd.f32 %v6365, %v7322
          %v7324 = vpop.f32.mrf.mxu0
          %v7325 = vadd.f32 %v6369, %v7324
          %v7326 = vpop.f32.mrf.mxu0
          %v7327 = vpop.f32.mrf.mxu0
          %7328 = vdwg.mxu0
          %7329 = vmatprep.subr.bf16.mxu0 %v6913
          %7330 = vmatpush1.bf16.msra.mxu0 %v6912
          %7331 = vmatprep.subr.bf16.mxu0 %v6897
          %7332 = vmatpush1.bf16.msra.mxu0 %v6896
          %7333 = vmatprep.subr.bf16.mxu0 %v6881
          %7334 = vmatpush1.bf16.msra.mxu0 %v6880
          %7335 = vmatprep.subr.bf16.mxu0 %v6865
          %7336 = vmatpush1.bf16.msra.mxu0 %v6864
          %7337 = vmatprep.subr.bf16.mxu0 %v6849
          %7338 = vmatpush1.bf16.msra.mxu0 %v6848
          %7339 = vmatprep.subr.bf16.mxu0 %v6833
          %7340 = vmatpush1.bf16.msra.mxu0 %v6832
          %7341 = vmatprep.subr.bf16.mxu0 %v6817
          %7342 = vmatpush1.bf16.msra.mxu0 %v6816
          %7343 = vmatprep.subr.bf16.mxu0 %v6801
          %7344 = vmatpush1.bf16.msra.mxu0 %v6800
          %7345 = vmatprep.subr.bf16.mxu0 0
          %7346 = vmatpush2.bf16.msra.mxu0 0
          %7347 = vmatprep.subr.bf16.mxu0 0
          %7348 = vmatpush2.bf16.msra.mxu0 0
          %7349 = vmatprep.subr.bf16.mxu0 0
          %7350 = vmatpush2.bf16.msra.mxu0 0
          %7351 = vmatprep.subr.bf16.mxu0 0
          %7352 = vmatpush2.bf16.msra.mxu0 0
          %7353 = vmatprep.subr.bf16.mxu0 0
          %7354 = vmatpush2.bf16.msra.mxu0 0
          %7355 = vmatprep.subr.bf16.mxu0 0
          %7356 = vmatpush2.bf16.msra.mxu0 0
          %7357 = vmatprep.subr.bf16.mxu0 0
          %7358 = vmatpush2.bf16.msra.mxu0 0
          %7359 = vmatprep.subr.bf16.mxu0 0
          %7360 = vmatpush2.bf16.msra.mxu0 0
          %7361 = vmatprep.mubr.bf16.mxu0 0
          %7362 = vmatmul.mubr.bf16.gmra.mxu0 %v6400
          %v7363 = vpop.f32.mrf.mxu0
          %v7364 = vadd.f32 %v6373, %v7363
          %v7365 = vpop.f32.mrf.mxu0
          %v7366 = vadd.f32 %v6377, %v7365
          %v7367 = vpop.f32.mrf.mxu0
          %v7368 = vpop.f32.mrf.mxu0
          %7369 = vdwg.mxu0
          %v7386 = vcombine.low %v7077, %v7079
          %v7387 = vcombine.low %v7118, %v7120
          %v7389 = vunpack.c.l.s4 1983009808
          %v7390 = vunpack.c.0.s8 %v7389
          %v7391 = vlaneseq
          %v7392 = vshrl.u32 %v7391, 7
          %v7393 = vsub.s32 %v7390, %v7392
          %v7394 = vrot.slane %v7386, %v7393
          %v7396 = vunpack.c.l.s4 1983009808
          %v7397 = vunpack.c.0.s8 %v7396
          %v7398 = vlaneseq
          %v7399 = vshrl.u32 %v7398, 7
          %v7400 = vsub.s32 %v7397, %v7399
          %v7401 = vrot.slane %v7387, %v7400
          %v7402 = vcombine.low %v7394, %v7401
          %v7403 = vcombine.low %v7159, %v7161
          %v7404 = vcombine.low %v7200, %v7202
          %v7406 = vunpack.c.l.s4 1983009808
          %v7407 = vunpack.c.0.s8 %v7406
          %v7408 = vlaneseq
          %v7409 = vshrl.u32 %v7408, 7
          %v7410 = vsub.s32 %v7407, %v7409
          %v7411 = vrot.slane %v7403, %v7410
          %v7413 = vunpack.c.l.s4 1983009808
          %v7414 = vunpack.c.0.s8 %v7413
          %v7415 = vlaneseq
          %v7416 = vshrl.u32 %v7415, 7
          %v7417 = vsub.s32 %v7414, %v7416
          %v7418 = vrot.slane %v7404, %v7417
          %v7419 = vcombine.low %v7411, %v7418
          %v7420 = vcombine.low %v7241, %v7243
          %v7421 = vcombine.low %v7282, %v7284
          %v7423 = vunpack.c.l.s4 1983009808
          %v7424 = vunpack.c.0.s8 %v7423
          %v7425 = vlaneseq
          %v7426 = vshrl.u32 %v7425, 7
          %v7427 = vsub.s32 %v7424, %v7426
          %v7428 = vrot.slane %v7420, %v7427
          %v7430 = vunpack.c.l.s4 1983009808
          %v7431 = vunpack.c.0.s8 %v7430
          %v7432 = vlaneseq
          %v7433 = vshrl.u32 %v7432, 7
          %v7434 = vsub.s32 %v7431, %v7433
          %v7435 = vrot.slane %v7421, %v7434
          %v7436 = vcombine.low %v7428, %v7435
          %v7437 = vcombine.low %v7323, %v7325
          %v7438 = vcombine.low %v7364, %v7366
          %v7440 = vunpack.c.l.s4 1983009808
          %v7441 = vunpack.c.0.s8 %v7440
          %v7442 = vlaneseq
          %v7443 = vshrl.u32 %v7442, 7
          %v7444 = vsub.s32 %v7441, %v7443
          %v7445 = vrot.slane %v7437, %v7444
          %v7447 = vunpack.c.l.s4 1983009808
          %v7448 = vunpack.c.0.s8 %v7447
          %v7449 = vlaneseq
          %v7450 = vshrl.u32 %v7449, 7
          %v7451 = vsub.s32 %v7448, %v7450
          %v7452 = vrot.slane %v7438, %v7451
          %v7453 = vcombine.low %v7445, %v7452
          %7458 = vst [vmem:[#allocation29] sm:$0xff] %v7402
          %7459 = vst [vmem:[#allocation29 + $0x8] sm:$0xff] %v7419
          %7460 = vst [vmem:[#allocation29 + $0x10] sm:$0xff] %v7436
          %7461 = vst [vmem:[#allocation29 + $0x18] sm:$0xff] %v7453
        $region164: #{encoder_forward.1} parent=95 // pred_fallthru
          _
        // Predicated region
        $region165: #{encoder_forward.1} parent=95 // pred_check
          %p7462 = pneg %p552
        $region166: #{encoder_forward.1} parent=95 // pred_check_branch
          %7464 = sbr.rel (%p7462) target = $region168
        $region167: #{encoder_forward.1} parent=95 // pred_region
          %s7466 = ssub.s32 512, 512
          %7467 = vsyncadd [#allocation7], %s7466
          %s7469 = sshll.u32 [#allocation29], 4
          %s7470 = int_to_ptr.vmem [resolvable:$true] %s7469
          %7472 = dma.vmem_to_hbm [thread:$0]  %s7470, 512, %s20, [#allocation7]
        $region168: #{encoder_forward.1} parent=95 // pred_fallthru
          _
        // Predicated region
        $region169: #{encoder_forward.1} parent=95 // pred_check
          %p7473 = pneg %p552
        $region170: #{encoder_forward.1} parent=95 // pred_check_branch
          %7475 = sbr.rel (%p7473) target = $region172
        $region171: #{encoder_forward.1} parent=95 // pred_region
          %7476 = dma.done [#allocation7], 512
        $region172: #{encoder_forward.1} parent=95 // pred_fallthru
          _
      $region96: #{encoder_forward.1} parent=5 // pred_fallthru
        _
      %p7477 = scmp.le.s32.totalorder 2, %s55
      // Predicated region
      $region173: #{encoder_forward.1} parent=5 // pred_check
        %p7478 = pneg %p7477
      $region174: #{encoder_forward.1} parent=5 // pred_check_branch
        %7480 = sbr.rel (%p7478) target = $region176
      $region175: #{encoder_forward.1} parent=5 // pred_region
        %s7481 = ssub.s32 %s55, 2
      $region176: #{encoder_forward.1} parent=5 // pred_fallthru
        _
    $region6: #{encoder_forward.1} parent=1 // loop_footer
      %s59 = sadd.s32 1, %s55
    $region7: #{encoder_forward.1} parent=1 // loop_footer_branch
      %54 = sbr.rel target = $region3
    $region8: #{encoder_forward.1} parent=1 // loop_exit
      _
    %7482 = vsyncpa [#allocation6], 1
    %s7483 = scalar_lea.sflag [#allocation6], 1
    %7484 = vsyncpa %s7483, 1
    %7485 = vsyncpa [#allocation9], 1
    %s7486 = scalar_lea.sflag [#allocation9], 1
    %7487 = vsyncpa %s7486, 1
    %7488 = vsyncpa [#allocation12], 1
    %s7489 = scalar_lea.sflag [#allocation12], 1
    %7490 = vsyncpa %s7489, 1
    %7491 = vsyncpa [#allocation15], 1
    %s7492 = scalar_lea.sflag [#allocation15], 1
    %7493 = vsyncpa %s7492, 1
    %7494 = vsyncpa [#allocation18], 1
    %s7495 = scalar_lea.sflag [#allocation18], 1
    %7496 = vsyncpa %s7495, 1
    %7497 = vsyncpa [#allocation21], 1
    %s7498 = scalar_lea.sflag [#allocation21], 1
    %7499 = vsyncpa %s7498, 1
    %7500 = vsyncpa [#allocation24], 1
    %s7501 = scalar_lea.sflag [#allocation24], 1
    %7502 = vsyncpa %s7501, 1
    %7503 = vsyncpa [#allocation27], 1
    %s7504 = scalar_lea.sflag [#allocation27], 1
    %7505 = vsyncpa %s7504, 1
    %7506 = vsyncpa [#allocation7], 1
    %s7507 = scalar_lea.sflag [#allocation7], 1
    %7508 = vsyncpa %s7507, 1

</llo_original>
